<compile_context>
chip_gen: v7x
topology: tpu7x:2x2x1
jax: 0.10.0
libtpu: 0.0.40
codegen_flags: <defaults>
</compile_context>

<pallas_src>
import functools

import numpy as np

import jax
import jax.numpy as jnp
from jax.experimental import pallas as pl
from jax.experimental.pallas import tpu as pltpu


# ---------------------------------------------------------------------------
# Model dimensions (small synthetic stand-in for DINOv2 CHANNELS_NUM)
# ---------------------------------------------------------------------------
PATCH = 14
EMBED_DIM = 128
NUM_HEADS = 4
DEPTH = 2
MLP_DIM = 4 * EMBED_DIM
FEAT_DIM = 64          # args.features_dim for CosGeM
LN_EPS = 1e-6
GEM_EPS = 1e-6
K_PAD = 640            # im2col K (3*14*14=588) zero-padded to a 128 multiple


# ---------------------------------------------------------------------------
# Pallas helpers
# ---------------------------------------------------------------------------

def _full_spec(shape):
  # Whole-array block (all shapes here are tiny; one VMEM block per input).
  return pl.BlockSpec(shape, lambda: (0,) * len(shape))


def _ln(x, g, b, eps):
  mu = jnp.mean(x, axis=-1, keepdims=True)
  var = jnp.mean(jnp.square(x - mu), axis=-1, keepdims=True)
  return (x - mu) * jax.lax.rsqrt(var + eps) * g + b


# ---------------------------------------------------------------------------
# The single fused kernel: patch embed -> ViT blocks -> final LN + CosGeM
# ---------------------------------------------------------------------------

def _vgl_kernel(patches_ref, pw_ref, sel_ref, add_ref,
                qkvw_ref, qkvb_ref, projw_ref, fc1w_ref, fc1b_ref, fc2w_ref,
                vec_ref, normv_ref, gemsel_ref, aggw_ref, aggb_ref,
                feats_ref, desc_ref,
                *, depth, batch, tokens, num_heads, eps, gem_eps):
  # ---- patch embed + token assembly ---------------------------------------
  # add_ref already folds: CLS token + positional embedding + patch bias.
  pe = jnp.dot(patches_ref[...].astype(jnp.bfloat16), pw_ref[...],
               preferred_element_type=jnp.float32)                # (B*Np, D)
  x = jnp.dot(sel_ref[...], pe,
              preferred_element_type=jnp.float32) + add_ref[...]  # (B*T, D)

  D = x.shape[-1]
  hd = D // num_heads
  scale = 1.0 / (hd ** 0.5)

  # ---- transformer blocks --------------------------------------------------
  for l in range(depth):                       # static, tiny depth
    vec = vec_ref[l]                           # (8, D) packed per-block vectors
    ln1_g, ln1_b = vec[0:1], vec[1:2]
    proj_b, ls1 = vec[2:3], vec[3:4]
    ln2_g, ln2_b = vec[4:5], vec[5:6]
    fc2_b, ls2 = vec[6:7], vec[7:8]

    # attention branch
    h1 = _ln(x, ln1_g, ln1_b, eps)
    qkv = jnp.dot(h1.astype(jnp.bfloat16), qkvw_ref[l],
                  preferred_element_type=jnp.float32) + qkvb_ref[l]  # (B*T, 3D)

    batch_outs = []
    for b in range(batch):                     # static, tiny; all in vregs
      r0 = b * tokens
      qkv_rows = qkv[r0:r0 + tokens, :]
      head_outs = []
      for h in range(num_heads):
        c0 = h * 3 * hd                        # head-major qkv column layout
        qh = qkv_rows[:, c0:c0 + hd]
        kh = qkv_rows[:, c0 + hd:c0 + 2 * hd]
        vh = qkv_rows[:, c0 + 2 * hd:c0 + 3 * hd]
        # q @ k^T without an in-kernel transpose.
        s = jax.lax.dot_general(qh, kh, (((1,), (1,)), ((), ())),
                                preferred_element_type=jnp.float32) * scale
        s = s - jnp.max(s, axis=-1, keepdims=True)
        p = jnp.exp(s)
        p = p * pl.reciprocal(jnp.sum(p, axis=-1, keepdims=True), approx=True)
        head_outs.append(jnp.dot(p, vh, preferred_element_type=jnp.float32))
      batch_outs.append(jnp.concatenate(head_outs, axis=-1))        # (T, D)
    attn = jnp.concatenate(batch_outs, axis=0)                      # (B*T, D)

    proj = jnp.dot(attn.astype(jnp.bfloat16), projw_ref[l],
                   preferred_element_type=jnp.float32) + proj_b
    x = x + ls1 * proj

    # MLP branch
    h2 = _ln(x, ln2_g, ln2_b, eps)
    mlp = jnp.dot(h2.astype(jnp.bfloat16), fc1w_ref[l],
                  preferred_element_type=jnp.float32) + fc1b_ref[l]
    # TODO(synk): PyTorch nn.GELU() default is exact erf; tanh approximation.
    mlp = jax.nn.gelu(mlp, approximate=True)
    mlp = jnp.dot(mlp.astype(jnp.bfloat16), fc2w_ref[l],
                  preferred_element_type=jnp.float32) + fc2_b
    x = x + ls2 * mlp

  # ---- final LayerNorm + CosGeM (GeM p=3 -> FC -> L2 normalize) -----------
  normv = normv_ref[...]
  feats = _ln(x, normv[0:1], normv[1:2], eps)
  feats_ref[...] = feats

  xc = jnp.maximum(feats, gem_eps)
  x3 = xc * xc * xc
  # gem_sel averages patch tokens per batch (CLS columns are zero) -> (B, D).
  pooled = jnp.dot(gemsel_ref[...], x3, preferred_element_type=jnp.float32)
  g = jnp.exp(jnp.log(pooled) / 3.0)           # pooled > 0 -> exact cube root
  y = jnp.dot(g.astype(jnp.bfloat16), aggw_ref[...],
              preferred_element_type=jnp.float32) + aggb_ref[...]   # (B, F)
  # exact (non-approx) reciprocal for the final L2 normalization.
  n = jnp.sqrt(jnp.sum(y * y, axis=-1, keepdims=True))
  desc_ref[...] = y / jnp.maximum(n, 1e-12)


# ---------------------------------------------------------------------------
# Parameters (packed / stacked layouts expected by the fused kernel)
# ---------------------------------------------------------------------------

def init_params(key):
  ks = iter(jax.random.split(key, 64))
  std = 0.02
  cpp = 3 * PATCH * PATCH
  hd = EMBED_DIM // NUM_HEADS

  patch_w = jax.random.normal(next(ks), (EMBED_DIM, 3, PATCH, PATCH),
                              jnp.float32) * std
  patch_w2 = patch_w.reshape(EMBED_DIM, cpp).T                    # (588, D)
  patch_w2 = jnp.pad(patch_w2, ((0, K_PAD - cpp), (0, 0)))        # zero-pad K

  # head-major column permutation: for each head h, q|k|v columns contiguous.
  perm = jnp.concatenate([jnp.arange(hd) + h * hd + j * EMBED_DIM
                          for h in range(NUM_HEADS) for j in range(3)])

  qkv_w, qkv_b, proj_w, fc1_w, fc1_b, fc2_w, vec = [], [], [], [], [], [], []
  for _ in range(DEPTH):
    w_qkv = jax.random.normal(next(ks), (EMBED_DIM, 3 * EMBED_DIM),
                              jnp.float32) * std
    b_qkv = jnp.zeros((3 * EMBED_DIM,), jnp.float32)
    qkv_w.append(w_qkv[:, perm].astype(jnp.bfloat16))
    qkv_b.append(b_qkv[perm].reshape(1, 3 * EMBED_DIM))
    proj_w.append((jax.random.normal(next(ks), (EMBED_DIM, EMBED_DIM),
                                     jnp.float32) * std).astype(jnp.bfloat16))
    fc1_w.append((jax.random.normal(next(ks), (EMBED_DIM, MLP_DIM),
                                    jnp.float32) * std).astype(jnp.bfloat16))
    fc1_b.append(jnp.zeros((1, MLP_DIM), jnp.float32))
    fc2_w.append((jax.random.normal(next(ks), (MLP_DIM, EMBED_DIM),
                                    jnp.float32) * std).astype(jnp.bfloat16))
    # packed per-block vectors: [ln1_g, ln1_b, proj_b, ls1, ln2_g, ln2_b,
    #                            fc2_b, ls2]  -> (8, D)
    vec.append(jnp.stack([
        jnp.ones((EMBED_DIM,), jnp.float32),          # ln1_g
        jnp.zeros((EMBED_DIM,), jnp.float32),         # ln1_b
        jnp.zeros((EMBED_DIM,), jnp.float32),         # proj_b
        jnp.full((EMBED_DIM,), 1e-5, jnp.float32),    # ls1 (LayerScale)
        jnp.ones((EMBED_DIM,), jnp.float32),          # ln2_g
        jnp.zeros((EMBED_DIM,), jnp.float32),         # ln2_b
        jnp.zeros((EMBED_DIM,), jnp.float32),         # fc2_b
        jnp.full((EMBED_DIM,), 1e-5, jnp.float32),    # ls2
    ]))

  return {
      "patch_w2": patch_w2.astype(jnp.bfloat16),      # (K_PAD, D) bf16
      "patch_b": jnp.zeros((EMBED_DIM,), jnp.float32),
      "cls": jax.random.normal(next(ks), (1, 1, EMBED_DIM), jnp.float32) * std,
      "qkv_w": jnp.stack(qkv_w),                      # (DEPTH, D, 3D) bf16
      "qkv_b": jnp.stack(qkv_b),                      # (DEPTH, 1, 3D) f32
      "proj_w": jnp.stack(proj_w),                    # (DEPTH, D, D) bf16
      "fc1_w": jnp.stack(fc1_w),                      # (DEPTH, D, MLP) bf16
      "fc1_b": jnp.stack(fc1_b),                      # (DEPTH, 1, MLP) f32
      "fc2_w": jnp.stack(fc2_w),                      # (DEPTH, MLP, D) bf16
      "vec": jnp.stack(vec),                          # (DEPTH, 8, D) f32
      "norm_vec": jnp.stack([jnp.ones((EMBED_DIM,), jnp.float32),
                             jnp.zeros((EMBED_DIM,), jnp.float32)]),  # (2, D)
      "agg_w": (jax.random.normal(next(ks), (EMBED_DIM, FEAT_DIM),
                                  jnp.float32) * std).astype(jnp.bfloat16),
      "agg_b": jnp.zeros((1, FEAT_DIM), jnp.float32),
  }


def make_pos_embed(key, num_tokens):
  return jax.random.normal(key, (1, num_tokens, EMBED_DIM), jnp.float32) * 0.02


# ---------------------------------------------------------------------------
# Forward: equivalent of VGLNet_Test.forward (eval mode) -> (agg_desc, feats_t)
# ---------------------------------------------------------------------------

def vglnet_test_forward(params, pos_embed, x):
  B, C, H, W = x.shape
  # eval-mode resize to a multiple of 14
  h = int(round(H / 14) * 14)
  w = int(round(W / 14) * 14)
  if (h, w) != (H, W):
    # TODO(synk): torchvision antialiased bilinear resize not replicated;
    # plain bilinear used instead.
    x = jax.image.resize(x, (B, C, h, w), method="linear")

  hp, wp = h // PATCH, w // PATCH
  Np = hp * wp
  T = Np + 1
  D = EMBED_DIM
  # TODO(synk): positional-embedding interpolation for image sizes that do not
  # match the pos_embed grid is not implemented.
  assert pos_embed.shape[1] == T

  # im2col unfold of the 14x14/stride-14 conv (pure layout, done by XLA).
  patches = x.reshape(B, C, hp, PATCH, wp, PATCH)
  patches = patches.transpose(0, 2, 4, 1, 3, 5).reshape(
      B * Np, C * PATCH * PATCH)
  patches = jnp.pad(patches, ((0, 0), (0, K_PAD - patches.shape[1])))

  # Trace-time constant matrices: token scatter (CLS rows zero) and per-batch
  # GeM averaging over patch tokens only.
  token_sel = np.zeros((B * T, B * Np), np.float32)
  gem_sel = np.zeros((B, B * T), np.float32)
  for bi in range(B):
    for t in range(Np):
      token_sel[bi * T + 1 + t, bi * Np + t] = 1.0
    gem_sel[bi, bi * T + 1:(bi + 1) * T] = 1.0 / Np
  token_sel = jnp.asarray(token_sel)
  gem_sel = jnp.asarray(gem_sel)

  # Additive term per token row: CLS rows get cls + pos[0]; patch rows get
  # pos[t] + patch-embed bias (bias folded here, free).
  cls_row = params["cls"].reshape(1, D) + pos_embed[0, :1]
  patch_rows = pos_embed[0, 1:] + params["patch_b"][None, :]
  token_add = jnp.tile(jnp.concatenate([cls_row, patch_rows], axis=0), (B, 1))

  args = [patches, params["patch_w2"], token_sel, token_add,
          params["qkv_w"], params["qkv_b"], params["proj_w"],
          params["fc1_w"], params["fc1_b"], params["fc2_w"], params["vec"],
          params["norm_vec"], gem_sel, params["agg_w"], params["agg_b"]]

  kernel = functools.partial(_vgl_kernel, depth=DEPTH, batch=B, tokens=T,
                             num_heads=NUM_HEADS, eps=LN_EPS, gem_eps=GEM_EPS)
  feats2d, desc = pl.pallas_call(
      kernel,
      out_shape=(jax.ShapeDtypeStruct((B * T, D), jnp.float32),
                 jax.ShapeDtypeStruct((B, FEAT_DIM), jnp.float32)),
      in_specs=[_full_spec(a.shape) for a in args],
      out_specs=(_full_spec((B * T, D)), _full_spec((B, FEAT_DIM))),
      compiler_params=pltpu.CompilerParams(vmem_limit_bytes=32 << 20),
  )(*args)

  feats_t = feats2d.reshape(B, T, D)
  return desc, feats_t


# ---------------------------------------------------------------------------

if __name__ == "__main__":
  key = jax.random.PRNGKey(0)
  k_params, k_pos, k_x = jax.random.split(key, 3)

  B, C, H, W = 2, 3, 28, 28          # 28 -> round(28/14)*14 = 28 (no resize)
  num_tokens = 1 + (H // PATCH) * (W // PATCH)

  params = init_params(k_params)
  pos_embed = make_pos_embed(k_pos, num_tokens)
  x = jax.random.normal(k_x, (B, C, H, W), jnp.float32)

  fwd = jax.jit(vglnet_test_forward)
  desc, feats_t = fwd(params, pos_embed, x)
  jax.block_until_ready(desc)
  jax.block_until_ready(feats_t)

  assert desc.shape == (B, FEAT_DIM)
  assert feats_t.shape == (B, num_tokens, EMBED_DIM)
  assert bool(jnp.all(jnp.isfinite(desc)))
  assert bool(jnp.all(jnp.isfinite(feats_t)))
  print("KERNEL_OK")
</pallas_src>

<mosaic_0001>
module attributes {stable_mosaic.version = 11 : i64} {
  func.func @_vgl_kernel(%arg0: memref<8x640xf32, #tpu.memory_space<vmem>>, %arg1: memref<640x128xbf16, #tpu.memory_space<vmem>>, %arg2: memref<10x8xf32, #tpu.memory_space<vmem>>, %arg3: memref<10x128xf32, #tpu.memory_space<vmem>>, %arg4: memref<2x128x384xbf16, #tpu.memory_space<vmem>>, %arg5: memref<2x1x384xf32, #tpu.memory_space<vmem>>, %arg6: memref<2x128x128xbf16, #tpu.memory_space<vmem>>, %arg7: memref<2x128x512xbf16, #tpu.memory_space<vmem>>, %arg8: memref<2x1x512xf32, #tpu.memory_space<vmem>>, %arg9: memref<2x512x128xbf16, #tpu.memory_space<vmem>>, %arg10: memref<2x8x128xf32, #tpu.memory_space<vmem>>, %arg11: memref<2x128xf32, #tpu.memory_space<vmem>>, %arg12: memref<2x10xf32, #tpu.memory_space<vmem>>, %arg13: memref<128x64xbf16, #tpu.memory_space<vmem>>, %arg14: memref<1x64xf32, #tpu.memory_space<vmem>>, %arg15: memref<10x128xf32, #tpu.memory_space<vmem>>, %arg16: memref<2x64xf32, #tpu.memory_space<vmem>>) attributes {dimension_semantics = [], scalar_prefetch = 0 : i64, scratch_operands = 0 : i64, tpu.core_type = #tpu.core_type<tc>} {
    %c0 = arith.constant 0 : index
    %c0_0 = arith.constant 0 : index
    %0 = vector.load %arg0[%c0, %c0_0] : memref<8x640xf32, #tpu.memory_space<vmem>>, vector<8x640xf32>
    %1 = arith.truncf %0 : vector<8x640xf32> to vector<8x640xbf16>
    %c0_1 = arith.constant 0 : index
    %c0_2 = arith.constant 0 : index
    %2 = vector.load %arg1[%c0_1, %c0_2] : memref<640x128xbf16, #tpu.memory_space<vmem>>, vector<640x128xbf16>
    %cst = arith.constant dense<0.000000e+00> : vector<8x128xf32>
    %3 = tpu.matmul %1, %2, %cst {dimension_numbers = #tpu.dot_dimension_numbers<[1], [0], [0], [1], [0, 0, 1, 1], [], []>} : vector<8x640xbf16>, vector<640x128xbf16>, vector<8x128xf32> -> vector<8x128xf32>
    %c0_3 = arith.constant 0 : index
    %c0_4 = arith.constant 0 : index
    %4 = vector.load %arg2[%c0_3, %c0_4] : memref<10x8xf32, #tpu.memory_space<vmem>>, vector<10x8xf32>
    %cst_5 = arith.constant dense<0.000000e+00> : vector<10x128xf32>
    %5 = tpu.matmul %4, %3, %cst_5 {dimension_numbers = #tpu.dot_dimension_numbers<[1], [0], [0], [1], [0, 0, 1, 1], [], []>} : vector<10x8xf32>, vector<8x128xf32>, vector<10x128xf32> -> vector<10x128xf32>
    %c0_6 = arith.constant 0 : index
    %c0_7 = arith.constant 0 : index
    %6 = vector.load %arg3[%c0_6, %c0_7] : memref<10x128xf32, #tpu.memory_space<vmem>>, vector<10x128xf32>
    %7 = arith.addf %5, %6 : vector<10x128xf32>
    %c0_8 = arith.constant 0 : index
    %c0_9 = arith.constant 0 : index
    %c0_10 = arith.constant 0 : index
    %8 = vector.load %arg10[%c0_8, %c0_9, %c0_10] : memref<2x8x128xf32, #tpu.memory_space<vmem>>, vector<1x8x128xf32>
    %9 = vector.shape_cast %8 : vector<1x8x128xf32> to vector<8x128xf32>
    %10 = vector.extract_strided_slice %9 {offsets = [0, 0], sizes = [1, 128], strides = [1, 1]} : vector<8x128xf32> to vector<1x128xf32>
    %11 = vector.extract_strided_slice %9 {offsets = [1, 0], sizes = [1, 128], strides = [1, 1]} : vector<8x128xf32> to vector<1x128xf32>
    %12 = vector.extract_strided_slice %9 {offsets = [2, 0], sizes = [1, 128], strides = [1, 1]} : vector<8x128xf32> to vector<1x128xf32>
    %13 = vector.extract_strided_slice %9 {offsets = [3, 0], sizes = [1, 128], strides = [1, 1]} : vector<8x128xf32> to vector<1x128xf32>
    %14 = vector.extract_strided_slice %9 {offsets = [4, 0], sizes = [1, 128], strides = [1, 1]} : vector<8x128xf32> to vector<1x128xf32>
    %15 = vector.extract_strided_slice %9 {offsets = [5, 0], sizes = [1, 128], strides = [1, 1]} : vector<8x128xf32> to vector<1x128xf32>
    %16 = vector.extract_strided_slice %9 {offsets = [6, 0], sizes = [1, 128], strides = [1, 1]} : vector<8x128xf32> to vector<1x128xf32>
    %17 = vector.extract_strided_slice %9 {offsets = [7, 0], sizes = [1, 128], strides = [1, 1]} : vector<8x128xf32> to vector<1x128xf32>
    %cst_11 = arith.constant dense<0.000000e+00> : vector<10xf32>
    %18 = vector.multi_reduction <add>, %7, %cst_11 [1] : vector<10x128xf32> to vector<10xf32>
    %19 = vector.shape_cast %18 : vector<10xf32> to vector<10x1xf32>
    %cst_12 = arith.constant 1.280000e+02 : f32
    %20 = vector.broadcast %cst_12 : f32 to vector<10x1xf32>
    %21 = arith.divf %19, %20 : vector<10x1xf32>
    %22 = vector.broadcast %21 : vector<10x1xf32> to vector<10x128xf32>
    %23 = arith.subf %7, %22 : vector<10x128xf32>
    %24 = arith.mulf %23, %23 : vector<10x128xf32>
    %cst_13 = arith.constant dense<0.000000e+00> : vector<10xf32>
    %25 = vector.multi_reduction <add>, %24, %cst_13 [1] : vector<10x128xf32> to vector<10xf32>
    %26 = vector.shape_cast %25 : vector<10xf32> to vector<10x1xf32>
    %cst_14 = arith.constant 1.280000e+02 : f32
    %27 = vector.broadcast %cst_14 : f32 to vector<10x1xf32>
    %28 = arith.divf %26, %27 : vector<10x1xf32>
    %29 = vector.broadcast %21 : vector<10x1xf32> to vector<10x128xf32>
    %30 = arith.subf %7, %29 : vector<10x128xf32>
    %cst_15 = arith.constant 9.99999997E-7 : f32
    %31 = vector.broadcast %cst_15 : f32 to vector<10x1xf32>
    %32 = arith.addf %28, %31 : vector<10x1xf32>
    %33 = math.rsqrt %32 : vector<10x1xf32>
    %34 = vector.broadcast %33 : vector<10x1xf32> to vector<10x128xf32>
    %35 = arith.mulf %30, %34 : vector<10x128xf32>
    %36 = vector.broadcast %10 : vector<1x128xf32> to vector<10x128xf32>
    %37 = arith.mulf %35, %36 : vector<10x128xf32>
    %38 = vector.broadcast %11 : vector<1x128xf32> to vector<10x128xf32>
    %39 = arith.addf %37, %38 : vector<10x128xf32>
    %40 = arith.truncf %39 : vector<10x128xf32> to vector<10x128xbf16>
    %c0_16 = arith.constant 0 : index
    %c0_17 = arith.constant 0 : index
    %c0_18 = arith.constant 0 : index
    %41 = vector.load %arg4[%c0_16, %c0_17, %c0_18] : memref<2x128x384xbf16, #tpu.memory_space<vmem>>, vector<1x128x384xbf16>
    %42 = vector.shape_cast %41 : vector<1x128x384xbf16> to vector<128x384xbf16>
    %cst_19 = arith.constant dense<0.000000e+00> : vector<10x384xf32>
    %43 = tpu.matmul %40, %42, %cst_19 {dimension_numbers = #tpu.dot_dimension_numbers<[1], [0], [0], [1], [0, 0, 1, 1], [], []>} : vector<10x128xbf16>, vector<128x384xbf16>, vector<10x384xf32> -> vector<10x384xf32>
    %c0_20 = arith.constant 0 : index
    %c0_21 = arith.constant 0 : index
    %c0_22 = arith.constant 0 : index
    %44 = vector.load %arg5[%c0_20, %c0_21, %c0_22] : memref<2x1x384xf32, #tpu.memory_space<vmem>>, vector<1x1x384xf32>
    %45 = vector.shape_cast %44 : vector<1x1x384xf32> to vector<1x384xf32>
    %46 = vector.broadcast %45 : vector<1x384xf32> to vector<10x384xf32>
    %47 = arith.addf %43, %46 : vector<10x384xf32>
    %48 = vector.extract_strided_slice %47 {offsets = [0, 0], sizes = [5, 384], strides = [1, 1]} : vector<10x384xf32> to vector<5x384xf32>
    %49 = vector.extract_strided_slice %48 {offsets = [0, 0], sizes = [5, 32], strides = [1, 1]} : vector<5x384xf32> to vector<5x32xf32>
    %50 = vector.extract_strided_slice %48 {offsets = [0, 32], sizes = [5, 32], strides = [1, 1]} : vector<5x384xf32> to vector<5x32xf32>
    %51 = vector.extract_strided_slice %48 {offsets = [0, 64], sizes = [5, 32], strides = [1, 1]} : vector<5x384xf32> to vector<5x32xf32>
    %cst_23 = arith.constant dense<0.000000e+00> : vector<5x5xf32>
    %52 = tpu.matmul %49, %50, %cst_23 {dimension_numbers = #tpu.dot_dimension_numbers<[1], [1], [0], [0], [0, 0, 1, 0], [], []>} : vector<5x32xf32>, vector<5x32xf32>, vector<5x5xf32> -> vector<5x5xf32>
    %cst_24 = arith.constant 0.176776692 : f32
    %53 = vector.broadcast %cst_24 : f32 to vector<5x5xf32>
    %54 = arith.mulf %52, %53 : vector<5x5xf32>
    %cst_25 = arith.constant dense<0xFF800000> : vector<5xf32>
    %55 = vector.multi_reduction <maximumf>, %54, %cst_25 [1] : vector<5x5xf32> to vector<5xf32>
    %56 = vector.shape_cast %55 : vector<5xf32> to vector<5x1xf32>
    %57 = vector.broadcast %56 : vector<5x1xf32> to vector<5x5xf32>
    %58 = arith.subf %54, %57 : vector<5x5xf32>
    %59 = math.exp %58 : vector<5x5xf32>
    %cst_26 = arith.constant dense<0.000000e+00> : vector<5xf32>
    %60 = vector.multi_reduction <add>, %59, %cst_26 [1] : vector<5x5xf32> to vector<5xf32>
    %61 = vector.shape_cast %60 : vector<5xf32> to vector<5x1xf32>
    %62 = tpu.reciprocal %61 {approx = true} : vector<5x1xf32> -> vector<5x1xf32>
    %63 = vector.broadcast %62 : vector<5x1xf32> to vector<5x5xf32>
    %64 = arith.mulf %59, %63 : vector<5x5xf32>
    %cst_27 = arith.constant dense<0.000000e+00> : vector<5x32xf32>
    %65 = tpu.matmul %64, %51, %cst_27 {dimension_numbers = #tpu.dot_dimension_numbers<[1], [0], [0], [1], [0, 0, 1, 1], [], []>} : vector<5x5xf32>, vector<5x32xf32>, vector<5x32xf32> -> vector<5x32xf32>
    %66 = vector.extract_strided_slice %48 {offsets = [0, 96], sizes = [5, 32], strides = [1, 1]} : vector<5x384xf32> to vector<5x32xf32>
    %67 = vector.extract_strided_slice %48 {offsets = [0, 128], sizes = [5, 32], strides = [1, 1]} : vector<5x384xf32> to vector<5x32xf32>
    %68 = vector.extract_strided_slice %48 {offsets = [0, 160], sizes = [5, 32], strides = [1, 1]} : vector<5x384xf32> to vector<5x32xf32>
    %cst_28 = arith.constant dense<0.000000e+00> : vector<5x5xf32>
    %69 = tpu.matmul %66, %67, %cst_28 {dimension_numbers = #tpu.dot_dimension_numbers<[1], [1], [0], [0], [0, 0, 1, 0], [], []>} : vector<5x32xf32>, vector<5x32xf32>, vector<5x5xf32> -> vector<5x5xf32>
    %cst_29 = arith.constant 0.176776692 : f32
    %70 = vector.broadcast %cst_29 : f32 to vector<5x5xf32>
    %71 = arith.mulf %69, %70 : vector<5x5xf32>
    %cst_30 = arith.constant dense<0xFF800000> : vector<5xf32>
    %72 = vector.multi_reduction <maximumf>, %71, %cst_30 [1] : vector<5x5xf32> to vector<5xf32>
    %73 = vector.shape_cast %72 : vector<5xf32> to vector<5x1xf32>
    %74 = vector.broadcast %73 : vector<5x1xf32> to vector<5x5xf32>
    %75 = arith.subf %71, %74 : vector<5x5xf32>
    %76 = math.exp %75 : vector<5x5xf32>
    %cst_31 = arith.constant dense<0.000000e+00> : vector<5xf32>
    %77 = vector.multi_reduction <add>, %76, %cst_31 [1] : vector<5x5xf32> to vector<5xf32>
    %78 = vector.shape_cast %77 : vector<5xf32> to vector<5x1xf32>
    %79 = tpu.reciprocal %78 {approx = true} : vector<5x1xf32> -> vector<5x1xf32>
    %80 = vector.broadcast %79 : vector<5x1xf32> to vector<5x5xf32>
    %81 = arith.mulf %76, %80 : vector<5x5xf32>
    %cst_32 = arith.constant dense<0.000000e+00> : vector<5x32xf32>
    %82 = tpu.matmul %81, %68, %cst_32 {dimension_numbers = #tpu.dot_dimension_numbers<[1], [0], [0], [1], [0, 0, 1, 1], [], []>} : vector<5x5xf32>, vector<5x32xf32>, vector<5x32xf32> -> vector<5x32xf32>
    %83 = vector.extract_strided_slice %48 {offsets = [0, 192], sizes = [5, 32], strides = [1, 1]} : vector<5x384xf32> to vector<5x32xf32>
    %84 = vector.extract_strided_slice %48 {offsets = [0, 224], sizes = [5, 32], strides = [1, 1]} : vector<5x384xf32> to vector<5x32xf32>
    %85 = vector.extract_strided_slice %48 {offsets = [0, 256], sizes = [5, 32], strides = [1, 1]} : vector<5x384xf32> to vector<5x32xf32>
    %cst_33 = arith.constant dense<0.000000e+00> : vector<5x5xf32>
    %86 = tpu.matmul %83, %84, %cst_33 {dimension_numbers = #tpu.dot_dimension_numbers<[1], [1], [0], [0], [0, 0, 1, 0], [], []>} : vector<5x32xf32>, vector<5x32xf32>, vector<5x5xf32> -> vector<5x5xf32>
    %cst_34 = arith.constant 0.176776692 : f32
    %87 = vector.broadcast %cst_34 : f32 to vector<5x5xf32>
    %88 = arith.mulf %86, %87 : vector<5x5xf32>
    %cst_35 = arith.constant dense<0xFF800000> : vector<5xf32>
    %89 = vector.multi_reduction <maximumf>, %88, %cst_35 [1] : vector<5x5xf32> to vector<5xf32>
    %90 = vector.shape_cast %89 : vector<5xf32> to vector<5x1xf32>
    %91 = vector.broadcast %90 : vector<5x1xf32> to vector<5x5xf32>
    %92 = arith.subf %88, %91 : vector<5x5xf32>
    %93 = math.exp %92 : vector<5x5xf32>
    %cst_36 = arith.constant dense<0.000000e+00> : vector<5xf32>
    %94 = vector.multi_reduction <add>, %93, %cst_36 [1] : vector<5x5xf32> to vector<5xf32>
    %95 = vector.shape_cast %94 : vector<5xf32> to vector<5x1xf32>
    %96 = tpu.reciprocal %95 {approx = true} : vector<5x1xf32> -> vector<5x1xf32>
    %97 = vector.broadcast %96 : vector<5x1xf32> to vector<5x5xf32>
    %98 = arith.mulf %93, %97 : vector<5x5xf32>
    %cst_37 = arith.constant dense<0.000000e+00> : vector<5x32xf32>
    %99 = tpu.matmul %98, %85, %cst_37 {dimension_numbers = #tpu.dot_dimension_numbers<[1], [0], [0], [1], [0, 0, 1, 1], [], []>} : vector<5x5xf32>, vector<5x32xf32>, vector<5x32xf32> -> vector<5x32xf32>
    %100 = vector.extract_strided_slice %48 {offsets = [0, 288], sizes = [5, 32], strides = [1, 1]} : vector<5x384xf32> to vector<5x32xf32>
    %101 = vector.extract_strided_slice %48 {offsets = [0, 320], sizes = [5, 32], strides = [1, 1]} : vector<5x384xf32> to vector<5x32xf32>
    %102 = vector.extract_strided_slice %48 {offsets = [0, 352], sizes = [5, 32], strides = [1, 1]} : vector<5x384xf32> to vector<5x32xf32>
    %cst_38 = arith.constant dense<0.000000e+00> : vector<5x5xf32>
    %103 = tpu.matmul %100, %101, %cst_38 {dimension_numbers = #tpu.dot_dimension_numbers<[1], [1], [0], [0], [0, 0, 1, 0], [], []>} : vector<5x32xf32>, vector<5x32xf32>, vector<5x5xf32> -> vector<5x5xf32>
    %cst_39 = arith.constant 0.176776692 : f32
    %104 = vector.broadcast %cst_39 : f32 to vector<5x5xf32>
    %105 = arith.mulf %103, %104 : vector<5x5xf32>
    %cst_40 = arith.constant dense<0xFF800000> : vector<5xf32>
    %106 = vector.multi_reduction <maximumf>, %105, %cst_40 [1] : vector<5x5xf32> to vector<5xf32>
    %107 = vector.shape_cast %106 : vector<5xf32> to vector<5x1xf32>
    %108 = vector.broadcast %107 : vector<5x1xf32> to vector<5x5xf32>
    %109 = arith.subf %105, %108 : vector<5x5xf32>
    %110 = math.exp %109 : vector<5x5xf32>
    %cst_41 = arith.constant dense<0.000000e+00> : vector<5xf32>
    %111 = vector.multi_reduction <add>, %110, %cst_41 [1] : vector<5x5xf32> to vector<5xf32>
    %112 = vector.shape_cast %111 : vector<5xf32> to vector<5x1xf32>
    %113 = tpu.reciprocal %112 {approx = true} : vector<5x1xf32> -> vector<5x1xf32>
    %114 = vector.broadcast %113 : vector<5x1xf32> to vector<5x5xf32>
    %115 = arith.mulf %110, %114 : vector<5x5xf32>
    %cst_42 = arith.constant dense<0.000000e+00> : vector<5x32xf32>
    %116 = tpu.matmul %115, %102, %cst_42 {dimension_numbers = #tpu.dot_dimension_numbers<[1], [0], [0], [1], [0, 0, 1, 1], [], []>} : vector<5x5xf32>, vector<5x32xf32>, vector<5x32xf32> -> vector<5x32xf32>
    %117 = tpu.concatenate %65, %82, %99, %116 in 1 : vector<5x32xf32>, vector<5x32xf32>, vector<5x32xf32>, vector<5x32xf32> -> vector<5x128xf32>
    %118 = vector.extract_strided_slice %47 {offsets = [5, 0], sizes = [5, 384], strides = [1, 1]} : vector<10x384xf32> to vector<5x384xf32>
    %119 = vector.extract_strided_slice %118 {offsets = [0, 0], sizes = [5, 32], strides = [1, 1]} : vector<5x384xf32> to vector<5x32xf32>
    %120 = vector.extract_strided_slice %118 {offsets = [0, 32], sizes = [5, 32], strides = [1, 1]} : vector<5x384xf32> to vector<5x32xf32>
    %121 = vector.extract_strided_slice %118 {offsets = [0, 64], sizes = [5, 32], strides = [1, 1]} : vector<5x384xf32> to vector<5x32xf32>
    %cst_43 = arith.constant dense<0.000000e+00> : vector<5x5xf32>
    %122 = tpu.matmul %119, %120, %cst_43 {dimension_numbers = #tpu.dot_dimension_numbers<[1], [1], [0], [0], [0, 0, 1, 0], [], []>} : vector<5x32xf32>, vector<5x32xf32>, vector<5x5xf32> -> vector<5x5xf32>
    %cst_44 = arith.constant 0.176776692 : f32
    %123 = vector.broadcast %cst_44 : f32 to vector<5x5xf32>
    %124 = arith.mulf %122, %123 : vector<5x5xf32>
    %cst_45 = arith.constant dense<0xFF800000> : vector<5xf32>
    %125 = vector.multi_reduction <maximumf>, %124, %cst_45 [1] : vector<5x5xf32> to vector<5xf32>
    %126 = vector.shape_cast %125 : vector<5xf32> to vector<5x1xf32>
    %127 = vector.broadcast %126 : vector<5x1xf32> to vector<5x5xf32>
    %128 = arith.subf %124, %127 : vector<5x5xf32>
    %129 = math.exp %128 : vector<5x5xf32>
    %cst_46 = arith.constant dense<0.000000e+00> : vector<5xf32>
    %130 = vector.multi_reduction <add>, %129, %cst_46 [1] : vector<5x5xf32> to vector<5xf32>
    %131 = vector.shape_cast %130 : vector<5xf32> to vector<5x1xf32>
    %132 = tpu.reciprocal %131 {approx = true} : vector<5x1xf32> -> vector<5x1xf32>
    %133 = vector.broadcast %132 : vector<5x1xf32> to vector<5x5xf32>
    %134 = arith.mulf %129, %133 : vector<5x5xf32>
    %cst_47 = arith.constant dense<0.000000e+00> : vector<5x32xf32>
    %135 = tpu.matmul %134, %121, %cst_47 {dimension_numbers = #tpu.dot_dimension_numbers<[1], [0], [0], [1], [0, 0, 1, 1], [], []>} : vector<5x5xf32>, vector<5x32xf32>, vector<5x32xf32> -> vector<5x32xf32>
    %136 = vector.extract_strided_slice %118 {offsets = [0, 96], sizes = [5, 32], strides = [1, 1]} : vector<5x384xf32> to vector<5x32xf32>
    %137 = vector.extract_strided_slice %118 {offsets = [0, 128], sizes = [5, 32], strides = [1, 1]} : vector<5x384xf32> to vector<5x32xf32>
    %138 = vector.extract_strided_slice %118 {offsets = [0, 160], sizes = [5, 32], strides = [1, 1]} : vector<5x384xf32> to vector<5x32xf32>
    %cst_48 = arith.constant dense<0.000000e+00> : vector<5x5xf32>
    %139 = tpu.matmul %136, %137, %cst_48 {dimension_numbers = #tpu.dot_dimension_numbers<[1], [1], [0], [0], [0, 0, 1, 0], [], []>} : vector<5x32xf32>, vector<5x32xf32>, vector<5x5xf32> -> vector<5x5xf32>
    %cst_49 = arith.constant 0.176776692 : f32
    %140 = vector.broadcast %cst_49 : f32 to vector<5x5xf32>
    %141 = arith.mulf %139, %140 : vector<5x5xf32>
    %cst_50 = arith.constant dense<0xFF800000> : vector<5xf32>
    %142 = vector.multi_reduction <maximumf>, %141, %cst_50 [1] : vector<5x5xf32> to vector<5xf32>
    %143 = vector.shape_cast %142 : vector<5xf32> to vector<5x1xf32>
    %144 = vector.broadcast %143 : vector<5x1xf32> to vector<5x5xf32>
    %145 = arith.subf %141, %144 : vector<5x5xf32>
    %146 = math.exp %145 : vector<5x5xf32>
    %cst_51 = arith.constant dense<0.000000e+00> : vector<5xf32>
    %147 = vector.multi_reduction <add>, %146, %cst_51 [1] : vector<5x5xf32> to vector<5xf32>
    %148 = vector.shape_cast %147 : vector<5xf32> to vector<5x1xf32>
    %149 = tpu.reciprocal %148 {approx = true} : vector<5x1xf32> -> vector<5x1xf32>
    %150 = vector.broadcast %149 : vector<5x1xf32> to vector<5x5xf32>
    %151 = arith.mulf %146, %150 : vector<5x5xf32>
    %cst_52 = arith.constant dense<0.000000e+00> : vector<5x32xf32>
    %152 = tpu.matmul %151, %138, %cst_52 {dimension_numbers = #tpu.dot_dimension_numbers<[1], [0], [0], [1], [0, 0, 1, 1], [], []>} : vector<5x5xf32>, vector<5x32xf32>, vector<5x32xf32> -> vector<5x32xf32>
    %153 = vector.extract_strided_slice %118 {offsets = [0, 192], sizes = [5, 32], strides = [1, 1]} : vector<5x384xf32> to vector<5x32xf32>
    %154 = vector.extract_strided_slice %118 {offsets = [0, 224], sizes = [5, 32], strides = [1, 1]} : vector<5x384xf32> to vector<5x32xf32>
    %155 = vector.extract_strided_slice %118 {offsets = [0, 256], sizes = [5, 32], strides = [1, 1]} : vector<5x384xf32> to vector<5x32xf32>
    %cst_53 = arith.constant dense<0.000000e+00> : vector<5x5xf32>
    %156 = tpu.matmul %153, %154, %cst_53 {dimension_numbers = #tpu.dot_dimension_numbers<[1], [1], [0], [0], [0, 0, 1, 0], [], []>} : vector<5x32xf32>, vector<5x32xf32>, vector<5x5xf32> -> vector<5x5xf32>
    %cst_54 = arith.constant 0.176776692 : f32
    %157 = vector.broadcast %cst_54 : f32 to vector<5x5xf32>
    %158 = arith.mulf %156, %157 : vector<5x5xf32>
    %cst_55 = arith.constant dense<0xFF800000> : vector<5xf32>
    %159 = vector.multi_reduction <maximumf>, %158, %cst_55 [1] : vector<5x5xf32> to vector<5xf32>
    %160 = vector.shape_cast %159 : vector<5xf32> to vector<5x1xf32>
    %161 = vector.broadcast %160 : vector<5x1xf32> to vector<5x5xf32>
    %162 = arith.subf %158, %161 : vector<5x5xf32>
    %163 = math.exp %162 : vector<5x5xf32>
    %cst_56 = arith.constant dense<0.000000e+00> : vector<5xf32>
    %164 = vector.multi_reduction <add>, %163, %cst_56 [1] : vector<5x5xf32> to vector<5xf32>
    %165 = vector.shape_cast %164 : vector<5xf32> to vector<5x1xf32>
    %166 = tpu.reciprocal %165 {approx = true} : vector<5x1xf32> -> vector<5x1xf32>
    %167 = vector.broadcast %166 : vector<5x1xf32> to vector<5x5xf32>
    %168 = arith.mulf %163, %167 : vector<5x5xf32>
    %cst_57 = arith.constant dense<0.000000e+00> : vector<5x32xf32>
    %169 = tpu.matmul %168, %155, %cst_57 {dimension_numbers = #tpu.dot_dimension_numbers<[1], [0], [0], [1], [0, 0, 1, 1], [], []>} : vector<5x5xf32>, vector<5x32xf32>, vector<5x32xf32> -> vector<5x32xf32>
    %170 = vector.extract_strided_slice %118 {offsets = [0, 288], sizes = [5, 32], strides = [1, 1]} : vector<5x384xf32> to vector<5x32xf32>
    %171 = vector.extract_strided_slice %118 {offsets = [0, 320], sizes = [5, 32], strides = [1, 1]} : vector<5x384xf32> to vector<5x32xf32>
    %172 = vector.extract_strided_slice %118 {offsets = [0, 352], sizes = [5, 32], strides = [1, 1]} : vector<5x384xf32> to vector<5x32xf32>
    %cst_58 = arith.constant dense<0.000000e+00> : vector<5x5xf32>
    %173 = tpu.matmul %170, %171, %cst_58 {dimension_numbers = #tpu.dot_dimension_numbers<[1], [1], [0], [0], [0, 0, 1, 0], [], []>} : vector<5x32xf32>, vector<5x32xf32>, vector<5x5xf32> -> vector<5x5xf32>
    %cst_59 = arith.constant 0.176776692 : f32
    %174 = vector.broadcast %cst_59 : f32 to vector<5x5xf32>
    %175 = arith.mulf %173, %174 : vector<5x5xf32>
    %cst_60 = arith.constant dense<0xFF800000> : vector<5xf32>
    %176 = vector.multi_reduction <maximumf>, %175, %cst_60 [1] : vector<5x5xf32> to vector<5xf32>
    %177 = vector.shape_cast %176 : vector<5xf32> to vector<5x1xf32>
    %178 = vector.broadcast %177 : vector<5x1xf32> to vector<5x5xf32>
    %179 = arith.subf %175, %178 : vector<5x5xf32>
    %180 = math.exp %179 : vector<5x5xf32>
    %cst_61 = arith.constant dense<0.000000e+00> : vector<5xf32>
    %181 = vector.multi_reduction <add>, %180, %cst_61 [1] : vector<5x5xf32> to vector<5xf32>
    %182 = vector.shape_cast %181 : vector<5xf32> to vector<5x1xf32>
    %183 = tpu.reciprocal %182 {approx = true} : vector<5x1xf32> -> vector<5x1xf32>
    %184 = vector.broadcast %183 : vector<5x1xf32> to vector<5x5xf32>
    %185 = arith.mulf %180, %184 : vector<5x5xf32>
    %cst_62 = arith.constant dense<0.000000e+00> : vector<5x32xf32>
    %186 = tpu.matmul %185, %172, %cst_62 {dimension_numbers = #tpu.dot_dimension_numbers<[1], [0], [0], [1], [0, 0, 1, 1], [], []>} : vector<5x5xf32>, vector<5x32xf32>, vector<5x32xf32> -> vector<5x32xf32>
    %187 = tpu.concatenate %135, %152, %169, %186 in 1 : vector<5x32xf32>, vector<5x32xf32>, vector<5x32xf32>, vector<5x32xf32> -> vector<5x128xf32>
    %188 = tpu.concatenate %117, %187 in 0 : vector<5x128xf32>, vector<5x128xf32> -> vector<10x128xf32>
    %189 = arith.truncf %188 : vector<10x128xf32> to vector<10x128xbf16>
    %c0_63 = arith.constant 0 : index
    %c0_64 = arith.constant 0 : index
    %c0_65 = arith.constant 0 : index
    %190 = vector.load %arg6[%c0_63, %c0_64, %c0_65] : memref<2x128x128xbf16, #tpu.memory_space<vmem>>, vector<1x128x128xbf16>
    %191 = vector.shape_cast %190 : vector<1x128x128xbf16> to vector<128x128xbf16>
    %cst_66 = arith.constant dense<0.000000e+00> : vector<10x128xf32>
    %192 = tpu.matmul %189, %191, %cst_66 {dimension_numbers = #tpu.dot_dimension_numbers<[1], [0], [0], [1], [0, 0, 1, 1], [], []>} : vector<10x128xbf16>, vector<128x128xbf16>, vector<10x128xf32> -> vector<10x128xf32>
    %193 = vector.broadcast %12 : vector<1x128xf32> to vector<10x128xf32>
    %194 = arith.addf %192, %193 : vector<10x128xf32>
    %195 = vector.broadcast %13 : vector<1x128xf32> to vector<10x128xf32>
    %196 = arith.mulf %195, %194 : vector<10x128xf32>
    %197 = arith.addf %7, %196 : vector<10x128xf32>
    %cst_67 = arith.constant dense<0.000000e+00> : vector<10xf32>
    %198 = vector.multi_reduction <add>, %197, %cst_67 [1] : vector<10x128xf32> to vector<10xf32>
    %199 = vector.shape_cast %198 : vector<10xf32> to vector<10x1xf32>
    %cst_68 = arith.constant 1.280000e+02 : f32
    %200 = vector.broadcast %cst_68 : f32 to vector<10x1xf32>
    %201 = arith.divf %199, %200 : vector<10x1xf32>
    %202 = vector.broadcast %201 : vector<10x1xf32> to vector<10x128xf32>
    %203 = arith.subf %197, %202 : vector<10x128xf32>
    %204 = arith.mulf %203, %203 : vector<10x128xf32>
    %cst_69 = arith.constant dense<0.000000e+00> : vector<10xf32>
    %205 = vector.multi_reduction <add>, %204, %cst_69 [1] : vector<10x128xf32> to vector<10xf32>
    %206 = vector.shape_cast %205 : vector<10xf32> to vector<10x1xf32>
    %cst_70 = arith.constant 1.280000e+02 : f32
    %207 = vector.broadcast %cst_70 : f32 to vector<10x1xf32>
    %208 = arith.divf %206, %207 : vector<10x1xf32>
    %209 = vector.broadcast %201 : vector<10x1xf32> to vector<10x128xf32>
    %210 = arith.subf %197, %209 : vector<10x128xf32>
    %cst_71 = arith.constant 9.99999997E-7 : f32
    %211 = vector.broadcast %cst_71 : f32 to vector<10x1xf32>
    %212 = arith.addf %208, %211 : vector<10x1xf32>
    %213 = math.rsqrt %212 : vector<10x1xf32>
    %214 = vector.broadcast %213 : vector<10x1xf32> to vector<10x128xf32>
    %215 = arith.mulf %210, %214 : vector<10x128xf32>
    %216 = vector.broadcast %14 : vector<1x128xf32> to vector<10x128xf32>
    %217 = arith.mulf %215, %216 : vector<10x128xf32>
    %218 = vector.broadcast %15 : vector<1x128xf32> to vector<10x128xf32>
    %219 = arith.addf %217, %218 : vector<10x128xf32>
    %220 = arith.truncf %219 : vector<10x128xf32> to vector<10x128xbf16>
    %c0_72 = arith.constant 0 : index
    %c0_73 = arith.constant 0 : index
    %c0_74 = arith.constant 0 : index
    %221 = vector.load %arg7[%c0_72, %c0_73, %c0_74] : memref<2x128x512xbf16, #tpu.memory_space<vmem>>, vector<1x128x512xbf16>
    %222 = vector.shape_cast %221 : vector<1x128x512xbf16> to vector<128x512xbf16>
    %cst_75 = arith.constant dense<0.000000e+00> : vector<10x512xf32>
    %223 = tpu.matmul %220, %222, %cst_75 {dimension_numbers = #tpu.dot_dimension_numbers<[1], [0], [0], [1], [0, 0, 1, 1], [], []>} : vector<10x128xbf16>, vector<128x512xbf16>, vector<10x512xf32> -> vector<10x512xf32>
    %c0_76 = arith.constant 0 : index
    %c0_77 = arith.constant 0 : index
    %c0_78 = arith.constant 0 : index
    %224 = vector.load %arg8[%c0_76, %c0_77, %c0_78] : memref<2x1x512xf32, #tpu.memory_space<vmem>>, vector<1x1x512xf32>
    %225 = vector.shape_cast %224 : vector<1x1x512xf32> to vector<1x512xf32>
    %226 = vector.broadcast %225 : vector<1x512xf32> to vector<10x512xf32>
    %227 = arith.addf %223, %226 : vector<10x512xf32>
    %228 = arith.mulf %227, %227 : vector<10x512xf32>
    %229 = arith.mulf %227, %228 : vector<10x512xf32>
    %cst_79 = arith.constant 4.471500e-02 : f32
    %230 = vector.broadcast %cst_79 : f32 to vector<10x512xf32>
    %231 = arith.mulf %230, %229 : vector<10x512xf32>
    %232 = arith.addf %227, %231 : vector<10x512xf32>
    %cst_80 = arith.constant 0.797884583 : f32
    %233 = vector.broadcast %cst_80 : f32 to vector<10x512xf32>
    %234 = arith.mulf %233, %232 : vector<10x512xf32>
    %235 = math.tanh %234 : vector<10x512xf32>
    %cst_81 = arith.constant 1.000000e+00 : f32
    %236 = vector.broadcast %cst_81 : f32 to vector<10x512xf32>
    %237 = arith.addf %236, %235 : vector<10x512xf32>
    %cst_82 = arith.constant 5.000000e-01 : f32
    %238 = vector.broadcast %cst_82 : f32 to vector<10x512xf32>
    %239 = arith.mulf %238, %237 : vector<10x512xf32>
    %240 = arith.mulf %227, %239 : vector<10x512xf32>
    %241 = arith.truncf %240 : vector<10x512xf32> to vector<10x512xbf16>
    %c0_83 = arith.constant 0 : index
    %c0_84 = arith.constant 0 : index
    %c0_85 = arith.constant 0 : index
    %242 = vector.load %arg9[%c0_83, %c0_84, %c0_85] : memref<2x512x128xbf16, #tpu.memory_space<vmem>>, vector<1x512x128xbf16>
    %243 = vector.shape_cast %242 : vector<1x512x128xbf16> to vector<512x128xbf16>
    %cst_86 = arith.constant dense<0.000000e+00> : vector<10x128xf32>
    %244 = tpu.matmul %241, %243, %cst_86 {dimension_numbers = #tpu.dot_dimension_numbers<[1], [0], [0], [1], [0, 0, 1, 1], [], []>} : vector<10x512xbf16>, vector<512x128xbf16>, vector<10x128xf32> -> vector<10x128xf32>
    %245 = vector.broadcast %16 : vector<1x128xf32> to vector<10x128xf32>
    %246 = arith.addf %244, %245 : vector<10x128xf32>
    %247 = vector.broadcast %17 : vector<1x128xf32> to vector<10x128xf32>
    %248 = arith.mulf %247, %246 : vector<10x128xf32>
    %249 = arith.addf %197, %248 : vector<10x128xf32>
    %c1 = arith.constant 1 : index
    %c0_87 = arith.constant 0 : index
    %c0_88 = arith.constant 0 : index
    %250 = vector.load %arg10[%c1, %c0_87, %c0_88] : memref<2x8x128xf32, #tpu.memory_space<vmem>>, vector<1x8x128xf32>
    %251 = vector.shape_cast %250 : vector<1x8x128xf32> to vector<8x128xf32>
    %252 = vector.extract_strided_slice %251 {offsets = [0, 0], sizes = [1, 128], strides = [1, 1]} : vector<8x128xf32> to vector<1x128xf32>
    %253 = vector.extract_strided_slice %251 {offsets = [1, 0], sizes = [1, 128], strides = [1, 1]} : vector<8x128xf32> to vector<1x128xf32>
    %254 = vector.extract_strided_slice %251 {offsets = [2, 0], sizes = [1, 128], strides = [1, 1]} : vector<8x128xf32> to vector<1x128xf32>
    %255 = vector.extract_strided_slice %251 {offsets = [3, 0], sizes = [1, 128], strides = [1, 1]} : vector<8x128xf32> to vector<1x128xf32>
    %256 = vector.extract_strided_slice %251 {offsets = [4, 0], sizes = [1, 128], strides = [1, 1]} : vector<8x128xf32> to vector<1x128xf32>
    %257 = vector.extract_strided_slice %251 {offsets = [5, 0], sizes = [1, 128], strides = [1, 1]} : vector<8x128xf32> to vector<1x128xf32>
    %258 = vector.extract_strided_slice %251 {offsets = [6, 0], sizes = [1, 128], strides = [1, 1]} : vector<8x128xf32> to vector<1x128xf32>
    %259 = vector.extract_strided_slice %251 {offsets = [7, 0], sizes = [1, 128], strides = [1, 1]} : vector<8x128xf32> to vector<1x128xf32>
    %cst_89 = arith.constant dense<0.000000e+00> : vector<10xf32>
    %260 = vector.multi_reduction <add>, %249, %cst_89 [1] : vector<10x128xf32> to vector<10xf32>
    %261 = vector.shape_cast %260 : vector<10xf32> to vector<10x1xf32>
    %cst_90 = arith.constant 1.280000e+02 : f32
    %262 = vector.broadcast %cst_90 : f32 to vector<10x1xf32>
    %263 = arith.divf %261, %262 : vector<10x1xf32>
    %264 = vector.broadcast %263 : vector<10x1xf32> to vector<10x128xf32>
    %265 = arith.subf %249, %264 : vector<10x128xf32>
    %266 = arith.mulf %265, %265 : vector<10x128xf32>
    %cst_91 = arith.constant dense<0.000000e+00> : vector<10xf32>
    %267 = vector.multi_reduction <add>, %266, %cst_91 [1] : vector<10x128xf32> to vector<10xf32>
    %268 = vector.shape_cast %267 : vector<10xf32> to vector<10x1xf32>
    %cst_92 = arith.constant 1.280000e+02 : f32
    %269 = vector.broadcast %cst_92 : f32 to vector<10x1xf32>
    %270 = arith.divf %268, %269 : vector<10x1xf32>
    %271 = vector.broadcast %263 : vector<10x1xf32> to vector<10x128xf32>
    %272 = arith.subf %249, %271 : vector<10x128xf32>
    %cst_93 = arith.constant 9.99999997E-7 : f32
    %273 = vector.broadcast %cst_93 : f32 to vector<10x1xf32>
    %274 = arith.addf %270, %273 : vector<10x1xf32>
    %275 = math.rsqrt %274 : vector<10x1xf32>
    %276 = vector.broadcast %275 : vector<10x1xf32> to vector<10x128xf32>
    %277 = arith.mulf %272, %276 : vector<10x128xf32>
    %278 = vector.broadcast %252 : vector<1x128xf32> to vector<10x128xf32>
    %279 = arith.mulf %277, %278 : vector<10x128xf32>
    %280 = vector.broadcast %253 : vector<1x128xf32> to vector<10x128xf32>
    %281 = arith.addf %279, %280 : vector<10x128xf32>
    %282 = arith.truncf %281 : vector<10x128xf32> to vector<10x128xbf16>
    %c1_94 = arith.constant 1 : index
    %c0_95 = arith.constant 0 : index
    %c0_96 = arith.constant 0 : index
    %283 = vector.load %arg4[%c1_94, %c0_95, %c0_96] : memref<2x128x384xbf16, #tpu.memory_space<vmem>>, vector<1x128x384xbf16>
    %284 = vector.shape_cast %283 : vector<1x128x384xbf16> to vector<128x384xbf16>
    %cst_97 = arith.constant dense<0.000000e+00> : vector<10x384xf32>
    %285 = tpu.matmul %282, %284, %cst_97 {dimension_numbers = #tpu.dot_dimension_numbers<[1], [0], [0], [1], [0, 0, 1, 1], [], []>} : vector<10x128xbf16>, vector<128x384xbf16>, vector<10x384xf32> -> vector<10x384xf32>
    %c1_98 = arith.constant 1 : index
    %c0_99 = arith.constant 0 : index
    %c0_100 = arith.constant 0 : index
    %286 = vector.load %arg5[%c1_98, %c0_99, %c0_100] : memref<2x1x384xf32, #tpu.memory_space<vmem>>, vector<1x1x384xf32>
    %287 = vector.shape_cast %286 : vector<1x1x384xf32> to vector<1x384xf32>
    %288 = vector.broadcast %287 : vector<1x384xf32> to vector<10x384xf32>
    %289 = arith.addf %285, %288 : vector<10x384xf32>
    %290 = vector.extract_strided_slice %289 {offsets = [0, 0], sizes = [5, 384], strides = [1, 1]} : vector<10x384xf32> to vector<5x384xf32>
    %291 = vector.extract_strided_slice %290 {offsets = [0, 0], sizes = [5, 32], strides = [1, 1]} : vector<5x384xf32> to vector<5x32xf32>
    %292 = vector.extract_strided_slice %290 {offsets = [0, 32], sizes = [5, 32], strides = [1, 1]} : vector<5x384xf32> to vector<5x32xf32>
    %293 = vector.extract_strided_slice %290 {offsets = [0, 64], sizes = [5, 32], strides = [1, 1]} : vector<5x384xf32> to vector<5x32xf32>
    %cst_101 = arith.constant dense<0.000000e+00> : vector<5x5xf32>
    %294 = tpu.matmul %291, %292, %cst_101 {dimension_numbers = #tpu.dot_dimension_numbers<[1], [1], [0], [0], [0, 0, 1, 0], [], []>} : vector<5x32xf32>, vector<5x32xf32>, vector<5x5xf32> -> vector<5x5xf32>
    %cst_102 = arith.constant 0.176776692 : f32
    %295 = vector.broadcast %cst_102 : f32 to vector<5x5xf32>
    %296 = arith.mulf %294, %295 : vector<5x5xf32>
    %cst_103 = arith.constant dense<0xFF800000> : vector<5xf32>
    %297 = vector.multi_reduction <maximumf>, %296, %cst_103 [1] : vector<5x5xf32> to vector<5xf32>
    %298 = vector.shape_cast %297 : vector<5xf32> to vector<5x1xf32>
    %299 = vector.broadcast %298 : vector<5x1xf32> to vector<5x5xf32>
    %300 = arith.subf %296, %299 : vector<5x5xf32>
    %301 = math.exp %300 : vector<5x5xf32>
    %cst_104 = arith.constant dense<0.000000e+00> : vector<5xf32>
    %302 = vector.multi_reduction <add>, %301, %cst_104 [1] : vector<5x5xf32> to vector<5xf32>
    %303 = vector.shape_cast %302 : vector<5xf32> to vector<5x1xf32>
    %304 = tpu.reciprocal %303 {approx = true} : vector<5x1xf32> -> vector<5x1xf32>
    %305 = vector.broadcast %304 : vector<5x1xf32> to vector<5x5xf32>
    %306 = arith.mulf %301, %305 : vector<5x5xf32>
    %cst_105 = arith.constant dense<0.000000e+00> : vector<5x32xf32>
    %307 = tpu.matmul %306, %293, %cst_105 {dimension_numbers = #tpu.dot_dimension_numbers<[1], [0], [0], [1], [0, 0, 1, 1], [], []>} : vector<5x5xf32>, vector<5x32xf32>, vector<5x32xf32> -> vector<5x32xf32>
    %308 = vector.extract_strided_slice %290 {offsets = [0, 96], sizes = [5, 32], strides = [1, 1]} : vector<5x384xf32> to vector<5x32xf32>
    %309 = vector.extract_strided_slice %290 {offsets = [0, 128], sizes = [5, 32], strides = [1, 1]} : vector<5x384xf32> to vector<5x32xf32>
    %310 = vector.extract_strided_slice %290 {offsets = [0, 160], sizes = [5, 32], strides = [1, 1]} : vector<5x384xf32> to vector<5x32xf32>
    %cst_106 = arith.constant dense<0.000000e+00> : vector<5x5xf32>
    %311 = tpu.matmul %308, %309, %cst_106 {dimension_numbers = #tpu.dot_dimension_numbers<[1], [1], [0], [0], [0, 0, 1, 0], [], []>} : vector<5x32xf32>, vector<5x32xf32>, vector<5x5xf32> -> vector<5x5xf32>
    %cst_107 = arith.constant 0.176776692 : f32
    %312 = vector.broadcast %cst_107 : f32 to vector<5x5xf32>
    %313 = arith.mulf %311, %312 : vector<5x5xf32>
    %cst_108 = arith.constant dense<0xFF800000> : vector<5xf32>
    %314 = vector.multi_reduction <maximumf>, %313, %cst_108 [1] : vector<5x5xf32> to vector<5xf32>
    %315 = vector.shape_cast %314 : vector<5xf32> to vector<5x1xf32>
    %316 = vector.broadcast %315 : vector<5x1xf32> to vector<5x5xf32>
    %317 = arith.subf %313, %316 : vector<5x5xf32>
    %318 = math.exp %317 : vector<5x5xf32>
    %cst_109 = arith.constant dense<0.000000e+00> : vector<5xf32>
    %319 = vector.multi_reduction <add>, %318, %cst_109 [1] : vector<5x5xf32> to vector<5xf32>
    %320 = vector.shape_cast %319 : vector<5xf32> to vector<5x1xf32>
    %321 = tpu.reciprocal %320 {approx = true} : vector<5x1xf32> -> vector<5x1xf32>
    %322 = vector.broadcast %321 : vector<5x1xf32> to vector<5x5xf32>
    %323 = arith.mulf %318, %322 : vector<5x5xf32>
    %cst_110 = arith.constant dense<0.000000e+00> : vector<5x32xf32>
    %324 = tpu.matmul %323, %310, %cst_110 {dimension_numbers = #tpu.dot_dimension_numbers<[1], [0], [0], [1], [0, 0, 1, 1], [], []>} : vector<5x5xf32>, vector<5x32xf32>, vector<5x32xf32> -> vector<5x32xf32>
    %325 = vector.extract_strided_slice %290 {offsets = [0, 192], sizes = [5, 32], strides = [1, 1]} : vector<5x384xf32> to vector<5x32xf32>
    %326 = vector.extract_strided_slice %290 {offsets = [0, 224], sizes = [5, 32], strides = [1, 1]} : vector<5x384xf32> to vector<5x32xf32>
    %327 = vector.extract_strided_slice %290 {offsets = [0, 256], sizes = [5, 32], strides = [1, 1]} : vector<5x384xf32> to vector<5x32xf32>
    %cst_111 = arith.constant dense<0.000000e+00> : vector<5x5xf32>
    %328 = tpu.matmul %325, %326, %cst_111 {dimension_numbers = #tpu.dot_dimension_numbers<[1], [1], [0], [0], [0, 0, 1, 0], [], []>} : vector<5x32xf32>, vector<5x32xf32>, vector<5x5xf32> -> vector<5x5xf32>
    %cst_112 = arith.constant 0.176776692 : f32
    %329 = vector.broadcast %cst_112 : f32 to vector<5x5xf32>
    %330 = arith.mulf %328, %329 : vector<5x5xf32>
    %cst_113 = arith.constant dense<0xFF800000> : vector<5xf32>
    %331 = vector.multi_reduction <maximumf>, %330, %cst_113 [1] : vector<5x5xf32> to vector<5xf32>
    %332 = vector.shape_cast %331 : vector<5xf32> to vector<5x1xf32>
    %333 = vector.broadcast %332 : vector<5x1xf32> to vector<5x5xf32>
    %334 = arith.subf %330, %333 : vector<5x5xf32>
    %335 = math.exp %334 : vector<5x5xf32>
    %cst_114 = arith.constant dense<0.000000e+00> : vector<5xf32>
    %336 = vector.multi_reduction <add>, %335, %cst_114 [1] : vector<5x5xf32> to vector<5xf32>
    %337 = vector.shape_cast %336 : vector<5xf32> to vector<5x1xf32>
    %338 = tpu.reciprocal %337 {approx = true} : vector<5x1xf32> -> vector<5x1xf32>
    %339 = vector.broadcast %338 : vector<5x1xf32> to vector<5x5xf32>
    %340 = arith.mulf %335, %339 : vector<5x5xf32>
    %cst_115 = arith.constant dense<0.000000e+00> : vector<5x32xf32>
    %341 = tpu.matmul %340, %327, %cst_115 {dimension_numbers = #tpu.dot_dimension_numbers<[1], [0], [0], [1], [0, 0, 1, 1], [], []>} : vector<5x5xf32>, vector<5x32xf32>, vector<5x32xf32> -> vector<5x32xf32>
    %342 = vector.extract_strided_slice %290 {offsets = [0, 288], sizes = [5, 32], strides = [1, 1]} : vector<5x384xf32> to vector<5x32xf32>
    %343 = vector.extract_strided_slice %290 {offsets = [0, 320], sizes = [5, 32], strides = [1, 1]} : vector<5x384xf32> to vector<5x32xf32>
    %344 = vector.extract_strided_slice %290 {offsets = [0, 352], sizes = [5, 32], strides = [1, 1]} : vector<5x384xf32> to vector<5x32xf32>
    %cst_116 = arith.constant dense<0.000000e+00> : vector<5x5xf32>
    %345 = tpu.matmul %342, %343, %cst_116 {dimension_numbers = #tpu.dot_dimension_numbers<[1], [1], [0], [0], [0, 0, 1, 0], [], []>} : vector<5x32xf32>, vector<5x32xf32>, vector<5x5xf32> -> vector<5x5xf32>
    %cst_117 = arith.constant 0.176776692 : f32
    %346 = vector.broadcast %cst_117 : f32 to vector<5x5xf32>
    %347 = arith.mulf %345, %346 : vector<5x5xf32>
    %cst_118 = arith.constant dense<0xFF800000> : vector<5xf32>
    %348 = vector.multi_reduction <maximumf>, %347, %cst_118 [1] : vector<5x5xf32> to vector<5xf32>
    %349 = vector.shape_cast %348 : vector<5xf32> to vector<5x1xf32>
    %350 = vector.broadcast %349 : vector<5x1xf32> to vector<5x5xf32>
    %351 = arith.subf %347, %350 : vector<5x5xf32>
    %352 = math.exp %351 : vector<5x5xf32>
    %cst_119 = arith.constant dense<0.000000e+00> : vector<5xf32>
    %353 = vector.multi_reduction <add>, %352, %cst_119 [1] : vector<5x5xf32> to vector<5xf32>
    %354 = vector.shape_cast %353 : vector<5xf32> to vector<5x1xf32>
    %355 = tpu.reciprocal %354 {approx = true} : vector<5x1xf32> -> vector<5x1xf32>
    %356 = vector.broadcast %355 : vector<5x1xf32> to vector<5x5xf32>
    %357 = arith.mulf %352, %356 : vector<5x5xf32>
    %cst_120 = arith.constant dense<0.000000e+00> : vector<5x32xf32>
    %358 = tpu.matmul %357, %344, %cst_120 {dimension_numbers = #tpu.dot_dimension_numbers<[1], [0], [0], [1], [0, 0, 1, 1], [], []>} : vector<5x5xf32>, vector<5x32xf32>, vector<5x32xf32> -> vector<5x32xf32>
    %359 = tpu.concatenate %307, %324, %341, %358 in 1 : vector<5x32xf32>, vector<5x32xf32>, vector<5x32xf32>, vector<5x32xf32> -> vector<5x128xf32>
    %360 = vector.extract_strided_slice %289 {offsets = [5, 0], sizes = [5, 384], strides = [1, 1]} : vector<10x384xf32> to vector<5x384xf32>
    %361 = vector.extract_strided_slice %360 {offsets = [0, 0], sizes = [5, 32], strides = [1, 1]} : vector<5x384xf32> to vector<5x32xf32>
    %362 = vector.extract_strided_slice %360 {offsets = [0, 32], sizes = [5, 32], strides = [1, 1]} : vector<5x384xf32> to vector<5x32xf32>
    %363 = vector.extract_strided_slice %360 {offsets = [0, 64], sizes = [5, 32], strides = [1, 1]} : vector<5x384xf32> to vector<5x32xf32>
    %cst_121 = arith.constant dense<0.000000e+00> : vector<5x5xf32>
    %364 = tpu.matmul %361, %362, %cst_121 {dimension_numbers = #tpu.dot_dimension_numbers<[1], [1], [0], [0], [0, 0, 1, 0], [], []>} : vector<5x32xf32>, vector<5x32xf32>, vector<5x5xf32> -> vector<5x5xf32>
    %cst_122 = arith.constant 0.176776692 : f32
    %365 = vector.broadcast %cst_122 : f32 to vector<5x5xf32>
    %366 = arith.mulf %364, %365 : vector<5x5xf32>
    %cst_123 = arith.constant dense<0xFF800000> : vector<5xf32>
    %367 = vector.multi_reduction <maximumf>, %366, %cst_123 [1] : vector<5x5xf32> to vector<5xf32>
    %368 = vector.shape_cast %367 : vector<5xf32> to vector<5x1xf32>
    %369 = vector.broadcast %368 : vector<5x1xf32> to vector<5x5xf32>
    %370 = arith.subf %366, %369 : vector<5x5xf32>
    %371 = math.exp %370 : vector<5x5xf32>
    %cst_124 = arith.constant dense<0.000000e+00> : vector<5xf32>
    %372 = vector.multi_reduction <add>, %371, %cst_124 [1] : vector<5x5xf32> to vector<5xf32>
    %373 = vector.shape_cast %372 : vector<5xf32> to vector<5x1xf32>
    %374 = tpu.reciprocal %373 {approx = true} : vector<5x1xf32> -> vector<5x1xf32>
    %375 = vector.broadcast %374 : vector<5x1xf32> to vector<5x5xf32>
    %376 = arith.mulf %371, %375 : vector<5x5xf32>
    %cst_125 = arith.constant dense<0.000000e+00> : vector<5x32xf32>
    %377 = tpu.matmul %376, %363, %cst_125 {dimension_numbers = #tpu.dot_dimension_numbers<[1], [0], [0], [1], [0, 0, 1, 1], [], []>} : vector<5x5xf32>, vector<5x32xf32>, vector<5x32xf32> -> vector<5x32xf32>
    %378 = vector.extract_strided_slice %360 {offsets = [0, 96], sizes = [5, 32], strides = [1, 1]} : vector<5x384xf32> to vector<5x32xf32>
    %379 = vector.extract_strided_slice %360 {offsets = [0, 128], sizes = [5, 32], strides = [1, 1]} : vector<5x384xf32> to vector<5x32xf32>
    %380 = vector.extract_strided_slice %360 {offsets = [0, 160], sizes = [5, 32], strides = [1, 1]} : vector<5x384xf32> to vector<5x32xf32>
    %cst_126 = arith.constant dense<0.000000e+00> : vector<5x5xf32>
    %381 = tpu.matmul %378, %379, %cst_126 {dimension_numbers = #tpu.dot_dimension_numbers<[1], [1], [0], [0], [0, 0, 1, 0], [], []>} : vector<5x32xf32>, vector<5x32xf32>, vector<5x5xf32> -> vector<5x5xf32>
    %cst_127 = arith.constant 0.176776692 : f32
    %382 = vector.broadcast %cst_127 : f32 to vector<5x5xf32>
    %383 = arith.mulf %381, %382 : vector<5x5xf32>
    %cst_128 = arith.constant dense<0xFF800000> : vector<5xf32>
    %384 = vector.multi_reduction <maximumf>, %383, %cst_128 [1] : vector<5x5xf32> to vector<5xf32>
    %385 = vector.shape_cast %384 : vector<5xf32> to vector<5x1xf32>
    %386 = vector.broadcast %385 : vector<5x1xf32> to vector<5x5xf32>
    %387 = arith.subf %383, %386 : vector<5x5xf32>
    %388 = math.exp %387 : vector<5x5xf32>
    %cst_129 = arith.constant dense<0.000000e+00> : vector<5xf32>
    %389 = vector.multi_reduction <add>, %388, %cst_129 [1] : vector<5x5xf32> to vector<5xf32>
    %390 = vector.shape_cast %389 : vector<5xf32> to vector<5x1xf32>
    %391 = tpu.reciprocal %390 {approx = true} : vector<5x1xf32> -> vector<5x1xf32>
    %392 = vector.broadcast %391 : vector<5x1xf32> to vector<5x5xf32>
    %393 = arith.mulf %388, %392 : vector<5x5xf32>
    %cst_130 = arith.constant dense<0.000000e+00> : vector<5x32xf32>
    %394 = tpu.matmul %393, %380, %cst_130 {dimension_numbers = #tpu.dot_dimension_numbers<[1], [0], [0], [1], [0, 0, 1, 1], [], []>} : vector<5x5xf32>, vector<5x32xf32>, vector<5x32xf32> -> vector<5x32xf32>
    %395 = vector.extract_strided_slice %360 {offsets = [0, 192], sizes = [5, 32], strides = [1, 1]} : vector<5x384xf32> to vector<5x32xf32>
    %396 = vector.extract_strided_slice %360 {offsets = [0, 224], sizes = [5, 32], strides = [1, 1]} : vector<5x384xf32> to vector<5x32xf32>
    %397 = vector.extract_strided_slice %360 {offsets = [0, 256], sizes = [5, 32], strides = [1, 1]} : vector<5x384xf32> to vector<5x32xf32>
    %cst_131 = arith.constant dense<0.000000e+00> : vector<5x5xf32>
    %398 = tpu.matmul %395, %396, %cst_131 {dimension_numbers = #tpu.dot_dimension_numbers<[1], [1], [0], [0], [0, 0, 1, 0], [], []>} : vector<5x32xf32>, vector<5x32xf32>, vector<5x5xf32> -> vector<5x5xf32>
    %cst_132 = arith.constant 0.176776692 : f32
    %399 = vector.broadcast %cst_132 : f32 to vector<5x5xf32>
    %400 = arith.mulf %398, %399 : vector<5x5xf32>
    %cst_133 = arith.constant dense<0xFF800000> : vector<5xf32>
    %401 = vector.multi_reduction <maximumf>, %400, %cst_133 [1] : vector<5x5xf32> to vector<5xf32>
    %402 = vector.shape_cast %401 : vector<5xf32> to vector<5x1xf32>
    %403 = vector.broadcast %402 : vector<5x1xf32> to vector<5x5xf32>
    %404 = arith.subf %400, %403 : vector<5x5xf32>
    %405 = math.exp %404 : vector<5x5xf32>
    %cst_134 = arith.constant dense<0.000000e+00> : vector<5xf32>
    %406 = vector.multi_reduction <add>, %405, %cst_134 [1] : vector<5x5xf32> to vector<5xf32>
    %407 = vector.shape_cast %406 : vector<5xf32> to vector<5x1xf32>
    %408 = tpu.reciprocal %407 {approx = true} : vector<5x1xf32> -> vector<5x1xf32>
    %409 = vector.broadcast %408 : vector<5x1xf32> to vector<5x5xf32>
    %410 = arith.mulf %405, %409 : vector<5x5xf32>
    %cst_135 = arith.constant dense<0.000000e+00> : vector<5x32xf32>
    %411 = tpu.matmul %410, %397, %cst_135 {dimension_numbers = #tpu.dot_dimension_numbers<[1], [0], [0], [1], [0, 0, 1, 1], [], []>} : vector<5x5xf32>, vector<5x32xf32>, vector<5x32xf32> -> vector<5x32xf32>
    %412 = vector.extract_strided_slice %360 {offsets = [0, 288], sizes = [5, 32], strides = [1, 1]} : vector<5x384xf32> to vector<5x32xf32>
    %413 = vector.extract_strided_slice %360 {offsets = [0, 320], sizes = [5, 32], strides = [1, 1]} : vector<5x384xf32> to vector<5x32xf32>
    %414 = vector.extract_strided_slice %360 {offsets = [0, 352], sizes = [5, 32], strides = [1, 1]} : vector<5x384xf32> to vector<5x32xf32>
    %cst_136 = arith.constant dense<0.000000e+00> : vector<5x5xf32>
    %415 = tpu.matmul %412, %413, %cst_136 {dimension_numbers = #tpu.dot_dimension_numbers<[1], [1], [0], [0], [0, 0, 1, 0], [], []>} : vector<5x32xf32>, vector<5x32xf32>, vector<5x5xf32> -> vector<5x5xf32>
    %cst_137 = arith.constant 0.176776692 : f32
    %416 = vector.broadcast %cst_137 : f32 to vector<5x5xf32>
    %417 = arith.mulf %415, %416 : vector<5x5xf32>
    %cst_138 = arith.constant dense<0xFF800000> : vector<5xf32>
    %418 = vector.multi_reduction <maximumf>, %417, %cst_138 [1] : vector<5x5xf32> to vector<5xf32>
    %419 = vector.shape_cast %418 : vector<5xf32> to vector<5x1xf32>
    %420 = vector.broadcast %419 : vector<5x1xf32> to vector<5x5xf32>
    %421 = arith.subf %417, %420 : vector<5x5xf32>
    %422 = math.exp %421 : vector<5x5xf32>
    %cst_139 = arith.constant dense<0.000000e+00> : vector<5xf32>
    %423 = vector.multi_reduction <add>, %422, %cst_139 [1] : vector<5x5xf32> to vector<5xf32>
    %424 = vector.shape_cast %423 : vector<5xf32> to vector<5x1xf32>
    %425 = tpu.reciprocal %424 {approx = true} : vector<5x1xf32> -> vector<5x1xf32>
    %426 = vector.broadcast %425 : vector<5x1xf32> to vector<5x5xf32>
    %427 = arith.mulf %422, %426 : vector<5x5xf32>
    %cst_140 = arith.constant dense<0.000000e+00> : vector<5x32xf32>
    %428 = tpu.matmul %427, %414, %cst_140 {dimension_numbers = #tpu.dot_dimension_numbers<[1], [0], [0], [1], [0, 0, 1, 1], [], []>} : vector<5x5xf32>, vector<5x32xf32>, vector<5x32xf32> -> vector<5x32xf32>
    %429 = tpu.concatenate %377, %394, %411, %428 in 1 : vector<5x32xf32>, vector<5x32xf32>, vector<5x32xf32>, vector<5x32xf32> -> vector<5x128xf32>
    %430 = tpu.concatenate %359, %429 in 0 : vector<5x128xf32>, vector<5x128xf32> -> vector<10x128xf32>
    %431 = arith.truncf %430 : vector<10x128xf32> to vector<10x128xbf16>
    %c1_141 = arith.constant 1 : index
    %c0_142 = arith.constant 0 : index
    %c0_143 = arith.constant 0 : index
    %432 = vector.load %arg6[%c1_141, %c0_142, %c0_143] : memref<2x128x128xbf16, #tpu.memory_space<vmem>>, vector<1x128x128xbf16>
    %433 = vector.shape_cast %432 : vector<1x128x128xbf16> to vector<128x128xbf16>
    %cst_144 = arith.constant dense<0.000000e+00> : vector<10x128xf32>
    %434 = tpu.matmul %431, %433, %cst_144 {dimension_numbers = #tpu.dot_dimension_numbers<[1], [0], [0], [1], [0, 0, 1, 1], [], []>} : vector<10x128xbf16>, vector<128x128xbf16>, vector<10x128xf32> -> vector<10x128xf32>
    %435 = vector.broadcast %254 : vector<1x128xf32> to vector<10x128xf32>
    %436 = arith.addf %434, %435 : vector<10x128xf32>
    %437 = vector.broadcast %255 : vector<1x128xf32> to vector<10x128xf32>
    %438 = arith.mulf %437, %436 : vector<10x128xf32>
    %439 = arith.addf %249, %438 : vector<10x128xf32>
    %cst_145 = arith.constant dense<0.000000e+00> : vector<10xf32>
    %440 = vector.multi_reduction <add>, %439, %cst_145 [1] : vector<10x128xf32> to vector<10xf32>
    %441 = vector.shape_cast %440 : vector<10xf32> to vector<10x1xf32>
    %cst_146 = arith.constant 1.280000e+02 : f32
    %442 = vector.broadcast %cst_146 : f32 to vector<10x1xf32>
    %443 = arith.divf %441, %442 : vector<10x1xf32>
    %444 = vector.broadcast %443 : vector<10x1xf32> to vector<10x128xf32>
    %445 = arith.subf %439, %444 : vector<10x128xf32>
    %446 = arith.mulf %445, %445 : vector<10x128xf32>
    %cst_147 = arith.constant dense<0.000000e+00> : vector<10xf32>
    %447 = vector.multi_reduction <add>, %446, %cst_147 [1] : vector<10x128xf32> to vector<10xf32>
    %448 = vector.shape_cast %447 : vector<10xf32> to vector<10x1xf32>
    %cst_148 = arith.constant 1.280000e+02 : f32
    %449 = vector.broadcast %cst_148 : f32 to vector<10x1xf32>
    %450 = arith.divf %448, %449 : vector<10x1xf32>
    %451 = vector.broadcast %443 : vector<10x1xf32> to vector<10x128xf32>
    %452 = arith.subf %439, %451 : vector<10x128xf32>
    %cst_149 = arith.constant 9.99999997E-7 : f32
    %453 = vector.broadcast %cst_149 : f32 to vector<10x1xf32>
    %454 = arith.addf %450, %453 : vector<10x1xf32>
    %455 = math.rsqrt %454 : vector<10x1xf32>
    %456 = vector.broadcast %455 : vector<10x1xf32> to vector<10x128xf32>
    %457 = arith.mulf %452, %456 : vector<10x128xf32>
    %458 = vector.broadcast %256 : vector<1x128xf32> to vector<10x128xf32>
    %459 = arith.mulf %457, %458 : vector<10x128xf32>
    %460 = vector.broadcast %257 : vector<1x128xf32> to vector<10x128xf32>
    %461 = arith.addf %459, %460 : vector<10x128xf32>
    %462 = arith.truncf %461 : vector<10x128xf32> to vector<10x128xbf16>
    %c1_150 = arith.constant 1 : index
    %c0_151 = arith.constant 0 : index
    %c0_152 = arith.constant 0 : index
    %463 = vector.load %arg7[%c1_150, %c0_151, %c0_152] : memref<2x128x512xbf16, #tpu.memory_space<vmem>>, vector<1x128x512xbf16>
    %464 = vector.shape_cast %463 : vector<1x128x512xbf16> to vector<128x512xbf16>
    %cst_153 = arith.constant dense<0.000000e+00> : vector<10x512xf32>
    %465 = tpu.matmul %462, %464, %cst_153 {dimension_numbers = #tpu.dot_dimension_numbers<[1], [0], [0], [1], [0, 0, 1, 1], [], []>} : vector<10x128xbf16>, vector<128x512xbf16>, vector<10x512xf32> -> vector<10x512xf32>
    %c1_154 = arith.constant 1 : index
    %c0_155 = arith.constant 0 : index
    %c0_156 = arith.constant 0 : index
    %466 = vector.load %arg8[%c1_154, %c0_155, %c0_156] : memref<2x1x512xf32, #tpu.memory_space<vmem>>, vector<1x1x512xf32>
    %467 = vector.shape_cast %466 : vector<1x1x512xf32> to vector<1x512xf32>
    %468 = vector.broadcast %467 : vector<1x512xf32> to vector<10x512xf32>
    %469 = arith.addf %465, %468 : vector<10x512xf32>
    %470 = arith.mulf %469, %469 : vector<10x512xf32>
    %471 = arith.mulf %469, %470 : vector<10x512xf32>
    %cst_157 = arith.constant 4.471500e-02 : f32
    %472 = vector.broadcast %cst_157 : f32 to vector<10x512xf32>
    %473 = arith.mulf %472, %471 : vector<10x512xf32>
    %474 = arith.addf %469, %473 : vector<10x512xf32>
    %cst_158 = arith.constant 0.797884583 : f32
    %475 = vector.broadcast %cst_158 : f32 to vector<10x512xf32>
    %476 = arith.mulf %475, %474 : vector<10x512xf32>
    %477 = math.tanh %476 : vector<10x512xf32>
    %cst_159 = arith.constant 1.000000e+00 : f32
    %478 = vector.broadcast %cst_159 : f32 to vector<10x512xf32>
    %479 = arith.addf %478, %477 : vector<10x512xf32>
    %cst_160 = arith.constant 5.000000e-01 : f32
    %480 = vector.broadcast %cst_160 : f32 to vector<10x512xf32>
    %481 = arith.mulf %480, %479 : vector<10x512xf32>
    %482 = arith.mulf %469, %481 : vector<10x512xf32>
    %483 = arith.truncf %482 : vector<10x512xf32> to vector<10x512xbf16>
    %c1_161 = arith.constant 1 : index
    %c0_162 = arith.constant 0 : index
    %c0_163 = arith.constant 0 : index
    %484 = vector.load %arg9[%c1_161, %c0_162, %c0_163] : memref<2x512x128xbf16, #tpu.memory_space<vmem>>, vector<1x512x128xbf16>
    %485 = vector.shape_cast %484 : vector<1x512x128xbf16> to vector<512x128xbf16>
    %cst_164 = arith.constant dense<0.000000e+00> : vector<10x128xf32>
    %486 = tpu.matmul %483, %485, %cst_164 {dimension_numbers = #tpu.dot_dimension_numbers<[1], [0], [0], [1], [0, 0, 1, 1], [], []>} : vector<10x512xbf16>, vector<512x128xbf16>, vector<10x128xf32> -> vector<10x128xf32>
    %487 = vector.broadcast %258 : vector<1x128xf32> to vector<10x128xf32>
    %488 = arith.addf %486, %487 : vector<10x128xf32>
    %489 = vector.broadcast %259 : vector<1x128xf32> to vector<10x128xf32>
    %490 = arith.mulf %489, %488 : vector<10x128xf32>
    %491 = arith.addf %439, %490 : vector<10x128xf32>
    %c0_165 = arith.constant 0 : index
    %c0_166 = arith.constant 0 : index
    %492 = vector.load %arg11[%c0_165, %c0_166] : memref<2x128xf32, #tpu.memory_space<vmem>>, vector<2x128xf32>
    %493 = vector.extract_strided_slice %492 {offsets = [0, 0], sizes = [1, 128], strides = [1, 1]} : vector<2x128xf32> to vector<1x128xf32>
    %494 = vector.extract_strided_slice %492 {offsets = [1, 0], sizes = [1, 128], strides = [1, 1]} : vector<2x128xf32> to vector<1x128xf32>
    %cst_167 = arith.constant dense<0.000000e+00> : vector<10xf32>
    %495 = vector.multi_reduction <add>, %491, %cst_167 [1] : vector<10x128xf32> to vector<10xf32>
    %496 = vector.shape_cast %495 : vector<10xf32> to vector<10x1xf32>
    %cst_168 = arith.constant 1.280000e+02 : f32
    %497 = vector.broadcast %cst_168 : f32 to vector<10x1xf32>
    %498 = arith.divf %496, %497 : vector<10x1xf32>
    %499 = vector.broadcast %498 : vector<10x1xf32> to vector<10x128xf32>
    %500 = arith.subf %491, %499 : vector<10x128xf32>
    %501 = arith.mulf %500, %500 : vector<10x128xf32>
    %cst_169 = arith.constant dense<0.000000e+00> : vector<10xf32>
    %502 = vector.multi_reduction <add>, %501, %cst_169 [1] : vector<10x128xf32> to vector<10xf32>
    %503 = vector.shape_cast %502 : vector<10xf32> to vector<10x1xf32>
    %cst_170 = arith.constant 1.280000e+02 : f32
    %504 = vector.broadcast %cst_170 : f32 to vector<10x1xf32>
    %505 = arith.divf %503, %504 : vector<10x1xf32>
    %506 = vector.broadcast %498 : vector<10x1xf32> to vector<10x128xf32>
    %507 = arith.subf %491, %506 : vector<10x128xf32>
    %cst_171 = arith.constant 9.99999997E-7 : f32
    %508 = vector.broadcast %cst_171 : f32 to vector<10x1xf32>
    %509 = arith.addf %505, %508 : vector<10x1xf32>
    %510 = math.rsqrt %509 : vector<10x1xf32>
    %511 = vector.broadcast %510 : vector<10x1xf32> to vector<10x128xf32>
    %512 = arith.mulf %507, %511 : vector<10x128xf32>
    %513 = vector.broadcast %493 : vector<1x128xf32> to vector<10x128xf32>
    %514 = arith.mulf %512, %513 : vector<10x128xf32>
    %515 = vector.broadcast %494 : vector<1x128xf32> to vector<10x128xf32>
    %516 = arith.addf %514, %515 : vector<10x128xf32>
    %c0_172 = arith.constant 0 : index
    %c0_173 = arith.constant 0 : index
    %517 = vector.load %arg15[%c0_172, %c0_173] : memref<10x128xf32, #tpu.memory_space<vmem>>, vector<10x128xf32>
    tpu.vector_store %arg15[%c0_172, %c0_173], %516 {strides = array<i32>} : memref<10x128xf32, #tpu.memory_space<vmem>>, vector<10x128xf32>,
    %cst_174 = arith.constant 9.99999997E-7 : f32
    %518 = vector.broadcast %cst_174 : f32 to vector<10x128xf32>
    %519 = arith.maximumf %516, %518 : vector<10x128xf32>
    %520 = arith.mulf %519, %519 : vector<10x128xf32>
    %521 = arith.mulf %520, %519 : vector<10x128xf32>
    %c0_175 = arith.constant 0 : index
    %c0_176 = arith.constant 0 : index
    %522 = vector.load %arg12[%c0_175, %c0_176] : memref<2x10xf32, #tpu.memory_space<vmem>>, vector<2x10xf32>
    %cst_177 = arith.constant dense<0.000000e+00> : vector<2x128xf32>
    %523 = tpu.matmul %522, %521, %cst_177 {dimension_numbers = #tpu.dot_dimension_numbers<[1], [0], [0], [1], [0, 0, 1, 1], [], []>} : vector<2x10xf32>, vector<10x128xf32>, vector<2x128xf32> -> vector<2x128xf32>
    %524 = math.log %523 : vector<2x128xf32>
    %cst_178 = arith.constant 3.000000e+00 : f32
    %525 = vector.broadcast %cst_178 : f32 to vector<2x128xf32>
    %526 = arith.divf %524, %525 : vector<2x128xf32>
    %527 = math.exp %526 : vector<2x128xf32>
    %528 = arith.truncf %527 : vector<2x128xf32> to vector<2x128xbf16>
    %c0_179 = arith.constant 0 : index
    %c0_180 = arith.constant 0 : index
    %529 = vector.load %arg13[%c0_179, %c0_180] : memref<128x64xbf16, #tpu.memory_space<vmem>>, vector<128x64xbf16>
    %cst_181 = arith.constant dense<0.000000e+00> : vector<2x64xf32>
    %530 = tpu.matmul %528, %529, %cst_181 {dimension_numbers = #tpu.dot_dimension_numbers<[1], [0], [0], [1], [0, 0, 1, 1], [], []>} : vector<2x128xbf16>, vector<128x64xbf16>, vector<2x64xf32> -> vector<2x64xf32>
    %c0_182 = arith.constant 0 : index
    %c0_183 = arith.constant 0 : index
    %531 = vector.load %arg14[%c0_182, %c0_183] : memref<1x64xf32, #tpu.memory_space<vmem>>, vector<1x64xf32>
    %532 = vector.broadcast %531 : vector<1x64xf32> to vector<2x64xf32>
    %533 = arith.addf %530, %532 : vector<2x64xf32>
    %534 = arith.mulf %533, %533 : vector<2x64xf32>
    %cst_184 = arith.constant dense<0.000000e+00> : vector<2xf32>
    %535 = vector.multi_reduction <add>, %534, %cst_184 [1] : vector<2x64xf32> to vector<2xf32>
    %536 = vector.shape_cast %535 : vector<2xf32> to vector<2x1xf32>
    %537 = math.sqrt %536 : vector<2x1xf32>
    %cst_185 = arith.constant 9.99999996E-13 : f32
    %538 = vector.broadcast %cst_185 : f32 to vector<2x1xf32>
    %539 = arith.maximumf %537, %538 : vector<2x1xf32>
    %540 = vector.broadcast %539 : vector<2x1xf32> to vector<2x64xf32>
    %541 = arith.divf %533, %540 : vector<2x64xf32>
    %c0_186 = arith.constant 0 : index
    %c0_187 = arith.constant 0 : index
    %542 = vector.load %arg16[%c0_186, %c0_187] : memref<2x64xf32, #tpu.memory_space<vmem>>, vector<2x64xf32>
    tpu.vector_store %arg16[%c0_186, %c0_187], %541 {strides = array<i32>} : memref<2x64xf32, #tpu.memory_space<vmem>>, vector<2x64xf32>,
    return
  }
}

</mosaic_0001>

<llo_original>
// kernel: tile.9
$region0: #{tile.9}
  %s0 = inlined_call_operand.vmem [shape: f32[2,5,128], index: 0, kind: input, shape index: {}]
  %s1 = inlined_call_operand.vmem [shape: f32[10,128], index: 1, kind: output, shape index: {}]
  %v2 = vld [vmem:[%s0] sm:$0x1f]
  %3 = vst [vmem:[%s1] sm:$0x1f] %v2
  %s4 = scalar_lea.vmem %s0, 8
  %v5 = vld [vmem:[%s4] sm:$0x1f]
  %s6 = scalar_lea.vmem %s1, 5
  %7 = vst [vmem:[%s6] sm:$0x1f] %v5

// kernel: vglnet_test_forward.1
$region0: #{vglnet_test_forward.1}
  #allocation0 [shape = 'u32[]', space=smem, size = 0x4, offset = 0x4, fixed_abs, tag = 'smem constant byte address 0x4 - core index']
  #allocation1 [shape = 'u32[144,128]{1,0:T(1,128)}', space=vmem, size = 0x12000, scoped, tag = 'internal scratch']
  %s0 = inlined_call_operand.vmem [shape: f32[8,640], index: 0, kind: input, shape index: {}]
  %s1 = inlined_call_operand.vmem [shape: bf16[640,128], index: 1, kind: input, shape index: {}]
  %s2 = inlined_call_operand.vmem [shape: f32[10,8], index: 2, kind: input, shape index: {}]
  %s3 = inlined_call_operand.vmem [shape: f32[10,128], index: 3, kind: input, shape index: {}]
  %s4 = inlined_call_operand.vmem [shape: bf16[2,128,384], index: 4, kind: input, shape index: {}]
  %s5 = inlined_call_operand.hbm [shape: f32[2,1,384], index: 5, kind: input, shape index: {}]
  %s6 = inlined_call_operand.vmem [shape: bf16[2,128,128], index: 6, kind: input, shape index: {}]
  %s7 = inlined_call_operand.vmem [shape: bf16[2,128,512], index: 7, kind: input, shape index: {}]
  %s8 = inlined_call_operand.vmem [shape: f32[2,1,512], index: 8, kind: input, shape index: {}]
  %s9 = inlined_call_operand.vmem [shape: bf16[2,512,128], index: 9, kind: input, shape index: {}]
  %s10 = inlined_call_operand.vmem [shape: f32[2,8,128], index: 10, kind: input, shape index: {}]
  %s11 = inlined_call_operand.vmem [shape: f32[2,128], index: 11, kind: input, shape index: {}]
  %s12 = inlined_call_operand.vmem [shape: f32[2,10], index: 12, kind: input, shape index: {}]
  %s13 = inlined_call_operand.vmem [shape: bf16[128,64], index: 13, kind: input, shape index: {}]
  %s14 = inlined_call_operand.hbm [shape: f32[1,64], index: 14, kind: input, shape index: {}]
  %s15 = inlined_call_operand.vmem [shape: f32[10,128], index: 15, kind: output, shape index: {0}]
  %s16 = inlined_call_operand.hbm [shape: f32[2,64], index: 16, kind: output, shape index: {1}]
  %17 = xla_tuple %s15, %s16
  %s18 = sld [smem:[#allocation0]]
  $region86: #{vglnet_test_forward.1} parent=0
    _
  %s20 = ssub.s32 1, %s18
  %s21 = scalar_select 0, %s20, %s18
  $region1: #{vglnet_test_forward.1} parent=0
    #allocation2 [shape = 'u8[3072]{0}', space=vmem, size = 0xc00, scoped, tag = 'input window, operand 5, single buffered']
    #allocation3 [shape = 's32[1]{0}', space=sflag, size = 0x4, scoped, tag = 'scoped memory for vglnet_test_forward.1']
    #allocation4 [shape = 's32[1]{0}', space=sflag, size = 0x4, scoped, tag = 'scoped memory for vglnet_test_forward.1']
    #allocation5 [shape = 'u8[512]{0}', space=vmem, size = 0x400, scoped, tag = 'input window, operand 14, single buffered']
    #allocation6 [shape = 's32[1]{0}', space=sflag, size = 0x4, scoped, tag = 'scoped memory for vglnet_test_forward.1']
    #allocation7 [shape = 'u8[1024]{0}', space=vmem, size = 0x400, scoped, tag = 'output window, operand 1, single buffered']
    %22 = vsyncpa [#allocation3], 0
    %23 = vsyncpa [#allocation6], 0
    %24 = vsyncpa [#allocation4], 0
    // Predicated region
    $region2: #{vglnet_test_forward.1} parent=1 // pred_check
      _
    $region3: #{vglnet_test_forward.1} parent=1 // pred_check_branch
      %26 = sbr.rel (0) target = $region5
    $region4: #{vglnet_test_forward.1} parent=1 // pred_region
      _
    $region5: #{vglnet_test_forward.1} parent=1 // pred_fallthru
      _
    // Predicated region
    $region6: #{vglnet_test_forward.1} parent=1 // pred_check
      _
    $region7: #{vglnet_test_forward.1} parent=1 // pred_check_branch
      %28 = sbr.rel (0) target = $region9
    $region8: #{vglnet_test_forward.1} parent=1 // pred_region
      _
    $region9: #{vglnet_test_forward.1} parent=1 // pred_fallthru
      _
    // Predicated region
    $region10: #{vglnet_test_forward.1} parent=1 // pred_check
      _
    $region11: #{vglnet_test_forward.1} parent=1 // pred_check_branch
      %30 = sbr.rel (0) target = $region13
    $region12: #{vglnet_test_forward.1} parent=1 // pred_region
      _
    $region13: #{vglnet_test_forward.1} parent=1 // pred_fallthru
      _
    // Predicated region
    $region14: #{vglnet_test_forward.1} parent=1 // pred_check
      _
    $region15: #{vglnet_test_forward.1} parent=1 // pred_check_branch
      %32 = sbr.rel (0) target = $region17
    $region16: #{vglnet_test_forward.1} parent=1 // pred_region
      _
    $region17: #{vglnet_test_forward.1} parent=1 // pred_fallthru
      _
    // Predicated region
    $region18: #{vglnet_test_forward.1} parent=1 // pred_check
      _
    $region19: #{vglnet_test_forward.1} parent=1 // pred_check_branch
      %34 = sbr.rel (0) target = $region21
    $region20: #{vglnet_test_forward.1} parent=1 // pred_region
      _
    $region21: #{vglnet_test_forward.1} parent=1 // pred_fallthru
      _
    // Predicated region
    $region22: #{vglnet_test_forward.1} parent=1 // pred_check
      _
    $region23: #{vglnet_test_forward.1} parent=1 // pred_check_branch
      %36 = sbr.rel (0) target = $region25
    $region24: #{vglnet_test_forward.1} parent=1 // pred_region
      %s38 = ssub.s32 96, 96
      %39 = vsyncadd [#allocation3], %s38
      %s40 = sshll.u32 [#allocation2], 4
      %s41 = int_to_ptr.vmem [resolvable:$true] %s40
      %46 = dma.hbm_to_vmem [thread:$0]  %s5, 96, %s41, [#allocation3], 48, 48, 3
    $region25: #{vglnet_test_forward.1} parent=1 // pred_fallthru
      _
    // Predicated region
    $region26: #{vglnet_test_forward.1} parent=1 // pred_check
      _
    $region27: #{vglnet_test_forward.1} parent=1 // pred_check_branch
      %48 = sbr.rel (0) target = $region29
    $region28: #{vglnet_test_forward.1} parent=1 // pred_region
      _
    $region29: #{vglnet_test_forward.1} parent=1 // pred_fallthru
      _
    // Predicated region
    $region30: #{vglnet_test_forward.1} parent=1 // pred_check
      _
    $region31: #{vglnet_test_forward.1} parent=1 // pred_check_branch
      %50 = sbr.rel (0) target = $region33
    $region32: #{vglnet_test_forward.1} parent=1 // pred_region
      _
    $region33: #{vglnet_test_forward.1} parent=1 // pred_fallthru
      _
    // Predicated region
    $region34: #{vglnet_test_forward.1} parent=1 // pred_check
      _
    $region35: #{vglnet_test_forward.1} parent=1 // pred_check_branch
      %52 = sbr.rel (0) target = $region37
    $region36: #{vglnet_test_forward.1} parent=1 // pred_region
      _
    $region37: #{vglnet_test_forward.1} parent=1 // pred_fallthru
      _
    // Predicated region
    $region38: #{vglnet_test_forward.1} parent=1 // pred_check
      _
    $region39: #{vglnet_test_forward.1} parent=1 // pred_check_branch
      %54 = sbr.rel (0) target = $region41
    $region40: #{vglnet_test_forward.1} parent=1 // pred_region
      _
    $region41: #{vglnet_test_forward.1} parent=1 // pred_fallthru
      _
    // Predicated region
    $region42: #{vglnet_test_forward.1} parent=1 // pred_check
      _
    $region43: #{vglnet_test_forward.1} parent=1 // pred_check_branch
      %56 = sbr.rel (0) target = $region45
    $region44: #{vglnet_test_forward.1} parent=1 // pred_region
      _
    $region45: #{vglnet_test_forward.1} parent=1 // pred_fallthru
      _
    // Predicated region
    $region46: #{vglnet_test_forward.1} parent=1 // pred_check
      _
    $region47: #{vglnet_test_forward.1} parent=1 // pred_check_branch
      %58 = sbr.rel (0) target = $region49
    $region48: #{vglnet_test_forward.1} parent=1 // pred_region
      _
    $region49: #{vglnet_test_forward.1} parent=1 // pred_fallthru
      _
    // Predicated region
    $region50: #{vglnet_test_forward.1} parent=1 // pred_check
      _
    $region51: #{vglnet_test_forward.1} parent=1 // pred_check_branch
      %60 = sbr.rel (0) target = $region53
    $region52: #{vglnet_test_forward.1} parent=1 // pred_region
      _
    $region53: #{vglnet_test_forward.1} parent=1 // pred_fallthru
      _
    // Predicated region
    $region54: #{vglnet_test_forward.1} parent=1 // pred_check
      _
    $region55: #{vglnet_test_forward.1} parent=1 // pred_check_branch
      %62 = sbr.rel (0) target = $region57
    $region56: #{vglnet_test_forward.1} parent=1 // pred_region
      _
    $region57: #{vglnet_test_forward.1} parent=1 // pred_fallthru
      _
    // Predicated region
    $region58: #{vglnet_test_forward.1} parent=1 // pred_check
      _
    $region59: #{vglnet_test_forward.1} parent=1 // pred_check_branch
      %64 = sbr.rel (0) target = $region61
    $region60: #{vglnet_test_forward.1} parent=1 // pred_region
      %s66 = ssub.s32 16, 16
      %67 = vsyncadd [#allocation6], %s66
      %s69 = sshll.u32 [#allocation5], 4
      %s70 = int_to_ptr.vmem [resolvable:$true] %s69
      %72 = dma.hbm_to_vmem [thread:$0]  %s14, 16, %s70, [#allocation6]
    $region61: #{vglnet_test_forward.1} parent=1 // pred_fallthru
      _
    // Predicated region
    $region62: #{vglnet_test_forward.1} parent=1 // pred_check
      _
    $region63: #{vglnet_test_forward.1} parent=1 // pred_check_branch
      %74 = sbr.rel (0) target = $region65
    $region64: #{vglnet_test_forward.1} parent=1 // pred_region
      %75 = dma.done [#allocation3], 96
    $region65: #{vglnet_test_forward.1} parent=1 // pred_fallthru
      _
    // Predicated region
    $region66: #{vglnet_test_forward.1} parent=1 // pred_check
      _
    $region67: #{vglnet_test_forward.1} parent=1 // pred_check_branch
      %77 = sbr.rel (0) target = $region69
    $region68: #{vglnet_test_forward.1} parent=1 // pred_region
      %78 = dma.done [#allocation6], 16
    $region69: #{vglnet_test_forward.1} parent=1 // pred_fallthru
      _
    %v80 = vld [vmem:[%s0] sm:$0xff]
    %v81 = vld [vmem:[%s0 + $0x8] sm:$0xff]
    %v82 = vld [vmem:[%s0 + $0x10] sm:$0xff]
    %v83 = vld [vmem:[%s0 + $0x18] sm:$0xff]
    %v84 = vld [vmem:[%s0 + $0x20] sm:$0xff]
    %v85 = vpack.c.bf16 %v80, %v80
    %v86 = vpack.c.bf16 %v81, %v81
    %v87 = vpack.c.bf16 %v82, %v82
    %v88 = vpack.c.bf16 %v83, %v83
    %v89 = vpack.c.bf16 %v84, %v84
    %v90 = vld [vmem:[%s1] sm:$0xf]
    %v91 = vld [vmem:[%s1 + $0x4] sm:$0xf]
    %v92 = vld [vmem:[%s1 + $0x8] sm:$0xf]
    %v93 = vld [vmem:[%s1 + $0xc] sm:$0xf]
    %v94 = vld [vmem:[%s1 + $0x10] sm:$0xf]
    %v95 = vld [vmem:[%s1 + $0x14] sm:$0xf]
    %v96 = vld [vmem:[%s1 + $0x18] sm:$0xf]
    %v97 = vld [vmem:[%s1 + $0x1c] sm:$0xf]
    %v98 = vld [vmem:[%s1 + $0x20] sm:$0xf]
    %v99 = vld [vmem:[%s1 + $0x24] sm:$0xf]
    %v100 = vld [vmem:[%s1 + $0x28] sm:$0xf]
    %v101 = vld [vmem:[%s1 + $0x2c] sm:$0xf]
    %v102 = vld [vmem:[%s1 + $0x30] sm:$0xf]
    %v103 = vld [vmem:[%s1 + $0x34] sm:$0xf]
    %v104 = vld [vmem:[%s1 + $0x38] sm:$0xf]
    %v105 = vld [vmem:[%s1 + $0x3c] sm:$0xf]
    %v106 = vld [vmem:[%s1 + $0x40] sm:$0xf]
    %v107 = vld [vmem:[%s1 + $0x44] sm:$0xf]
    %v108 = vld [vmem:[%s1 + $0x48] sm:$0xf]
    %v109 = vld [vmem:[%s1 + $0x4c] sm:$0xf]
    %v110 = vld [vmem:[%s1 + $0x50] sm:$0xf]
    %v111 = vld [vmem:[%s1 + $0x54] sm:$0xf]
    %v112 = vld [vmem:[%s1 + $0x58] sm:$0xf]
    %v113 = vld [vmem:[%s1 + $0x5c] sm:$0xf]
    %v114 = vld [vmem:[%s1 + $0x60] sm:$0xf]
    %v115 = vld [vmem:[%s1 + $0x64] sm:$0xf]
    %v116 = vld [vmem:[%s1 + $0x68] sm:$0xf]
    %v117 = vld [vmem:[%s1 + $0x6c] sm:$0xf]
    %v118 = vld [vmem:[%s1 + $0x70] sm:$0xf]
    %v119 = vld [vmem:[%s1 + $0x74] sm:$0xf]
    %v120 = vld [vmem:[%s1 + $0x78] sm:$0xf]
    %v121 = vld [vmem:[%s1 + $0x7c] sm:$0xf]
    %v122 = vld [vmem:[%s1 + $0x80] sm:$0xf]
    %v123 = vld [vmem:[%s1 + $0x84] sm:$0xf]
    %v124 = vld [vmem:[%s1 + $0x88] sm:$0xf]
    %v125 = vld [vmem:[%s1 + $0x8c] sm:$0xf]
    %v126 = vld [vmem:[%s1 + $0x90] sm:$0xf]
    %v127 = vld [vmem:[%s1 + $0x94] sm:$0xf]
    %v128 = vld [vmem:[%s1 + $0x98] sm:$0xf]
    %v129 = vld [vmem:[%s1 + $0x9c] sm:$0xf]
    %v130 = vld [vmem:[%s1 + $0xa0] sm:$0xf]
    %v131 = vld [vmem:[%s1 + $0xa4] sm:$0xf]
    %v132 = vld [vmem:[%s1 + $0xa8] sm:$0xf]
    %v133 = vld [vmem:[%s1 + $0xac] sm:$0xf]
    %v134 = vld [vmem:[%s1 + $0xb0] sm:$0xf]
    %v135 = vld [vmem:[%s1 + $0xb4] sm:$0xf]
    %v136 = vld [vmem:[%s1 + $0xb8] sm:$0xf]
    %v137 = vld [vmem:[%s1 + $0xbc] sm:$0xf]
    %v138 = vld [vmem:[%s1 + $0xc0] sm:$0xf]
    %v139 = vld [vmem:[%s1 + $0xc4] sm:$0xf]
    %v140 = vld [vmem:[%s1 + $0xc8] sm:$0xf]
    %v141 = vld [vmem:[%s1 + $0xcc] sm:$0xf]
    %v142 = vld [vmem:[%s1 + $0xd0] sm:$0xf]
    %v143 = vld [vmem:[%s1 + $0xd4] sm:$0xf]
    %v144 = vld [vmem:[%s1 + $0xd8] sm:$0xf]
    %v145 = vld [vmem:[%s1 + $0xdc] sm:$0xf]
    %v146 = vld [vmem:[%s1 + $0xe0] sm:$0xf]
    %v147 = vld [vmem:[%s1 + $0xe4] sm:$0xf]
    %v148 = vld [vmem:[%s1 + $0xe8] sm:$0xf]
    %v149 = vld [vmem:[%s1 + $0xec] sm:$0xf]
    %v150 = vld [vmem:[%s1 + $0xf0] sm:$0xf]
    %v151 = vld [vmem:[%s1 + $0xf4] sm:$0xf]
    %v152 = vld [vmem:[%s1 + $0xf8] sm:$0xf]
    %v153 = vld [vmem:[%s1 + $0xfc] sm:$0xf]
    %v154 = vld [vmem:[%s1 + $0x100] sm:$0xf]
    %v155 = vld [vmem:[%s1 + $0x104] sm:$0xf]
    %v156 = vld [vmem:[%s1 + $0x108] sm:$0xf]
    %v157 = vld [vmem:[%s1 + $0x10c] sm:$0xf]
    %v158 = vld [vmem:[%s1 + $0x110] sm:$0xf]
    %v159 = vld [vmem:[%s1 + $0x114] sm:$0xf]
    %v160 = vld [vmem:[%s1 + $0x118] sm:$0xf]
    %v161 = vld [vmem:[%s1 + $0x11c] sm:$0xf]
    %v162 = vld [vmem:[%s1 + $0x120] sm:$0xf]
    %v163 = vld [vmem:[%s1 + $0x124] sm:$0xf]
    %v164 = vld [vmem:[%s1 + $0x128] sm:$0xf]
    %v165 = vld [vmem:[%s1 + $0x12c] sm:$0xf]
    %v166 = vld [vmem:[%s1 + $0x130] sm:$0xf]
    %v167 = vld [vmem:[%s1 + $0x134] sm:$0xf]
    %v168 = vld [vmem:[%s1 + $0x138] sm:$0xf]
    %v169 = vld [vmem:[%s1 + $0x13c] sm:$0xf]
    %v250 = vunpack.c.l.b16 %v90
    %v251 = vunpack.c.l.b16 %v91
    %v252 = vunpack.c.l.b16 %v92
    %v253 = vunpack.c.l.b16 %v93
    %v254 = vunpack.c.l.b16 %v94
    %v255 = vunpack.c.l.b16 %v95
    %v256 = vunpack.c.l.b16 %v96
    %v257 = vunpack.c.l.b16 %v97
    %v258 = vunpack.c.l.b16 %v98
    %v259 = vunpack.c.l.b16 %v99
    %v260 = vunpack.c.l.b16 %v100
    %v261 = vunpack.c.l.b16 %v101
    %v262 = vunpack.c.l.b16 %v102
    %v263 = vunpack.c.l.b16 %v103
    %v264 = vunpack.c.l.b16 %v104
    %v265 = vunpack.c.l.b16 %v105
    %v266 = vunpack.c.l.b16 %v106
    %v267 = vunpack.c.l.b16 %v107
    %v268 = vunpack.c.l.b16 %v108
    %v269 = vunpack.c.l.b16 %v109
    %v270 = vunpack.c.l.b16 %v110
    %v271 = vunpack.c.l.b16 %v111
    %v272 = vunpack.c.l.b16 %v112
    %v273 = vunpack.c.l.b16 %v113
    %v274 = vunpack.c.l.b16 %v114
    %v275 = vunpack.c.l.b16 %v115
    %v276 = vunpack.c.l.b16 %v116
    %v277 = vunpack.c.l.b16 %v117
    %v278 = vunpack.c.l.b16 %v118
    %v279 = vunpack.c.l.b16 %v119
    %v280 = vunpack.c.l.b16 %v120
    %v281 = vunpack.c.l.b16 %v121
    %v282 = vunpack.c.l.b16 %v122
    %v283 = vunpack.c.l.b16 %v123
    %v284 = vunpack.c.l.b16 %v124
    %v285 = vunpack.c.l.b16 %v125
    %v286 = vunpack.c.l.b16 %v126
    %v287 = vunpack.c.l.b16 %v127
    %v288 = vunpack.c.l.b16 %v128
    %v289 = vunpack.c.l.b16 %v129
    %v290 = vunpack.c.l.b16 %v130
    %v291 = vunpack.c.l.b16 %v131
    %v292 = vunpack.c.l.b16 %v132
    %v293 = vunpack.c.l.b16 %v133
    %v294 = vunpack.c.l.b16 %v134
    %v295 = vunpack.c.l.b16 %v135
    %v296 = vunpack.c.l.b16 %v136
    %v297 = vunpack.c.l.b16 %v137
    %v298 = vunpack.c.l.b16 %v138
    %v299 = vunpack.c.l.b16 %v139
    %v300 = vunpack.c.l.b16 %v140
    %v301 = vunpack.c.l.b16 %v141
    %v302 = vunpack.c.l.b16 %v142
    %v303 = vunpack.c.l.b16 %v143
    %v304 = vunpack.c.l.b16 %v144
    %v305 = vunpack.c.l.b16 %v145
    %v306 = vunpack.c.l.b16 %v146
    %v307 = vunpack.c.l.b16 %v147
    %v308 = vunpack.c.l.b16 %v148
    %v309 = vunpack.c.l.b16 %v149
    %v310 = vunpack.c.l.b16 %v150
    %v311 = vunpack.c.l.b16 %v151
    %v312 = vunpack.c.l.b16 %v152
    %v313 = vunpack.c.l.b16 %v153
    %v314 = vunpack.c.l.b16 %v154
    %v315 = vunpack.c.l.b16 %v155
    %v316 = vunpack.c.l.b16 %v156
    %v317 = vunpack.c.l.b16 %v157
    %v318 = vunpack.c.l.b16 %v158
    %v319 = vunpack.c.l.b16 %v159
    %v320 = vunpack.c.l.b16 %v160
    %v321 = vunpack.c.l.b16 %v161
    %v322 = vunpack.c.l.b16 %v162
    %v323 = vunpack.c.l.b16 %v163
    %v324 = vunpack.c.l.b16 %v164
    %v325 = vunpack.c.l.b16 %v165
    %v326 = vunpack.c.l.b16 %v166
    %v327 = vunpack.c.l.b16 %v167
    %v328 = vunpack.c.l.b16 %v168
    %v329 = vunpack.c.l.b16 %v169
    %v330 = vpack.c.b16 %v251, %v250
    %v331 = vpack.c.b16 %v253, %v252
    %v332 = vpack.c.b16 %v255, %v254
    %v333 = vpack.c.b16 %v257, %v256
    %v334 = vpack.c.b16 %v259, %v258
    %v335 = vpack.c.b16 %v261, %v260
    %v336 = vpack.c.b16 %v263, %v262
    %v337 = vpack.c.b16 %v265, %v264
    %v338 = vpack.c.b16 %v267, %v266
    %v339 = vpack.c.b16 %v269, %v268
    %v340 = vpack.c.b16 %v271, %v270
    %v341 = vpack.c.b16 %v273, %v272
    %v342 = vpack.c.b16 %v275, %v274
    %v343 = vpack.c.b16 %v277, %v276
    %v344 = vpack.c.b16 %v279, %v278
    %v345 = vpack.c.b16 %v281, %v280
    %v346 = vpack.c.b16 %v283, %v282
    %v347 = vpack.c.b16 %v285, %v284
    %v348 = vpack.c.b16 %v287, %v286
    %v349 = vpack.c.b16 %v289, %v288
    %v350 = vpack.c.b16 %v291, %v290
    %v351 = vpack.c.b16 %v293, %v292
    %v352 = vpack.c.b16 %v295, %v294
    %v353 = vpack.c.b16 %v297, %v296
    %v354 = vpack.c.b16 %v299, %v298
    %v355 = vpack.c.b16 %v301, %v300
    %v356 = vpack.c.b16 %v303, %v302
    %v357 = vpack.c.b16 %v305, %v304
    %v358 = vpack.c.b16 %v307, %v306
    %v359 = vpack.c.b16 %v309, %v308
    %v360 = vpack.c.b16 %v311, %v310
    %v361 = vpack.c.b16 %v313, %v312
    %v362 = vpack.c.b16 %v315, %v314
    %v363 = vpack.c.b16 %v317, %v316
    %v364 = vpack.c.b16 %v319, %v318
    %v365 = vpack.c.b16 %v321, %v320
    %v366 = vpack.c.b16 %v323, %v322
    %v367 = vpack.c.b16 %v325, %v324
    %v368 = vpack.c.b16 %v327, %v326
    %v369 = vpack.c.b16 %v329, %v328
    %410 = vmatprep.subr.bf16.mxu0 0
    %411 = vmatpush1.bf16.msra.mxu0 %v330
    %412 = vmatprep.subr.bf16.mxu0 0
    %413 = vmatpush1.bf16.msra.mxu0 %v331
    %414 = vmatprep.subr.bf16.mxu0 0
    %415 = vmatpush1.bf16.msra.mxu0 %v332
    %416 = vmatprep.subr.bf16.mxu0 0
    %417 = vmatpush1.bf16.msra.mxu0 %v333
    %418 = vmatprep.subr.bf16.mxu0 0
    %419 = vmatpush1.bf16.msra.mxu0 %v334
    %420 = vmatprep.subr.bf16.mxu0 0
    %421 = vmatpush1.bf16.msra.mxu0 %v335
    %422 = vmatprep.subr.bf16.mxu0 0
    %423 = vmatpush1.bf16.msra.mxu0 %v336
    %424 = vmatprep.subr.bf16.mxu0 0
    %425 = vmatpush1.bf16.msra.mxu0 %v337
    %426 = vmatprep.subr.bf16.mxu0 0
    %427 = vmatpush1.bf16.msra.mxu0 %v338
    %428 = vmatprep.subr.bf16.mxu0 0
    %429 = vmatpush1.bf16.msra.mxu0 %v339
    %430 = vmatprep.subr.bf16.mxu0 0
    %431 = vmatpush1.bf16.msra.mxu0 %v340
    %432 = vmatprep.subr.bf16.mxu0 0
    %433 = vmatpush1.bf16.msra.mxu0 %v341
    %434 = vmatprep.subr.bf16.mxu0 0
    %435 = vmatpush1.bf16.msra.mxu0 %v342
    %436 = vmatprep.subr.bf16.mxu0 0
    %437 = vmatpush1.bf16.msra.mxu0 %v343
    %438 = vmatprep.subr.bf16.mxu0 0
    %439 = vmatpush1.bf16.msra.mxu0 %v344
    %440 = vmatprep.subr.bf16.mxu0 0
    %441 = vmatpush1.bf16.msra.mxu0 %v345
    %442 = vmatprep.mubr.bf16.mxu0 %v86
    %443 = vmatmul.mubr.bf16.gmra.mrb[0].mxu0 %v85
    %v444 = vpop.f32.mrb[0].mxu0
    %v445 = vadd.f32 0.0, %v444
    %v446 = vpop.f32.mrb[0].mxu0
    %v447 = vpop.f32.mrb[0].mxu0
    %v448 = vpop.f32.mrb[0].mxu0
    %449 = vdwg.mxu0
    %450 = vmatprep.subr.bf16.mxu0 0
    %451 = vmatpush1.bf16.msra.mxu0 %v346
    %452 = vmatprep.subr.bf16.mxu0 0
    %453 = vmatpush1.bf16.msra.mxu0 %v347
    %454 = vmatprep.subr.bf16.mxu0 0
    %455 = vmatpush1.bf16.msra.mxu0 %v348
    %456 = vmatprep.subr.bf16.mxu0 0
    %457 = vmatpush1.bf16.msra.mxu0 %v349
    %458 = vmatprep.subr.bf16.mxu0 0
    %459 = vmatpush1.bf16.msra.mxu0 %v350
    %460 = vmatprep.subr.bf16.mxu0 0
    %461 = vmatpush1.bf16.msra.mxu0 %v351
    %462 = vmatprep.subr.bf16.mxu0 0
    %463 = vmatpush1.bf16.msra.mxu0 %v352
    %464 = vmatprep.subr.bf16.mxu0 0
    %465 = vmatpush1.bf16.msra.mxu0 %v353
    %466 = vmatprep.subr.bf16.mxu0 0
    %467 = vmatpush1.bf16.msra.mxu0 %v354
    %468 = vmatprep.subr.bf16.mxu0 0
    %469 = vmatpush1.bf16.msra.mxu0 %v355
    %470 = vmatprep.subr.bf16.mxu0 0
    %471 = vmatpush1.bf16.msra.mxu0 %v356
    %472 = vmatprep.subr.bf16.mxu0 0
    %473 = vmatpush1.bf16.msra.mxu0 %v357
    %474 = vmatprep.subr.bf16.mxu0 0
    %475 = vmatpush1.bf16.msra.mxu0 %v358
    %476 = vmatprep.subr.bf16.mxu0 0
    %477 = vmatpush1.bf16.msra.mxu0 %v359
    %478 = vmatprep.subr.bf16.mxu0 0
    %479 = vmatpush1.bf16.msra.mxu0 %v360
    %480 = vmatprep.subr.bf16.mxu0 0
    %481 = vmatpush1.bf16.msra.mxu0 %v361
    %482 = vmatprep.mubr.bf16.mxu0 %v88
    %483 = vmatmul.mubr.bf16.gmra.mrb[0].mxu0 %v87
    %v484 = vpop.f32.mrb[0].mxu0
    %v485 = vadd.f32 %v445, %v484
    %v486 = vpop.f32.mrb[0].mxu0
    %v487 = vpop.f32.mrb[0].mxu0
    %v488 = vpop.f32.mrb[0].mxu0
    %489 = vdwg.mxu0
    %490 = vmatprep.subr.bf16.mxu0 0
    %491 = vmatpush1.bf16.msra.mxu0 %v362
    %492 = vmatprep.subr.bf16.mxu0 0
    %493 = vmatpush1.bf16.msra.mxu0 %v363
    %494 = vmatprep.subr.bf16.mxu0 0
    %495 = vmatpush1.bf16.msra.mxu0 %v364
    %496 = vmatprep.subr.bf16.mxu0 0
    %497 = vmatpush1.bf16.msra.mxu0 %v365
    %498 = vmatprep.subr.bf16.mxu0 0
    %499 = vmatpush1.bf16.msra.mxu0 %v366
    %500 = vmatprep.subr.bf16.mxu0 0
    %501 = vmatpush1.bf16.msra.mxu0 %v367
    %502 = vmatprep.subr.bf16.mxu0 0
    %503 = vmatpush1.bf16.msra.mxu0 %v368
    %504 = vmatprep.subr.bf16.mxu0 0
    %505 = vmatpush1.bf16.msra.mxu0 %v369
    %506 = vmatprep.subr.bf16.mxu0 0
    %507 = vmatpush1.bf16.msra.mxu0 0
    %508 = vmatprep.subr.bf16.mxu0 0
    %509 = vmatpush1.bf16.msra.mxu0 0
    %510 = vmatprep.subr.bf16.mxu0 0
    %511 = vmatpush1.bf16.msra.mxu0 0
    %512 = vmatprep.subr.bf16.mxu0 0
    %513 = vmatpush1.bf16.msra.mxu0 0
    %514 = vmatprep.subr.bf16.mxu0 0
    %515 = vmatpush1.bf16.msra.mxu0 0
    %516 = vmatprep.subr.bf16.mxu0 0
    %517 = vmatpush1.bf16.msra.mxu0 0
    %518 = vmatprep.subr.bf16.mxu0 0
    %519 = vmatpush1.bf16.msra.mxu0 0
    %520 = vmatprep.subr.bf16.mxu0 0
    %521 = vmatpush1.bf16.msra.mxu0 0
    %522 = vmatprep.mubr.bf16.mxu0 0
    %523 = vmatmul.mubr.bf16.gmra.mrb[0].mxu0 %v89
    %v524 = vpop.f32.mrb[0].mxu0
    %v525 = vadd.f32 %v485, %v524
    %v526 = vpop.f32.mrb[0].mxu0
    %v527 = vpop.f32.mrb[0].mxu0
    %v528 = vpop.f32.mrb[0].mxu0
    %529 = vdwg.mxu0
    %v530 = vld [vmem:[%s2] sm:$0xff]
    %v531 = vld [vmem:[%s2 + $0x8] sm:$0x3]
    %v532 = vld [vmem:[%s3] sm:$0xff]
    %v533 = vld [vmem:[%s3 + $0x8] sm:$0x3]
    %vm534 = vcmask 64512
    %v536 = vsel %vm534, %v530, 0
    %v539 = vsel %vm534, %v531, 0
    %541 = vmatprep.subr.mxu0 0.0
    %542 = vmatpush1.msra.mxu0 %v525
    %543 = vmatprep.subr.mxu0 0.0
    %544 = vmatpush1.msra.mxu0 0.0
    %545 = vmatprep.subr.mxu0 0.0
    %546 = vmatpush1.msra.mxu0 0.0
    %547 = vmatprep.subr.mxu0 0.0
    %548 = vmatpush1.msra.mxu0 0.0
    %549 = vmatprep.subr.mxu0 0.0
    %550 = vmatpush1.msra.mxu0 0.0
    %551 = vmatprep.subr.mxu0 0.0
    %552 = vmatpush1.msra.mxu0 0.0
    %553 = vmatprep.subr.mxu0 0.0
    %554 = vmatpush1.msra.mxu0 0.0
    %555 = vmatprep.subr.mxu0 0.0
    %556 = vmatpush1.msra.mxu0 0.0
    %557 = vmatprep.subr.mxu0 0.0
    %558 = vmatpush1.msra.mxu0 0.0
    %559 = vmatprep.subr.mxu0 0.0
    %560 = vmatpush1.msra.mxu0 0.0
    %561 = vmatprep.subr.mxu0 0.0
    %562 = vmatpush1.msra.mxu0 0.0
    %563 = vmatprep.subr.mxu0 0.0
    %564 = vmatpush1.msra.mxu0 0.0
    %565 = vmatprep.subr.mxu0 0.0
    %566 = vmatpush1.msra.mxu0 0.0
    %567 = vmatprep.subr.mxu0 0.0
    %568 = vmatpush1.msra.mxu0 0.0
    %569 = vmatprep.subr.mxu0 0.0
    %570 = vmatpush1.msra.mxu0 0.0
    %571 = vmatprep.subr.mxu0 0.0
    %572 = vmatpush1.msra.mxu0 0.0
    %573 = vmatprep.subr.mxu0 0.0
    %574 = vmatpush1.msra.mxu0 0.0
    %575 = vmatprep.subr.mxu0 0.0
    %576 = vmatpush1.msra.mxu0 0.0
    %577 = vmatprep.subr.mxu0 0.0
    %578 = vmatpush1.msra.mxu0 0.0
    %579 = vmatprep.subr.mxu0 0.0
    %580 = vmatpush1.msra.mxu0 0.0
    %581 = vmatprep.subr.mxu0 0.0
    %582 = vmatpush1.msra.mxu0 0.0
    %583 = vmatprep.subr.mxu0 0.0
    %584 = vmatpush1.msra.mxu0 0.0
    %585 = vmatprep.subr.mxu0 0.0
    %586 = vmatpush1.msra.mxu0 0.0
    %587 = vmatprep.subr.mxu0 0.0
    %588 = vmatpush1.msra.mxu0 0.0
    %589 = vmatprep.subr.mxu0 0.0
    %590 = vmatpush1.msra.mxu0 0.0
    %591 = vmatprep.subr.mxu0 0.0
    %592 = vmatpush1.msra.mxu0 0.0
    %593 = vmatprep.subr.mxu0 0.0
    %594 = vmatpush1.msra.mxu0 0.0
    %595 = vmatprep.subr.mxu0 0.0
    %596 = vmatpush1.msra.mxu0 0.0
    %597 = vmatprep.subr.mxu0 0.0
    %598 = vmatpush1.msra.mxu0 0.0
    %599 = vmatprep.subr.mxu0 0.0
    %600 = vmatpush1.msra.mxu0 0.0
    %601 = vmatprep.subr.mxu0 0.0
    %602 = vmatpush1.msra.mxu0 0.0
    %603 = vmatprep.subr.mxu0 0.0
    %604 = vmatpush1.msra.mxu0 0.0
    %605 = vmatprep.mubr.f32.mxu0 0.0
    %606 = vmatmul.mubr.f32.gmra.mrb[0].mxu0 %v536
    %v607 = vpop.f32.mrb[0].mxu0
    %v608 = vadd.f32 %v532, %v607
    %v609 = vpop.f32.mrb[0].mxu0
    %610 = vmatprep.mubr.f32.mxu0 0.0
    %611 = vmatmul.mubr.f32.gmra.mrb[0].mxu0 %v539
    %v612 = vpop.f32.mrb[0].mxu0
    %v613 = vadd.f32 %v533, %v612
    %v614 = vpop.f32.mrb[0].mxu0
    %615 = vdwg.mxu0
    %v616 = vld [vmem:[%s10] sm:$0xff]
    %617 = vadd.xlane.f32.xlu0 %v608
    %v618 = vpop.xlane.xlu0 %617
    %vm619 = vcmask 1041408
    %v620 = vsel %vm619, %v613, 0.0
    %621 = vadd.xlane.f32.xlu0 %v620
    %v622 = vpop.xlane.xlu0 %621
    %v623 = vrcp.pop 128.0
    %v624 = vmul.f32 %v618, %v623
    %v625 = vmul.f32 %v622, %v623
    %v626 = vsub.f32 %v608, %v624
    %v627 = vsub.f32 %v613, %v625
    %v628 = vmul.f32 %v626, %v626
    %v629 = vmul.f32 %v627, %v627
    %630 = vadd.xlane.f32.xlu0 %v628
    %v631 = vpop.xlane.xlu0 %630
    %v632 = vsel %vm619, %v629, 0.0
    %633 = vadd.xlane.f32.xlu0 %v632
    %v634 = vpop.xlane.xlu0 %633
    %v635 = vmul.f32 %v631, %v623
    %v636 = vmul.f32 %v634, %v623
    %v637 = vadd.f32 %v635, 1e-06
    %v638 = vadd.f32 %v636, 1e-06
    %v639 = vrsqrt.pop %v637
    %v640 = vrsqrt.pop %v638
    %v641 = vmul.f32 %v626, %v639
    %v642 = vmul.f32 %v627, %v640
    %v643 = vlaneseq
    %v644 = vshrl.u32 %v643, 7
    %v645 = vsub.s32 0, %v644
    %v646 = vrot.slane %v616, %v645
    %v647 = vmul.f32 %v641, %v646
    %v648 = vmul.f32 %v642, %v646
    %v649 = vlaneseq
    %v650 = vshrl.u32 %v649, 7
    %v651 = vsub.s32 1, %v650
    %v652 = vrot.slane %v616, %v651
    %v653 = vadd.f32 %v647, %v652
    %v654 = vadd.f32 %v648, %v652
    %v655 = vpack.c.bf16 %v654, %v653
    %v656 = vld [vmem:[%s4] sm:$0xff]
    %v657 = vld [vmem:[%s4 + $0x8] sm:$0xf]
    %v658 = vld [vmem:[%s4 + $0xc] sm:$0xff]
    %v659 = vld [vmem:[%s4 + $0x14] sm:$0xf]
    %v660 = vld [vmem:[%s4 + $0x18] sm:$0xff]
    %v661 = vld [vmem:[%s4 + $0x20] sm:$0xf]
    %v662 = vld [vmem:[%s4 + $0x24] sm:$0xff]
    %v663 = vld [vmem:[%s4 + $0x2c] sm:$0xf]
    %v664 = vld [vmem:[%s4 + $0x30] sm:$0xff]
    %v665 = vld [vmem:[%s4 + $0x38] sm:$0xf]
    %v666 = vld [vmem:[%s4 + $0x3c] sm:$0xff]
    %v667 = vld [vmem:[%s4 + $0x44] sm:$0xf]
    %v668 = vld [vmem:[%s4 + $0x48] sm:$0xff]
    %v669 = vld [vmem:[%s4 + $0x50] sm:$0xf]
    %v670 = vld [vmem:[%s4 + $0x54] sm:$0xff]
    %v671 = vld [vmem:[%s4 + $0x5c] sm:$0xf]
    %v672 = vld [vmem:[%s4 + $0x60] sm:$0xff]
    %v673 = vld [vmem:[%s4 + $0x68] sm:$0xf]
    %v674 = vld [vmem:[%s4 + $0x6c] sm:$0xff]
    %v675 = vld [vmem:[%s4 + $0x74] sm:$0xf]
    %v676 = vld [vmem:[%s4 + $0x78] sm:$0xff]
    %v677 = vld [vmem:[%s4 + $0x80] sm:$0xf]
    %v678 = vld [vmem:[%s4 + $0x84] sm:$0xff]
    %v679 = vld [vmem:[%s4 + $0x8c] sm:$0xf]
    %v680 = vld [vmem:[%s4 + $0x90] sm:$0xff]
    %v681 = vld [vmem:[%s4 + $0x98] sm:$0xf]
    %v682 = vld [vmem:[%s4 + $0x9c] sm:$0xff]
    %v683 = vld [vmem:[%s4 + $0xa4] sm:$0xf]
    %v684 = vld [vmem:[%s4 + $0xa8] sm:$0xff]
    %v685 = vld [vmem:[%s4 + $0xb0] sm:$0xf]
    %v686 = vld [vmem:[%s4 + $0xb4] sm:$0xff]
    %v687 = vld [vmem:[%s4 + $0xbc] sm:$0xf]
    %v688 = vld [vmem:[#allocation2] sm:$0x7]
    %v690 = vlaneseq
    %v691 = vshrl.u32 %v690, 7
    %v692 = vsub.s32 0, %v691
    %v693 = vrot.slane %v688, %v692
    %v694 = vlaneseq
    %v695 = vshrl.u32 %v694, 7
    %v696 = vsub.s32 1, %v695
    %v697 = vrot.slane %v688, %v696
    %v698 = vlaneseq
    %v699 = vshrl.u32 %v698, 7
    %v700 = vsub.s32 2, %v699
    %v701 = vrot.slane %v688, %v700
    %v737 = vunpack.c.l.b16 %v656
    %v738 = vunpack.c.h.b16 %v656
    %v739 = vunpack.c.l.b16 %v657
    %v740 = vunpack.c.l.b16 %v658
    %v741 = vunpack.c.h.b16 %v658
    %v742 = vunpack.c.l.b16 %v659
    %v743 = vunpack.c.l.b16 %v660
    %v744 = vunpack.c.h.b16 %v660
    %v745 = vunpack.c.l.b16 %v661
    %v746 = vunpack.c.l.b16 %v662
    %v747 = vunpack.c.h.b16 %v662
    %v748 = vunpack.c.l.b16 %v663
    %v749 = vunpack.c.l.b16 %v664
    %v750 = vunpack.c.h.b16 %v664
    %v751 = vunpack.c.l.b16 %v665
    %v752 = vunpack.c.l.b16 %v666
    %v753 = vunpack.c.h.b16 %v666
    %v754 = vunpack.c.l.b16 %v667
    %v755 = vunpack.c.l.b16 %v668
    %v756 = vunpack.c.h.b16 %v668
    %v757 = vunpack.c.l.b16 %v669
    %v758 = vunpack.c.l.b16 %v670
    %v759 = vunpack.c.h.b16 %v670
    %v760 = vunpack.c.l.b16 %v671
    %v761 = vunpack.c.l.b16 %v672
    %v762 = vunpack.c.h.b16 %v672
    %v763 = vunpack.c.l.b16 %v673
    %v764 = vunpack.c.l.b16 %v674
    %v765 = vunpack.c.h.b16 %v674
    %v766 = vunpack.c.l.b16 %v675
    %v767 = vunpack.c.l.b16 %v676
    %v768 = vunpack.c.h.b16 %v676
    %v769 = vunpack.c.l.b16 %v677
    %v770 = vunpack.c.l.b16 %v678
    %v771 = vunpack.c.h.b16 %v678
    %v772 = vunpack.c.l.b16 %v679
    %v773 = vunpack.c.l.b16 %v680
    %v774 = vunpack.c.h.b16 %v680
    %v775 = vunpack.c.l.b16 %v681
    %v776 = vunpack.c.l.b16 %v682
    %v777 = vunpack.c.h.b16 %v682
    %v778 = vunpack.c.l.b16 %v683
    %v779 = vunpack.c.l.b16 %v684
    %v780 = vunpack.c.h.b16 %v684
    %v781 = vunpack.c.l.b16 %v685
    %v782 = vunpack.c.l.b16 %v686
    %v783 = vunpack.c.h.b16 %v686
    %v784 = vunpack.c.l.b16 %v687
    %v785 = vpack.c.b16 %v740, %v737
    %v786 = vpack.c.b16 %v741, %v738
    %v787 = vpack.c.b16 %v742, %v739
    %v788 = vpack.c.b16 %v746, %v743
    %v789 = vpack.c.b16 %v747, %v744
    %v790 = vpack.c.b16 %v748, %v745
    %v791 = vpack.c.b16 %v752, %v749
    %v792 = vpack.c.b16 %v753, %v750
    %v793 = vpack.c.b16 %v754, %v751
    %v794 = vpack.c.b16 %v758, %v755
    %v795 = vpack.c.b16 %v759, %v756
    %v796 = vpack.c.b16 %v760, %v757
    %v797 = vpack.c.b16 %v764, %v761
    %v798 = vpack.c.b16 %v765, %v762
    %v799 = vpack.c.b16 %v766, %v763
    %v800 = vpack.c.b16 %v770, %v767
    %v801 = vpack.c.b16 %v771, %v768
    %v802 = vpack.c.b16 %v772, %v769
    %v803 = vpack.c.b16 %v776, %v773
    %v804 = vpack.c.b16 %v777, %v774
    %v805 = vpack.c.b16 %v778, %v775
    %v806 = vpack.c.b16 %v782, %v779
    %v807 = vpack.c.b16 %v783, %v780
    %v808 = vpack.c.b16 %v784, %v781
    %833 = vmatprep.subr.bf16.mxu0 %v786
    %834 = vmatpush1.bf16.msra.mxu0 %v785
    %835 = vmatprep.subr.bf16.mxu0 %v789
    %836 = vmatpush1.bf16.msra.mxu0 %v788
    %837 = vmatprep.subr.bf16.mxu0 %v792
    %838 = vmatpush1.bf16.msra.mxu0 %v791
    %839 = vmatprep.subr.bf16.mxu0 %v795
    %840 = vmatpush1.bf16.msra.mxu0 %v794
    %841 = vmatprep.subr.bf16.mxu0 %v798
    %842 = vmatpush1.bf16.msra.mxu0 %v797
    %843 = vmatprep.subr.bf16.mxu0 %v801
    %844 = vmatpush1.bf16.msra.mxu0 %v800
    %845 = vmatprep.subr.bf16.mxu0 %v804
    %846 = vmatpush1.bf16.msra.mxu0 %v803
    %847 = vmatprep.subr.bf16.mxu0 %v807
    %848 = vmatpush1.bf16.msra.mxu0 %v806
    %849 = vmatprep.subr.bf16.mxu0 0
    %850 = vmatpush1.bf16.msra.mxu0 0
    %851 = vmatprep.subr.bf16.mxu0 0
    %852 = vmatpush1.bf16.msra.mxu0 0
    %853 = vmatprep.subr.bf16.mxu0 0
    %854 = vmatpush1.bf16.msra.mxu0 0
    %855 = vmatprep.subr.bf16.mxu0 0
    %856 = vmatpush1.bf16.msra.mxu0 0
    %857 = vmatprep.subr.bf16.mxu0 0
    %858 = vmatpush1.bf16.msra.mxu0 0
    %859 = vmatprep.subr.bf16.mxu0 0
    %860 = vmatpush1.bf16.msra.mxu0 0
    %861 = vmatprep.subr.bf16.mxu0 0
    %862 = vmatpush1.bf16.msra.mxu0 0
    %863 = vmatprep.subr.bf16.mxu0 0
    %864 = vmatpush1.bf16.msra.mxu0 0
    %865 = vmatprep.mubr.bf16.mxu0 0
    %866 = vmatmul.mubr.bf16.gmra.mrb[0].mxu0 %v655
    %v867 = vpop.f32.mrb[0].mxu0
    %v868 = vadd.f32 %v693, %v867
    %v869 = vpop.f32.mrb[0].mxu0
    %v870 = vadd.f32 %v697, %v869
    %v871 = vpop.f32.mrb[0].mxu0
    %v872 = vadd.f32 %v693, %v871
    %v873 = vpop.f32.mrb[0].mxu0
    %v874 = vadd.f32 %v697, %v873
    %875 = vdwg.mxu0
    %876 = vmatprep.subr.bf16.mxu0 0
    %877 = vmatpush1.bf16.msra.mxu0 %v787
    %878 = vmatprep.subr.bf16.mxu0 0
    %879 = vmatpush1.bf16.msra.mxu0 %v790
    %880 = vmatprep.subr.bf16.mxu0 0
    %881 = vmatpush1.bf16.msra.mxu0 %v793
    %882 = vmatprep.subr.bf16.mxu0 0
    %883 = vmatpush1.bf16.msra.mxu0 %v796
    %884 = vmatprep.subr.bf16.mxu0 0
    %885 = vmatpush1.bf16.msra.mxu0 %v799
    %886 = vmatprep.subr.bf16.mxu0 0
    %887 = vmatpush1.bf16.msra.mxu0 %v802
    %888 = vmatprep.subr.bf16.mxu0 0
    %889 = vmatpush1.bf16.msra.mxu0 %v805
    %890 = vmatprep.subr.bf16.mxu0 0
    %891 = vmatpush1.bf16.msra.mxu0 %v808
    %892 = vmatprep.subr.bf16.mxu0 0
    %893 = vmatpush1.bf16.msra.mxu0 0
    %894 = vmatprep.subr.bf16.mxu0 0
    %895 = vmatpush1.bf16.msra.mxu0 0
    %896 = vmatprep.subr.bf16.mxu0 0
    %897 = vmatpush1.bf16.msra.mxu0 0
    %898 = vmatprep.subr.bf16.mxu0 0
    %899 = vmatpush1.bf16.msra.mxu0 0
    %900 = vmatprep.subr.bf16.mxu0 0
    %901 = vmatpush1.bf16.msra.mxu0 0
    %902 = vmatprep.subr.bf16.mxu0 0
    %903 = vmatpush1.bf16.msra.mxu0 0
    %904 = vmatprep.subr.bf16.mxu0 0
    %905 = vmatpush1.bf16.msra.mxu0 0
    %906 = vmatprep.subr.bf16.mxu0 0
    %907 = vmatpush1.bf16.msra.mxu0 0
    %908 = vmatprep.mubr.bf16.mxu0 0
    %909 = vmatmul.mubr.bf16.gmra.mrb[0].mxu0 %v655
    %v910 = vpop.f32.mrb[0].mxu0
    %v911 = vadd.f32 %v701, %v910
    %v912 = vpop.f32.mrb[0].mxu0
    %v913 = vpop.f32.mrb[0].mxu0
    %v914 = vadd.f32 %v701, %v913
    %v915 = vpop.f32.mrb[0].mxu0
    %916 = vdwg.mxu0
    %918 = vrot.lane.b32.xlu0 %v868, 96
    %v919 = vpop.permute.xlu0 %918
    %vm920 = vcmask 261120
    %v921 = vsel %vm920, %v868, 0
    %v923 = vsel %vm920, %v919, 0
    %925 = vmatprep.subr.mxu0 0.0
    %926 = vmatpush1.xpose.msra.mxu0 %v923
    %927 = vmatprep.subr.mxu0 0.0
    %928 = vmatpush1.xpose.msra.mxu0 0.0
    %929 = vmatprep.subr.mxu0 0.0
    %930 = vmatpush1.xpose.msra.mxu0 0.0
    %931 = vmatprep.subr.mxu0 0.0
    %932 = vmatpush1.xpose.msra.mxu0 0.0
    %933 = vmatprep.subr.mxu0 0.0
    %934 = vmatpush1.xpose.msra.mxu0 0.0
    %935 = vmatprep.subr.mxu0 0.0
    %936 = vmatpush1.xpose.msra.mxu0 0.0
    %937 = vmatprep.subr.mxu0 0.0
    %938 = vmatpush1.xpose.msra.mxu0 0.0
    %939 = vmatprep.subr.mxu0 0.0
    %940 = vmatpush1.xpose.msra.mxu0 0.0
    %941 = vmatprep.subr.mxu0 0.0
    %942 = vmatpush1.xpose.msra.mxu0 0.0
    %943 = vmatprep.subr.mxu0 0.0
    %944 = vmatpush1.xpose.msra.mxu0 0.0
    %945 = vmatprep.subr.mxu0 0.0
    %946 = vmatpush1.xpose.msra.mxu0 0.0
    %947 = vmatprep.subr.mxu0 0.0
    %948 = vmatpush1.xpose.msra.mxu0 0.0
    %949 = vmatprep.subr.mxu0 0.0
    %950 = vmatpush1.xpose.msra.mxu0 0.0
    %951 = vmatprep.subr.mxu0 0.0
    %952 = vmatpush1.xpose.msra.mxu0 0.0
    %953 = vmatprep.subr.mxu0 0.0
    %954 = vmatpush1.xpose.msra.mxu0 0.0
    %955 = vmatprep.subr.mxu0 0.0
    %956 = vmatpush1.xpose.msra.mxu0 0.0
    %957 = vmatprep.subr.mxu0 0.0
    %958 = vmatpush1.xpose.msra.mxu0 0.0
    %959 = vmatprep.subr.mxu0 0.0
    %960 = vmatpush1.xpose.msra.mxu0 0.0
    %961 = vmatprep.subr.mxu0 0.0
    %962 = vmatpush1.xpose.msra.mxu0 0.0
    %963 = vmatprep.subr.mxu0 0.0
    %964 = vmatpush1.xpose.msra.mxu0 0.0
    %965 = vmatprep.subr.mxu0 0.0
    %966 = vmatpush1.xpose.msra.mxu0 0.0
    %967 = vmatprep.subr.mxu0 0.0
    %968 = vmatpush1.xpose.msra.mxu0 0.0
    %969 = vmatprep.subr.mxu0 0.0
    %970 = vmatpush1.xpose.msra.mxu0 0.0
    %971 = vmatprep.subr.mxu0 0.0
    %972 = vmatpush1.xpose.msra.mxu0 0.0
    %973 = vmatprep.subr.mxu0 0.0
    %974 = vmatpush1.xpose.msra.mxu0 0.0
    %975 = vmatprep.subr.mxu0 0.0
    %976 = vmatpush1.xpose.msra.mxu0 0.0
    %977 = vmatprep.subr.mxu0 0.0
    %978 = vmatpush1.xpose.msra.mxu0 0.0
    %979 = vmatprep.subr.mxu0 0.0
    %980 = vmatpush1.xpose.msra.mxu0 0.0
    %981 = vmatprep.subr.mxu0 0.0
    %982 = vmatpush1.xpose.msra.mxu0 0.0
    %983 = vmatprep.subr.mxu0 0.0
    %984 = vmatpush1.xpose.msra.mxu0 0.0
    %985 = vmatprep.subr.mxu0 0.0
    %986 = vmatpush1.xpose.msra.mxu0 0.0
    %987 = vmatprep.subr.mxu0 0.0
    %988 = vmatpush1.xpose.msra.mxu0 0.0
    %989 = vmatprep.mubr.f32.mxu0 0.0
    %990 = vmatmul.mubr.f32.gmra.mrb[0].mxu0 %v921
    %v991 = vpop.f32.mrb[0].mxu0
    %v992 = vadd.f32 0.0, %v991
    %v993 = vpop.f32.mrb[0].mxu0
    %994 = vdwg.mxu0
    %v995 = vmul.f32 %v992, 0.17677669
    %vm996 = vcmask 36864
    %v997 = vsel %vm996, %v995, -inf
    %998 = vmax.xlane.f32.xlu0 %v997
    %v999 = vpop.xlane.xlu0 %998
    %v1000 = vsub.f32 %v995, %v999
    %v1001 = vmul.f32 %v1000, 1.442695
    %v1002 = vpow.pop %v1001
    %v1003 = vsel %vm996, %v1002, 0.0
    %1004 = vadd.xlane.f32.xlu0 %v1003
    %v1005 = vpop.xlane.xlu0 %1004
    %v1006 = vrcp.pop %v1005
    %v1007 = vmul.f32 %v1002, %v1006
    %1008 = vrot.lane.b32.xlu0 %v868, 64
    %v1009 = vpop.permute.xlu0 %1008
    %vm1010 = vcmask 39936
    %v1012 = vsel %vm1010, %v1007, 0
    %vm1014 = vcmask 1044480
    %v1015 = vsel %vm1014, %v1009, 0
    %1017 = vmatprep.subr.mxu0 0.0
    %1018 = vmatpush1.msra.mxu0 %v1015
    %1019 = vmatprep.subr.mxu0 0.0
    %1020 = vmatpush1.msra.mxu0 0.0
    %1021 = vmatprep.subr.mxu0 0.0
    %1022 = vmatpush1.msra.mxu0 0.0
    %1023 = vmatprep.subr.mxu0 0.0
    %1024 = vmatpush1.msra.mxu0 0.0
    %1025 = vmatprep.subr.mxu0 0.0
    %1026 = vmatpush1.msra.mxu0 0.0
    %1027 = vmatprep.subr.mxu0 0.0
    %1028 = vmatpush1.msra.mxu0 0.0
    %1029 = vmatprep.subr.mxu0 0.0
    %1030 = vmatpush1.msra.mxu0 0.0
    %1031 = vmatprep.subr.mxu0 0.0
    %1032 = vmatpush1.msra.mxu0 0.0
    %1033 = vmatprep.subr.mxu0 0.0
    %1034 = vmatpush1.msra.mxu0 0.0
    %1035 = vmatprep.subr.mxu0 0.0
    %1036 = vmatpush1.msra.mxu0 0.0
    %1037 = vmatprep.subr.mxu0 0.0
    %1038 = vmatpush1.msra.mxu0 0.0
    %1039 = vmatprep.subr.mxu0 0.0
    %1040 = vmatpush1.msra.mxu0 0.0
    %1041 = vmatprep.subr.mxu0 0.0
    %1042 = vmatpush1.msra.mxu0 0.0
    %1043 = vmatprep.subr.mxu0 0.0
    %1044 = vmatpush1.msra.mxu0 0.0
    %1045 = vmatprep.subr.mxu0 0.0
    %1046 = vmatpush1.msra.mxu0 0.0
    %1047 = vmatprep.subr.mxu0 0.0
    %1048 = vmatpush1.msra.mxu0 0.0
    %1049 = vmatprep.subr.mxu0 0.0
    %1050 = vmatpush1.msra.mxu0 0.0
    %1051 = vmatprep.subr.mxu0 0.0
    %1052 = vmatpush1.msra.mxu0 0.0
    %1053 = vmatprep.subr.mxu0 0.0
    %1054 = vmatpush1.msra.mxu0 0.0
    %1055 = vmatprep.subr.mxu0 0.0
    %1056 = vmatpush1.msra.mxu0 0.0
    %1057 = vmatprep.subr.mxu0 0.0
    %1058 = vmatpush1.msra.mxu0 0.0
    %1059 = vmatprep.subr.mxu0 0.0
    %1060 = vmatpush1.msra.mxu0 0.0
    %1061 = vmatprep.subr.mxu0 0.0
    %1062 = vmatpush1.msra.mxu0 0.0
    %1063 = vmatprep.subr.mxu0 0.0
    %1064 = vmatpush1.msra.mxu0 0.0
    %1065 = vmatprep.subr.mxu0 0.0
    %1066 = vmatpush1.msra.mxu0 0.0
    %1067 = vmatprep.subr.mxu0 0.0
    %1068 = vmatpush1.msra.mxu0 0.0
    %1069 = vmatprep.subr.mxu0 0.0
    %1070 = vmatpush1.msra.mxu0 0.0
    %1071 = vmatprep.subr.mxu0 0.0
    %1072 = vmatpush1.msra.mxu0 0.0
    %1073 = vmatprep.subr.mxu0 0.0
    %1074 = vmatpush1.msra.mxu0 0.0
    %1075 = vmatprep.subr.mxu0 0.0
    %1076 = vmatpush1.msra.mxu0 0.0
    %1077 = vmatprep.subr.mxu0 0.0
    %1078 = vmatpush1.msra.mxu0 0.0
    %1079 = vmatprep.subr.mxu0 0.0
    %1080 = vmatpush1.msra.mxu0 0.0
    %1081 = vmatprep.mubr.f32.mxu0 0.0
    %1082 = vmatmul.mubr.f32.gmra.mrb[0].mxu0 %v1012
    %v1083 = vpop.f32.mrb[0].mxu0
    %v1084 = vadd.f32 0.0, %v1083
    %v1085 = vpop.f32.mrb[0].mxu0
    %1086 = vdwg.mxu0
    %1087 = vrot.lane.b32.xlu0 %v868, 32
    %v1088 = vpop.permute.xlu0 %1087
    %v1089 = vsel %vm920, %v1088, 0
    %v1092 = vsel %vm920, %v870, 0
    %1094 = vmatprep.subr.mxu0 0.0
    %1095 = vmatpush1.xpose.msra.mxu0 %v1092
    %1096 = vmatprep.subr.mxu0 0.0
    %1097 = vmatpush1.xpose.msra.mxu0 0.0
    %1098 = vmatprep.subr.mxu0 0.0
    %1099 = vmatpush1.xpose.msra.mxu0 0.0
    %1100 = vmatprep.subr.mxu0 0.0
    %1101 = vmatpush1.xpose.msra.mxu0 0.0
    %1102 = vmatprep.subr.mxu0 0.0
    %1103 = vmatpush1.xpose.msra.mxu0 0.0
    %1104 = vmatprep.subr.mxu0 0.0
    %1105 = vmatpush1.xpose.msra.mxu0 0.0
    %1106 = vmatprep.subr.mxu0 0.0
    %1107 = vmatpush1.xpose.msra.mxu0 0.0
    %1108 = vmatprep.subr.mxu0 0.0
    %1109 = vmatpush1.xpose.msra.mxu0 0.0
    %1110 = vmatprep.subr.mxu0 0.0
    %1111 = vmatpush1.xpose.msra.mxu0 0.0
    %1112 = vmatprep.subr.mxu0 0.0
    %1113 = vmatpush1.xpose.msra.mxu0 0.0
    %1114 = vmatprep.subr.mxu0 0.0
    %1115 = vmatpush1.xpose.msra.mxu0 0.0
    %1116 = vmatprep.subr.mxu0 0.0
    %1117 = vmatpush1.xpose.msra.mxu0 0.0
    %1118 = vmatprep.subr.mxu0 0.0
    %1119 = vmatpush1.xpose.msra.mxu0 0.0
    %1120 = vmatprep.subr.mxu0 0.0
    %1121 = vmatpush1.xpose.msra.mxu0 0.0
    %1122 = vmatprep.subr.mxu0 0.0
    %1123 = vmatpush1.xpose.msra.mxu0 0.0
    %1124 = vmatprep.subr.mxu0 0.0
    %1125 = vmatpush1.xpose.msra.mxu0 0.0
    %1126 = vmatprep.subr.mxu0 0.0
    %1127 = vmatpush1.xpose.msra.mxu0 0.0
    %1128 = vmatprep.subr.mxu0 0.0
    %1129 = vmatpush1.xpose.msra.mxu0 0.0
    %1130 = vmatprep.subr.mxu0 0.0
    %1131 = vmatpush1.xpose.msra.mxu0 0.0
    %1132 = vmatprep.subr.mxu0 0.0
    %1133 = vmatpush1.xpose.msra.mxu0 0.0
    %1134 = vmatprep.subr.mxu0 0.0
    %1135 = vmatpush1.xpose.msra.mxu0 0.0
    %1136 = vmatprep.subr.mxu0 0.0
    %1137 = vmatpush1.xpose.msra.mxu0 0.0
    %1138 = vmatprep.subr.mxu0 0.0
    %1139 = vmatpush1.xpose.msra.mxu0 0.0
    %1140 = vmatprep.subr.mxu0 0.0
    %1141 = vmatpush1.xpose.msra.mxu0 0.0
    %1142 = vmatprep.subr.mxu0 0.0
    %1143 = vmatpush1.xpose.msra.mxu0 0.0
    %1144 = vmatprep.subr.mxu0 0.0
    %1145 = vmatpush1.xpose.msra.mxu0 0.0
    %1146 = vmatprep.subr.mxu0 0.0
    %1147 = vmatpush1.xpose.msra.mxu0 0.0
    %1148 = vmatprep.subr.mxu0 0.0
    %1149 = vmatpush1.xpose.msra.mxu0 0.0
    %1150 = vmatprep.subr.mxu0 0.0
    %1151 = vmatpush1.xpose.msra.mxu0 0.0
    %1152 = vmatprep.subr.mxu0 0.0
    %1153 = vmatpush1.xpose.msra.mxu0 0.0
    %1154 = vmatprep.subr.mxu0 0.0
    %1155 = vmatpush1.xpose.msra.mxu0 0.0
    %1156 = vmatprep.subr.mxu0 0.0
    %1157 = vmatpush1.xpose.msra.mxu0 0.0
    %1158 = vmatprep.mubr.f32.mxu0 0.0
    %1159 = vmatmul.mubr.f32.gmra.mrb[0].mxu0 %v1089
    %v1160 = vpop.f32.mrb[0].mxu0
    %v1161 = vadd.f32 0.0, %v1160
    %v1162 = vpop.f32.mrb[0].mxu0
    %1163 = vdwg.mxu0
    %v1164 = vmul.f32 %v1161, 0.17677669
    %v1165 = vsel %vm996, %v1164, -inf
    %1166 = vmax.xlane.f32.xlu0 %v1165
    %v1167 = vpop.xlane.xlu0 %1166
    %v1168 = vsub.f32 %v1164, %v1167
    %v1169 = vmul.f32 %v1168, 1.442695
    %v1170 = vpow.pop %v1169
    %v1171 = vsel %vm996, %v1170, 0.0
    %1172 = vadd.xlane.f32.xlu0 %v1171
    %v1173 = vpop.xlane.xlu0 %1172
    %v1174 = vrcp.pop %v1173
    %v1175 = vmul.f32 %v1170, %v1174
    %1176 = vrot.lane.b32.xlu0 %v870, 96
    %v1177 = vpop.permute.xlu0 %1176
    %v1179 = vsel %vm1010, %v1175, 0
    %v1181 = vsel %vm1014, %v1177, 0
    %1183 = vmatprep.subr.mxu0 0.0
    %1184 = vmatpush1.msra.mxu0 %v1181
    %1185 = vmatprep.subr.mxu0 0.0
    %1186 = vmatpush1.msra.mxu0 0.0
    %1187 = vmatprep.subr.mxu0 0.0
    %1188 = vmatpush1.msra.mxu0 0.0
    %1189 = vmatprep.subr.mxu0 0.0
    %1190 = vmatpush1.msra.mxu0 0.0
    %1191 = vmatprep.subr.mxu0 0.0
    %1192 = vmatpush1.msra.mxu0 0.0
    %1193 = vmatprep.subr.mxu0 0.0
    %1194 = vmatpush1.msra.mxu0 0.0
    %1195 = vmatprep.subr.mxu0 0.0
    %1196 = vmatpush1.msra.mxu0 0.0
    %1197 = vmatprep.subr.mxu0 0.0
    %1198 = vmatpush1.msra.mxu0 0.0
    %1199 = vmatprep.subr.mxu0 0.0
    %1200 = vmatpush1.msra.mxu0 0.0
    %1201 = vmatprep.subr.mxu0 0.0
    %1202 = vmatpush1.msra.mxu0 0.0
    %1203 = vmatprep.subr.mxu0 0.0
    %1204 = vmatpush1.msra.mxu0 0.0
    %1205 = vmatprep.subr.mxu0 0.0
    %1206 = vmatpush1.msra.mxu0 0.0
    %1207 = vmatprep.subr.mxu0 0.0
    %1208 = vmatpush1.msra.mxu0 0.0
    %1209 = vmatprep.subr.mxu0 0.0
    %1210 = vmatpush1.msra.mxu0 0.0
    %1211 = vmatprep.subr.mxu0 0.0
    %1212 = vmatpush1.msra.mxu0 0.0
    %1213 = vmatprep.subr.mxu0 0.0
    %1214 = vmatpush1.msra.mxu0 0.0
    %1215 = vmatprep.subr.mxu0 0.0
    %1216 = vmatpush1.msra.mxu0 0.0
    %1217 = vmatprep.subr.mxu0 0.0
    %1218 = vmatpush1.msra.mxu0 0.0
    %1219 = vmatprep.subr.mxu0 0.0
    %1220 = vmatpush1.msra.mxu0 0.0
    %1221 = vmatprep.subr.mxu0 0.0
    %1222 = vmatpush1.msra.mxu0 0.0
    %1223 = vmatprep.subr.mxu0 0.0
    %1224 = vmatpush1.msra.mxu0 0.0
    %1225 = vmatprep.subr.mxu0 0.0
    %1226 = vmatpush1.msra.mxu0 0.0
    %1227 = vmatprep.subr.mxu0 0.0
    %1228 = vmatpush1.msra.mxu0 0.0
    %1229 = vmatprep.subr.mxu0 0.0
    %1230 = vmatpush1.msra.mxu0 0.0
    %1231 = vmatprep.subr.mxu0 0.0
    %1232 = vmatpush1.msra.mxu0 0.0
    %1233 = vmatprep.subr.mxu0 0.0
    %1234 = vmatpush1.msra.mxu0 0.0
    %1235 = vmatprep.subr.mxu0 0.0
    %1236 = vmatpush1.msra.mxu0 0.0
    %1237 = vmatprep.subr.mxu0 0.0
    %1238 = vmatpush1.msra.mxu0 0.0
    %1239 = vmatprep.subr.mxu0 0.0
    %1240 = vmatpush1.msra.mxu0 0.0
    %1241 = vmatprep.subr.mxu0 0.0
    %1242 = vmatpush1.msra.mxu0 0.0
    %1243 = vmatprep.subr.mxu0 0.0
    %1244 = vmatpush1.msra.mxu0 0.0
    %1245 = vmatprep.subr.mxu0 0.0
    %1246 = vmatpush1.msra.mxu0 0.0
    %1247 = vmatprep.mubr.f32.mxu0 0.0
    %1248 = vmatmul.mubr.f32.gmra.mrb[0].mxu0 %v1179
    %v1249 = vpop.f32.mrb[0].mxu0
    %v1250 = vadd.f32 0.0, %v1249
    %v1251 = vpop.f32.mrb[0].mxu0
    %1252 = vdwg.mxu0
    %1253 = vrot.lane.b32.xlu0 %v870, 64
    %v1254 = vpop.permute.xlu0 %1253
    %1255 = vrot.lane.b32.xlu0 %v870, 32
    %v1256 = vpop.permute.xlu0 %1255
    %v1257 = vsel %vm920, %v1254, 0
    %v1259 = vsel %vm920, %v1256, 0
    %1261 = vmatprep.subr.mxu0 0.0
    %1262 = vmatpush1.xpose.msra.mxu0 %v1259
    %1263 = vmatprep.subr.mxu0 0.0
    %1264 = vmatpush1.xpose.msra.mxu0 0.0
    %1265 = vmatprep.subr.mxu0 0.0
    %1266 = vmatpush1.xpose.msra.mxu0 0.0
    %1267 = vmatprep.subr.mxu0 0.0
    %1268 = vmatpush1.xpose.msra.mxu0 0.0
    %1269 = vmatprep.subr.mxu0 0.0
    %1270 = vmatpush1.xpose.msra.mxu0 0.0
    %1271 = vmatprep.subr.mxu0 0.0
    %1272 = vmatpush1.xpose.msra.mxu0 0.0
    %1273 = vmatprep.subr.mxu0 0.0
    %1274 = vmatpush1.xpose.msra.mxu0 0.0
    %1275 = vmatprep.subr.mxu0 0.0
    %1276 = vmatpush1.xpose.msra.mxu0 0.0
    %1277 = vmatprep.subr.mxu0 0.0
    %1278 = vmatpush1.xpose.msra.mxu0 0.0
    %1279 = vmatprep.subr.mxu0 0.0
    %1280 = vmatpush1.xpose.msra.mxu0 0.0
    %1281 = vmatprep.subr.mxu0 0.0
    %1282 = vmatpush1.xpose.msra.mxu0 0.0
    %1283 = vmatprep.subr.mxu0 0.0
    %1284 = vmatpush1.xpose.msra.mxu0 0.0
    %1285 = vmatprep.subr.mxu0 0.0
    %1286 = vmatpush1.xpose.msra.mxu0 0.0
    %1287 = vmatprep.subr.mxu0 0.0
    %1288 = vmatpush1.xpose.msra.mxu0 0.0
    %1289 = vmatprep.subr.mxu0 0.0
    %1290 = vmatpush1.xpose.msra.mxu0 0.0
    %1291 = vmatprep.subr.mxu0 0.0
    %1292 = vmatpush1.xpose.msra.mxu0 0.0
    %1293 = vmatprep.subr.mxu0 0.0
    %1294 = vmatpush1.xpose.msra.mxu0 0.0
    %1295 = vmatprep.subr.mxu0 0.0
    %1296 = vmatpush1.xpose.msra.mxu0 0.0
    %1297 = vmatprep.subr.mxu0 0.0
    %1298 = vmatpush1.xpose.msra.mxu0 0.0
    %1299 = vmatprep.subr.mxu0 0.0
    %1300 = vmatpush1.xpose.msra.mxu0 0.0
    %1301 = vmatprep.subr.mxu0 0.0
    %1302 = vmatpush1.xpose.msra.mxu0 0.0
    %1303 = vmatprep.subr.mxu0 0.0
    %1304 = vmatpush1.xpose.msra.mxu0 0.0
    %1305 = vmatprep.subr.mxu0 0.0
    %1306 = vmatpush1.xpose.msra.mxu0 0.0
    %1307 = vmatprep.subr.mxu0 0.0
    %1308 = vmatpush1.xpose.msra.mxu0 0.0
    %1309 = vmatprep.subr.mxu0 0.0
    %1310 = vmatpush1.xpose.msra.mxu0 0.0
    %1311 = vmatprep.subr.mxu0 0.0
    %1312 = vmatpush1.xpose.msra.mxu0 0.0
    %1313 = vmatprep.subr.mxu0 0.0
    %1314 = vmatpush1.xpose.msra.mxu0 0.0
    %1315 = vmatprep.subr.mxu0 0.0
    %1316 = vmatpush1.xpose.msra.mxu0 0.0
    %1317 = vmatprep.subr.mxu0 0.0
    %1318 = vmatpush1.xpose.msra.mxu0 0.0
    %1319 = vmatprep.subr.mxu0 0.0
    %1320 = vmatpush1.xpose.msra.mxu0 0.0
    %1321 = vmatprep.subr.mxu0 0.0
    %1322 = vmatpush1.xpose.msra.mxu0 0.0
    %1323 = vmatprep.subr.mxu0 0.0
    %1324 = vmatpush1.xpose.msra.mxu0 0.0
    %1325 = vmatprep.mubr.f32.mxu0 0.0
    %1326 = vmatmul.mubr.f32.gmra.mrb[0].mxu0 %v1257
    %v1327 = vpop.f32.mrb[0].mxu0
    %v1328 = vadd.f32 0.0, %v1327
    %v1329 = vpop.f32.mrb[0].mxu0
    %1330 = vdwg.mxu0
    %v1331 = vmul.f32 %v1328, 0.17677669
    %v1332 = vsel %vm996, %v1331, -inf
    %1333 = vmax.xlane.f32.xlu0 %v1332
    %v1334 = vpop.xlane.xlu0 %1333
    %v1335 = vsub.f32 %v1331, %v1334
    %v1336 = vmul.f32 %v1335, 1.442695
    %v1337 = vpow.pop %v1336
    %v1338 = vsel %vm996, %v1337, 0.0
    %1339 = vadd.xlane.f32.xlu0 %v1338
    %v1340 = vpop.xlane.xlu0 %1339
    %v1341 = vrcp.pop %v1340
    %v1342 = vmul.f32 %v1337, %v1341
    %v1344 = vsel %vm1010, %v1342, 0
    %v1347 = vsel %vm1014, %v911, 0
    %1349 = vmatprep.subr.mxu0 0.0
    %1350 = vmatpush1.msra.mxu0 %v1347
    %1351 = vmatprep.subr.mxu0 0.0
    %1352 = vmatpush1.msra.mxu0 0.0
    %1353 = vmatprep.subr.mxu0 0.0
    %1354 = vmatpush1.msra.mxu0 0.0
    %1355 = vmatprep.subr.mxu0 0.0
    %1356 = vmatpush1.msra.mxu0 0.0
    %1357 = vmatprep.subr.mxu0 0.0
    %1358 = vmatpush1.msra.mxu0 0.0
    %1359 = vmatprep.subr.mxu0 0.0
    %1360 = vmatpush1.msra.mxu0 0.0
    %1361 = vmatprep.subr.mxu0 0.0
    %1362 = vmatpush1.msra.mxu0 0.0
    %1363 = vmatprep.subr.mxu0 0.0
    %1364 = vmatpush1.msra.mxu0 0.0
    %1365 = vmatprep.subr.mxu0 0.0
    %1366 = vmatpush1.msra.mxu0 0.0
    %1367 = vmatprep.subr.mxu0 0.0
    %1368 = vmatpush1.msra.mxu0 0.0
    %1369 = vmatprep.subr.mxu0 0.0
    %1370 = vmatpush1.msra.mxu0 0.0
    %1371 = vmatprep.subr.mxu0 0.0
    %1372 = vmatpush1.msra.mxu0 0.0
    %1373 = vmatprep.subr.mxu0 0.0
    %1374 = vmatpush1.msra.mxu0 0.0
    %1375 = vmatprep.subr.mxu0 0.0
    %1376 = vmatpush1.msra.mxu0 0.0
    %1377 = vmatprep.subr.mxu0 0.0
    %1378 = vmatpush1.msra.mxu0 0.0
    %1379 = vmatprep.subr.mxu0 0.0
    %1380 = vmatpush1.msra.mxu0 0.0
    %1381 = vmatprep.subr.mxu0 0.0
    %1382 = vmatpush1.msra.mxu0 0.0
    %1383 = vmatprep.subr.mxu0 0.0
    %1384 = vmatpush1.msra.mxu0 0.0
    %1385 = vmatprep.subr.mxu0 0.0
    %1386 = vmatpush1.msra.mxu0 0.0
    %1387 = vmatprep.subr.mxu0 0.0
    %1388 = vmatpush1.msra.mxu0 0.0
    %1389 = vmatprep.subr.mxu0 0.0
    %1390 = vmatpush1.msra.mxu0 0.0
    %1391 = vmatprep.subr.mxu0 0.0
    %1392 = vmatpush1.msra.mxu0 0.0
    %1393 = vmatprep.subr.mxu0 0.0
    %1394 = vmatpush1.msra.mxu0 0.0
    %1395 = vmatprep.subr.mxu0 0.0
    %1396 = vmatpush1.msra.mxu0 0.0
    %1397 = vmatprep.subr.mxu0 0.0
    %1398 = vmatpush1.msra.mxu0 0.0
    %1399 = vmatprep.subr.mxu0 0.0
    %1400 = vmatpush1.msra.mxu0 0.0
    %1401 = vmatprep.subr.mxu0 0.0
    %1402 = vmatpush1.msra.mxu0 0.0
    %1403 = vmatprep.subr.mxu0 0.0
    %1404 = vmatpush1.msra.mxu0 0.0
    %1405 = vmatprep.subr.mxu0 0.0
    %1406 = vmatpush1.msra.mxu0 0.0
    %1407 = vmatprep.subr.mxu0 0.0
    %1408 = vmatpush1.msra.mxu0 0.0
    %1409 = vmatprep.subr.mxu0 0.0
    %1410 = vmatpush1.msra.mxu0 0.0
    %1411 = vmatprep.subr.mxu0 0.0
    %1412 = vmatpush1.msra.mxu0 0.0
    %1413 = vmatprep.mubr.f32.mxu0 0.0
    %1414 = vmatmul.mubr.f32.gmra.mrb[0].mxu0 %v1344
    %v1415 = vpop.f32.mrb[0].mxu0
    %v1416 = vadd.f32 0.0, %v1415
    %v1417 = vpop.f32.mrb[0].mxu0
    %1418 = vdwg.mxu0
    %1419 = vrot.lane.b32.xlu0 %v911, 96
    %v1420 = vpop.permute.xlu0 %1419
    %1421 = vrot.lane.b32.xlu0 %v911, 64
    %v1422 = vpop.permute.xlu0 %1421
    %v1423 = vsel %vm920, %v1420, 0
    %v1425 = vsel %vm920, %v1422, 0
    %1427 = vmatprep.subr.mxu0 0.0
    %1428 = vmatpush1.xpose.msra.mxu0 %v1425
    %1429 = vmatprep.subr.mxu0 0.0
    %1430 = vmatpush1.xpose.msra.mxu0 0.0
    %1431 = vmatprep.subr.mxu0 0.0
    %1432 = vmatpush1.xpose.msra.mxu0 0.0
    %1433 = vmatprep.subr.mxu0 0.0
    %1434 = vmatpush1.xpose.msra.mxu0 0.0
    %1435 = vmatprep.subr.mxu0 0.0
    %1436 = vmatpush1.xpose.msra.mxu0 0.0
    %1437 = vmatprep.subr.mxu0 0.0
    %1438 = vmatpush1.xpose.msra.mxu0 0.0
    %1439 = vmatprep.subr.mxu0 0.0
    %1440 = vmatpush1.xpose.msra.mxu0 0.0
    %1441 = vmatprep.subr.mxu0 0.0
    %1442 = vmatpush1.xpose.msra.mxu0 0.0
    %1443 = vmatprep.subr.mxu0 0.0
    %1444 = vmatpush1.xpose.msra.mxu0 0.0
    %1445 = vmatprep.subr.mxu0 0.0
    %1446 = vmatpush1.xpose.msra.mxu0 0.0
    %1447 = vmatprep.subr.mxu0 0.0
    %1448 = vmatpush1.xpose.msra.mxu0 0.0
    %1449 = vmatprep.subr.mxu0 0.0
    %1450 = vmatpush1.xpose.msra.mxu0 0.0
    %1451 = vmatprep.subr.mxu0 0.0
    %1452 = vmatpush1.xpose.msra.mxu0 0.0
    %1453 = vmatprep.subr.mxu0 0.0
    %1454 = vmatpush1.xpose.msra.mxu0 0.0
    %1455 = vmatprep.subr.mxu0 0.0
    %1456 = vmatpush1.xpose.msra.mxu0 0.0
    %1457 = vmatprep.subr.mxu0 0.0
    %1458 = vmatpush1.xpose.msra.mxu0 0.0
    %1459 = vmatprep.subr.mxu0 0.0
    %1460 = vmatpush1.xpose.msra.mxu0 0.0
    %1461 = vmatprep.subr.mxu0 0.0
    %1462 = vmatpush1.xpose.msra.mxu0 0.0
    %1463 = vmatprep.subr.mxu0 0.0
    %1464 = vmatpush1.xpose.msra.mxu0 0.0
    %1465 = vmatprep.subr.mxu0 0.0
    %1466 = vmatpush1.xpose.msra.mxu0 0.0
    %1467 = vmatprep.subr.mxu0 0.0
    %1468 = vmatpush1.xpose.msra.mxu0 0.0
    %1469 = vmatprep.subr.mxu0 0.0
    %1470 = vmatpush1.xpose.msra.mxu0 0.0
    %1471 = vmatprep.subr.mxu0 0.0
    %1472 = vmatpush1.xpose.msra.mxu0 0.0
    %1473 = vmatprep.subr.mxu0 0.0
    %1474 = vmatpush1.xpose.msra.mxu0 0.0
    %1475 = vmatprep.subr.mxu0 0.0
    %1476 = vmatpush1.xpose.msra.mxu0 0.0
    %1477 = vmatprep.subr.mxu0 0.0
    %1478 = vmatpush1.xpose.msra.mxu0 0.0
    %1479 = vmatprep.subr.mxu0 0.0
    %1480 = vmatpush1.xpose.msra.mxu0 0.0
    %1481 = vmatprep.subr.mxu0 0.0
    %1482 = vmatpush1.xpose.msra.mxu0 0.0
    %1483 = vmatprep.subr.mxu0 0.0
    %1484 = vmatpush1.xpose.msra.mxu0 0.0
    %1485 = vmatprep.subr.mxu0 0.0
    %1486 = vmatpush1.xpose.msra.mxu0 0.0
    %1487 = vmatprep.subr.mxu0 0.0
    %1488 = vmatpush1.xpose.msra.mxu0 0.0
    %1489 = vmatprep.subr.mxu0 0.0
    %1490 = vmatpush1.xpose.msra.mxu0 0.0
    %1491 = vmatprep.mubr.f32.mxu0 0.0
    %1492 = vmatmul.mubr.f32.gmra.mrb[0].mxu0 %v1423
    %v1493 = vpop.f32.mrb[0].mxu0
    %v1494 = vadd.f32 0.0, %v1493
    %v1495 = vpop.f32.mrb[0].mxu0
    %1496 = vdwg.mxu0
    %v1497 = vmul.f32 %v1494, 0.17677669
    %v1498 = vsel %vm996, %v1497, -inf
    %1499 = vmax.xlane.f32.xlu0 %v1498
    %v1500 = vpop.xlane.xlu0 %1499
    %v1501 = vsub.f32 %v1497, %v1500
    %v1502 = vmul.f32 %v1501, 1.442695
    %v1503 = vpow.pop %v1502
    %v1504 = vsel %vm996, %v1503, 0.0
    %1505 = vadd.xlane.f32.xlu0 %v1504
    %v1506 = vpop.xlane.xlu0 %1505
    %v1507 = vrcp.pop %v1506
    %v1508 = vmul.f32 %v1503, %v1507
    %1509 = vrot.lane.b32.xlu0 %v911, 32
    %v1510 = vpop.permute.xlu0 %1509
    %v1512 = vsel %vm1010, %v1508, 0
    %v1514 = vsel %vm1014, %v1510, 0
    %1516 = vmatprep.subr.mxu0 0.0
    %1517 = vmatpush1.msra.mxu0 %v1514
    %1518 = vmatprep.subr.mxu0 0.0
    %1519 = vmatpush1.msra.mxu0 0.0
    %1520 = vmatprep.subr.mxu0 0.0
    %1521 = vmatpush1.msra.mxu0 0.0
    %1522 = vmatprep.subr.mxu0 0.0
    %1523 = vmatpush1.msra.mxu0 0.0
    %1524 = vmatprep.subr.mxu0 0.0
    %1525 = vmatpush1.msra.mxu0 0.0
    %1526 = vmatprep.subr.mxu0 0.0
    %1527 = vmatpush1.msra.mxu0 0.0
    %1528 = vmatprep.subr.mxu0 0.0
    %1529 = vmatpush1.msra.mxu0 0.0
    %1530 = vmatprep.subr.mxu0 0.0
    %1531 = vmatpush1.msra.mxu0 0.0
    %1532 = vmatprep.subr.mxu0 0.0
    %1533 = vmatpush1.msra.mxu0 0.0
    %1534 = vmatprep.subr.mxu0 0.0
    %1535 = vmatpush1.msra.mxu0 0.0
    %1536 = vmatprep.subr.mxu0 0.0
    %1537 = vmatpush1.msra.mxu0 0.0
    %1538 = vmatprep.subr.mxu0 0.0
    %1539 = vmatpush1.msra.mxu0 0.0
    %1540 = vmatprep.subr.mxu0 0.0
    %1541 = vmatpush1.msra.mxu0 0.0
    %1542 = vmatprep.subr.mxu0 0.0
    %1543 = vmatpush1.msra.mxu0 0.0
    %1544 = vmatprep.subr.mxu0 0.0
    %1545 = vmatpush1.msra.mxu0 0.0
    %1546 = vmatprep.subr.mxu0 0.0
    %1547 = vmatpush1.msra.mxu0 0.0
    %1548 = vmatprep.subr.mxu0 0.0
    %1549 = vmatpush1.msra.mxu0 0.0
    %1550 = vmatprep.subr.mxu0 0.0
    %1551 = vmatpush1.msra.mxu0 0.0
    %1552 = vmatprep.subr.mxu0 0.0
    %1553 = vmatpush1.msra.mxu0 0.0
    %1554 = vmatprep.subr.mxu0 0.0
    %1555 = vmatpush1.msra.mxu0 0.0
    %1556 = vmatprep.subr.mxu0 0.0
    %1557 = vmatpush1.msra.mxu0 0.0
    %1558 = vmatprep.subr.mxu0 0.0
    %1559 = vmatpush1.msra.mxu0 0.0
    %1560 = vmatprep.subr.mxu0 0.0
    %1561 = vmatpush1.msra.mxu0 0.0
    %1562 = vmatprep.subr.mxu0 0.0
    %1563 = vmatpush1.msra.mxu0 0.0
    %1564 = vmatprep.subr.mxu0 0.0
    %1565 = vmatpush1.msra.mxu0 0.0
    %1566 = vmatprep.subr.mxu0 0.0
    %1567 = vmatpush1.msra.mxu0 0.0
    %1568 = vmatprep.subr.mxu0 0.0
    %1569 = vmatpush1.msra.mxu0 0.0
    %1570 = vmatprep.subr.mxu0 0.0
    %1571 = vmatpush1.msra.mxu0 0.0
    %1572 = vmatprep.subr.mxu0 0.0
    %1573 = vmatpush1.msra.mxu0 0.0
    %1574 = vmatprep.subr.mxu0 0.0
    %1575 = vmatpush1.msra.mxu0 0.0
    %1576 = vmatprep.subr.mxu0 0.0
    %1577 = vmatpush1.msra.mxu0 0.0
    %1578 = vmatprep.subr.mxu0 0.0
    %1579 = vmatpush1.msra.mxu0 0.0
    %1580 = vmatprep.mubr.f32.mxu0 0.0
    %1581 = vmatmul.mubr.f32.gmra.mrb[0].mxu0 %v1512
    %v1582 = vpop.f32.mrb[0].mxu0
    %v1583 = vadd.f32 0.0, %v1582
    %v1584 = vpop.f32.mrb[0].mxu0
    %1585 = vdwg.mxu0
    %1587 = vrot.lane.b32.xlu0 %v1250, 32
    %v1588 = vpop.permute.xlu0 %1587
    %1591 = vrot.lane.b32.xlu0 %v1416, 64
    %v1592 = vpop.permute.xlu0 %1591
    %1595 = vrot.lane.b32.xlu0 %v1583, 96
    %v1596 = vpop.permute.xlu0 %1595
    %v1598 = vsel %vm920, %v1084, %v1588
    %vm1599 = vcmask 523264
    %v1600 = vsel %vm1599, %v1598, %v1592
    %vm1601 = vcmask 785408
    %v1602 = vsel %vm1601, %v1600, %v1596
    %vm1604 = vcmask 1042432
    %v1605 = vrot.slane %v868, 5
    %v1606 = vrot.slane %v872, 5
    %v1607 = vsel %vm1604, %v1605, %v1606
    %1608 = vrot.lane.b32.xlu0 %v1607, 96
    %v1609 = vpop.permute.xlu0 %1608
    %v1610 = vsel %vm920, %v1607, 0
    %v1612 = vsel %vm920, %v1609, 0
    %1614 = vmatprep.subr.mxu0 0.0
    %1615 = vmatpush1.xpose.msra.mxu0 %v1612
    %1616 = vmatprep.subr.mxu0 0.0
    %1617 = vmatpush1.xpose.msra.mxu0 0.0
    %1618 = vmatprep.subr.mxu0 0.0
    %1619 = vmatpush1.xpose.msra.mxu0 0.0
    %1620 = vmatprep.subr.mxu0 0.0
    %1621 = vmatpush1.xpose.msra.mxu0 0.0
    %1622 = vmatprep.subr.mxu0 0.0
    %1623 = vmatpush1.xpose.msra.mxu0 0.0
    %1624 = vmatprep.subr.mxu0 0.0
    %1625 = vmatpush1.xpose.msra.mxu0 0.0
    %1626 = vmatprep.subr.mxu0 0.0
    %1627 = vmatpush1.xpose.msra.mxu0 0.0
    %1628 = vmatprep.subr.mxu0 0.0
    %1629 = vmatpush1.xpose.msra.mxu0 0.0
    %1630 = vmatprep.subr.mxu0 0.0
    %1631 = vmatpush1.xpose.msra.mxu0 0.0
    %1632 = vmatprep.subr.mxu0 0.0
    %1633 = vmatpush1.xpose.msra.mxu0 0.0
    %1634 = vmatprep.subr.mxu0 0.0
    %1635 = vmatpush1.xpose.msra.mxu0 0.0
    %1636 = vmatprep.subr.mxu0 0.0
    %1637 = vmatpush1.xpose.msra.mxu0 0.0
    %1638 = vmatprep.subr.mxu0 0.0
    %1639 = vmatpush1.xpose.msra.mxu0 0.0
    %1640 = vmatprep.subr.mxu0 0.0
    %1641 = vmatpush1.xpose.msra.mxu0 0.0
    %1642 = vmatprep.subr.mxu0 0.0
    %1643 = vmatpush1.xpose.msra.mxu0 0.0
    %1644 = vmatprep.subr.mxu0 0.0
    %1645 = vmatpush1.xpose.msra.mxu0 0.0
    %1646 = vmatprep.subr.mxu0 0.0
    %1647 = vmatpush1.xpose.msra.mxu0 0.0
    %1648 = vmatprep.subr.mxu0 0.0
    %1649 = vmatpush1.xpose.msra.mxu0 0.0
    %1650 = vmatprep.subr.mxu0 0.0
    %1651 = vmatpush1.xpose.msra.mxu0 0.0
    %1652 = vmatprep.subr.mxu0 0.0
    %1653 = vmatpush1.xpose.msra.mxu0 0.0
    %1654 = vmatprep.subr.mxu0 0.0
    %1655 = vmatpush1.xpose.msra.mxu0 0.0
    %1656 = vmatprep.subr.mxu0 0.0
    %1657 = vmatpush1.xpose.msra.mxu0 0.0
    %1658 = vmatprep.subr.mxu0 0.0
    %1659 = vmatpush1.xpose.msra.mxu0 0.0
    %1660 = vmatprep.subr.mxu0 0.0
    %1661 = vmatpush1.xpose.msra.mxu0 0.0
    %1662 = vmatprep.subr.mxu0 0.0
    %1663 = vmatpush1.xpose.msra.mxu0 0.0
    %1664 = vmatprep.subr.mxu0 0.0
    %1665 = vmatpush1.xpose.msra.mxu0 0.0
    %1666 = vmatprep.subr.mxu0 0.0
    %1667 = vmatpush1.xpose.msra.mxu0 0.0
    %1668 = vmatprep.subr.mxu0 0.0
    %1669 = vmatpush1.xpose.msra.mxu0 0.0
    %1670 = vmatprep.subr.mxu0 0.0
    %1671 = vmatpush1.xpose.msra.mxu0 0.0
    %1672 = vmatprep.subr.mxu0 0.0
    %1673 = vmatpush1.xpose.msra.mxu0 0.0
    %1674 = vmatprep.subr.mxu0 0.0
    %1675 = vmatpush1.xpose.msra.mxu0 0.0
    %1676 = vmatprep.subr.mxu0 0.0
    %1677 = vmatpush1.xpose.msra.mxu0 0.0
    %1678 = vmatprep.mubr.f32.mxu0 0.0
    %1679 = vmatmul.mubr.f32.gmra.mrb[0].mxu0 %v1610
    %v1680 = vpop.f32.mrb[0].mxu0
    %v1681 = vadd.f32 0.0, %v1680
    %v1682 = vpop.f32.mrb[0].mxu0
    %1683 = vdwg.mxu0
    %v1684 = vmul.f32 %v1681, 0.17677669
    %v1685 = vsel %vm996, %v1684, -inf
    %1686 = vmax.xlane.f32.xlu0 %v1685
    %v1687 = vpop.xlane.xlu0 %1686
    %v1688 = vsub.f32 %v1684, %v1687
    %v1689 = vmul.f32 %v1688, 1.442695
    %v1690 = vpow.pop %v1689
    %v1691 = vsel %vm996, %v1690, 0.0
    %1692 = vadd.xlane.f32.xlu0 %v1691
    %v1693 = vpop.xlane.xlu0 %1692
    %v1694 = vrcp.pop %v1693
    %v1695 = vmul.f32 %v1690, %v1694
    %1696 = vrot.lane.b32.xlu0 %v1607, 64
    %v1697 = vpop.permute.xlu0 %1696
    %v1699 = vsel %vm1010, %v1695, 0
    %v1701 = vsel %vm1014, %v1697, 0
    %1703 = vmatprep.subr.mxu0 0.0
    %1704 = vmatpush1.msra.mxu0 %v1701
    %1705 = vmatprep.subr.mxu0 0.0
    %1706 = vmatpush1.msra.mxu0 0.0
    %1707 = vmatprep.subr.mxu0 0.0
    %1708 = vmatpush1.msra.mxu0 0.0
    %1709 = vmatprep.subr.mxu0 0.0
    %1710 = vmatpush1.msra.mxu0 0.0
    %1711 = vmatprep.subr.mxu0 0.0
    %1712 = vmatpush1.msra.mxu0 0.0
    %1713 = vmatprep.subr.mxu0 0.0
    %1714 = vmatpush1.msra.mxu0 0.0
    %1715 = vmatprep.subr.mxu0 0.0
    %1716 = vmatpush1.msra.mxu0 0.0
    %1717 = vmatprep.subr.mxu0 0.0
    %1718 = vmatpush1.msra.mxu0 0.0
    %1719 = vmatprep.subr.mxu0 0.0
    %1720 = vmatpush1.msra.mxu0 0.0
    %1721 = vmatprep.subr.mxu0 0.0
    %1722 = vmatpush1.msra.mxu0 0.0
    %1723 = vmatprep.subr.mxu0 0.0
    %1724 = vmatpush1.msra.mxu0 0.0
    %1725 = vmatprep.subr.mxu0 0.0
    %1726 = vmatpush1.msra.mxu0 0.0
    %1727 = vmatprep.subr.mxu0 0.0
    %1728 = vmatpush1.msra.mxu0 0.0
    %1729 = vmatprep.subr.mxu0 0.0
    %1730 = vmatpush1.msra.mxu0 0.0
    %1731 = vmatprep.subr.mxu0 0.0
    %1732 = vmatpush1.msra.mxu0 0.0
    %1733 = vmatprep.subr.mxu0 0.0
    %1734 = vmatpush1.msra.mxu0 0.0
    %1735 = vmatprep.subr.mxu0 0.0
    %1736 = vmatpush1.msra.mxu0 0.0
    %1737 = vmatprep.subr.mxu0 0.0
    %1738 = vmatpush1.msra.mxu0 0.0
    %1739 = vmatprep.subr.mxu0 0.0
    %1740 = vmatpush1.msra.mxu0 0.0
    %1741 = vmatprep.subr.mxu0 0.0
    %1742 = vmatpush1.msra.mxu0 0.0
    %1743 = vmatprep.subr.mxu0 0.0
    %1744 = vmatpush1.msra.mxu0 0.0
    %1745 = vmatprep.subr.mxu0 0.0
    %1746 = vmatpush1.msra.mxu0 0.0
    %1747 = vmatprep.subr.mxu0 0.0
    %1748 = vmatpush1.msra.mxu0 0.0
    %1749 = vmatprep.subr.mxu0 0.0
    %1750 = vmatpush1.msra.mxu0 0.0
    %1751 = vmatprep.subr.mxu0 0.0
    %1752 = vmatpush1.msra.mxu0 0.0
    %1753 = vmatprep.subr.mxu0 0.0
    %1754 = vmatpush1.msra.mxu0 0.0
    %1755 = vmatprep.subr.mxu0 0.0
    %1756 = vmatpush1.msra.mxu0 0.0
    %1757 = vmatprep.subr.mxu0 0.0
    %1758 = vmatpush1.msra.mxu0 0.0
    %1759 = vmatprep.subr.mxu0 0.0
    %1760 = vmatpush1.msra.mxu0 0.0
    %1761 = vmatprep.subr.mxu0 0.0
    %1762 = vmatpush1.msra.mxu0 0.0
    %1763 = vmatprep.subr.mxu0 0.0
    %1764 = vmatpush1.msra.mxu0 0.0
    %1765 = vmatprep.subr.mxu0 0.0
    %1766 = vmatpush1.msra.mxu0 0.0
    %1767 = vmatprep.mubr.f32.mxu0 0.0
    %1768 = vmatmul.mubr.f32.gmra.mrb[0].mxu0 %v1699
    %v1769 = vpop.f32.mrb[0].mxu0
    %v1770 = vadd.f32 0.0, %v1769
    %v1771 = vpop.f32.mrb[0].mxu0
    %1772 = vdwg.mxu0
    %1773 = vrot.lane.b32.xlu0 %v1607, 32
    %v1774 = vpop.permute.xlu0 %1773
    %v1776 = vrot.slane %v870, 5
    %v1777 = vrot.slane %v874, 5
    %v1778 = vsel %vm1604, %v1776, %v1777
    %v1779 = vsel %vm920, %v1774, 0
    %v1781 = vsel %vm920, %v1778, 0
    %1783 = vmatprep.subr.mxu0 0.0
    %1784 = vmatpush1.xpose.msra.mxu0 %v1781
    %1785 = vmatprep.subr.mxu0 0.0
    %1786 = vmatpush1.xpose.msra.mxu0 0.0
    %1787 = vmatprep.subr.mxu0 0.0
    %1788 = vmatpush1.xpose.msra.mxu0 0.0
    %1789 = vmatprep.subr.mxu0 0.0
    %1790 = vmatpush1.xpose.msra.mxu0 0.0
    %1791 = vmatprep.subr.mxu0 0.0
    %1792 = vmatpush1.xpose.msra.mxu0 0.0
    %1793 = vmatprep.subr.mxu0 0.0
    %1794 = vmatpush1.xpose.msra.mxu0 0.0
    %1795 = vmatprep.subr.mxu0 0.0
    %1796 = vmatpush1.xpose.msra.mxu0 0.0
    %1797 = vmatprep.subr.mxu0 0.0
    %1798 = vmatpush1.xpose.msra.mxu0 0.0
    %1799 = vmatprep.subr.mxu0 0.0
    %1800 = vmatpush1.xpose.msra.mxu0 0.0
    %1801 = vmatprep.subr.mxu0 0.0
    %1802 = vmatpush1.xpose.msra.mxu0 0.0
    %1803 = vmatprep.subr.mxu0 0.0
    %1804 = vmatpush1.xpose.msra.mxu0 0.0
    %1805 = vmatprep.subr.mxu0 0.0
    %1806 = vmatpush1.xpose.msra.mxu0 0.0
    %1807 = vmatprep.subr.mxu0 0.0
    %1808 = vmatpush1.xpose.msra.mxu0 0.0
    %1809 = vmatprep.subr.mxu0 0.0
    %1810 = vmatpush1.xpose.msra.mxu0 0.0
    %1811 = vmatprep.subr.mxu0 0.0
    %1812 = vmatpush1.xpose.msra.mxu0 0.0
    %1813 = vmatprep.subr.mxu0 0.0
    %1814 = vmatpush1.xpose.msra.mxu0 0.0
    %1815 = vmatprep.subr.mxu0 0.0
    %1816 = vmatpush1.xpose.msra.mxu0 0.0
    %1817 = vmatprep.subr.mxu0 0.0
    %1818 = vmatpush1.xpose.msra.mxu0 0.0
    %1819 = vmatprep.subr.mxu0 0.0
    %1820 = vmatpush1.xpose.msra.mxu0 0.0
    %1821 = vmatprep.subr.mxu0 0.0
    %1822 = vmatpush1.xpose.msra.mxu0 0.0
    %1823 = vmatprep.subr.mxu0 0.0
    %1824 = vmatpush1.xpose.msra.mxu0 0.0
    %1825 = vmatprep.subr.mxu0 0.0
    %1826 = vmatpush1.xpose.msra.mxu0 0.0
    %1827 = vmatprep.subr.mxu0 0.0
    %1828 = vmatpush1.xpose.msra.mxu0 0.0
    %1829 = vmatprep.subr.mxu0 0.0
    %1830 = vmatpush1.xpose.msra.mxu0 0.0
    %1831 = vmatprep.subr.mxu0 0.0
    %1832 = vmatpush1.xpose.msra.mxu0 0.0
    %1833 = vmatprep.subr.mxu0 0.0
    %1834 = vmatpush1.xpose.msra.mxu0 0.0
    %1835 = vmatprep.subr.mxu0 0.0
    %1836 = vmatpush1.xpose.msra.mxu0 0.0
    %1837 = vmatprep.subr.mxu0 0.0
    %1838 = vmatpush1.xpose.msra.mxu0 0.0
    %1839 = vmatprep.subr.mxu0 0.0
    %1840 = vmatpush1.xpose.msra.mxu0 0.0
    %1841 = vmatprep.subr.mxu0 0.0
    %1842 = vmatpush1.xpose.msra.mxu0 0.0
    %1843 = vmatprep.subr.mxu0 0.0
    %1844 = vmatpush1.xpose.msra.mxu0 0.0
    %1845 = vmatprep.subr.mxu0 0.0
    %1846 = vmatpush1.xpose.msra.mxu0 0.0
    %1847 = vmatprep.mubr.f32.mxu0 0.0
    %1848 = vmatmul.mubr.f32.gmra.mrb[0].mxu0 %v1779
    %v1849 = vpop.f32.mrb[0].mxu0
    %v1850 = vadd.f32 0.0, %v1849
    %v1851 = vpop.f32.mrb[0].mxu0
    %1852 = vdwg.mxu0
    %v1853 = vmul.f32 %v1850, 0.17677669
    %v1854 = vsel %vm996, %v1853, -inf
    %1855 = vmax.xlane.f32.xlu0 %v1854
    %v1856 = vpop.xlane.xlu0 %1855
    %v1857 = vsub.f32 %v1853, %v1856
    %v1858 = vmul.f32 %v1857, 1.442695
    %v1859 = vpow.pop %v1858
    %v1860 = vsel %vm996, %v1859, 0.0
    %1861 = vadd.xlane.f32.xlu0 %v1860
    %v1862 = vpop.xlane.xlu0 %1861
    %v1863 = vrcp.pop %v1862
    %v1864 = vmul.f32 %v1859, %v1863
    %1865 = vrot.lane.b32.xlu0 %v1778, 96
    %v1866 = vpop.permute.xlu0 %1865
    %v1868 = vsel %vm1010, %v1864, 0
    %v1870 = vsel %vm1014, %v1866, 0
    %1872 = vmatprep.subr.mxu0 0.0
    %1873 = vmatpush1.msra.mxu0 %v1870
    %1874 = vmatprep.subr.mxu0 0.0
    %1875 = vmatpush1.msra.mxu0 0.0
    %1876 = vmatprep.subr.mxu0 0.0
    %1877 = vmatpush1.msra.mxu0 0.0
    %1878 = vmatprep.subr.mxu0 0.0
    %1879 = vmatpush1.msra.mxu0 0.0
    %1880 = vmatprep.subr.mxu0 0.0
    %1881 = vmatpush1.msra.mxu0 0.0
    %1882 = vmatprep.subr.mxu0 0.0
    %1883 = vmatpush1.msra.mxu0 0.0
    %1884 = vmatprep.subr.mxu0 0.0
    %1885 = vmatpush1.msra.mxu0 0.0
    %1886 = vmatprep.subr.mxu0 0.0
    %1887 = vmatpush1.msra.mxu0 0.0
    %1888 = vmatprep.subr.mxu0 0.0
    %1889 = vmatpush1.msra.mxu0 0.0
    %1890 = vmatprep.subr.mxu0 0.0
    %1891 = vmatpush1.msra.mxu0 0.0
    %1892 = vmatprep.subr.mxu0 0.0
    %1893 = vmatpush1.msra.mxu0 0.0
    %1894 = vmatprep.subr.mxu0 0.0
    %1895 = vmatpush1.msra.mxu0 0.0
    %1896 = vmatprep.subr.mxu0 0.0
    %1897 = vmatpush1.msra.mxu0 0.0
    %1898 = vmatprep.subr.mxu0 0.0
    %1899 = vmatpush1.msra.mxu0 0.0
    %1900 = vmatprep.subr.mxu0 0.0
    %1901 = vmatpush1.msra.mxu0 0.0
    %1902 = vmatprep.subr.mxu0 0.0
    %1903 = vmatpush1.msra.mxu0 0.0
    %1904 = vmatprep.subr.mxu0 0.0
    %1905 = vmatpush1.msra.mxu0 0.0
    %1906 = vmatprep.subr.mxu0 0.0
    %1907 = vmatpush1.msra.mxu0 0.0
    %1908 = vmatprep.subr.mxu0 0.0
    %1909 = vmatpush1.msra.mxu0 0.0
    %1910 = vmatprep.subr.mxu0 0.0
    %1911 = vmatpush1.msra.mxu0 0.0
    %1912 = vmatprep.subr.mxu0 0.0
    %1913 = vmatpush1.msra.mxu0 0.0
    %1914 = vmatprep.subr.mxu0 0.0
    %1915 = vmatpush1.msra.mxu0 0.0
    %1916 = vmatprep.subr.mxu0 0.0
    %1917 = vmatpush1.msra.mxu0 0.0
    %1918 = vmatprep.subr.mxu0 0.0
    %1919 = vmatpush1.msra.mxu0 0.0
    %1920 = vmatprep.subr.mxu0 0.0
    %1921 = vmatpush1.msra.mxu0 0.0
    %1922 = vmatprep.subr.mxu0 0.0
    %1923 = vmatpush1.msra.mxu0 0.0
    %1924 = vmatprep.subr.mxu0 0.0
    %1925 = vmatpush1.msra.mxu0 0.0
    %1926 = vmatprep.subr.mxu0 0.0
    %1927 = vmatpush1.msra.mxu0 0.0
    %1928 = vmatprep.subr.mxu0 0.0
    %1929 = vmatpush1.msra.mxu0 0.0
    %1930 = vmatprep.subr.mxu0 0.0
    %1931 = vmatpush1.msra.mxu0 0.0
    %1932 = vmatprep.subr.mxu0 0.0
    %1933 = vmatpush1.msra.mxu0 0.0
    %1934 = vmatprep.subr.mxu0 0.0
    %1935 = vmatpush1.msra.mxu0 0.0
    %1936 = vmatprep.mubr.f32.mxu0 0.0
    %1937 = vmatmul.mubr.f32.gmra.mrb[0].mxu0 %v1868
    %v1938 = vpop.f32.mrb[0].mxu0
    %v1939 = vadd.f32 0.0, %v1938
    %v1940 = vpop.f32.mrb[0].mxu0
    %1941 = vdwg.mxu0
    %1942 = vrot.lane.b32.xlu0 %v1778, 64
    %v1943 = vpop.permute.xlu0 %1942
    %1944 = vrot.lane.b32.xlu0 %v1778, 32
    %v1945 = vpop.permute.xlu0 %1944
    %v1946 = vsel %vm920, %v1943, 0
    %v1948 = vsel %vm920, %v1945, 0
    %1950 = vmatprep.subr.mxu0 0.0
    %1951 = vmatpush1.xpose.msra.mxu0 %v1948
    %1952 = vmatprep.subr.mxu0 0.0
    %1953 = vmatpush1.xpose.msra.mxu0 0.0
    %1954 = vmatprep.subr.mxu0 0.0
    %1955 = vmatpush1.xpose.msra.mxu0 0.0
    %1956 = vmatprep.subr.mxu0 0.0
    %1957 = vmatpush1.xpose.msra.mxu0 0.0
    %1958 = vmatprep.subr.mxu0 0.0
    %1959 = vmatpush1.xpose.msra.mxu0 0.0
    %1960 = vmatprep.subr.mxu0 0.0
    %1961 = vmatpush1.xpose.msra.mxu0 0.0
    %1962 = vmatprep.subr.mxu0 0.0
    %1963 = vmatpush1.xpose.msra.mxu0 0.0
    %1964 = vmatprep.subr.mxu0 0.0
    %1965 = vmatpush1.xpose.msra.mxu0 0.0
    %1966 = vmatprep.subr.mxu0 0.0
    %1967 = vmatpush1.xpose.msra.mxu0 0.0
    %1968 = vmatprep.subr.mxu0 0.0
    %1969 = vmatpush1.xpose.msra.mxu0 0.0
    %1970 = vmatprep.subr.mxu0 0.0
    %1971 = vmatpush1.xpose.msra.mxu0 0.0
    %1972 = vmatprep.subr.mxu0 0.0
    %1973 = vmatpush1.xpose.msra.mxu0 0.0
    %1974 = vmatprep.subr.mxu0 0.0
    %1975 = vmatpush1.xpose.msra.mxu0 0.0
    %1976 = vmatprep.subr.mxu0 0.0
    %1977 = vmatpush1.xpose.msra.mxu0 0.0
    %1978 = vmatprep.subr.mxu0 0.0
    %1979 = vmatpush1.xpose.msra.mxu0 0.0
    %1980 = vmatprep.subr.mxu0 0.0
    %1981 = vmatpush1.xpose.msra.mxu0 0.0
    %1982 = vmatprep.subr.mxu0 0.0
    %1983 = vmatpush1.xpose.msra.mxu0 0.0
    %1984 = vmatprep.subr.mxu0 0.0
    %1985 = vmatpush1.xpose.msra.mxu0 0.0
    %1986 = vmatprep.subr.mxu0 0.0
    %1987 = vmatpush1.xpose.msra.mxu0 0.0
    %1988 = vmatprep.subr.mxu0 0.0
    %1989 = vmatpush1.xpose.msra.mxu0 0.0
    %1990 = vmatprep.subr.mxu0 0.0
    %1991 = vmatpush1.xpose.msra.mxu0 0.0
    %1992 = vmatprep.subr.mxu0 0.0
    %1993 = vmatpush1.xpose.msra.mxu0 0.0
    %1994 = vmatprep.subr.mxu0 0.0
    %1995 = vmatpush1.xpose.msra.mxu0 0.0
    %1996 = vmatprep.subr.mxu0 0.0
    %1997 = vmatpush1.xpose.msra.mxu0 0.0
    %1998 = vmatprep.subr.mxu0 0.0
    %1999 = vmatpush1.xpose.msra.mxu0 0.0
    %2000 = vmatprep.subr.mxu0 0.0
    %2001 = vmatpush1.xpose.msra.mxu0 0.0
    %2002 = vmatprep.subr.mxu0 0.0
    %2003 = vmatpush1.xpose.msra.mxu0 0.0
    %2004 = vmatprep.subr.mxu0 0.0
    %2005 = vmatpush1.xpose.msra.mxu0 0.0
    %2006 = vmatprep.subr.mxu0 0.0
    %2007 = vmatpush1.xpose.msra.mxu0 0.0
    %2008 = vmatprep.subr.mxu0 0.0
    %2009 = vmatpush1.xpose.msra.mxu0 0.0
    %2010 = vmatprep.subr.mxu0 0.0
    %2011 = vmatpush1.xpose.msra.mxu0 0.0
    %2012 = vmatprep.subr.mxu0 0.0
    %2013 = vmatpush1.xpose.msra.mxu0 0.0
    %2014 = vmatprep.mubr.f32.mxu0 0.0
    %2015 = vmatmul.mubr.f32.gmra.mrb[0].mxu0 %v1946
    %v2016 = vpop.f32.mrb[0].mxu0
    %v2017 = vadd.f32 0.0, %v2016
    %v2018 = vpop.f32.mrb[0].mxu0
    %2019 = vdwg.mxu0
    %v2020 = vmul.f32 %v2017, 0.17677669
    %v2021 = vsel %vm996, %v2020, -inf
    %2022 = vmax.xlane.f32.xlu0 %v2021
    %v2023 = vpop.xlane.xlu0 %2022
    %v2024 = vsub.f32 %v2020, %v2023
    %v2025 = vmul.f32 %v2024, 1.442695
    %v2026 = vpow.pop %v2025
    %v2027 = vsel %vm996, %v2026, 0.0
    %2028 = vadd.xlane.f32.xlu0 %v2027
    %v2029 = vpop.xlane.xlu0 %2028
    %v2030 = vrcp.pop %v2029
    %v2031 = vmul.f32 %v2026, %v2030
    %v2033 = vrot.slane %v911, 5
    %v2034 = vrot.slane %v914, 5
    %v2035 = vsel %vm1604, %v2033, %v2034
    %v2037 = vsel %vm1010, %v2031, 0
    %v2039 = vsel %vm1014, %v2035, 0
    %2041 = vmatprep.subr.mxu0 0.0
    %2042 = vmatpush1.msra.mxu0 %v2039
    %2043 = vmatprep.subr.mxu0 0.0
    %2044 = vmatpush1.msra.mxu0 0.0
    %2045 = vmatprep.subr.mxu0 0.0
    %2046 = vmatpush1.msra.mxu0 0.0
    %2047 = vmatprep.subr.mxu0 0.0
    %2048 = vmatpush1.msra.mxu0 0.0
    %2049 = vmatprep.subr.mxu0 0.0
    %2050 = vmatpush1.msra.mxu0 0.0
    %2051 = vmatprep.subr.mxu0 0.0
    %2052 = vmatpush1.msra.mxu0 0.0
    %2053 = vmatprep.subr.mxu0 0.0
    %2054 = vmatpush1.msra.mxu0 0.0
    %2055 = vmatprep.subr.mxu0 0.0
    %2056 = vmatpush1.msra.mxu0 0.0
    %2057 = vmatprep.subr.mxu0 0.0
    %2058 = vmatpush1.msra.mxu0 0.0
    %2059 = vmatprep.subr.mxu0 0.0
    %2060 = vmatpush1.msra.mxu0 0.0
    %2061 = vmatprep.subr.mxu0 0.0
    %2062 = vmatpush1.msra.mxu0 0.0
    %2063 = vmatprep.subr.mxu0 0.0
    %2064 = vmatpush1.msra.mxu0 0.0
    %2065 = vmatprep.subr.mxu0 0.0
    %2066 = vmatpush1.msra.mxu0 0.0
    %2067 = vmatprep.subr.mxu0 0.0
    %2068 = vmatpush1.msra.mxu0 0.0
    %2069 = vmatprep.subr.mxu0 0.0
    %2070 = vmatpush1.msra.mxu0 0.0
    %2071 = vmatprep.subr.mxu0 0.0
    %2072 = vmatpush1.msra.mxu0 0.0
    %2073 = vmatprep.subr.mxu0 0.0
    %2074 = vmatpush1.msra.mxu0 0.0
    %2075 = vmatprep.subr.mxu0 0.0
    %2076 = vmatpush1.msra.mxu0 0.0
    %2077 = vmatprep.subr.mxu0 0.0
    %2078 = vmatpush1.msra.mxu0 0.0
    %2079 = vmatprep.subr.mxu0 0.0
    %2080 = vmatpush1.msra.mxu0 0.0
    %2081 = vmatprep.subr.mxu0 0.0
    %2082 = vmatpush1.msra.mxu0 0.0
    %2083 = vmatprep.subr.mxu0 0.0
    %2084 = vmatpush1.msra.mxu0 0.0
    %2085 = vmatprep.subr.mxu0 0.0
    %2086 = vmatpush1.msra.mxu0 0.0
    %2087 = vmatprep.subr.mxu0 0.0
    %2088 = vmatpush1.msra.mxu0 0.0
    %2089 = vmatprep.subr.mxu0 0.0
    %2090 = vmatpush1.msra.mxu0 0.0
    %2091 = vmatprep.subr.mxu0 0.0
    %2092 = vmatpush1.msra.mxu0 0.0
    %2093 = vmatprep.subr.mxu0 0.0
    %2094 = vmatpush1.msra.mxu0 0.0
    %2095 = vmatprep.subr.mxu0 0.0
    %2096 = vmatpush1.msra.mxu0 0.0
    %2097 = vmatprep.subr.mxu0 0.0
    %2098 = vmatpush1.msra.mxu0 0.0
    %2099 = vmatprep.subr.mxu0 0.0
    %2100 = vmatpush1.msra.mxu0 0.0
    %2101 = vmatprep.subr.mxu0 0.0
    %2102 = vmatpush1.msra.mxu0 0.0
    %2103 = vmatprep.subr.mxu0 0.0
    %2104 = vmatpush1.msra.mxu0 0.0
    %2105 = vmatprep.mubr.f32.mxu0 0.0
    %2106 = vmatmul.mubr.f32.gmra.mrb[0].mxu0 %v2037
    %v2107 = vpop.f32.mrb[0].mxu0
    %v2108 = vadd.f32 0.0, %v2107
    %v2109 = vpop.f32.mrb[0].mxu0
    %2110 = vdwg.mxu0
    %2111 = vrot.lane.b32.xlu0 %v2035, 96
    %v2112 = vpop.permute.xlu0 %2111
    %2113 = vrot.lane.b32.xlu0 %v2035, 64
    %v2114 = vpop.permute.xlu0 %2113
    %v2115 = vsel %vm920, %v2112, 0
    %v2117 = vsel %vm920, %v2114, 0
    %2119 = vmatprep.subr.mxu0 0.0
    %2120 = vmatpush1.xpose.msra.mxu0 %v2117
    %2121 = vmatprep.subr.mxu0 0.0
    %2122 = vmatpush1.xpose.msra.mxu0 0.0
    %2123 = vmatprep.subr.mxu0 0.0
    %2124 = vmatpush1.xpose.msra.mxu0 0.0
    %2125 = vmatprep.subr.mxu0 0.0
    %2126 = vmatpush1.xpose.msra.mxu0 0.0
    %2127 = vmatprep.subr.mxu0 0.0
    %2128 = vmatpush1.xpose.msra.mxu0 0.0
    %2129 = vmatprep.subr.mxu0 0.0
    %2130 = vmatpush1.xpose.msra.mxu0 0.0
    %2131 = vmatprep.subr.mxu0 0.0
    %2132 = vmatpush1.xpose.msra.mxu0 0.0
    %2133 = vmatprep.subr.mxu0 0.0
    %2134 = vmatpush1.xpose.msra.mxu0 0.0
    %2135 = vmatprep.subr.mxu0 0.0
    %2136 = vmatpush1.xpose.msra.mxu0 0.0
    %2137 = vmatprep.subr.mxu0 0.0
    %2138 = vmatpush1.xpose.msra.mxu0 0.0
    %2139 = vmatprep.subr.mxu0 0.0
    %2140 = vmatpush1.xpose.msra.mxu0 0.0
    %2141 = vmatprep.subr.mxu0 0.0
    %2142 = vmatpush1.xpose.msra.mxu0 0.0
    %2143 = vmatprep.subr.mxu0 0.0
    %2144 = vmatpush1.xpose.msra.mxu0 0.0
    %2145 = vmatprep.subr.mxu0 0.0
    %2146 = vmatpush1.xpose.msra.mxu0 0.0
    %2147 = vmatprep.subr.mxu0 0.0
    %2148 = vmatpush1.xpose.msra.mxu0 0.0
    %2149 = vmatprep.subr.mxu0 0.0
    %2150 = vmatpush1.xpose.msra.mxu0 0.0
    %2151 = vmatprep.subr.mxu0 0.0
    %2152 = vmatpush1.xpose.msra.mxu0 0.0
    %2153 = vmatprep.subr.mxu0 0.0
    %2154 = vmatpush1.xpose.msra.mxu0 0.0
    %2155 = vmatprep.subr.mxu0 0.0
    %2156 = vmatpush1.xpose.msra.mxu0 0.0
    %2157 = vmatprep.subr.mxu0 0.0
    %2158 = vmatpush1.xpose.msra.mxu0 0.0
    %2159 = vmatprep.subr.mxu0 0.0
    %2160 = vmatpush1.xpose.msra.mxu0 0.0
    %2161 = vmatprep.subr.mxu0 0.0
    %2162 = vmatpush1.xpose.msra.mxu0 0.0
    %2163 = vmatprep.subr.mxu0 0.0
    %2164 = vmatpush1.xpose.msra.mxu0 0.0
    %2165 = vmatprep.subr.mxu0 0.0
    %2166 = vmatpush1.xpose.msra.mxu0 0.0
    %2167 = vmatprep.subr.mxu0 0.0
    %2168 = vmatpush1.xpose.msra.mxu0 0.0
    %2169 = vmatprep.subr.mxu0 0.0
    %2170 = vmatpush1.xpose.msra.mxu0 0.0
    %2171 = vmatprep.subr.mxu0 0.0
    %2172 = vmatpush1.xpose.msra.mxu0 0.0
    %2173 = vmatprep.subr.mxu0 0.0
    %2174 = vmatpush1.xpose.msra.mxu0 0.0
    %2175 = vmatprep.subr.mxu0 0.0
    %2176 = vmatpush1.xpose.msra.mxu0 0.0
    %2177 = vmatprep.subr.mxu0 0.0
    %2178 = vmatpush1.xpose.msra.mxu0 0.0
    %2179 = vmatprep.subr.mxu0 0.0
    %2180 = vmatpush1.xpose.msra.mxu0 0.0
    %2181 = vmatprep.subr.mxu0 0.0
    %2182 = vmatpush1.xpose.msra.mxu0 0.0
    %2183 = vmatprep.mubr.f32.mxu0 0.0
    %2184 = vmatmul.mubr.f32.gmra.mrb[0].mxu0 %v2115
    %v2185 = vpop.f32.mrb[0].mxu0
    %v2186 = vadd.f32 0.0, %v2185
    %v2187 = vpop.f32.mrb[0].mxu0
    %2188 = vdwg.mxu0
    %v2189 = vmul.f32 %v2186, 0.17677669
    %v2190 = vsel %vm996, %v2189, -inf
    %2191 = vmax.xlane.f32.xlu0 %v2190
    %v2192 = vpop.xlane.xlu0 %2191
    %v2193 = vsub.f32 %v2189, %v2192
    %v2194 = vmul.f32 %v2193, 1.442695
    %v2195 = vpow.pop %v2194
    %v2196 = vsel %vm996, %v2195, 0.0
    %2197 = vadd.xlane.f32.xlu0 %v2196
    %v2198 = vpop.xlane.xlu0 %2197
    %v2199 = vrcp.pop %v2198
    %v2200 = vmul.f32 %v2195, %v2199
    %2201 = vrot.lane.b32.xlu0 %v2035, 32
    %v2202 = vpop.permute.xlu0 %2201
    %v2204 = vsel %vm1010, %v2200, 0
    %v2206 = vsel %vm1014, %v2202, 0
    %2208 = vmatprep.subr.mxu0 0.0
    %2209 = vmatpush1.msra.mxu0 %v2206
    %2210 = vmatprep.subr.mxu0 0.0
    %2211 = vmatpush1.msra.mxu0 0.0
    %2212 = vmatprep.subr.mxu0 0.0
    %2213 = vmatpush1.msra.mxu0 0.0
    %2214 = vmatprep.subr.mxu0 0.0
    %2215 = vmatpush1.msra.mxu0 0.0
    %2216 = vmatprep.subr.mxu0 0.0
    %2217 = vmatpush1.msra.mxu0 0.0
    %2218 = vmatprep.subr.mxu0 0.0
    %2219 = vmatpush1.msra.mxu0 0.0
    %2220 = vmatprep.subr.mxu0 0.0
    %2221 = vmatpush1.msra.mxu0 0.0
    %2222 = vmatprep.subr.mxu0 0.0
    %2223 = vmatpush1.msra.mxu0 0.0
    %2224 = vmatprep.subr.mxu0 0.0
    %2225 = vmatpush1.msra.mxu0 0.0
    %2226 = vmatprep.subr.mxu0 0.0
    %2227 = vmatpush1.msra.mxu0 0.0
    %2228 = vmatprep.subr.mxu0 0.0
    %2229 = vmatpush1.msra.mxu0 0.0
    %2230 = vmatprep.subr.mxu0 0.0
    %2231 = vmatpush1.msra.mxu0 0.0
    %2232 = vmatprep.subr.mxu0 0.0
    %2233 = vmatpush1.msra.mxu0 0.0
    %2234 = vmatprep.subr.mxu0 0.0
    %2235 = vmatpush1.msra.mxu0 0.0
    %2236 = vmatprep.subr.mxu0 0.0
    %2237 = vmatpush1.msra.mxu0 0.0
    %2238 = vmatprep.subr.mxu0 0.0
    %2239 = vmatpush1.msra.mxu0 0.0
    %2240 = vmatprep.subr.mxu0 0.0
    %2241 = vmatpush1.msra.mxu0 0.0
    %2242 = vmatprep.subr.mxu0 0.0
    %2243 = vmatpush1.msra.mxu0 0.0
    %2244 = vmatprep.subr.mxu0 0.0
    %2245 = vmatpush1.msra.mxu0 0.0
    %2246 = vmatprep.subr.mxu0 0.0
    %2247 = vmatpush1.msra.mxu0 0.0
    %2248 = vmatprep.subr.mxu0 0.0
    %2249 = vmatpush1.msra.mxu0 0.0
    %2250 = vmatprep.subr.mxu0 0.0
    %2251 = vmatpush1.msra.mxu0 0.0
    %2252 = vmatprep.subr.mxu0 0.0
    %2253 = vmatpush1.msra.mxu0 0.0
    %2254 = vmatprep.subr.mxu0 0.0
    %2255 = vmatpush1.msra.mxu0 0.0
    %2256 = vmatprep.subr.mxu0 0.0
    %2257 = vmatpush1.msra.mxu0 0.0
    %2258 = vmatprep.subr.mxu0 0.0
    %2259 = vmatpush1.msra.mxu0 0.0
    %2260 = vmatprep.subr.mxu0 0.0
    %2261 = vmatpush1.msra.mxu0 0.0
    %2262 = vmatprep.subr.mxu0 0.0
    %2263 = vmatpush1.msra.mxu0 0.0
    %2264 = vmatprep.subr.mxu0 0.0
    %2265 = vmatpush1.msra.mxu0 0.0
    %2266 = vmatprep.subr.mxu0 0.0
    %2267 = vmatpush1.msra.mxu0 0.0
    %2268 = vmatprep.subr.mxu0 0.0
    %2269 = vmatpush1.msra.mxu0 0.0
    %2270 = vmatprep.subr.mxu0 0.0
    %2271 = vmatpush1.msra.mxu0 0.0
    %2272 = vmatprep.mubr.f32.mxu0 0.0
    %2273 = vmatmul.mubr.f32.gmra.mrb[0].mxu0 %v2204
    %v2274 = vpop.f32.mrb[0].mxu0
    %v2275 = vadd.f32 0.0, %v2274
    %v2276 = vpop.f32.mrb[0].mxu0
    %2277 = vdwg.mxu0
    %2279 = vrot.lane.b32.xlu0 %v1939, 32
    %v2280 = vpop.permute.xlu0 %2279
    %2283 = vrot.lane.b32.xlu0 %v2108, 64
    %v2284 = vpop.permute.xlu0 %2283
    %2287 = vrot.lane.b32.xlu0 %v2275, 96
    %v2288 = vpop.permute.xlu0 %2287
    %v2290 = vsel %vm920, %v1770, %v2280
    %v2291 = vsel %vm1599, %v2290, %v2284
    %v2292 = vsel %vm1601, %v2291, %v2288
    %v2294 = vrot.slane %v2292, 3
    %v2296 = vsel %vm1014, %v1602, %v2294
    %v2297 = vpack.c.bf16 %v2294, %v2296
    %v2298 = vld [vmem:[%s6] sm:$0xf]
    %v2299 = vld [vmem:[%s6 + $0x4] sm:$0xf]
    %v2300 = vld [vmem:[%s6 + $0x8] sm:$0xf]
    %v2301 = vld [vmem:[%s6 + $0xc] sm:$0xf]
    %v2302 = vld [vmem:[%s6 + $0x10] sm:$0xf]
    %v2303 = vld [vmem:[%s6 + $0x14] sm:$0xf]
    %v2304 = vld [vmem:[%s6 + $0x18] sm:$0xf]
    %v2305 = vld [vmem:[%s6 + $0x1c] sm:$0xf]
    %v2306 = vld [vmem:[%s6 + $0x20] sm:$0xf]
    %v2307 = vld [vmem:[%s6 + $0x24] sm:$0xf]
    %v2308 = vld [vmem:[%s6 + $0x28] sm:$0xf]
    %v2309 = vld [vmem:[%s6 + $0x2c] sm:$0xf]
    %v2310 = vld [vmem:[%s6 + $0x30] sm:$0xf]
    %v2311 = vld [vmem:[%s6 + $0x34] sm:$0xf]
    %v2312 = vld [vmem:[%s6 + $0x38] sm:$0xf]
    %v2313 = vld [vmem:[%s6 + $0x3c] sm:$0xf]
    %v2314 = vlaneseq
    %v2315 = vshrl.u32 %v2314, 7
    %v2316 = vsub.s32 2, %v2315
    %v2317 = vrot.slane %v616, %v2316
    %v2334 = vunpack.c.l.b16 %v2298
    %v2335 = vunpack.c.l.b16 %v2299
    %v2336 = vunpack.c.l.b16 %v2300
    %v2337 = vunpack.c.l.b16 %v2301
    %v2338 = vunpack.c.l.b16 %v2302
    %v2339 = vunpack.c.l.b16 %v2303
    %v2340 = vunpack.c.l.b16 %v2304
    %v2341 = vunpack.c.l.b16 %v2305
    %v2342 = vunpack.c.l.b16 %v2306
    %v2343 = vunpack.c.l.b16 %v2307
    %v2344 = vunpack.c.l.b16 %v2308
    %v2345 = vunpack.c.l.b16 %v2309
    %v2346 = vunpack.c.l.b16 %v2310
    %v2347 = vunpack.c.l.b16 %v2311
    %v2348 = vunpack.c.l.b16 %v2312
    %v2349 = vunpack.c.l.b16 %v2313
    %v2350 = vpack.c.b16 %v2335, %v2334
    %v2351 = vpack.c.b16 %v2337, %v2336
    %v2352 = vpack.c.b16 %v2339, %v2338
    %v2353 = vpack.c.b16 %v2341, %v2340
    %v2354 = vpack.c.b16 %v2343, %v2342
    %v2355 = vpack.c.b16 %v2345, %v2344
    %v2356 = vpack.c.b16 %v2347, %v2346
    %v2357 = vpack.c.b16 %v2349, %v2348
    %2366 = vmatprep.subr.bf16.mxu0 0
    %2367 = vmatpush1.bf16.msra.mxu0 %v2350
    %2368 = vmatprep.subr.bf16.mxu0 0
    %2369 = vmatpush1.bf16.msra.mxu0 %v2351
    %2370 = vmatprep.subr.bf16.mxu0 0
    %2371 = vmatpush1.bf16.msra.mxu0 %v2352
    %2372 = vmatprep.subr.bf16.mxu0 0
    %2373 = vmatpush1.bf16.msra.mxu0 %v2353
    %2374 = vmatprep.subr.bf16.mxu0 0
    %2375 = vmatpush1.bf16.msra.mxu0 %v2354
    %2376 = vmatprep.subr.bf16.mxu0 0
    %2377 = vmatpush1.bf16.msra.mxu0 %v2355
    %2378 = vmatprep.subr.bf16.mxu0 0
    %2379 = vmatpush1.bf16.msra.mxu0 %v2356
    %2380 = vmatprep.subr.bf16.mxu0 0
    %2381 = vmatpush1.bf16.msra.mxu0 %v2357
    %2382 = vmatprep.subr.bf16.mxu0 0
    %2383 = vmatpush1.bf16.msra.mxu0 0
    %2384 = vmatprep.subr.bf16.mxu0 0
    %2385 = vmatpush1.bf16.msra.mxu0 0
    %2386 = vmatprep.subr.bf16.mxu0 0
    %2387 = vmatpush1.bf16.msra.mxu0 0
    %2388 = vmatprep.subr.bf16.mxu0 0
    %2389 = vmatpush1.bf16.msra.mxu0 0
    %2390 = vmatprep.subr.bf16.mxu0 0
    %2391 = vmatpush1.bf16.msra.mxu0 0
    %2392 = vmatprep.subr.bf16.mxu0 0
    %2393 = vmatpush1.bf16.msra.mxu0 0
    %2394 = vmatprep.subr.bf16.mxu0 0
    %2395 = vmatpush1.bf16.msra.mxu0 0
    %2396 = vmatprep.subr.bf16.mxu0 0
    %2397 = vmatpush1.bf16.msra.mxu0 0
    %2398 = vmatprep.mubr.bf16.mxu0 0
    %2399 = vmatmul.mubr.bf16.gmra.mrb[0].mxu0 %v2297
    %v2400 = vpop.f32.mrb[0].mxu0
    %v2401 = vadd.f32 %v2317, %v2400
    %v2402 = vpop.f32.mrb[0].mxu0
    %v2403 = vpop.f32.mrb[0].mxu0
    %v2404 = vadd.f32 %v2317, %v2403
    %v2405 = vpop.f32.mrb[0].mxu0
    %2406 = vdwg.mxu0
    %v2407 = vlaneseq
    %v2408 = vshrl.u32 %v2407, 7
    %v2409 = vsub.s32 3, %v2408
    %v2410 = vrot.slane %v616, %v2409
    %v2411 = vmul.f32 %v2410, %v2401
    %v2412 = vmul.f32 %v2410, %v2404
    %v2413 = vadd.f32 %v608, %v2411
    %v2414 = vadd.f32 %v613, %v2412
    %2415 = vadd.xlane.f32.xlu0 %v2413
    %v2416 = vpop.xlane.xlu0 %2415
    %v2417 = vsel %vm619, %v2414, 0.0
    %2418 = vadd.xlane.f32.xlu0 %v2417
    %v2419 = vpop.xlane.xlu0 %2418
    %v2420 = vmul.f32 %v2416, %v623
    %v2421 = vmul.f32 %v2419, %v623
    %v2422 = vsub.f32 %v2413, %v2420
    %v2423 = vsub.f32 %v2414, %v2421
    %v2424 = vmul.f32 %v2422, %v2422
    %v2425 = vmul.f32 %v2423, %v2423
    %2426 = vadd.xlane.f32.xlu0 %v2424
    %v2427 = vpop.xlane.xlu0 %2426
    %v2428 = vsel %vm619, %v2425, 0.0
    %2429 = vadd.xlane.f32.xlu0 %v2428
    %v2430 = vpop.xlane.xlu0 %2429
    %v2431 = vmul.f32 %v2427, %v623
    %v2432 = vmul.f32 %v2430, %v623
    %v2433 = vadd.f32 %v2431, 1e-06
    %v2434 = vadd.f32 %v2432, 1e-06
    %v2435 = vrsqrt.pop %v2433
    %v2436 = vrsqrt.pop %v2434
    %v2437 = vmul.f32 %v2422, %v2435
    %v2438 = vmul.f32 %v2423, %v2436
    %v2439 = vlaneseq
    %v2440 = vshrl.u32 %v2439, 7
    %v2441 = vsub.s32 4, %v2440
    %v2442 = vrot.slane %v616, %v2441
    %v2443 = vmul.f32 %v2437, %v2442
    %v2444 = vmul.f32 %v2438, %v2442
    %v2445 = vlaneseq
    %v2446 = vshrl.u32 %v2445, 7
    %v2447 = vsub.s32 5, %v2446
    %v2448 = vrot.slane %v616, %v2447
    %v2449 = vadd.f32 %v2443, %v2448
    %v2450 = vadd.f32 %v2444, %v2448
    %v2451 = vpack.c.bf16 %v2450, %v2449
    %v2452 = vld [vmem:[%s7] sm:$0xff]
    %v2453 = vld [vmem:[%s7 + $0x8] sm:$0xff]
    %v2454 = vld [vmem:[%s7 + $0x10] sm:$0xff]
    %v2455 = vld [vmem:[%s7 + $0x18] sm:$0xff]
    %v2456 = vld [vmem:[%s7 + $0x20] sm:$0xff]
    %v2457 = vld [vmem:[%s7 + $0x28] sm:$0xff]
    %v2458 = vld [vmem:[%s7 + $0x30] sm:$0xff]
    %v2459 = vld [vmem:[%s7 + $0x38] sm:$0xff]
    %v2460 = vld [vmem:[%s7 + $0x40] sm:$0xff]
    %v2461 = vld [vmem:[%s7 + $0x48] sm:$0xff]
    %v2462 = vld [vmem:[%s7 + $0x50] sm:$0xff]
    %v2463 = vld [vmem:[%s7 + $0x58] sm:$0xff]
    %v2464 = vld [vmem:[%s7 + $0x60] sm:$0xff]
    %v2465 = vld [vmem:[%s7 + $0x68] sm:$0xff]
    %v2466 = vld [vmem:[%s7 + $0x70] sm:$0xff]
    %v2467 = vld [vmem:[%s7 + $0x78] sm:$0xff]
    %v2468 = vld [vmem:[%s7 + $0x80] sm:$0xff]
    %v2469 = vld [vmem:[%s7 + $0x88] sm:$0xff]
    %v2470 = vld [vmem:[%s7 + $0x90] sm:$0xff]
    %v2471 = vld [vmem:[%s7 + $0x98] sm:$0xff]
    %v2472 = vld [vmem:[%s7 + $0xa0] sm:$0xff]
    %v2473 = vld [vmem:[%s7 + $0xa8] sm:$0xff]
    %v2474 = vld [vmem:[%s7 + $0xb0] sm:$0xff]
    %v2475 = vld [vmem:[%s7 + $0xb8] sm:$0xff]
    %v2476 = vld [vmem:[%s7 + $0xc0] sm:$0xff]
    %v2477 = vld [vmem:[%s7 + $0xc8] sm:$0xff]
    %v2478 = vld [vmem:[%s7 + $0xd0] sm:$0xff]
    %v2479 = vld [vmem:[%s7 + $0xd8] sm:$0xff]
    %v2480 = vld [vmem:[%s7 + $0xe0] sm:$0xff]
    %v2481 = vld [vmem:[%s7 + $0xe8] sm:$0xff]
    %v2482 = vld [vmem:[%s7 + $0xf0] sm:$0xff]
    %v2483 = vld [vmem:[%s7 + $0xf8] sm:$0xff]
    %v2484 = vld [vmem:[%s8] sm:$0xf]
    %v2486 = vlaneseq
    %v2487 = vshrl.u32 %v2486, 7
    %v2488 = vsub.s32 0, %v2487
    %v2489 = vrot.slane %v2484, %v2488
    %v2490 = vlaneseq
    %v2491 = vshrl.u32 %v2490, 7
    %v2492 = vsub.s32 1, %v2491
    %v2493 = vrot.slane %v2484, %v2492
    %v2494 = vlaneseq
    %v2495 = vshrl.u32 %v2494, 7
    %v2496 = vsub.s32 2, %v2495
    %v2497 = vrot.slane %v2484, %v2496
    %v2498 = vlaneseq
    %v2499 = vshrl.u32 %v2498, 7
    %v2500 = vsub.s32 3, %v2499
    %v2501 = vrot.slane %v2484, %v2500
    %v2538 = vunpack.c.l.b16 %v2452
    %v2539 = vunpack.c.h.b16 %v2452
    %v2540 = vunpack.c.l.b16 %v2453
    %v2541 = vunpack.c.h.b16 %v2453
    %v2542 = vunpack.c.l.b16 %v2454
    %v2543 = vunpack.c.h.b16 %v2454
    %v2544 = vunpack.c.l.b16 %v2455
    %v2545 = vunpack.c.h.b16 %v2455
    %v2546 = vunpack.c.l.b16 %v2456
    %v2547 = vunpack.c.h.b16 %v2456
    %v2548 = vunpack.c.l.b16 %v2457
    %v2549 = vunpack.c.h.b16 %v2457
    %v2550 = vunpack.c.l.b16 %v2458
    %v2551 = vunpack.c.h.b16 %v2458
    %v2552 = vunpack.c.l.b16 %v2459
    %v2553 = vunpack.c.h.b16 %v2459
    %v2554 = vunpack.c.l.b16 %v2460
    %v2555 = vunpack.c.h.b16 %v2460
    %v2556 = vunpack.c.l.b16 %v2461
    %v2557 = vunpack.c.h.b16 %v2461
    %v2558 = vunpack.c.l.b16 %v2462
    %v2559 = vunpack.c.h.b16 %v2462
    %v2560 = vunpack.c.l.b16 %v2463
    %v2561 = vunpack.c.h.b16 %v2463
    %v2562 = vunpack.c.l.b16 %v2464
    %v2563 = vunpack.c.h.b16 %v2464
    %v2564 = vunpack.c.l.b16 %v2465
    %v2565 = vunpack.c.h.b16 %v2465
    %v2566 = vunpack.c.l.b16 %v2466
    %v2567 = vunpack.c.h.b16 %v2466
    %v2568 = vunpack.c.l.b16 %v2467
    %v2569 = vunpack.c.h.b16 %v2467
    %v2570 = vunpack.c.l.b16 %v2468
    %v2571 = vunpack.c.h.b16 %v2468
    %v2572 = vunpack.c.l.b16 %v2469
    %v2573 = vunpack.c.h.b16 %v2469
    %v2574 = vunpack.c.l.b16 %v2470
    %v2575 = vunpack.c.h.b16 %v2470
    %v2576 = vunpack.c.l.b16 %v2471
    %v2577 = vunpack.c.h.b16 %v2471
    %v2578 = vunpack.c.l.b16 %v2472
    %v2579 = vunpack.c.h.b16 %v2472
    %v2580 = vunpack.c.l.b16 %v2473
    %v2581 = vunpack.c.h.b16 %v2473
    %v2582 = vunpack.c.l.b16 %v2474
    %v2583 = vunpack.c.h.b16 %v2474
    %v2584 = vunpack.c.l.b16 %v2475
    %v2585 = vunpack.c.h.b16 %v2475
    %v2586 = vunpack.c.l.b16 %v2476
    %v2587 = vunpack.c.h.b16 %v2476
    %v2588 = vunpack.c.l.b16 %v2477
    %v2589 = vunpack.c.h.b16 %v2477
    %v2590 = vunpack.c.l.b16 %v2478
    %v2591 = vunpack.c.h.b16 %v2478
    %v2592 = vunpack.c.l.b16 %v2479
    %v2593 = vunpack.c.h.b16 %v2479
    %v2594 = vunpack.c.l.b16 %v2480
    %v2595 = vunpack.c.h.b16 %v2480
    %v2596 = vunpack.c.l.b16 %v2481
    %v2597 = vunpack.c.h.b16 %v2481
    %v2598 = vunpack.c.l.b16 %v2482
    %v2599 = vunpack.c.h.b16 %v2482
    %v2600 = vunpack.c.l.b16 %v2483
    %v2601 = vunpack.c.h.b16 %v2483
    %v2602 = vpack.c.b16 %v2542, %v2538
    %v2603 = vpack.c.b16 %v2543, %v2539
    %v2604 = vpack.c.b16 %v2544, %v2540
    %v2605 = vpack.c.b16 %v2545, %v2541
    %v2606 = vpack.c.b16 %v2550, %v2546
    %v2607 = vpack.c.b16 %v2551, %v2547
    %v2608 = vpack.c.b16 %v2552, %v2548
    %v2609 = vpack.c.b16 %v2553, %v2549
    %v2610 = vpack.c.b16 %v2558, %v2554
    %v2611 = vpack.c.b16 %v2559, %v2555
    %v2612 = vpack.c.b16 %v2560, %v2556
    %v2613 = vpack.c.b16 %v2561, %v2557
    %v2614 = vpack.c.b16 %v2566, %v2562
    %v2615 = vpack.c.b16 %v2567, %v2563
    %v2616 = vpack.c.b16 %v2568, %v2564
    %v2617 = vpack.c.b16 %v2569, %v2565
    %v2618 = vpack.c.b16 %v2574, %v2570
    %v2619 = vpack.c.b16 %v2575, %v2571
    %v2620 = vpack.c.b16 %v2576, %v2572
    %v2621 = vpack.c.b16 %v2577, %v2573
    %v2622 = vpack.c.b16 %v2582, %v2578
    %v2623 = vpack.c.b16 %v2583, %v2579
    %v2624 = vpack.c.b16 %v2584, %v2580
    %v2625 = vpack.c.b16 %v2585, %v2581
    %v2626 = vpack.c.b16 %v2590, %v2586
    %v2627 = vpack.c.b16 %v2591, %v2587
    %v2628 = vpack.c.b16 %v2592, %v2588
    %v2629 = vpack.c.b16 %v2593, %v2589
    %v2630 = vpack.c.b16 %v2598, %v2594
    %v2631 = vpack.c.b16 %v2599, %v2595
    %v2632 = vpack.c.b16 %v2600, %v2596
    %v2633 = vpack.c.b16 %v2601, %v2597
    %2666 = vmatprep.subr.bf16.mxu0 %v2603
    %2667 = vmatpush1.bf16.msra.mxu0 %v2602
    %2668 = vmatprep.subr.bf16.mxu0 %v2607
    %2669 = vmatpush1.bf16.msra.mxu0 %v2606
    %2670 = vmatprep.subr.bf16.mxu0 %v2611
    %2671 = vmatpush1.bf16.msra.mxu0 %v2610
    %2672 = vmatprep.subr.bf16.mxu0 %v2615
    %2673 = vmatpush1.bf16.msra.mxu0 %v2614
    %2674 = vmatprep.subr.bf16.mxu0 %v2619
    %2675 = vmatpush1.bf16.msra.mxu0 %v2618
    %2676 = vmatprep.subr.bf16.mxu0 %v2623
    %2677 = vmatpush1.bf16.msra.mxu0 %v2622
    %2678 = vmatprep.subr.bf16.mxu0 %v2627
    %2679 = vmatpush1.bf16.msra.mxu0 %v2626
    %2680 = vmatprep.subr.bf16.mxu0 %v2631
    %2681 = vmatpush1.bf16.msra.mxu0 %v2630
    %2682 = vmatprep.subr.bf16.mxu0 0
    %2683 = vmatpush1.bf16.msra.mxu0 0
    %2684 = vmatprep.subr.bf16.mxu0 0
    %2685 = vmatpush1.bf16.msra.mxu0 0
    %2686 = vmatprep.subr.bf16.mxu0 0
    %2687 = vmatpush1.bf16.msra.mxu0 0
    %2688 = vmatprep.subr.bf16.mxu0 0
    %2689 = vmatpush1.bf16.msra.mxu0 0
    %2690 = vmatprep.subr.bf16.mxu0 0
    %2691 = vmatpush1.bf16.msra.mxu0 0
    %2692 = vmatprep.subr.bf16.mxu0 0
    %2693 = vmatpush1.bf16.msra.mxu0 0
    %2694 = vmatprep.subr.bf16.mxu0 0
    %2695 = vmatpush1.bf16.msra.mxu0 0
    %2696 = vmatprep.subr.bf16.mxu0 0
    %2697 = vmatpush1.bf16.msra.mxu0 0
    %2698 = vmatprep.mubr.bf16.mxu0 0
    %2699 = vmatmul.mubr.bf16.gmra.mrb[0].mxu0 %v2451
    %v2700 = vpop.f32.mrb[0].mxu0
    %v2701 = vadd.f32 %v2489, %v2700
    %v2702 = vpop.f32.mrb[0].mxu0
    %v2703 = vadd.f32 %v2493, %v2702
    %v2704 = vpop.f32.mrb[0].mxu0
    %v2705 = vadd.f32 %v2489, %v2704
    %v2706 = vpop.f32.mrb[0].mxu0
    %v2707 = vadd.f32 %v2493, %v2706
    %2708 = vdwg.mxu0
    %2709 = vmatprep.subr.bf16.mxu0 %v2605
    %2710 = vmatpush1.bf16.msra.mxu0 %v2604
    %2711 = vmatprep.subr.bf16.mxu0 %v2609
    %2712 = vmatpush1.bf16.msra.mxu0 %v2608
    %2713 = vmatprep.subr.bf16.mxu0 %v2613
    %2714 = vmatpush1.bf16.msra.mxu0 %v2612
    %2715 = vmatprep.subr.bf16.mxu0 %v2617
    %2716 = vmatpush1.bf16.msra.mxu0 %v2616
    %2717 = vmatprep.subr.bf16.mxu0 %v2621
    %2718 = vmatpush1.bf16.msra.mxu0 %v2620
    %2719 = vmatprep.subr.bf16.mxu0 %v2625
    %2720 = vmatpush1.bf16.msra.mxu0 %v2624
    %2721 = vmatprep.subr.bf16.mxu0 %v2629
    %2722 = vmatpush1.bf16.msra.mxu0 %v2628
    %2723 = vmatprep.subr.bf16.mxu0 %v2633
    %2724 = vmatpush1.bf16.msra.mxu0 %v2632
    %2725 = vmatprep.subr.bf16.mxu0 0
    %2726 = vmatpush1.bf16.msra.mxu0 0
    %2727 = vmatprep.subr.bf16.mxu0 0
    %2728 = vmatpush1.bf16.msra.mxu0 0
    %2729 = vmatprep.subr.bf16.mxu0 0
    %2730 = vmatpush1.bf16.msra.mxu0 0
    %2731 = vmatprep.subr.bf16.mxu0 0
    %2732 = vmatpush1.bf16.msra.mxu0 0
    %2733 = vmatprep.subr.bf16.mxu0 0
    %2734 = vmatpush1.bf16.msra.mxu0 0
    %2735 = vmatprep.subr.bf16.mxu0 0
    %2736 = vmatpush1.bf16.msra.mxu0 0
    %2737 = vmatprep.subr.bf16.mxu0 0
    %2738 = vmatpush1.bf16.msra.mxu0 0
    %2739 = vmatprep.subr.bf16.mxu0 0
    %2740 = vmatpush1.bf16.msra.mxu0 0
    %2741 = vmatprep.mubr.bf16.mxu0 0
    %2742 = vmatmul.mubr.bf16.gmra.mrb[0].mxu0 %v2451
    %v2743 = vpop.f32.mrb[0].mxu0
    %v2744 = vadd.f32 %v2497, %v2743
    %v2745 = vpop.f32.mrb[0].mxu0
    %v2746 = vadd.f32 %v2501, %v2745
    %v2747 = vpop.f32.mrb[0].mxu0
    %v2748 = vadd.f32 %v2497, %v2747
    %v2749 = vpop.f32.mrb[0].mxu0
    %v2750 = vadd.f32 %v2501, %v2749
    %2751 = vdwg.mxu0
    %v2752 = vmul.f32 %v2701, %v2701
    %v2753 = vmul.f32 %v2703, %v2703
    %v2754 = vmul.f32 %v2744, %v2744
    %v2755 = vmul.f32 %v2746, %v2746
    %v2756 = vmul.f32 %v2705, %v2705
    %v2757 = vmul.f32 %v2707, %v2707
    %v2758 = vmul.f32 %v2748, %v2748
    %v2759 = vmul.f32 %v2750, %v2750
    %v2760 = vmul.f32 %v2701, %v2752
    %v2761 = vmul.f32 %v2703, %v2753
    %v2762 = vmul.f32 %v2744, %v2754
    %v2763 = vmul.f32 %v2746, %v2755
    %v2764 = vmul.f32 %v2705, %v2756
    %v2765 = vmul.f32 %v2707, %v2757
    %v2766 = vmul.f32 %v2748, %v2758
    %v2767 = vmul.f32 %v2750, %v2759
    %v2768 = vmul.f32 %v2760, 0.044715
    %v2769 = vmul.f32 %v2761, 0.044715
    %v2770 = vmul.f32 %v2762, 0.044715
    %v2771 = vmul.f32 %v2763, 0.044715
    %v2772 = vmul.f32 %v2764, 0.044715
    %v2773 = vmul.f32 %v2765, 0.044715
    %v2774 = vmul.f32 %v2766, 0.044715
    %v2775 = vmul.f32 %v2767, 0.044715
    %v2776 = vadd.f32 %v2701, %v2768
    %v2777 = vadd.f32 %v2703, %v2769
    %v2778 = vadd.f32 %v2744, %v2770
    %v2779 = vadd.f32 %v2746, %v2771
    %v2780 = vadd.f32 %v2705, %v2772
    %v2781 = vadd.f32 %v2707, %v2773
    %v2782 = vadd.f32 %v2748, %v2774
    %v2783 = vadd.f32 %v2750, %v2775
    %v2784 = vmul.f32 %v2776, 0.7978846
    %v2785 = vmul.f32 %v2777, 0.7978846
    %v2786 = vmul.f32 %v2778, 0.7978846
    %v2787 = vmul.f32 %v2779, 0.7978846
    %v2788 = vmul.f32 %v2780, 0.7978846
    %v2789 = vmul.f32 %v2781, 0.7978846
    %v2790 = vmul.f32 %v2782, 0.7978846
    %v2791 = vmul.f32 %v2783, 0.7978846
    %v2792 = vtanh.pop %v2784
    %v2793 = vtanh.pop %v2785
    %v2794 = vtanh.pop %v2786
    %v2795 = vtanh.pop %v2787
    %v2796 = vtanh.pop %v2788
    %v2797 = vtanh.pop %v2789
    %v2798 = vtanh.pop %v2790
    %v2799 = vtanh.pop %v2791
    %v2800 = vadd.f32 %v2792, 1.0
    %v2801 = vadd.f32 %v2793, 1.0
    %v2802 = vadd.f32 %v2794, 1.0
    %v2803 = vadd.f32 %v2795, 1.0
    %v2804 = vadd.f32 %v2796, 1.0
    %v2805 = vadd.f32 %v2797, 1.0
    %v2806 = vadd.f32 %v2798, 1.0
    %v2807 = vadd.f32 %v2799, 1.0
    %v2808 = vmul.f32 %v2800, 0.5
    %v2809 = vmul.f32 %v2801, 0.5
    %v2810 = vmul.f32 %v2802, 0.5
    %v2811 = vmul.f32 %v2803, 0.5
    %v2812 = vmul.f32 %v2804, 0.5
    %v2813 = vmul.f32 %v2805, 0.5
    %v2814 = vmul.f32 %v2806, 0.5
    %v2815 = vmul.f32 %v2807, 0.5
    %v2816 = vmul.f32 %v2701, %v2808
    %v2817 = vmul.f32 %v2703, %v2809
    %v2818 = vmul.f32 %v2744, %v2810
    %v2819 = vmul.f32 %v2746, %v2811
    %v2820 = vmul.f32 %v2705, %v2812
    %v2821 = vmul.f32 %v2707, %v2813
    %v2822 = vmul.f32 %v2748, %v2814
    %v2823 = vmul.f32 %v2750, %v2815
    %v2824 = vpack.c.bf16 %v2820, %v2816
    %v2825 = vpack.c.bf16 %v2821, %v2817
    %v2826 = vpack.c.bf16 %v2822, %v2818
    %v2827 = vpack.c.bf16 %v2823, %v2819
    %v2828 = vld [vmem:[%s9] sm:$0xf]
    %v2829 = vld [vmem:[%s9 + $0x4] sm:$0xf]
    %v2830 = vld [vmem:[%s9 + $0x8] sm:$0xf]
    %v2831 = vld [vmem:[%s9 + $0xc] sm:$0xf]
    %v2832 = vld [vmem:[%s9 + $0x10] sm:$0xf]
    %v2833 = vld [vmem:[%s9 + $0x14] sm:$0xf]
    %v2834 = vld [vmem:[%s9 + $0x18] sm:$0xf]
    %v2835 = vld [vmem:[%s9 + $0x1c] sm:$0xf]
    %v2836 = vld [vmem:[%s9 + $0x20] sm:$0xf]
    %v2837 = vld [vmem:[%s9 + $0x24] sm:$0xf]
    %v2838 = vld [vmem:[%s9 + $0x28] sm:$0xf]
    %v2839 = vld [vmem:[%s9 + $0x2c] sm:$0xf]
    %v2840 = vld [vmem:[%s9 + $0x30] sm:$0xf]
    %v2841 = vld [vmem:[%s9 + $0x34] sm:$0xf]
    %v2842 = vld [vmem:[%s9 + $0x38] sm:$0xf]
    %v2843 = vld [vmem:[%s9 + $0x3c] sm:$0xf]
    %v2844 = vld [vmem:[%s9 + $0x40] sm:$0xf]
    %v2845 = vld [vmem:[%s9 + $0x44] sm:$0xf]
    %v2846 = vld [vmem:[%s9 + $0x48] sm:$0xf]
    %v2847 = vld [vmem:[%s9 + $0x4c] sm:$0xf]
    %v2848 = vld [vmem:[%s9 + $0x50] sm:$0xf]
    %v2849 = vld [vmem:[%s9 + $0x54] sm:$0xf]
    %v2850 = vld [vmem:[%s9 + $0x58] sm:$0xf]
    %v2851 = vld [vmem:[%s9 + $0x5c] sm:$0xf]
    %v2852 = vld [vmem:[%s9 + $0x60] sm:$0xf]
    %v2853 = vld [vmem:[%s9 + $0x64] sm:$0xf]
    %v2854 = vld [vmem:[%s9 + $0x68] sm:$0xf]
    %v2855 = vld [vmem:[%s9 + $0x6c] sm:$0xf]
    %v2856 = vld [vmem:[%s9 + $0x70] sm:$0xf]
    %v2857 = vld [vmem:[%s9 + $0x74] sm:$0xf]
    %v2858 = vld [vmem:[%s9 + $0x78] sm:$0xf]
    %v2859 = vld [vmem:[%s9 + $0x7c] sm:$0xf]
    %v2860 = vld [vmem:[%s9 + $0x80] sm:$0xf]
    %v2861 = vld [vmem:[%s9 + $0x84] sm:$0xf]
    %v2862 = vld [vmem:[%s9 + $0x88] sm:$0xf]
    %v2863 = vld [vmem:[%s9 + $0x8c] sm:$0xf]
    %v2864 = vld [vmem:[%s9 + $0x90] sm:$0xf]
    %v2865 = vld [vmem:[%s9 + $0x94] sm:$0xf]
    %v2866 = vld [vmem:[%s9 + $0x98] sm:$0xf]
    %v2867 = vld [vmem:[%s9 + $0x9c] sm:$0xf]
    %v2868 = vld [vmem:[%s9 + $0xa0] sm:$0xf]
    %v2869 = vld [vmem:[%s9 + $0xa4] sm:$0xf]
    %v2870 = vld [vmem:[%s9 + $0xa8] sm:$0xf]
    %v2871 = vld [vmem:[%s9 + $0xac] sm:$0xf]
    %v2872 = vld [vmem:[%s9 + $0xb0] sm:$0xf]
    %v2873 = vld [vmem:[%s9 + $0xb4] sm:$0xf]
    %v2874 = vld [vmem:[%s9 + $0xb8] sm:$0xf]
    %v2875 = vld [vmem:[%s9 + $0xbc] sm:$0xf]
    %v2876 = vld [vmem:[%s9 + $0xc0] sm:$0xf]
    %v2877 = vld [vmem:[%s9 + $0xc4] sm:$0xf]
    %v2878 = vld [vmem:[%s9 + $0xc8] sm:$0xf]
    %v2879 = vld [vmem:[%s9 + $0xcc] sm:$0xf]
    %v2880 = vld [vmem:[%s9 + $0xd0] sm:$0xf]
    %v2881 = vld [vmem:[%s9 + $0xd4] sm:$0xf]
    %v2882 = vld [vmem:[%s9 + $0xd8] sm:$0xf]
    %v2883 = vld [vmem:[%s9 + $0xdc] sm:$0xf]
    %v2884 = vld [vmem:[%s9 + $0xe0] sm:$0xf]
    %v2885 = vld [vmem:[%s9 + $0xe4] sm:$0xf]
    %v2886 = vld [vmem:[%s9 + $0xe8] sm:$0xf]
    %v2887 = vld [vmem:[%s9 + $0xec] sm:$0xf]
    %v2888 = vld [vmem:[%s9 + $0xf0] sm:$0xf]
    %v2889 = vld [vmem:[%s9 + $0xf4] sm:$0xf]
    %v2890 = vld [vmem:[%s9 + $0xf8] sm:$0xf]
    %v2891 = vld [vmem:[%s9 + $0xfc] sm:$0xf]
    %v2892 = vlaneseq
    %v2893 = vshrl.u32 %v2892, 7
    %v2894 = vsub.s32 6, %v2893
    %v2895 = vrot.slane %v616, %v2894
    %v2960 = vunpack.c.l.b16 %v2828
    %v2961 = vunpack.c.l.b16 %v2829
    %v2962 = vunpack.c.l.b16 %v2830
    %v2963 = vunpack.c.l.b16 %v2831
    %v2964 = vunpack.c.l.b16 %v2832
    %v2965 = vunpack.c.l.b16 %v2833
    %v2966 = vunpack.c.l.b16 %v2834
    %v2967 = vunpack.c.l.b16 %v2835
    %v2968 = vunpack.c.l.b16 %v2836
    %v2969 = vunpack.c.l.b16 %v2837
    %v2970 = vunpack.c.l.b16 %v2838
    %v2971 = vunpack.c.l.b16 %v2839
    %v2972 = vunpack.c.l.b16 %v2840
    %v2973 = vunpack.c.l.b16 %v2841
    %v2974 = vunpack.c.l.b16 %v2842
    %v2975 = vunpack.c.l.b16 %v2843
    %v2976 = vunpack.c.l.b16 %v2844
    %v2977 = vunpack.c.l.b16 %v2845
    %v2978 = vunpack.c.l.b16 %v2846
    %v2979 = vunpack.c.l.b16 %v2847
    %v2980 = vunpack.c.l.b16 %v2848
    %v2981 = vunpack.c.l.b16 %v2849
    %v2982 = vunpack.c.l.b16 %v2850
    %v2983 = vunpack.c.l.b16 %v2851
    %v2984 = vunpack.c.l.b16 %v2852
    %v2985 = vunpack.c.l.b16 %v2853
    %v2986 = vunpack.c.l.b16 %v2854
    %v2987 = vunpack.c.l.b16 %v2855
    %v2988 = vunpack.c.l.b16 %v2856
    %v2989 = vunpack.c.l.b16 %v2857
    %v2990 = vunpack.c.l.b16 %v2858
    %v2991 = vunpack.c.l.b16 %v2859
    %v2992 = vunpack.c.l.b16 %v2860
    %v2993 = vunpack.c.l.b16 %v2861
    %v2994 = vunpack.c.l.b16 %v2862
    %v2995 = vunpack.c.l.b16 %v2863
    %v2996 = vunpack.c.l.b16 %v2864
    %v2997 = vunpack.c.l.b16 %v2865
    %v2998 = vunpack.c.l.b16 %v2866
    %v2999 = vunpack.c.l.b16 %v2867
    %v3000 = vunpack.c.l.b16 %v2868
    %v3001 = vunpack.c.l.b16 %v2869
    %v3002 = vunpack.c.l.b16 %v2870
    %v3003 = vunpack.c.l.b16 %v2871
    %v3004 = vunpack.c.l.b16 %v2872
    %v3005 = vunpack.c.l.b16 %v2873
    %v3006 = vunpack.c.l.b16 %v2874
    %v3007 = vunpack.c.l.b16 %v2875
    %v3008 = vunpack.c.l.b16 %v2876
    %v3009 = vunpack.c.l.b16 %v2877
    %v3010 = vunpack.c.l.b16 %v2878
    %v3011 = vunpack.c.l.b16 %v2879
    %v3012 = vunpack.c.l.b16 %v2880
    %v3013 = vunpack.c.l.b16 %v2881
    %v3014 = vunpack.c.l.b16 %v2882
    %v3015 = vunpack.c.l.b16 %v2883
    %v3016 = vunpack.c.l.b16 %v2884
    %v3017 = vunpack.c.l.b16 %v2885
    %v3018 = vunpack.c.l.b16 %v2886
    %v3019 = vunpack.c.l.b16 %v2887
    %v3020 = vunpack.c.l.b16 %v2888
    %v3021 = vunpack.c.l.b16 %v2889
    %v3022 = vunpack.c.l.b16 %v2890
    %v3023 = vunpack.c.l.b16 %v2891
    %v3024 = vpack.c.b16 %v2961, %v2960
    %v3025 = vpack.c.b16 %v2963, %v2962
    %v3026 = vpack.c.b16 %v2965, %v2964
    %v3027 = vpack.c.b16 %v2967, %v2966
    %v3028 = vpack.c.b16 %v2969, %v2968
    %v3029 = vpack.c.b16 %v2971, %v2970
    %v3030 = vpack.c.b16 %v2973, %v2972
    %v3031 = vpack.c.b16 %v2975, %v2974
    %v3032 = vpack.c.b16 %v2977, %v2976
    %v3033 = vpack.c.b16 %v2979, %v2978
    %v3034 = vpack.c.b16 %v2981, %v2980
    %v3035 = vpack.c.b16 %v2983, %v2982
    %v3036 = vpack.c.b16 %v2985, %v2984
    %v3037 = vpack.c.b16 %v2987, %v2986
    %v3038 = vpack.c.b16 %v2989, %v2988
    %v3039 = vpack.c.b16 %v2991, %v2990
    %v3040 = vpack.c.b16 %v2993, %v2992
    %v3041 = vpack.c.b16 %v2995, %v2994
    %v3042 = vpack.c.b16 %v2997, %v2996
    %v3043 = vpack.c.b16 %v2999, %v2998
    %v3044 = vpack.c.b16 %v3001, %v3000
    %v3045 = vpack.c.b16 %v3003, %v3002
    %v3046 = vpack.c.b16 %v3005, %v3004
    %v3047 = vpack.c.b16 %v3007, %v3006
    %v3048 = vpack.c.b16 %v3009, %v3008
    %v3049 = vpack.c.b16 %v3011, %v3010
    %v3050 = vpack.c.b16 %v3013, %v3012
    %v3051 = vpack.c.b16 %v3015, %v3014
    %v3052 = vpack.c.b16 %v3017, %v3016
    %v3053 = vpack.c.b16 %v3019, %v3018
    %v3054 = vpack.c.b16 %v3021, %v3020
    %v3055 = vpack.c.b16 %v3023, %v3022
    %3088 = vmatprep.subr.bf16.mxu0 0
    %3089 = vmatpush1.bf16.msra.mxu0 %v3024
    %3090 = vmatprep.subr.bf16.mxu0 0
    %3091 = vmatpush1.bf16.msra.mxu0 %v3025
    %3092 = vmatprep.subr.bf16.mxu0 0
    %3093 = vmatpush1.bf16.msra.mxu0 %v3026
    %3094 = vmatprep.subr.bf16.mxu0 0
    %3095 = vmatpush1.bf16.msra.mxu0 %v3027
    %3096 = vmatprep.subr.bf16.mxu0 0
    %3097 = vmatpush1.bf16.msra.mxu0 %v3028
    %3098 = vmatprep.subr.bf16.mxu0 0
    %3099 = vmatpush1.bf16.msra.mxu0 %v3029
    %3100 = vmatprep.subr.bf16.mxu0 0
    %3101 = vmatpush1.bf16.msra.mxu0 %v3030
    %3102 = vmatprep.subr.bf16.mxu0 0
    %3103 = vmatpush1.bf16.msra.mxu0 %v3031
    %3104 = vmatprep.subr.bf16.mxu0 0
    %3105 = vmatpush1.bf16.msra.mxu0 %v3032
    %3106 = vmatprep.subr.bf16.mxu0 0
    %3107 = vmatpush1.bf16.msra.mxu0 %v3033
    %3108 = vmatprep.subr.bf16.mxu0 0
    %3109 = vmatpush1.bf16.msra.mxu0 %v3034
    %3110 = vmatprep.subr.bf16.mxu0 0
    %3111 = vmatpush1.bf16.msra.mxu0 %v3035
    %3112 = vmatprep.subr.bf16.mxu0 0
    %3113 = vmatpush1.bf16.msra.mxu0 %v3036
    %3114 = vmatprep.subr.bf16.mxu0 0
    %3115 = vmatpush1.bf16.msra.mxu0 %v3037
    %3116 = vmatprep.subr.bf16.mxu0 0
    %3117 = vmatpush1.bf16.msra.mxu0 %v3038
    %3118 = vmatprep.subr.bf16.mxu0 0
    %3119 = vmatpush1.bf16.msra.mxu0 %v3039
    %3120 = vmatprep.mubr.bf16.mxu0 %v2825
    %3121 = vmatmul.mubr.bf16.gmra.mrb[0].mxu0 %v2824
    %v3122 = vpop.f32.mrb[0].mxu0
    %v3123 = vadd.f32 %v2895, %v3122
    %v3124 = vpop.f32.mrb[0].mxu0
    %v3125 = vpop.f32.mrb[0].mxu0
    %v3126 = vadd.f32 %v2895, %v3125
    %v3127 = vpop.f32.mrb[0].mxu0
    %3128 = vdwg.mxu0
    %3129 = vmatprep.subr.bf16.mxu0 0
    %3130 = vmatpush1.bf16.msra.mxu0 %v3040
    %3131 = vmatprep.subr.bf16.mxu0 0
    %3132 = vmatpush1.bf16.msra.mxu0 %v3041
    %3133 = vmatprep.subr.bf16.mxu0 0
    %3134 = vmatpush1.bf16.msra.mxu0 %v3042
    %3135 = vmatprep.subr.bf16.mxu0 0
    %3136 = vmatpush1.bf16.msra.mxu0 %v3043
    %3137 = vmatprep.subr.bf16.mxu0 0
    %3138 = vmatpush1.bf16.msra.mxu0 %v3044
    %3139 = vmatprep.subr.bf16.mxu0 0
    %3140 = vmatpush1.bf16.msra.mxu0 %v3045
    %3141 = vmatprep.subr.bf16.mxu0 0
    %3142 = vmatpush1.bf16.msra.mxu0 %v3046
    %3143 = vmatprep.subr.bf16.mxu0 0
    %3144 = vmatpush1.bf16.msra.mxu0 %v3047
    %3145 = vmatprep.subr.bf16.mxu0 0
    %3146 = vmatpush1.bf16.msra.mxu0 %v3048
    %3147 = vmatprep.subr.bf16.mxu0 0
    %3148 = vmatpush1.bf16.msra.mxu0 %v3049
    %3149 = vmatprep.subr.bf16.mxu0 0
    %3150 = vmatpush1.bf16.msra.mxu0 %v3050
    %3151 = vmatprep.subr.bf16.mxu0 0
    %3152 = vmatpush1.bf16.msra.mxu0 %v3051
    %3153 = vmatprep.subr.bf16.mxu0 0
    %3154 = vmatpush1.bf16.msra.mxu0 %v3052
    %3155 = vmatprep.subr.bf16.mxu0 0
    %3156 = vmatpush1.bf16.msra.mxu0 %v3053
    %3157 = vmatprep.subr.bf16.mxu0 0
    %3158 = vmatpush1.bf16.msra.mxu0 %v3054
    %3159 = vmatprep.subr.bf16.mxu0 0
    %3160 = vmatpush1.bf16.msra.mxu0 %v3055
    %3161 = vmatprep.mubr.bf16.mxu0 %v2827
    %3162 = vmatmul.mubr.bf16.gmra.mrb[0].mxu0 %v2826
    %v3163 = vpop.f32.mrb[0].mxu0
    %v3164 = vadd.f32 %v3123, %v3163
    %v3165 = vpop.f32.mrb[0].mxu0
    %v3166 = vpop.f32.mrb[0].mxu0
    %v3167 = vadd.f32 %v3126, %v3166
    %v3168 = vpop.f32.mrb[0].mxu0
    %3169 = vdwg.mxu0
    %v3170 = vlaneseq
    %v3171 = vshrl.u32 %v3170, 7
    %v3172 = vsub.s32 7, %v3171
    %v3173 = vrot.slane %v616, %v3172
    %v3174 = vmul.f32 %v3173, %v3164
    %v3175 = vmul.f32 %v3173, %v3167
    %v3176 = vadd.f32 %v2413, %v3174
    %v3177 = vadd.f32 %v2414, %v3175
    %s3178 = scalar_lea.vmem %s10, 8
    %v3179 = vld [vmem:[%s3178] sm:$0xff]
    %3180 = vadd.xlane.f32.xlu0 %v3176
    %v3181 = vpop.xlane.xlu0 %3180
    %v3182 = vsel %vm619, %v3177, 0.0
    %3183 = vadd.xlane.f32.xlu0 %v3182
    %v3184 = vpop.xlane.xlu0 %3183
    %v3185 = vmul.f32 %v3181, %v623
    %v3186 = vmul.f32 %v3184, %v623
    %v3187 = vsub.f32 %v3176, %v3185
    %v3188 = vsub.f32 %v3177, %v3186
    %v3189 = vmul.f32 %v3187, %v3187
    %v3190 = vmul.f32 %v3188, %v3188
    %3191 = vadd.xlane.f32.xlu0 %v3189
    %v3192 = vpop.xlane.xlu0 %3191
    %v3193 = vsel %vm619, %v3190, 0.0
    %3194 = vadd.xlane.f32.xlu0 %v3193
    %v3195 = vpop.xlane.xlu0 %3194
    %v3196 = vmul.f32 %v3192, %v623
    %v3197 = vmul.f32 %v3195, %v623
    %v3198 = vadd.f32 %v3196, 1e-06
    %v3199 = vadd.f32 %v3197, 1e-06
    %v3200 = vrsqrt.pop %v3198
    %v3201 = vrsqrt.pop %v3199
    %v3202 = vmul.f32 %v3187, %v3200
    %v3203 = vmul.f32 %v3188, %v3201
    %v3204 = vlaneseq
    %v3205 = vshrl.u32 %v3204, 7
    %v3206 = vsub.s32 0, %v3205
    %v3207 = vrot.slane %v3179, %v3206
    %v3208 = vmul.f32 %v3202, %v3207
    %v3209 = vmul.f32 %v3203, %v3207
    %v3210 = vlaneseq
    %v3211 = vshrl.u32 %v3210, 7
    %v3212 = vsub.s32 1, %v3211
    %v3213 = vrot.slane %v3179, %v3212
    %v3214 = vadd.f32 %v3208, %v3213
    %v3215 = vadd.f32 %v3209, %v3213
    %v3216 = vpack.c.bf16 %v3215, %v3214
    %s3217 = scalar_lea.vmem %s4, 192
    %v3218 = vld [vmem:[%s3217] sm:$0xff]
    %v3219 = vld [vmem:[%s3217 + $0x8] sm:$0xf]
    %v3220 = vld [vmem:[%s3217 + $0xc] sm:$0xff]
    %v3221 = vld [vmem:[%s3217 + $0x14] sm:$0xf]
    %v3222 = vld [vmem:[%s3217 + $0x18] sm:$0xff]
    %v3223 = vld [vmem:[%s3217 + $0x20] sm:$0xf]
    %v3224 = vld [vmem:[%s3217 + $0x24] sm:$0xff]
    %v3225 = vld [vmem:[%s3217 + $0x2c] sm:$0xf]
    %v3226 = vld [vmem:[%s3217 + $0x30] sm:$0xff]
    %v3227 = vld [vmem:[%s3217 + $0x38] sm:$0xf]
    %v3228 = vld [vmem:[%s3217 + $0x3c] sm:$0xff]
    %v3229 = vld [vmem:[%s3217 + $0x44] sm:$0xf]
    %v3230 = vld [vmem:[%s3217 + $0x48] sm:$0xff]
    %v3231 = vld [vmem:[%s3217 + $0x50] sm:$0xf]
    %v3232 = vld [vmem:[%s3217 + $0x54] sm:$0xff]
    %v3233 = vld [vmem:[%s3217 + $0x5c] sm:$0xf]
    %v3234 = vld [vmem:[%s3217 + $0x60] sm:$0xff]
    %v3235 = vld [vmem:[%s3217 + $0x68] sm:$0xf]
    %v3236 = vld [vmem:[%s3217 + $0x6c] sm:$0xff]
    %v3237 = vld [vmem:[%s3217 + $0x74] sm:$0xf]
    %v3238 = vld [vmem:[%s3217 + $0x78] sm:$0xff]
    %v3239 = vld [vmem:[%s3217 + $0x80] sm:$0xf]
    %v3240 = vld [vmem:[%s3217 + $0x84] sm:$0xff]
    %v3241 = vld [vmem:[%s3217 + $0x8c] sm:$0xf]
    %v3242 = vld [vmem:[%s3217 + $0x90] sm:$0xff]
    %v3243 = vld [vmem:[%s3217 + $0x98] sm:$0xf]
    %v3244 = vld [vmem:[%s3217 + $0x9c] sm:$0xff]
    %v3245 = vld [vmem:[%s3217 + $0xa4] sm:$0xf]
    %v3246 = vld [vmem:[%s3217 + $0xa8] sm:$0xff]
    %v3247 = vld [vmem:[%s3217 + $0xb0] sm:$0xf]
    %v3248 = vld [vmem:[%s3217 + $0xb4] sm:$0xff]
    %v3249 = vld [vmem:[%s3217 + $0xbc] sm:$0xf]
    %s3250 = scalar_lea.vmem [#allocation2], 3
    %v3251 = vld [vmem:[%s3250] sm:$0x7]
    %v3253 = vlaneseq
    %v3254 = vshrl.u32 %v3253, 7
    %v3255 = vsub.s32 0, %v3254
    %v3256 = vrot.slane %v3251, %v3255
    %v3257 = vlaneseq
    %v3258 = vshrl.u32 %v3257, 7
    %v3259 = vsub.s32 1, %v3258
    %v3260 = vrot.slane %v3251, %v3259
    %v3261 = vlaneseq
    %v3262 = vshrl.u32 %v3261, 7
    %v3263 = vsub.s32 2, %v3262
    %v3264 = vrot.slane %v3251, %v3263
    %v3300 = vunpack.c.l.b16 %v3218
    %v3301 = vunpack.c.h.b16 %v3218
    %v3302 = vunpack.c.l.b16 %v3219
    %v3303 = vunpack.c.l.b16 %v3220
    %v3304 = vunpack.c.h.b16 %v3220
    %v3305 = vunpack.c.l.b16 %v3221
    %v3306 = vunpack.c.l.b16 %v3222
    %v3307 = vunpack.c.h.b16 %v3222
    %v3308 = vunpack.c.l.b16 %v3223
    %v3309 = vunpack.c.l.b16 %v3224
    %v3310 = vunpack.c.h.b16 %v3224
    %v3311 = vunpack.c.l.b16 %v3225
    %v3312 = vunpack.c.l.b16 %v3226
    %v3313 = vunpack.c.h.b16 %v3226
    %v3314 = vunpack.c.l.b16 %v3227
    %v3315 = vunpack.c.l.b16 %v3228
    %v3316 = vunpack.c.h.b16 %v3228
    %v3317 = vunpack.c.l.b16 %v3229
    %v3318 = vunpack.c.l.b16 %v3230
    %v3319 = vunpack.c.h.b16 %v3230
    %v3320 = vunpack.c.l.b16 %v3231
    %v3321 = vunpack.c.l.b16 %v3232
    %v3322 = vunpack.c.h.b16 %v3232
    %v3323 = vunpack.c.l.b16 %v3233
    %v3324 = vunpack.c.l.b16 %v3234
    %v3325 = vunpack.c.h.b16 %v3234
    %v3326 = vunpack.c.l.b16 %v3235
    %v3327 = vunpack.c.l.b16 %v3236
    %v3328 = vunpack.c.h.b16 %v3236
    %v3329 = vunpack.c.l.b16 %v3237
    %v3330 = vunpack.c.l.b16 %v3238
    %v3331 = vunpack.c.h.b16 %v3238
    %v3332 = vunpack.c.l.b16 %v3239
    %v3333 = vunpack.c.l.b16 %v3240
    %v3334 = vunpack.c.h.b16 %v3240
    %v3335 = vunpack.c.l.b16 %v3241
    %v3336 = vunpack.c.l.b16 %v3242
    %v3337 = vunpack.c.h.b16 %v3242
    %v3338 = vunpack.c.l.b16 %v3243
    %v3339 = vunpack.c.l.b16 %v3244
    %v3340 = vunpack.c.h.b16 %v3244
    %v3341 = vunpack.c.l.b16 %v3245
    %v3342 = vunpack.c.l.b16 %v3246
    %v3343 = vunpack.c.h.b16 %v3246
    %v3344 = vunpack.c.l.b16 %v3247
    %v3345 = vunpack.c.l.b16 %v3248
    %v3346 = vunpack.c.h.b16 %v3248
    %v3347 = vunpack.c.l.b16 %v3249
    %v3348 = vpack.c.b16 %v3303, %v3300
    %v3349 = vpack.c.b16 %v3304, %v3301
    %v3350 = vpack.c.b16 %v3305, %v3302
    %v3351 = vpack.c.b16 %v3309, %v3306
    %v3352 = vpack.c.b16 %v3310, %v3307
    %v3353 = vpack.c.b16 %v3311, %v3308
    %v3354 = vpack.c.b16 %v3315, %v3312
    %v3355 = vpack.c.b16 %v3316, %v3313
    %v3356 = vpack.c.b16 %v3317, %v3314
    %v3357 = vpack.c.b16 %v3321, %v3318
    %v3358 = vpack.c.b16 %v3322, %v3319
    %v3359 = vpack.c.b16 %v3323, %v3320
    %v3360 = vpack.c.b16 %v3327, %v3324
    %v3361 = vpack.c.b16 %v3328, %v3325
    %v3362 = vpack.c.b16 %v3329, %v3326
    %v3363 = vpack.c.b16 %v3333, %v3330
    %v3364 = vpack.c.b16 %v3334, %v3331
    %v3365 = vpack.c.b16 %v3335, %v3332
    %v3366 = vpack.c.b16 %v3339, %v3336
    %v3367 = vpack.c.b16 %v3340, %v3337
    %v3368 = vpack.c.b16 %v3341, %v3338
    %v3369 = vpack.c.b16 %v3345, %v3342
    %v3370 = vpack.c.b16 %v3346, %v3343
    %v3371 = vpack.c.b16 %v3347, %v3344
    %3396 = vmatprep.subr.bf16.mxu0 %v3349
    %3397 = vmatpush1.bf16.msra.mxu0 %v3348
    %3398 = vmatprep.subr.bf16.mxu0 %v3352
    %3399 = vmatpush1.bf16.msra.mxu0 %v3351
    %3400 = vmatprep.subr.bf16.mxu0 %v3355
    %3401 = vmatpush1.bf16.msra.mxu0 %v3354
    %3402 = vmatprep.subr.bf16.mxu0 %v3358
    %3403 = vmatpush1.bf16.msra.mxu0 %v3357
    %3404 = vmatprep.subr.bf16.mxu0 %v3361
    %3405 = vmatpush1.bf16.msra.mxu0 %v3360
    %3406 = vmatprep.subr.bf16.mxu0 %v3364
    %3407 = vmatpush1.bf16.msra.mxu0 %v3363
    %3408 = vmatprep.subr.bf16.mxu0 %v3367
    %3409 = vmatpush1.bf16.msra.mxu0 %v3366
    %3410 = vmatprep.subr.bf16.mxu0 %v3370
    %3411 = vmatpush1.bf16.msra.mxu0 %v3369
    %3412 = vmatprep.subr.bf16.mxu0 0
    %3413 = vmatpush1.bf16.msra.mxu0 0
    %3414 = vmatprep.subr.bf16.mxu0 0
    %3415 = vmatpush1.bf16.msra.mxu0 0
    %3416 = vmatprep.subr.bf16.mxu0 0
    %3417 = vmatpush1.bf16.msra.mxu0 0
    %3418 = vmatprep.subr.bf16.mxu0 0
    %3419 = vmatpush1.bf16.msra.mxu0 0
    %3420 = vmatprep.subr.bf16.mxu0 0
    %3421 = vmatpush1.bf16.msra.mxu0 0
    %3422 = vmatprep.subr.bf16.mxu0 0
    %3423 = vmatpush1.bf16.msra.mxu0 0
    %3424 = vmatprep.subr.bf16.mxu0 0
    %3425 = vmatpush1.bf16.msra.mxu0 0
    %3426 = vmatprep.subr.bf16.mxu0 0
    %3427 = vmatpush1.bf16.msra.mxu0 0
    %3428 = vmatprep.mubr.bf16.mxu0 0
    %3429 = vmatmul.mubr.bf16.gmra.mrb[0].mxu0 %v3216
    %v3430 = vpop.f32.mrb[0].mxu0
    %v3431 = vadd.f32 %v3256, %v3430
    %v3432 = vpop.f32.mrb[0].mxu0
    %v3433 = vadd.f32 %v3260, %v3432
    %v3434 = vpop.f32.mrb[0].mxu0
    %v3435 = vadd.f32 %v3256, %v3434
    %v3436 = vpop.f32.mrb[0].mxu0
    %v3437 = vadd.f32 %v3260, %v3436
    %3438 = vdwg.mxu0
    %3439 = vmatprep.subr.bf16.mxu0 0
    %3440 = vmatpush1.bf16.msra.mxu0 %v3350
    %3441 = vmatprep.subr.bf16.mxu0 0
    %3442 = vmatpush1.bf16.msra.mxu0 %v3353
    %3443 = vmatprep.subr.bf16.mxu0 0
    %3444 = vmatpush1.bf16.msra.mxu0 %v3356
    %3445 = vmatprep.subr.bf16.mxu0 0
    %3446 = vmatpush1.bf16.msra.mxu0 %v3359
    %3447 = vmatprep.subr.bf16.mxu0 0
    %3448 = vmatpush1.bf16.msra.mxu0 %v3362
    %3449 = vmatprep.subr.bf16.mxu0 0
    %3450 = vmatpush1.bf16.msra.mxu0 %v3365
    %3451 = vmatprep.subr.bf16.mxu0 0
    %3452 = vmatpush1.bf16.msra.mxu0 %v3368
    %3453 = vmatprep.subr.bf16.mxu0 0
    %3454 = vmatpush1.bf16.msra.mxu0 %v3371
    %3455 = vmatprep.subr.bf16.mxu0 0
    %3456 = vmatpush1.bf16.msra.mxu0 0
    %3457 = vmatprep.subr.bf16.mxu0 0
    %3458 = vmatpush1.bf16.msra.mxu0 0
    %3459 = vmatprep.subr.bf16.mxu0 0
    %3460 = vmatpush1.bf16.msra.mxu0 0
    %3461 = vmatprep.subr.bf16.mxu0 0
    %3462 = vmatpush1.bf16.msra.mxu0 0
    %3463 = vmatprep.subr.bf16.mxu0 0
    %3464 = vmatpush1.bf16.msra.mxu0 0
    %3465 = vmatprep.subr.bf16.mxu0 0
    %3466 = vmatpush1.bf16.msra.mxu0 0
    %3467 = vmatprep.subr.bf16.mxu0 0
    %3468 = vmatpush1.bf16.msra.mxu0 0
    %3469 = vmatprep.subr.bf16.mxu0 0
    %3470 = vmatpush1.bf16.msra.mxu0 0
    %3471 = vmatprep.mubr.bf16.mxu0 0
    %3472 = vmatmul.mubr.bf16.gmra.mrb[0].mxu0 %v3216
    %v3473 = vpop.f32.mrb[0].mxu0
    %v3474 = vadd.f32 %v3264, %v3473
    %v3475 = vpop.f32.mrb[0].mxu0
    %v3476 = vpop.f32.mrb[0].mxu0
    %v3477 = vadd.f32 %v3264, %v3476
    %v3478 = vpop.f32.mrb[0].mxu0
    %3479 = vdwg.mxu0
    %3481 = vrot.lane.b32.xlu0 %v3431, 96
    %v3482 = vpop.permute.xlu0 %3481
    %v3483 = vsel %vm920, %v3431, 0
    %v3485 = vsel %vm920, %v3482, 0
    %3487 = vmatprep.subr.mxu0 0.0
    %3488 = vmatpush1.xpose.msra.mxu0 %v3485
    %3489 = vmatprep.subr.mxu0 0.0
    %3490 = vmatpush1.xpose.msra.mxu0 0.0
    %3491 = vmatprep.subr.mxu0 0.0
    %3492 = vmatpush1.xpose.msra.mxu0 0.0
    %3493 = vmatprep.subr.mxu0 0.0
    %3494 = vmatpush1.xpose.msra.mxu0 0.0
    %3495 = vmatprep.subr.mxu0 0.0
    %3496 = vmatpush1.xpose.msra.mxu0 0.0
    %3497 = vmatprep.subr.mxu0 0.0
    %3498 = vmatpush1.xpose.msra.mxu0 0.0
    %3499 = vmatprep.subr.mxu0 0.0
    %3500 = vmatpush1.xpose.msra.mxu0 0.0
    %3501 = vmatprep.subr.mxu0 0.0
    %3502 = vmatpush1.xpose.msra.mxu0 0.0
    %3503 = vmatprep.subr.mxu0 0.0
    %3504 = vmatpush1.xpose.msra.mxu0 0.0
    %3505 = vmatprep.subr.mxu0 0.0
    %3506 = vmatpush1.xpose.msra.mxu0 0.0
    %3507 = vmatprep.subr.mxu0 0.0
    %3508 = vmatpush1.xpose.msra.mxu0 0.0
    %3509 = vmatprep.subr.mxu0 0.0
    %3510 = vmatpush1.xpose.msra.mxu0 0.0
    %3511 = vmatprep.subr.mxu0 0.0
    %3512 = vmatpush1.xpose.msra.mxu0 0.0
    %3513 = vmatprep.subr.mxu0 0.0
    %3514 = vmatpush1.xpose.msra.mxu0 0.0
    %3515 = vmatprep.subr.mxu0 0.0
    %3516 = vmatpush1.xpose.msra.mxu0 0.0
    %3517 = vmatprep.subr.mxu0 0.0
    %3518 = vmatpush1.xpose.msra.mxu0 0.0
    %3519 = vmatprep.subr.mxu0 0.0
    %3520 = vmatpush1.xpose.msra.mxu0 0.0
    %3521 = vmatprep.subr.mxu0 0.0
    %3522 = vmatpush1.xpose.msra.mxu0 0.0
    %3523 = vmatprep.subr.mxu0 0.0
    %3524 = vmatpush1.xpose.msra.mxu0 0.0
    %3525 = vmatprep.subr.mxu0 0.0
    %3526 = vmatpush1.xpose.msra.mxu0 0.0
    %3527 = vmatprep.subr.mxu0 0.0
    %3528 = vmatpush1.xpose.msra.mxu0 0.0
    %3529 = vmatprep.subr.mxu0 0.0
    %3530 = vmatpush1.xpose.msra.mxu0 0.0
    %3531 = vmatprep.subr.mxu0 0.0
    %3532 = vmatpush1.xpose.msra.mxu0 0.0
    %3533 = vmatprep.subr.mxu0 0.0
    %3534 = vmatpush1.xpose.msra.mxu0 0.0
    %3535 = vmatprep.subr.mxu0 0.0
    %3536 = vmatpush1.xpose.msra.mxu0 0.0
    %3537 = vmatprep.subr.mxu0 0.0
    %3538 = vmatpush1.xpose.msra.mxu0 0.0
    %3539 = vmatprep.subr.mxu0 0.0
    %3540 = vmatpush1.xpose.msra.mxu0 0.0
    %3541 = vmatprep.subr.mxu0 0.0
    %3542 = vmatpush1.xpose.msra.mxu0 0.0
    %3543 = vmatprep.subr.mxu0 0.0
    %3544 = vmatpush1.xpose.msra.mxu0 0.0
    %3545 = vmatprep.subr.mxu0 0.0
    %3546 = vmatpush1.xpose.msra.mxu0 0.0
    %3547 = vmatprep.subr.mxu0 0.0
    %3548 = vmatpush1.xpose.msra.mxu0 0.0
    %3549 = vmatprep.subr.mxu0 0.0
    %3550 = vmatpush1.xpose.msra.mxu0 0.0
    %3551 = vmatprep.mubr.f32.mxu0 0.0
    %3552 = vmatmul.mubr.f32.gmra.mrb[0].mxu0 %v3483
    %v3553 = vpop.f32.mrb[0].mxu0
    %v3554 = vadd.f32 0.0, %v3553
    %v3555 = vpop.f32.mrb[0].mxu0
    %3556 = vdwg.mxu0
    %v3557 = vmul.f32 %v3554, 0.17677669
    %v3558 = vsel %vm996, %v3557, -inf
    %3559 = vmax.xlane.f32.xlu0 %v3558
    %v3560 = vpop.xlane.xlu0 %3559
    %v3561 = vsub.f32 %v3557, %v3560
    %v3562 = vmul.f32 %v3561, 1.442695
    %v3563 = vpow.pop %v3562
    %v3564 = vsel %vm996, %v3563, 0.0
    %3565 = vadd.xlane.f32.xlu0 %v3564
    %v3566 = vpop.xlane.xlu0 %3565
    %v3567 = vrcp.pop %v3566
    %v3568 = vmul.f32 %v3563, %v3567
    %3569 = vrot.lane.b32.xlu0 %v3431, 64
    %v3570 = vpop.permute.xlu0 %3569
    %v3572 = vsel %vm1010, %v3568, 0
    %v3574 = vsel %vm1014, %v3570, 0
    %3576 = vmatprep.subr.mxu0 0.0
    %3577 = vmatpush1.msra.mxu0 %v3574
    %3578 = vmatprep.subr.mxu0 0.0
    %3579 = vmatpush1.msra.mxu0 0.0
    %3580 = vmatprep.subr.mxu0 0.0
    %3581 = vmatpush1.msra.mxu0 0.0
    %3582 = vmatprep.subr.mxu0 0.0
    %3583 = vmatpush1.msra.mxu0 0.0
    %3584 = vmatprep.subr.mxu0 0.0
    %3585 = vmatpush1.msra.mxu0 0.0
    %3586 = vmatprep.subr.mxu0 0.0
    %3587 = vmatpush1.msra.mxu0 0.0
    %3588 = vmatprep.subr.mxu0 0.0
    %3589 = vmatpush1.msra.mxu0 0.0
    %3590 = vmatprep.subr.mxu0 0.0
    %3591 = vmatpush1.msra.mxu0 0.0
    %3592 = vmatprep.subr.mxu0 0.0
    %3593 = vmatpush1.msra.mxu0 0.0
    %3594 = vmatprep.subr.mxu0 0.0
    %3595 = vmatpush1.msra.mxu0 0.0
    %3596 = vmatprep.subr.mxu0 0.0
    %3597 = vmatpush1.msra.mxu0 0.0
    %3598 = vmatprep.subr.mxu0 0.0
    %3599 = vmatpush1.msra.mxu0 0.0
    %3600 = vmatprep.subr.mxu0 0.0
    %3601 = vmatpush1.msra.mxu0 0.0
    %3602 = vmatprep.subr.mxu0 0.0
    %3603 = vmatpush1.msra.mxu0 0.0
    %3604 = vmatprep.subr.mxu0 0.0
    %3605 = vmatpush1.msra.mxu0 0.0
    %3606 = vmatprep.subr.mxu0 0.0
    %3607 = vmatpush1.msra.mxu0 0.0
    %3608 = vmatprep.subr.mxu0 0.0
    %3609 = vmatpush1.msra.mxu0 0.0
    %3610 = vmatprep.subr.mxu0 0.0
    %3611 = vmatpush1.msra.mxu0 0.0
    %3612 = vmatprep.subr.mxu0 0.0
    %3613 = vmatpush1.msra.mxu0 0.0
    %3614 = vmatprep.subr.mxu0 0.0
    %3615 = vmatpush1.msra.mxu0 0.0
    %3616 = vmatprep.subr.mxu0 0.0
    %3617 = vmatpush1.msra.mxu0 0.0
    %3618 = vmatprep.subr.mxu0 0.0
    %3619 = vmatpush1.msra.mxu0 0.0
    %3620 = vmatprep.subr.mxu0 0.0
    %3621 = vmatpush1.msra.mxu0 0.0
    %3622 = vmatprep.subr.mxu0 0.0
    %3623 = vmatpush1.msra.mxu0 0.0
    %3624 = vmatprep.subr.mxu0 0.0
    %3625 = vmatpush1.msra.mxu0 0.0
    %3626 = vmatprep.subr.mxu0 0.0
    %3627 = vmatpush1.msra.mxu0 0.0
    %3628 = vmatprep.subr.mxu0 0.0
    %3629 = vmatpush1.msra.mxu0 0.0
    %3630 = vmatprep.subr.mxu0 0.0
    %3631 = vmatpush1.msra.mxu0 0.0
    %3632 = vmatprep.subr.mxu0 0.0
    %3633 = vmatpush1.msra.mxu0 0.0
    %3634 = vmatprep.subr.mxu0 0.0
    %3635 = vmatpush1.msra.mxu0 0.0
    %3636 = vmatprep.subr.mxu0 0.0
    %3637 = vmatpush1.msra.mxu0 0.0
    %3638 = vmatprep.subr.mxu0 0.0
    %3639 = vmatpush1.msra.mxu0 0.0
    %3640 = vmatprep.mubr.f32.mxu0 0.0
    %3641 = vmatmul.mubr.f32.gmra.mrb[0].mxu0 %v3572
    %v3642 = vpop.f32.mrb[0].mxu0
    %v3643 = vadd.f32 0.0, %v3642
    %v3644 = vpop.f32.mrb[0].mxu0
    %3645 = vdwg.mxu0
    %3646 = vrot.lane.b32.xlu0 %v3431, 32
    %v3647 = vpop.permute.xlu0 %3646
    %v3648 = vsel %vm920, %v3647, 0
    %v3651 = vsel %vm920, %v3433, 0
    %3653 = vmatprep.subr.mxu0 0.0
    %3654 = vmatpush1.xpose.msra.mxu0 %v3651
    %3655 = vmatprep.subr.mxu0 0.0
    %3656 = vmatpush1.xpose.msra.mxu0 0.0
    %3657 = vmatprep.subr.mxu0 0.0
    %3658 = vmatpush1.xpose.msra.mxu0 0.0
    %3659 = vmatprep.subr.mxu0 0.0
    %3660 = vmatpush1.xpose.msra.mxu0 0.0
    %3661 = vmatprep.subr.mxu0 0.0
    %3662 = vmatpush1.xpose.msra.mxu0 0.0
    %3663 = vmatprep.subr.mxu0 0.0
    %3664 = vmatpush1.xpose.msra.mxu0 0.0
    %3665 = vmatprep.subr.mxu0 0.0
    %3666 = vmatpush1.xpose.msra.mxu0 0.0
    %3667 = vmatprep.subr.mxu0 0.0
    %3668 = vmatpush1.xpose.msra.mxu0 0.0
    %3669 = vmatprep.subr.mxu0 0.0
    %3670 = vmatpush1.xpose.msra.mxu0 0.0
    %3671 = vmatprep.subr.mxu0 0.0
    %3672 = vmatpush1.xpose.msra.mxu0 0.0
    %3673 = vmatprep.subr.mxu0 0.0
    %3674 = vmatpush1.xpose.msra.mxu0 0.0
    %3675 = vmatprep.subr.mxu0 0.0
    %3676 = vmatpush1.xpose.msra.mxu0 0.0
    %3677 = vmatprep.subr.mxu0 0.0
    %3678 = vmatpush1.xpose.msra.mxu0 0.0
    %3679 = vmatprep.subr.mxu0 0.0
    %3680 = vmatpush1.xpose.msra.mxu0 0.0
    %3681 = vmatprep.subr.mxu0 0.0
    %3682 = vmatpush1.xpose.msra.mxu0 0.0
    %3683 = vmatprep.subr.mxu0 0.0
    %3684 = vmatpush1.xpose.msra.mxu0 0.0
    %3685 = vmatprep.subr.mxu0 0.0
    %3686 = vmatpush1.xpose.msra.mxu0 0.0
    %3687 = vmatprep.subr.mxu0 0.0
    %3688 = vmatpush1.xpose.msra.mxu0 0.0
    %3689 = vmatprep.subr.mxu0 0.0
    %3690 = vmatpush1.xpose.msra.mxu0 0.0
    %3691 = vmatprep.subr.mxu0 0.0
    %3692 = vmatpush1.xpose.msra.mxu0 0.0
    %3693 = vmatprep.subr.mxu0 0.0
    %3694 = vmatpush1.xpose.msra.mxu0 0.0
    %3695 = vmatprep.subr.mxu0 0.0
    %3696 = vmatpush1.xpose.msra.mxu0 0.0
    %3697 = vmatprep.subr.mxu0 0.0
    %3698 = vmatpush1.xpose.msra.mxu0 0.0
    %3699 = vmatprep.subr.mxu0 0.0
    %3700 = vmatpush1.xpose.msra.mxu0 0.0
    %3701 = vmatprep.subr.mxu0 0.0
    %3702 = vmatpush1.xpose.msra.mxu0 0.0
    %3703 = vmatprep.subr.mxu0 0.0
    %3704 = vmatpush1.xpose.msra.mxu0 0.0
    %3705 = vmatprep.subr.mxu0 0.0
    %3706 = vmatpush1.xpose.msra.mxu0 0.0
    %3707 = vmatprep.subr.mxu0 0.0
    %3708 = vmatpush1.xpose.msra.mxu0 0.0
    %3709 = vmatprep.subr.mxu0 0.0
    %3710 = vmatpush1.xpose.msra.mxu0 0.0
    %3711 = vmatprep.subr.mxu0 0.0
    %3712 = vmatpush1.xpose.msra.mxu0 0.0
    %3713 = vmatprep.subr.mxu0 0.0
    %3714 = vmatpush1.xpose.msra.mxu0 0.0
    %3715 = vmatprep.subr.mxu0 0.0
    %3716 = vmatpush1.xpose.msra.mxu0 0.0
    %3717 = vmatprep.mubr.f32.mxu0 0.0
    %3718 = vmatmul.mubr.f32.gmra.mrb[0].mxu0 %v3648
    %v3719 = vpop.f32.mrb[0].mxu0
    %v3720 = vadd.f32 0.0, %v3719
    %v3721 = vpop.f32.mrb[0].mxu0
    %3722 = vdwg.mxu0
    %v3723 = vmul.f32 %v3720, 0.17677669
    %v3724 = vsel %vm996, %v3723, -inf
    %3725 = vmax.xlane.f32.xlu0 %v3724
    %v3726 = vpop.xlane.xlu0 %3725
    %v3727 = vsub.f32 %v3723, %v3726
    %v3728 = vmul.f32 %v3727, 1.442695
    %v3729 = vpow.pop %v3728
    %v3730 = vsel %vm996, %v3729, 0.0
    %3731 = vadd.xlane.f32.xlu0 %v3730
    %v3732 = vpop.xlane.xlu0 %3731
    %v3733 = vrcp.pop %v3732
    %v3734 = vmul.f32 %v3729, %v3733
    %3735 = vrot.lane.b32.xlu0 %v3433, 96
    %v3736 = vpop.permute.xlu0 %3735
    %v3738 = vsel %vm1010, %v3734, 0
    %v3740 = vsel %vm1014, %v3736, 0
    %3742 = vmatprep.subr.mxu0 0.0
    %3743 = vmatpush1.msra.mxu0 %v3740
    %3744 = vmatprep.subr.mxu0 0.0
    %3745 = vmatpush1.msra.mxu0 0.0
    %3746 = vmatprep.subr.mxu0 0.0
    %3747 = vmatpush1.msra.mxu0 0.0
    %3748 = vmatprep.subr.mxu0 0.0
    %3749 = vmatpush1.msra.mxu0 0.0
    %3750 = vmatprep.subr.mxu0 0.0
    %3751 = vmatpush1.msra.mxu0 0.0
    %3752 = vmatprep.subr.mxu0 0.0
    %3753 = vmatpush1.msra.mxu0 0.0
    %3754 = vmatprep.subr.mxu0 0.0
    %3755 = vmatpush1.msra.mxu0 0.0
    %3756 = vmatprep.subr.mxu0 0.0
    %3757 = vmatpush1.msra.mxu0 0.0
    %3758 = vmatprep.subr.mxu0 0.0
    %3759 = vmatpush1.msra.mxu0 0.0
    %3760 = vmatprep.subr.mxu0 0.0
    %3761 = vmatpush1.msra.mxu0 0.0
    %3762 = vmatprep.subr.mxu0 0.0
    %3763 = vmatpush1.msra.mxu0 0.0
    %3764 = vmatprep.subr.mxu0 0.0
    %3765 = vmatpush1.msra.mxu0 0.0
    %3766 = vmatprep.subr.mxu0 0.0
    %3767 = vmatpush1.msra.mxu0 0.0
    %3768 = vmatprep.subr.mxu0 0.0
    %3769 = vmatpush1.msra.mxu0 0.0
    %3770 = vmatprep.subr.mxu0 0.0
    %3771 = vmatpush1.msra.mxu0 0.0
    %3772 = vmatprep.subr.mxu0 0.0
    %3773 = vmatpush1.msra.mxu0 0.0
    %3774 = vmatprep.subr.mxu0 0.0
    %3775 = vmatpush1.msra.mxu0 0.0
    %3776 = vmatprep.subr.mxu0 0.0
    %3777 = vmatpush1.msra.mxu0 0.0
    %3778 = vmatprep.subr.mxu0 0.0
    %3779 = vmatpush1.msra.mxu0 0.0
    %3780 = vmatprep.subr.mxu0 0.0
    %3781 = vmatpush1.msra.mxu0 0.0
    %3782 = vmatprep.subr.mxu0 0.0
    %3783 = vmatpush1.msra.mxu0 0.0
    %3784 = vmatprep.subr.mxu0 0.0
    %3785 = vmatpush1.msra.mxu0 0.0
    %3786 = vmatprep.subr.mxu0 0.0
    %3787 = vmatpush1.msra.mxu0 0.0
    %3788 = vmatprep.subr.mxu0 0.0
    %3789 = vmatpush1.msra.mxu0 0.0
    %3790 = vmatprep.subr.mxu0 0.0
    %3791 = vmatpush1.msra.mxu0 0.0
    %3792 = vmatprep.subr.mxu0 0.0
    %3793 = vmatpush1.msra.mxu0 0.0
    %3794 = vmatprep.subr.mxu0 0.0
    %3795 = vmatpush1.msra.mxu0 0.0
    %3796 = vmatprep.subr.mxu0 0.0
    %3797 = vmatpush1.msra.mxu0 0.0
    %3798 = vmatprep.subr.mxu0 0.0
    %3799 = vmatpush1.msra.mxu0 0.0
    %3800 = vmatprep.subr.mxu0 0.0
    %3801 = vmatpush1.msra.mxu0 0.0
    %3802 = vmatprep.subr.mxu0 0.0
    %3803 = vmatpush1.msra.mxu0 0.0
    %3804 = vmatprep.subr.mxu0 0.0
    %3805 = vmatpush1.msra.mxu0 0.0
    %3806 = vmatprep.mubr.f32.mxu0 0.0
    %3807 = vmatmul.mubr.f32.gmra.mrb[0].mxu0 %v3738
    %v3808 = vpop.f32.mrb[0].mxu0
    %v3809 = vadd.f32 0.0, %v3808
    %v3810 = vpop.f32.mrb[0].mxu0
    %3811 = vdwg.mxu0
    %3812 = vrot.lane.b32.xlu0 %v3433, 64
    %v3813 = vpop.permute.xlu0 %3812
    %3814 = vrot.lane.b32.xlu0 %v3433, 32
    %v3815 = vpop.permute.xlu0 %3814
    %v3816 = vsel %vm920, %v3813, 0
    %v3818 = vsel %vm920, %v3815, 0
    %3820 = vmatprep.subr.mxu0 0.0
    %3821 = vmatpush1.xpose.msra.mxu0 %v3818
    %3822 = vmatprep.subr.mxu0 0.0
    %3823 = vmatpush1.xpose.msra.mxu0 0.0
    %3824 = vmatprep.subr.mxu0 0.0
    %3825 = vmatpush1.xpose.msra.mxu0 0.0
    %3826 = vmatprep.subr.mxu0 0.0
    %3827 = vmatpush1.xpose.msra.mxu0 0.0
    %3828 = vmatprep.subr.mxu0 0.0
    %3829 = vmatpush1.xpose.msra.mxu0 0.0
    %3830 = vmatprep.subr.mxu0 0.0
    %3831 = vmatpush1.xpose.msra.mxu0 0.0
    %3832 = vmatprep.subr.mxu0 0.0
    %3833 = vmatpush1.xpose.msra.mxu0 0.0
    %3834 = vmatprep.subr.mxu0 0.0
    %3835 = vmatpush1.xpose.msra.mxu0 0.0
    %3836 = vmatprep.subr.mxu0 0.0
    %3837 = vmatpush1.xpose.msra.mxu0 0.0
    %3838 = vmatprep.subr.mxu0 0.0
    %3839 = vmatpush1.xpose.msra.mxu0 0.0
    %3840 = vmatprep.subr.mxu0 0.0
    %3841 = vmatpush1.xpose.msra.mxu0 0.0
    %3842 = vmatprep.subr.mxu0 0.0
    %3843 = vmatpush1.xpose.msra.mxu0 0.0
    %3844 = vmatprep.subr.mxu0 0.0
    %3845 = vmatpush1.xpose.msra.mxu0 0.0
    %3846 = vmatprep.subr.mxu0 0.0
    %3847 = vmatpush1.xpose.msra.mxu0 0.0
    %3848 = vmatprep.subr.mxu0 0.0
    %3849 = vmatpush1.xpose.msra.mxu0 0.0
    %3850 = vmatprep.subr.mxu0 0.0
    %3851 = vmatpush1.xpose.msra.mxu0 0.0
    %3852 = vmatprep.subr.mxu0 0.0
    %3853 = vmatpush1.xpose.msra.mxu0 0.0
    %3854 = vmatprep.subr.mxu0 0.0
    %3855 = vmatpush1.xpose.msra.mxu0 0.0
    %3856 = vmatprep.subr.mxu0 0.0
    %3857 = vmatpush1.xpose.msra.mxu0 0.0
    %3858 = vmatprep.subr.mxu0 0.0
    %3859 = vmatpush1.xpose.msra.mxu0 0.0
    %3860 = vmatprep.subr.mxu0 0.0
    %3861 = vmatpush1.xpose.msra.mxu0 0.0
    %3862 = vmatprep.subr.mxu0 0.0
    %3863 = vmatpush1.xpose.msra.mxu0 0.0
    %3864 = vmatprep.subr.mxu0 0.0
    %3865 = vmatpush1.xpose.msra.mxu0 0.0
    %3866 = vmatprep.subr.mxu0 0.0
    %3867 = vmatpush1.xpose.msra.mxu0 0.0
    %3868 = vmatprep.subr.mxu0 0.0
    %3869 = vmatpush1.xpose.msra.mxu0 0.0
    %3870 = vmatprep.subr.mxu0 0.0
    %3871 = vmatpush1.xpose.msra.mxu0 0.0
    %3872 = vmatprep.subr.mxu0 0.0
    %3873 = vmatpush1.xpose.msra.mxu0 0.0
    %3874 = vmatprep.subr.mxu0 0.0
    %3875 = vmatpush1.xpose.msra.mxu0 0.0
    %3876 = vmatprep.subr.mxu0 0.0
    %3877 = vmatpush1.xpose.msra.mxu0 0.0
    %3878 = vmatprep.subr.mxu0 0.0
    %3879 = vmatpush1.xpose.msra.mxu0 0.0
    %3880 = vmatprep.subr.mxu0 0.0
    %3881 = vmatpush1.xpose.msra.mxu0 0.0
    %3882 = vmatprep.subr.mxu0 0.0
    %3883 = vmatpush1.xpose.msra.mxu0 0.0
    %3884 = vmatprep.mubr.f32.mxu0 0.0
    %3885 = vmatmul.mubr.f32.gmra.mrb[0].mxu0 %v3816
    %v3886 = vpop.f32.mrb[0].mxu0
    %v3887 = vadd.f32 0.0, %v3886
    %v3888 = vpop.f32.mrb[0].mxu0
    %3889 = vdwg.mxu0
    %v3890 = vmul.f32 %v3887, 0.17677669
    %v3891 = vsel %vm996, %v3890, -inf
    %3892 = vmax.xlane.f32.xlu0 %v3891
    %v3893 = vpop.xlane.xlu0 %3892
    %v3894 = vsub.f32 %v3890, %v3893
    %v3895 = vmul.f32 %v3894, 1.442695
    %v3896 = vpow.pop %v3895
    %v3897 = vsel %vm996, %v3896, 0.0
    %3898 = vadd.xlane.f32.xlu0 %v3897
    %v3899 = vpop.xlane.xlu0 %3898
    %v3900 = vrcp.pop %v3899
    %v3901 = vmul.f32 %v3896, %v3900
    %v3903 = vsel %vm1010, %v3901, 0
    %v3906 = vsel %vm1014, %v3474, 0
    %3908 = vmatprep.subr.mxu0 0.0
    %3909 = vmatpush1.msra.mxu0 %v3906
    %3910 = vmatprep.subr.mxu0 0.0
    %3911 = vmatpush1.msra.mxu0 0.0
    %3912 = vmatprep.subr.mxu0 0.0
    %3913 = vmatpush1.msra.mxu0 0.0
    %3914 = vmatprep.subr.mxu0 0.0
    %3915 = vmatpush1.msra.mxu0 0.0
    %3916 = vmatprep.subr.mxu0 0.0
    %3917 = vmatpush1.msra.mxu0 0.0
    %3918 = vmatprep.subr.mxu0 0.0
    %3919 = vmatpush1.msra.mxu0 0.0
    %3920 = vmatprep.subr.mxu0 0.0
    %3921 = vmatpush1.msra.mxu0 0.0
    %3922 = vmatprep.subr.mxu0 0.0
    %3923 = vmatpush1.msra.mxu0 0.0
    %3924 = vmatprep.subr.mxu0 0.0
    %3925 = vmatpush1.msra.mxu0 0.0
    %3926 = vmatprep.subr.mxu0 0.0
    %3927 = vmatpush1.msra.mxu0 0.0
    %3928 = vmatprep.subr.mxu0 0.0
    %3929 = vmatpush1.msra.mxu0 0.0
    %3930 = vmatprep.subr.mxu0 0.0
    %3931 = vmatpush1.msra.mxu0 0.0
    %3932 = vmatprep.subr.mxu0 0.0
    %3933 = vmatpush1.msra.mxu0 0.0
    %3934 = vmatprep.subr.mxu0 0.0
    %3935 = vmatpush1.msra.mxu0 0.0
    %3936 = vmatprep.subr.mxu0 0.0
    %3937 = vmatpush1.msra.mxu0 0.0
    %3938 = vmatprep.subr.mxu0 0.0
    %3939 = vmatpush1.msra.mxu0 0.0
    %3940 = vmatprep.subr.mxu0 0.0
    %3941 = vmatpush1.msra.mxu0 0.0
    %3942 = vmatprep.subr.mxu0 0.0
    %3943 = vmatpush1.msra.mxu0 0.0
    %3944 = vmatprep.subr.mxu0 0.0
    %3945 = vmatpush1.msra.mxu0 0.0
    %3946 = vmatprep.subr.mxu0 0.0
    %3947 = vmatpush1.msra.mxu0 0.0
    %3948 = vmatprep.subr.mxu0 0.0
    %3949 = vmatpush1.msra.mxu0 0.0
    %3950 = vmatprep.subr.mxu0 0.0
    %3951 = vmatpush1.msra.mxu0 0.0
    %3952 = vmatprep.subr.mxu0 0.0
    %3953 = vmatpush1.msra.mxu0 0.0
    %3954 = vmatprep.subr.mxu0 0.0
    %3955 = vmatpush1.msra.mxu0 0.0
    %3956 = vmatprep.subr.mxu0 0.0
    %3957 = vmatpush1.msra.mxu0 0.0
    %3958 = vmatprep.subr.mxu0 0.0
    %3959 = vmatpush1.msra.mxu0 0.0
    %3960 = vmatprep.subr.mxu0 0.0
    %3961 = vmatpush1.msra.mxu0 0.0
    %3962 = vmatprep.subr.mxu0 0.0
    %3963 = vmatpush1.msra.mxu0 0.0
    %3964 = vmatprep.subr.mxu0 0.0
    %3965 = vmatpush1.msra.mxu0 0.0
    %3966 = vmatprep.subr.mxu0 0.0
    %3967 = vmatpush1.msra.mxu0 0.0
    %3968 = vmatprep.subr.mxu0 0.0
    %3969 = vmatpush1.msra.mxu0 0.0
    %3970 = vmatprep.subr.mxu0 0.0
    %3971 = vmatpush1.msra.mxu0 0.0
    %3972 = vmatprep.mubr.f32.mxu0 0.0
    %3973 = vmatmul.mubr.f32.gmra.mrb[0].mxu0 %v3903
    %v3974 = vpop.f32.mrb[0].mxu0
    %v3975 = vadd.f32 0.0, %v3974
    %v3976 = vpop.f32.mrb[0].mxu0
    %3977 = vdwg.mxu0
    %3978 = vrot.lane.b32.xlu0 %v3474, 96
    %v3979 = vpop.permute.xlu0 %3978
    %3980 = vrot.lane.b32.xlu0 %v3474, 64
    %v3981 = vpop.permute.xlu0 %3980
    %v3982 = vsel %vm920, %v3979, 0
    %v3984 = vsel %vm920, %v3981, 0
    %3986 = vmatprep.subr.mxu0 0.0
    %3987 = vmatpush1.xpose.msra.mxu0 %v3984
    %3988 = vmatprep.subr.mxu0 0.0
    %3989 = vmatpush1.xpose.msra.mxu0 0.0
    %3990 = vmatprep.subr.mxu0 0.0
    %3991 = vmatpush1.xpose.msra.mxu0 0.0
    %3992 = vmatprep.subr.mxu0 0.0
    %3993 = vmatpush1.xpose.msra.mxu0 0.0
    %3994 = vmatprep.subr.mxu0 0.0
    %3995 = vmatpush1.xpose.msra.mxu0 0.0
    %3996 = vmatprep.subr.mxu0 0.0
    %3997 = vmatpush1.xpose.msra.mxu0 0.0
    %3998 = vmatprep.subr.mxu0 0.0
    %3999 = vmatpush1.xpose.msra.mxu0 0.0
    %4000 = vmatprep.subr.mxu0 0.0
    %4001 = vmatpush1.xpose.msra.mxu0 0.0
    %4002 = vmatprep.subr.mxu0 0.0
    %4003 = vmatpush1.xpose.msra.mxu0 0.0
    %4004 = vmatprep.subr.mxu0 0.0
    %4005 = vmatpush1.xpose.msra.mxu0 0.0
    %4006 = vmatprep.subr.mxu0 0.0
    %4007 = vmatpush1.xpose.msra.mxu0 0.0
    %4008 = vmatprep.subr.mxu0 0.0
    %4009 = vmatpush1.xpose.msra.mxu0 0.0
    %4010 = vmatprep.subr.mxu0 0.0
    %4011 = vmatpush1.xpose.msra.mxu0 0.0
    %4012 = vmatprep.subr.mxu0 0.0
    %4013 = vmatpush1.xpose.msra.mxu0 0.0
    %4014 = vmatprep.subr.mxu0 0.0
    %4015 = vmatpush1.xpose.msra.mxu0 0.0
    %4016 = vmatprep.subr.mxu0 0.0
    %4017 = vmatpush1.xpose.msra.mxu0 0.0
    %4018 = vmatprep.subr.mxu0 0.0
    %4019 = vmatpush1.xpose.msra.mxu0 0.0
    %4020 = vmatprep.subr.mxu0 0.0
    %4021 = vmatpush1.xpose.msra.mxu0 0.0
    %4022 = vmatprep.subr.mxu0 0.0
    %4023 = vmatpush1.xpose.msra.mxu0 0.0
    %4024 = vmatprep.subr.mxu0 0.0
    %4025 = vmatpush1.xpose.msra.mxu0 0.0
    %4026 = vmatprep.subr.mxu0 0.0
    %4027 = vmatpush1.xpose.msra.mxu0 0.0
    %4028 = vmatprep.subr.mxu0 0.0
    %4029 = vmatpush1.xpose.msra.mxu0 0.0
    %4030 = vmatprep.subr.mxu0 0.0
    %4031 = vmatpush1.xpose.msra.mxu0 0.0
    %4032 = vmatprep.subr.mxu0 0.0
    %4033 = vmatpush1.xpose.msra.mxu0 0.0
    %4034 = vmatprep.subr.mxu0 0.0
    %4035 = vmatpush1.xpose.msra.mxu0 0.0
    %4036 = vmatprep.subr.mxu0 0.0
    %4037 = vmatpush1.xpose.msra.mxu0 0.0
    %4038 = vmatprep.subr.mxu0 0.0
    %4039 = vmatpush1.xpose.msra.mxu0 0.0
    %4040 = vmatprep.subr.mxu0 0.0
    %4041 = vmatpush1.xpose.msra.mxu0 0.0
    %4042 = vmatprep.subr.mxu0 0.0
    %4043 = vmatpush1.xpose.msra.mxu0 0.0
    %4044 = vmatprep.subr.mxu0 0.0
    %4045 = vmatpush1.xpose.msra.mxu0 0.0
    %4046 = vmatprep.subr.mxu0 0.0
    %4047 = vmatpush1.xpose.msra.mxu0 0.0
    %4048 = vmatprep.subr.mxu0 0.0
    %4049 = vmatpush1.xpose.msra.mxu0 0.0
    %4050 = vmatprep.mubr.f32.mxu0 0.0
    %4051 = vmatmul.mubr.f32.gmra.mrb[0].mxu0 %v3982
    %v4052 = vpop.f32.mrb[0].mxu0
    %v4053 = vadd.f32 0.0, %v4052
    %v4054 = vpop.f32.mrb[0].mxu0
    %4055 = vdwg.mxu0
    %v4056 = vmul.f32 %v4053, 0.17677669
    %v4057 = vsel %vm996, %v4056, -inf
    %4058 = vmax.xlane.f32.xlu0 %v4057
    %v4059 = vpop.xlane.xlu0 %4058
    %v4060 = vsub.f32 %v4056, %v4059
    %v4061 = vmul.f32 %v4060, 1.442695
    %v4062 = vpow.pop %v4061
    %v4063 = vsel %vm996, %v4062, 0.0
    %4064 = vadd.xlane.f32.xlu0 %v4063
    %v4065 = vpop.xlane.xlu0 %4064
    %v4066 = vrcp.pop %v4065
    %v4067 = vmul.f32 %v4062, %v4066
    %4068 = vrot.lane.b32.xlu0 %v3474, 32
    %v4069 = vpop.permute.xlu0 %4068
    %v4071 = vsel %vm1010, %v4067, 0
    %v4073 = vsel %vm1014, %v4069, 0
    %4075 = vmatprep.subr.mxu0 0.0
    %4076 = vmatpush1.msra.mxu0 %v4073
    %4077 = vmatprep.subr.mxu0 0.0
    %4078 = vmatpush1.msra.mxu0 0.0
    %4079 = vmatprep.subr.mxu0 0.0
    %4080 = vmatpush1.msra.mxu0 0.0
    %4081 = vmatprep.subr.mxu0 0.0
    %4082 = vmatpush1.msra.mxu0 0.0
    %4083 = vmatprep.subr.mxu0 0.0
    %4084 = vmatpush1.msra.mxu0 0.0
    %4085 = vmatprep.subr.mxu0 0.0
    %4086 = vmatpush1.msra.mxu0 0.0
    %4087 = vmatprep.subr.mxu0 0.0
    %4088 = vmatpush1.msra.mxu0 0.0
    %4089 = vmatprep.subr.mxu0 0.0
    %4090 = vmatpush1.msra.mxu0 0.0
    %4091 = vmatprep.subr.mxu0 0.0
    %4092 = vmatpush1.msra.mxu0 0.0
    %4093 = vmatprep.subr.mxu0 0.0
    %4094 = vmatpush1.msra.mxu0 0.0
    %4095 = vmatprep.subr.mxu0 0.0
    %4096 = vmatpush1.msra.mxu0 0.0
    %4097 = vmatprep.subr.mxu0 0.0
    %4098 = vmatpush1.msra.mxu0 0.0
    %4099 = vmatprep.subr.mxu0 0.0
    %4100 = vmatpush1.msra.mxu0 0.0
    %4101 = vmatprep.subr.mxu0 0.0
    %4102 = vmatpush1.msra.mxu0 0.0
    %4103 = vmatprep.subr.mxu0 0.0
    %4104 = vmatpush1.msra.mxu0 0.0
    %4105 = vmatprep.subr.mxu0 0.0
    %4106 = vmatpush1.msra.mxu0 0.0
    %4107 = vmatprep.subr.mxu0 0.0
    %4108 = vmatpush1.msra.mxu0 0.0
    %4109 = vmatprep.subr.mxu0 0.0
    %4110 = vmatpush1.msra.mxu0 0.0
    %4111 = vmatprep.subr.mxu0 0.0
    %4112 = vmatpush1.msra.mxu0 0.0
    %4113 = vmatprep.subr.mxu0 0.0
    %4114 = vmatpush1.msra.mxu0 0.0
    %4115 = vmatprep.subr.mxu0 0.0
    %4116 = vmatpush1.msra.mxu0 0.0
    %4117 = vmatprep.subr.mxu0 0.0
    %4118 = vmatpush1.msra.mxu0 0.0
    %4119 = vmatprep.subr.mxu0 0.0
    %4120 = vmatpush1.msra.mxu0 0.0
    %4121 = vmatprep.subr.mxu0 0.0
    %4122 = vmatpush1.msra.mxu0 0.0
    %4123 = vmatprep.subr.mxu0 0.0
    %4124 = vmatpush1.msra.mxu0 0.0
    %4125 = vmatprep.subr.mxu0 0.0
    %4126 = vmatpush1.msra.mxu0 0.0
    %4127 = vmatprep.subr.mxu0 0.0
    %4128 = vmatpush1.msra.mxu0 0.0
    %4129 = vmatprep.subr.mxu0 0.0
    %4130 = vmatpush1.msra.mxu0 0.0
    %4131 = vmatprep.subr.mxu0 0.0
    %4132 = vmatpush1.msra.mxu0 0.0
    %4133 = vmatprep.subr.mxu0 0.0
    %4134 = vmatpush1.msra.mxu0 0.0
    %4135 = vmatprep.subr.mxu0 0.0
    %4136 = vmatpush1.msra.mxu0 0.0
    %4137 = vmatprep.subr.mxu0 0.0
    %4138 = vmatpush1.msra.mxu0 0.0
    %4139 = vmatprep.mubr.f32.mxu0 0.0
    %4140 = vmatmul.mubr.f32.gmra.mrb[0].mxu0 %v4071
    %v4141 = vpop.f32.mrb[0].mxu0
    %v4142 = vadd.f32 0.0, %v4141
    %v4143 = vpop.f32.mrb[0].mxu0
    %4144 = vdwg.mxu0
    %4146 = vrot.lane.b32.xlu0 %v3809, 32
    %v4147 = vpop.permute.xlu0 %4146
    %4150 = vrot.lane.b32.xlu0 %v3975, 64
    %v4151 = vpop.permute.xlu0 %4150
    %4154 = vrot.lane.b32.xlu0 %v4142, 96
    %v4155 = vpop.permute.xlu0 %4154
    %v4157 = vsel %vm920, %v3643, %v4147
    %v4158 = vsel %vm1599, %v4157, %v4151
    %v4159 = vsel %vm1601, %v4158, %v4155
    %v4161 = vrot.slane %v3431, 5
    %v4162 = vrot.slane %v3435, 5
    %v4163 = vsel %vm1604, %v4161, %v4162
    %4164 = vrot.lane.b32.xlu0 %v4163, 96
    %v4165 = vpop.permute.xlu0 %4164
    %v4166 = vsel %vm920, %v4163, 0
    %v4168 = vsel %vm920, %v4165, 0
    %4170 = vmatprep.subr.mxu0 0.0
    %4171 = vmatpush1.xpose.msra.mxu0 %v4168
    %4172 = vmatprep.subr.mxu0 0.0
    %4173 = vmatpush1.xpose.msra.mxu0 0.0
    %4174 = vmatprep.subr.mxu0 0.0
    %4175 = vmatpush1.xpose.msra.mxu0 0.0
    %4176 = vmatprep.subr.mxu0 0.0
    %4177 = vmatpush1.xpose.msra.mxu0 0.0
    %4178 = vmatprep.subr.mxu0 0.0
    %4179 = vmatpush1.xpose.msra.mxu0 0.0
    %4180 = vmatprep.subr.mxu0 0.0
    %4181 = vmatpush1.xpose.msra.mxu0 0.0
    %4182 = vmatprep.subr.mxu0 0.0
    %4183 = vmatpush1.xpose.msra.mxu0 0.0
    %4184 = vmatprep.subr.mxu0 0.0
    %4185 = vmatpush1.xpose.msra.mxu0 0.0
    %4186 = vmatprep.subr.mxu0 0.0
    %4187 = vmatpush1.xpose.msra.mxu0 0.0
    %4188 = vmatprep.subr.mxu0 0.0
    %4189 = vmatpush1.xpose.msra.mxu0 0.0
    %4190 = vmatprep.subr.mxu0 0.0
    %4191 = vmatpush1.xpose.msra.mxu0 0.0
    %4192 = vmatprep.subr.mxu0 0.0
    %4193 = vmatpush1.xpose.msra.mxu0 0.0
    %4194 = vmatprep.subr.mxu0 0.0
    %4195 = vmatpush1.xpose.msra.mxu0 0.0
    %4196 = vmatprep.subr.mxu0 0.0
    %4197 = vmatpush1.xpose.msra.mxu0 0.0
    %4198 = vmatprep.subr.mxu0 0.0
    %4199 = vmatpush1.xpose.msra.mxu0 0.0
    %4200 = vmatprep.subr.mxu0 0.0
    %4201 = vmatpush1.xpose.msra.mxu0 0.0
    %4202 = vmatprep.subr.mxu0 0.0
    %4203 = vmatpush1.xpose.msra.mxu0 0.0
    %4204 = vmatprep.subr.mxu0 0.0
    %4205 = vmatpush1.xpose.msra.mxu0 0.0
    %4206 = vmatprep.subr.mxu0 0.0
    %4207 = vmatpush1.xpose.msra.mxu0 0.0
    %4208 = vmatprep.subr.mxu0 0.0
    %4209 = vmatpush1.xpose.msra.mxu0 0.0
    %4210 = vmatprep.subr.mxu0 0.0
    %4211 = vmatpush1.xpose.msra.mxu0 0.0
    %4212 = vmatprep.subr.mxu0 0.0
    %4213 = vmatpush1.xpose.msra.mxu0 0.0
    %4214 = vmatprep.subr.mxu0 0.0
    %4215 = vmatpush1.xpose.msra.mxu0 0.0
    %4216 = vmatprep.subr.mxu0 0.0
    %4217 = vmatpush1.xpose.msra.mxu0 0.0
    %4218 = vmatprep.subr.mxu0 0.0
    %4219 = vmatpush1.xpose.msra.mxu0 0.0
    %4220 = vmatprep.subr.mxu0 0.0
    %4221 = vmatpush1.xpose.msra.mxu0 0.0
    %4222 = vmatprep.subr.mxu0 0.0
    %4223 = vmatpush1.xpose.msra.mxu0 0.0
    %4224 = vmatprep.subr.mxu0 0.0
    %4225 = vmatpush1.xpose.msra.mxu0 0.0
    %4226 = vmatprep.subr.mxu0 0.0
    %4227 = vmatpush1.xpose.msra.mxu0 0.0
    %4228 = vmatprep.subr.mxu0 0.0
    %4229 = vmatpush1.xpose.msra.mxu0 0.0
    %4230 = vmatprep.subr.mxu0 0.0
    %4231 = vmatpush1.xpose.msra.mxu0 0.0
    %4232 = vmatprep.subr.mxu0 0.0
    %4233 = vmatpush1.xpose.msra.mxu0 0.0
    %4234 = vmatprep.mubr.f32.mxu0 0.0
    %4235 = vmatmul.mubr.f32.gmra.mrb[0].mxu0 %v4166
    %v4236 = vpop.f32.mrb[0].mxu0
    %v4237 = vadd.f32 0.0, %v4236
    %v4238 = vpop.f32.mrb[0].mxu0
    %4239 = vdwg.mxu0
    %v4240 = vmul.f32 %v4237, 0.17677669
    %v4241 = vsel %vm996, %v4240, -inf
    %4242 = vmax.xlane.f32.xlu0 %v4241
    %v4243 = vpop.xlane.xlu0 %4242
    %v4244 = vsub.f32 %v4240, %v4243
    %v4245 = vmul.f32 %v4244, 1.442695
    %v4246 = vpow.pop %v4245
    %v4247 = vsel %vm996, %v4246, 0.0
    %4248 = vadd.xlane.f32.xlu0 %v4247
    %v4249 = vpop.xlane.xlu0 %4248
    %v4250 = vrcp.pop %v4249
    %v4251 = vmul.f32 %v4246, %v4250
    %4252 = vrot.lane.b32.xlu0 %v4163, 64
    %v4253 = vpop.permute.xlu0 %4252
    %v4255 = vsel %vm1010, %v4251, 0
    %v4257 = vsel %vm1014, %v4253, 0
    %4259 = vmatprep.subr.mxu0 0.0
    %4260 = vmatpush1.msra.mxu0 %v4257
    %4261 = vmatprep.subr.mxu0 0.0
    %4262 = vmatpush1.msra.mxu0 0.0
    %4263 = vmatprep.subr.mxu0 0.0
    %4264 = vmatpush1.msra.mxu0 0.0
    %4265 = vmatprep.subr.mxu0 0.0
    %4266 = vmatpush1.msra.mxu0 0.0
    %4267 = vmatprep.subr.mxu0 0.0
    %4268 = vmatpush1.msra.mxu0 0.0
    %4269 = vmatprep.subr.mxu0 0.0
    %4270 = vmatpush1.msra.mxu0 0.0
    %4271 = vmatprep.subr.mxu0 0.0
    %4272 = vmatpush1.msra.mxu0 0.0
    %4273 = vmatprep.subr.mxu0 0.0
    %4274 = vmatpush1.msra.mxu0 0.0
    %4275 = vmatprep.subr.mxu0 0.0
    %4276 = vmatpush1.msra.mxu0 0.0
    %4277 = vmatprep.subr.mxu0 0.0
    %4278 = vmatpush1.msra.mxu0 0.0
    %4279 = vmatprep.subr.mxu0 0.0
    %4280 = vmatpush1.msra.mxu0 0.0
    %4281 = vmatprep.subr.mxu0 0.0
    %4282 = vmatpush1.msra.mxu0 0.0
    %4283 = vmatprep.subr.mxu0 0.0
    %4284 = vmatpush1.msra.mxu0 0.0
    %4285 = vmatprep.subr.mxu0 0.0
    %4286 = vmatpush1.msra.mxu0 0.0
    %4287 = vmatprep.subr.mxu0 0.0
    %4288 = vmatpush1.msra.mxu0 0.0
    %4289 = vmatprep.subr.mxu0 0.0
    %4290 = vmatpush1.msra.mxu0 0.0
    %4291 = vmatprep.subr.mxu0 0.0
    %4292 = vmatpush1.msra.mxu0 0.0
    %4293 = vmatprep.subr.mxu0 0.0
    %4294 = vmatpush1.msra.mxu0 0.0
    %4295 = vmatprep.subr.mxu0 0.0
    %4296 = vmatpush1.msra.mxu0 0.0
    %4297 = vmatprep.subr.mxu0 0.0
    %4298 = vmatpush1.msra.mxu0 0.0
    %4299 = vmatprep.subr.mxu0 0.0
    %4300 = vmatpush1.msra.mxu0 0.0
    %4301 = vmatprep.subr.mxu0 0.0
    %4302 = vmatpush1.msra.mxu0 0.0
    %4303 = vmatprep.subr.mxu0 0.0
    %4304 = vmatpush1.msra.mxu0 0.0
    %4305 = vmatprep.subr.mxu0 0.0
    %4306 = vmatpush1.msra.mxu0 0.0
    %4307 = vmatprep.subr.mxu0 0.0
    %4308 = vmatpush1.msra.mxu0 0.0
    %4309 = vmatprep.subr.mxu0 0.0
    %4310 = vmatpush1.msra.mxu0 0.0
    %4311 = vmatprep.subr.mxu0 0.0
    %4312 = vmatpush1.msra.mxu0 0.0
    %4313 = vmatprep.subr.mxu0 0.0
    %4314 = vmatpush1.msra.mxu0 0.0
    %4315 = vmatprep.subr.mxu0 0.0
    %4316 = vmatpush1.msra.mxu0 0.0
    %4317 = vmatprep.subr.mxu0 0.0
    %4318 = vmatpush1.msra.mxu0 0.0
    %4319 = vmatprep.subr.mxu0 0.0
    %4320 = vmatpush1.msra.mxu0 0.0
    %4321 = vmatprep.subr.mxu0 0.0
    %4322 = vmatpush1.msra.mxu0 0.0
    %4323 = vmatprep.mubr.f32.mxu0 0.0
    %4324 = vmatmul.mubr.f32.gmra.mrb[0].mxu0 %v4255
    %v4325 = vpop.f32.mrb[0].mxu0
    %v4326 = vadd.f32 0.0, %v4325
    %v4327 = vpop.f32.mrb[0].mxu0
    %4328 = vdwg.mxu0
    %4329 = vrot.lane.b32.xlu0 %v4163, 32
    %v4330 = vpop.permute.xlu0 %4329
    %v4332 = vrot.slane %v3433, 5
    %v4333 = vrot.slane %v3437, 5
    %v4334 = vsel %vm1604, %v4332, %v4333
    %v4335 = vsel %vm920, %v4330, 0
    %v4337 = vsel %vm920, %v4334, 0
    %4339 = vmatprep.subr.mxu0 0.0
    %4340 = vmatpush1.xpose.msra.mxu0 %v4337
    %4341 = vmatprep.subr.mxu0 0.0
    %4342 = vmatpush1.xpose.msra.mxu0 0.0
    %4343 = vmatprep.subr.mxu0 0.0
    %4344 = vmatpush1.xpose.msra.mxu0 0.0
    %4345 = vmatprep.subr.mxu0 0.0
    %4346 = vmatpush1.xpose.msra.mxu0 0.0
    %4347 = vmatprep.subr.mxu0 0.0
    %4348 = vmatpush1.xpose.msra.mxu0 0.0
    %4349 = vmatprep.subr.mxu0 0.0
    %4350 = vmatpush1.xpose.msra.mxu0 0.0
    %4351 = vmatprep.subr.mxu0 0.0
    %4352 = vmatpush1.xpose.msra.mxu0 0.0
    %4353 = vmatprep.subr.mxu0 0.0
    %4354 = vmatpush1.xpose.msra.mxu0 0.0
    %4355 = vmatprep.subr.mxu0 0.0
    %4356 = vmatpush1.xpose.msra.mxu0 0.0
    %4357 = vmatprep.subr.mxu0 0.0
    %4358 = vmatpush1.xpose.msra.mxu0 0.0
    %4359 = vmatprep.subr.mxu0 0.0
    %4360 = vmatpush1.xpose.msra.mxu0 0.0
    %4361 = vmatprep.subr.mxu0 0.0
    %4362 = vmatpush1.xpose.msra.mxu0 0.0
    %4363 = vmatprep.subr.mxu0 0.0
    %4364 = vmatpush1.xpose.msra.mxu0 0.0
    %4365 = vmatprep.subr.mxu0 0.0
    %4366 = vmatpush1.xpose.msra.mxu0 0.0
    %4367 = vmatprep.subr.mxu0 0.0
    %4368 = vmatpush1.xpose.msra.mxu0 0.0
    %4369 = vmatprep.subr.mxu0 0.0
    %4370 = vmatpush1.xpose.msra.mxu0 0.0
    %4371 = vmatprep.subr.mxu0 0.0
    %4372 = vmatpush1.xpose.msra.mxu0 0.0
    %4373 = vmatprep.subr.mxu0 0.0
    %4374 = vmatpush1.xpose.msra.mxu0 0.0
    %4375 = vmatprep.subr.mxu0 0.0
    %4376 = vmatpush1.xpose.msra.mxu0 0.0
    %4377 = vmatprep.subr.mxu0 0.0
    %4378 = vmatpush1.xpose.msra.mxu0 0.0
    %4379 = vmatprep.subr.mxu0 0.0
    %4380 = vmatpush1.xpose.msra.mxu0 0.0
    %4381 = vmatprep.subr.mxu0 0.0
    %4382 = vmatpush1.xpose.msra.mxu0 0.0
    %4383 = vmatprep.subr.mxu0 0.0
    %4384 = vmatpush1.xpose.msra.mxu0 0.0
    %4385 = vmatprep.subr.mxu0 0.0
    %4386 = vmatpush1.xpose.msra.mxu0 0.0
    %4387 = vmatprep.subr.mxu0 0.0
    %4388 = vmatpush1.xpose.msra.mxu0 0.0
    %4389 = vmatprep.subr.mxu0 0.0
    %4390 = vmatpush1.xpose.msra.mxu0 0.0
    %4391 = vmatprep.subr.mxu0 0.0
    %4392 = vmatpush1.xpose.msra.mxu0 0.0
    %4393 = vmatprep.subr.mxu0 0.0
    %4394 = vmatpush1.xpose.msra.mxu0 0.0
    %4395 = vmatprep.subr.mxu0 0.0
    %4396 = vmatpush1.xpose.msra.mxu0 0.0
    %4397 = vmatprep.subr.mxu0 0.0
    %4398 = vmatpush1.xpose.msra.mxu0 0.0
    %4399 = vmatprep.subr.mxu0 0.0
    %4400 = vmatpush1.xpose.msra.mxu0 0.0
    %4401 = vmatprep.subr.mxu0 0.0
    %4402 = vmatpush1.xpose.msra.mxu0 0.0
    %4403 = vmatprep.mubr.f32.mxu0 0.0
    %4404 = vmatmul.mubr.f32.gmra.mrb[0].mxu0 %v4335
    %v4405 = vpop.f32.mrb[0].mxu0
    %v4406 = vadd.f32 0.0, %v4405
    %v4407 = vpop.f32.mrb[0].mxu0
    %4408 = vdwg.mxu0
    %v4409 = vmul.f32 %v4406, 0.17677669
    %v4410 = vsel %vm996, %v4409, -inf
    %4411 = vmax.xlane.f32.xlu0 %v4410
    %v4412 = vpop.xlane.xlu0 %4411
    %v4413 = vsub.f32 %v4409, %v4412
    %v4414 = vmul.f32 %v4413, 1.442695
    %v4415 = vpow.pop %v4414
    %v4416 = vsel %vm996, %v4415, 0.0
    %4417 = vadd.xlane.f32.xlu0 %v4416
    %v4418 = vpop.xlane.xlu0 %4417
    %v4419 = vrcp.pop %v4418
    %v4420 = vmul.f32 %v4415, %v4419
    %4421 = vrot.lane.b32.xlu0 %v4334, 96
    %v4422 = vpop.permute.xlu0 %4421
    %v4424 = vsel %vm1010, %v4420, 0
    %v4426 = vsel %vm1014, %v4422, 0
    %4428 = vmatprep.subr.mxu0 0.0
    %4429 = vmatpush1.msra.mxu0 %v4426
    %4430 = vmatprep.subr.mxu0 0.0
    %4431 = vmatpush1.msra.mxu0 0.0
    %4432 = vmatprep.subr.mxu0 0.0
    %4433 = vmatpush1.msra.mxu0 0.0
    %4434 = vmatprep.subr.mxu0 0.0
    %4435 = vmatpush1.msra.mxu0 0.0
    %4436 = vmatprep.subr.mxu0 0.0
    %4437 = vmatpush1.msra.mxu0 0.0
    %4438 = vmatprep.subr.mxu0 0.0
    %4439 = vmatpush1.msra.mxu0 0.0
    %4440 = vmatprep.subr.mxu0 0.0
    %4441 = vmatpush1.msra.mxu0 0.0
    %4442 = vmatprep.subr.mxu0 0.0
    %4443 = vmatpush1.msra.mxu0 0.0
    %4444 = vmatprep.subr.mxu0 0.0
    %4445 = vmatpush1.msra.mxu0 0.0
    %4446 = vmatprep.subr.mxu0 0.0
    %4447 = vmatpush1.msra.mxu0 0.0
    %4448 = vmatprep.subr.mxu0 0.0
    %4449 = vmatpush1.msra.mxu0 0.0
    %4450 = vmatprep.subr.mxu0 0.0
    %4451 = vmatpush1.msra.mxu0 0.0
    %4452 = vmatprep.subr.mxu0 0.0
    %4453 = vmatpush1.msra.mxu0 0.0
    %4454 = vmatprep.subr.mxu0 0.0
    %4455 = vmatpush1.msra.mxu0 0.0
    %4456 = vmatprep.subr.mxu0 0.0
    %4457 = vmatpush1.msra.mxu0 0.0
    %4458 = vmatprep.subr.mxu0 0.0
    %4459 = vmatpush1.msra.mxu0 0.0
    %4460 = vmatprep.subr.mxu0 0.0
    %4461 = vmatpush1.msra.mxu0 0.0
    %4462 = vmatprep.subr.mxu0 0.0
    %4463 = vmatpush1.msra.mxu0 0.0
    %4464 = vmatprep.subr.mxu0 0.0
    %4465 = vmatpush1.msra.mxu0 0.0
    %4466 = vmatprep.subr.mxu0 0.0
    %4467 = vmatpush1.msra.mxu0 0.0
    %4468 = vmatprep.subr.mxu0 0.0
    %4469 = vmatpush1.msra.mxu0 0.0
    %4470 = vmatprep.subr.mxu0 0.0
    %4471 = vmatpush1.msra.mxu0 0.0
    %4472 = vmatprep.subr.mxu0 0.0
    %4473 = vmatpush1.msra.mxu0 0.0
    %4474 = vmatprep.subr.mxu0 0.0
    %4475 = vmatpush1.msra.mxu0 0.0
    %4476 = vmatprep.subr.mxu0 0.0
    %4477 = vmatpush1.msra.mxu0 0.0
    %4478 = vmatprep.subr.mxu0 0.0
    %4479 = vmatpush1.msra.mxu0 0.0
    %4480 = vmatprep.subr.mxu0 0.0
    %4481 = vmatpush1.msra.mxu0 0.0
    %4482 = vmatprep.subr.mxu0 0.0
    %4483 = vmatpush1.msra.mxu0 0.0
    %4484 = vmatprep.subr.mxu0 0.0
    %4485 = vmatpush1.msra.mxu0 0.0
    %4486 = vmatprep.subr.mxu0 0.0
    %4487 = vmatpush1.msra.mxu0 0.0
    %4488 = vmatprep.subr.mxu0 0.0
    %4489 = vmatpush1.msra.mxu0 0.0
    %4490 = vmatprep.subr.mxu0 0.0
    %4491 = vmatpush1.msra.mxu0 0.0
    %4492 = vmatprep.mubr.f32.mxu0 0.0
    %4493 = vmatmul.mubr.f32.gmra.mrb[0].mxu0 %v4424
    %v4494 = vpop.f32.mrb[0].mxu0
    %v4495 = vadd.f32 0.0, %v4494
    %v4496 = vpop.f32.mrb[0].mxu0
    %4497 = vdwg.mxu0
    %4498 = vrot.lane.b32.xlu0 %v4334, 64
    %v4499 = vpop.permute.xlu0 %4498
    %4500 = vrot.lane.b32.xlu0 %v4334, 32
    %v4501 = vpop.permute.xlu0 %4500
    %v4502 = vsel %vm920, %v4499, 0
    %v4504 = vsel %vm920, %v4501, 0
    %4506 = vmatprep.subr.mxu0 0.0
    %4507 = vmatpush1.xpose.msra.mxu0 %v4504
    %4508 = vmatprep.subr.mxu0 0.0
    %4509 = vmatpush1.xpose.msra.mxu0 0.0
    %4510 = vmatprep.subr.mxu0 0.0
    %4511 = vmatpush1.xpose.msra.mxu0 0.0
    %4512 = vmatprep.subr.mxu0 0.0
    %4513 = vmatpush1.xpose.msra.mxu0 0.0
    %4514 = vmatprep.subr.mxu0 0.0
    %4515 = vmatpush1.xpose.msra.mxu0 0.0
    %4516 = vmatprep.subr.mxu0 0.0
    %4517 = vmatpush1.xpose.msra.mxu0 0.0
    %4518 = vmatprep.subr.mxu0 0.0
    %4519 = vmatpush1.xpose.msra.mxu0 0.0
    %4520 = vmatprep.subr.mxu0 0.0
    %4521 = vmatpush1.xpose.msra.mxu0 0.0
    %4522 = vmatprep.subr.mxu0 0.0
    %4523 = vmatpush1.xpose.msra.mxu0 0.0
    %4524 = vmatprep.subr.mxu0 0.0
    %4525 = vmatpush1.xpose.msra.mxu0 0.0
    %4526 = vmatprep.subr.mxu0 0.0
    %4527 = vmatpush1.xpose.msra.mxu0 0.0
    %4528 = vmatprep.subr.mxu0 0.0
    %4529 = vmatpush1.xpose.msra.mxu0 0.0
    %4530 = vmatprep.subr.mxu0 0.0
    %4531 = vmatpush1.xpose.msra.mxu0 0.0
    %4532 = vmatprep.subr.mxu0 0.0
    %4533 = vmatpush1.xpose.msra.mxu0 0.0
    %4534 = vmatprep.subr.mxu0 0.0
    %4535 = vmatpush1.xpose.msra.mxu0 0.0
    %4536 = vmatprep.subr.mxu0 0.0
    %4537 = vmatpush1.xpose.msra.mxu0 0.0
    %4538 = vmatprep.subr.mxu0 0.0
    %4539 = vmatpush1.xpose.msra.mxu0 0.0
    %4540 = vmatprep.subr.mxu0 0.0
    %4541 = vmatpush1.xpose.msra.mxu0 0.0
    %4542 = vmatprep.subr.mxu0 0.0
    %4543 = vmatpush1.xpose.msra.mxu0 0.0
    %4544 = vmatprep.subr.mxu0 0.0
    %4545 = vmatpush1.xpose.msra.mxu0 0.0
    %4546 = vmatprep.subr.mxu0 0.0
    %4547 = vmatpush1.xpose.msra.mxu0 0.0
    %4548 = vmatprep.subr.mxu0 0.0
    %4549 = vmatpush1.xpose.msra.mxu0 0.0
    %4550 = vmatprep.subr.mxu0 0.0
    %4551 = vmatpush1.xpose.msra.mxu0 0.0
    %4552 = vmatprep.subr.mxu0 0.0
    %4553 = vmatpush1.xpose.msra.mxu0 0.0
    %4554 = vmatprep.subr.mxu0 0.0
    %4555 = vmatpush1.xpose.msra.mxu0 0.0
    %4556 = vmatprep.subr.mxu0 0.0
    %4557 = vmatpush1.xpose.msra.mxu0 0.0
    %4558 = vmatprep.subr.mxu0 0.0
    %4559 = vmatpush1.xpose.msra.mxu0 0.0
    %4560 = vmatprep.subr.mxu0 0.0
    %4561 = vmatpush1.xpose.msra.mxu0 0.0
    %4562 = vmatprep.subr.mxu0 0.0
    %4563 = vmatpush1.xpose.msra.mxu0 0.0
    %4564 = vmatprep.subr.mxu0 0.0
    %4565 = vmatpush1.xpose.msra.mxu0 0.0
    %4566 = vmatprep.subr.mxu0 0.0
    %4567 = vmatpush1.xpose.msra.mxu0 0.0
    %4568 = vmatprep.subr.mxu0 0.0
    %4569 = vmatpush1.xpose.msra.mxu0 0.0
    %4570 = vmatprep.mubr.f32.mxu0 0.0
    %4571 = vmatmul.mubr.f32.gmra.mrb[0].mxu0 %v4502
    %v4572 = vpop.f32.mrb[0].mxu0
    %v4573 = vadd.f32 0.0, %v4572
    %v4574 = vpop.f32.mrb[0].mxu0
    %4575 = vdwg.mxu0
    %v4576 = vmul.f32 %v4573, 0.17677669
    %v4577 = vsel %vm996, %v4576, -inf
    %4578 = vmax.xlane.f32.xlu0 %v4577
    %v4579 = vpop.xlane.xlu0 %4578
    %v4580 = vsub.f32 %v4576, %v4579
    %v4581 = vmul.f32 %v4580, 1.442695
    %v4582 = vpow.pop %v4581
    %v4583 = vsel %vm996, %v4582, 0.0
    %4584 = vadd.xlane.f32.xlu0 %v4583
    %v4585 = vpop.xlane.xlu0 %4584
    %v4586 = vrcp.pop %v4585
    %v4587 = vmul.f32 %v4582, %v4586
    %v4589 = vrot.slane %v3474, 5
    %v4590 = vrot.slane %v3477, 5
    %v4591 = vsel %vm1604, %v4589, %v4590
    %v4593 = vsel %vm1010, %v4587, 0
    %v4595 = vsel %vm1014, %v4591, 0
    %4597 = vmatprep.subr.mxu0 0.0
    %4598 = vmatpush1.msra.mxu0 %v4595
    %4599 = vmatprep.subr.mxu0 0.0
    %4600 = vmatpush1.msra.mxu0 0.0
    %4601 = vmatprep.subr.mxu0 0.0
    %4602 = vmatpush1.msra.mxu0 0.0
    %4603 = vmatprep.subr.mxu0 0.0
    %4604 = vmatpush1.msra.mxu0 0.0
    %4605 = vmatprep.subr.mxu0 0.0
    %4606 = vmatpush1.msra.mxu0 0.0
    %4607 = vmatprep.subr.mxu0 0.0
    %4608 = vmatpush1.msra.mxu0 0.0
    %4609 = vmatprep.subr.mxu0 0.0
    %4610 = vmatpush1.msra.mxu0 0.0
    %4611 = vmatprep.subr.mxu0 0.0
    %4612 = vmatpush1.msra.mxu0 0.0
    %4613 = vmatprep.subr.mxu0 0.0
    %4614 = vmatpush1.msra.mxu0 0.0
    %4615 = vmatprep.subr.mxu0 0.0
    %4616 = vmatpush1.msra.mxu0 0.0
    %4617 = vmatprep.subr.mxu0 0.0
    %4618 = vmatpush1.msra.mxu0 0.0
    %4619 = vmatprep.subr.mxu0 0.0
    %4620 = vmatpush1.msra.mxu0 0.0
    %4621 = vmatprep.subr.mxu0 0.0
    %4622 = vmatpush1.msra.mxu0 0.0
    %4623 = vmatprep.subr.mxu0 0.0
    %4624 = vmatpush1.msra.mxu0 0.0
    %4625 = vmatprep.subr.mxu0 0.0
    %4626 = vmatpush1.msra.mxu0 0.0
    %4627 = vmatprep.subr.mxu0 0.0
    %4628 = vmatpush1.msra.mxu0 0.0
    %4629 = vmatprep.subr.mxu0 0.0
    %4630 = vmatpush1.msra.mxu0 0.0
    %4631 = vmatprep.subr.mxu0 0.0
    %4632 = vmatpush1.msra.mxu0 0.0
    %4633 = vmatprep.subr.mxu0 0.0
    %4634 = vmatpush1.msra.mxu0 0.0
    %4635 = vmatprep.subr.mxu0 0.0
    %4636 = vmatpush1.msra.mxu0 0.0
    %4637 = vmatprep.subr.mxu0 0.0
    %4638 = vmatpush1.msra.mxu0 0.0
    %4639 = vmatprep.subr.mxu0 0.0
    %4640 = vmatpush1.msra.mxu0 0.0
    %4641 = vmatprep.subr.mxu0 0.0
    %4642 = vmatpush1.msra.mxu0 0.0
    %4643 = vmatprep.subr.mxu0 0.0
    %4644 = vmatpush1.msra.mxu0 0.0
    %4645 = vmatprep.subr.mxu0 0.0
    %4646 = vmatpush1.msra.mxu0 0.0
    %4647 = vmatprep.subr.mxu0 0.0
    %4648 = vmatpush1.msra.mxu0 0.0
    %4649 = vmatprep.subr.mxu0 0.0
    %4650 = vmatpush1.msra.mxu0 0.0
    %4651 = vmatprep.subr.mxu0 0.0
    %4652 = vmatpush1.msra.mxu0 0.0
    %4653 = vmatprep.subr.mxu0 0.0
    %4654 = vmatpush1.msra.mxu0 0.0
    %4655 = vmatprep.subr.mxu0 0.0
    %4656 = vmatpush1.msra.mxu0 0.0
    %4657 = vmatprep.subr.mxu0 0.0
    %4658 = vmatpush1.msra.mxu0 0.0
    %4659 = vmatprep.subr.mxu0 0.0
    %4660 = vmatpush1.msra.mxu0 0.0
    %4661 = vmatprep.mubr.f32.mxu0 0.0
    %4662 = vmatmul.mubr.f32.gmra.mrb[0].mxu0 %v4593
    %v4663 = vpop.f32.mrb[0].mxu0
    %v4664 = vadd.f32 0.0, %v4663
    %v4665 = vpop.f32.mrb[0].mxu0
    %4666 = vdwg.mxu0
    %4667 = vrot.lane.b32.xlu0 %v4591, 96
    %v4668 = vpop.permute.xlu0 %4667
    %4669 = vrot.lane.b32.xlu0 %v4591, 64
    %v4670 = vpop.permute.xlu0 %4669
    %v4671 = vsel %vm920, %v4668, 0
    %v4673 = vsel %vm920, %v4670, 0
    %4675 = vmatprep.subr.mxu0 0.0
    %4676 = vmatpush1.xpose.msra.mxu0 %v4673
    %4677 = vmatprep.subr.mxu0 0.0
    %4678 = vmatpush1.xpose.msra.mxu0 0.0
    %4679 = vmatprep.subr.mxu0 0.0
    %4680 = vmatpush1.xpose.msra.mxu0 0.0
    %4681 = vmatprep.subr.mxu0 0.0
    %4682 = vmatpush1.xpose.msra.mxu0 0.0
    %4683 = vmatprep.subr.mxu0 0.0
    %4684 = vmatpush1.xpose.msra.mxu0 0.0
    %4685 = vmatprep.subr.mxu0 0.0
    %4686 = vmatpush1.xpose.msra.mxu0 0.0
    %4687 = vmatprep.subr.mxu0 0.0
    %4688 = vmatpush1.xpose.msra.mxu0 0.0
    %4689 = vmatprep.subr.mxu0 0.0
    %4690 = vmatpush1.xpose.msra.mxu0 0.0
    %4691 = vmatprep.subr.mxu0 0.0
    %4692 = vmatpush1.xpose.msra.mxu0 0.0
    %4693 = vmatprep.subr.mxu0 0.0
    %4694 = vmatpush1.xpose.msra.mxu0 0.0
    %4695 = vmatprep.subr.mxu0 0.0
    %4696 = vmatpush1.xpose.msra.mxu0 0.0
    %4697 = vmatprep.subr.mxu0 0.0
    %4698 = vmatpush1.xpose.msra.mxu0 0.0
    %4699 = vmatprep.subr.mxu0 0.0
    %4700 = vmatpush1.xpose.msra.mxu0 0.0
    %4701 = vmatprep.subr.mxu0 0.0
    %4702 = vmatpush1.xpose.msra.mxu0 0.0
    %4703 = vmatprep.subr.mxu0 0.0
    %4704 = vmatpush1.xpose.msra.mxu0 0.0
    %4705 = vmatprep.subr.mxu0 0.0
    %4706 = vmatpush1.xpose.msra.mxu0 0.0
    %4707 = vmatprep.subr.mxu0 0.0
    %4708 = vmatpush1.xpose.msra.mxu0 0.0
    %4709 = vmatprep.subr.mxu0 0.0
    %4710 = vmatpush1.xpose.msra.mxu0 0.0
    %4711 = vmatprep.subr.mxu0 0.0
    %4712 = vmatpush1.xpose.msra.mxu0 0.0
    %4713 = vmatprep.subr.mxu0 0.0
    %4714 = vmatpush1.xpose.msra.mxu0 0.0
    %4715 = vmatprep.subr.mxu0 0.0
    %4716 = vmatpush1.xpose.msra.mxu0 0.0
    %4717 = vmatprep.subr.mxu0 0.0
    %4718 = vmatpush1.xpose.msra.mxu0 0.0
    %4719 = vmatprep.subr.mxu0 0.0
    %4720 = vmatpush1.xpose.msra.mxu0 0.0
    %4721 = vmatprep.subr.mxu0 0.0
    %4722 = vmatpush1.xpose.msra.mxu0 0.0
    %4723 = vmatprep.subr.mxu0 0.0
    %4724 = vmatpush1.xpose.msra.mxu0 0.0
    %4725 = vmatprep.subr.mxu0 0.0
    %4726 = vmatpush1.xpose.msra.mxu0 0.0
    %4727 = vmatprep.subr.mxu0 0.0
    %4728 = vmatpush1.xpose.msra.mxu0 0.0
    %4729 = vmatprep.subr.mxu0 0.0
    %4730 = vmatpush1.xpose.msra.mxu0 0.0
    %4731 = vmatprep.subr.mxu0 0.0
    %4732 = vmatpush1.xpose.msra.mxu0 0.0
    %4733 = vmatprep.subr.mxu0 0.0
    %4734 = vmatpush1.xpose.msra.mxu0 0.0
    %4735 = vmatprep.subr.mxu0 0.0
    %4736 = vmatpush1.xpose.msra.mxu0 0.0
    %4737 = vmatprep.subr.mxu0 0.0
    %4738 = vmatpush1.xpose.msra.mxu0 0.0
    %4739 = vmatprep.mubr.f32.mxu0 0.0
    %4740 = vmatmul.mubr.f32.gmra.mrb[0].mxu0 %v4671
    %v4741 = vpop.f32.mrb[0].mxu0
    %v4742 = vadd.f32 0.0, %v4741
    %v4743 = vpop.f32.mrb[0].mxu0
    %4744 = vdwg.mxu0
    %v4745 = vmul.f32 %v4742, 0.17677669
    %v4746 = vsel %vm996, %v4745, -inf
    %4747 = vmax.xlane.f32.xlu0 %v4746
    %v4748 = vpop.xlane.xlu0 %4747
    %v4749 = vsub.f32 %v4745, %v4748
    %v4750 = vmul.f32 %v4749, 1.442695
    %v4751 = vpow.pop %v4750
    %v4752 = vsel %vm996, %v4751, 0.0
    %4753 = vadd.xlane.f32.xlu0 %v4752
    %v4754 = vpop.xlane.xlu0 %4753
    %v4755 = vrcp.pop %v4754
    %v4756 = vmul.f32 %v4751, %v4755
    %4757 = vrot.lane.b32.xlu0 %v4591, 32
    %v4758 = vpop.permute.xlu0 %4757
    %v4760 = vsel %vm1010, %v4756, 0
    %v4762 = vsel %vm1014, %v4758, 0
    %4764 = vmatprep.subr.mxu0 0.0
    %4765 = vmatpush1.msra.mxu0 %v4762
    %4766 = vmatprep.subr.mxu0 0.0
    %4767 = vmatpush1.msra.mxu0 0.0
    %4768 = vmatprep.subr.mxu0 0.0
    %4769 = vmatpush1.msra.mxu0 0.0
    %4770 = vmatprep.subr.mxu0 0.0
    %4771 = vmatpush1.msra.mxu0 0.0
    %4772 = vmatprep.subr.mxu0 0.0
    %4773 = vmatpush1.msra.mxu0 0.0
    %4774 = vmatprep.subr.mxu0 0.0
    %4775 = vmatpush1.msra.mxu0 0.0
    %4776 = vmatprep.subr.mxu0 0.0
    %4777 = vmatpush1.msra.mxu0 0.0
    %4778 = vmatprep.subr.mxu0 0.0
    %4779 = vmatpush1.msra.mxu0 0.0
    %4780 = vmatprep.subr.mxu0 0.0
    %4781 = vmatpush1.msra.mxu0 0.0
    %4782 = vmatprep.subr.mxu0 0.0
    %4783 = vmatpush1.msra.mxu0 0.0
    %4784 = vmatprep.subr.mxu0 0.0
    %4785 = vmatpush1.msra.mxu0 0.0
    %4786 = vmatprep.subr.mxu0 0.0
    %4787 = vmatpush1.msra.mxu0 0.0
    %4788 = vmatprep.subr.mxu0 0.0
    %4789 = vmatpush1.msra.mxu0 0.0
    %4790 = vmatprep.subr.mxu0 0.0
    %4791 = vmatpush1.msra.mxu0 0.0
    %4792 = vmatprep.subr.mxu0 0.0
    %4793 = vmatpush1.msra.mxu0 0.0
    %4794 = vmatprep.subr.mxu0 0.0
    %4795 = vmatpush1.msra.mxu0 0.0
    %4796 = vmatprep.subr.mxu0 0.0
    %4797 = vmatpush1.msra.mxu0 0.0
    %4798 = vmatprep.subr.mxu0 0.0
    %4799 = vmatpush1.msra.mxu0 0.0
    %4800 = vmatprep.subr.mxu0 0.0
    %4801 = vmatpush1.msra.mxu0 0.0
    %4802 = vmatprep.subr.mxu0 0.0
    %4803 = vmatpush1.msra.mxu0 0.0
    %4804 = vmatprep.subr.mxu0 0.0
    %4805 = vmatpush1.msra.mxu0 0.0
    %4806 = vmatprep.subr.mxu0 0.0
    %4807 = vmatpush1.msra.mxu0 0.0
    %4808 = vmatprep.subr.mxu0 0.0
    %4809 = vmatpush1.msra.mxu0 0.0
    %4810 = vmatprep.subr.mxu0 0.0
    %4811 = vmatpush1.msra.mxu0 0.0
    %4812 = vmatprep.subr.mxu0 0.0
    %4813 = vmatpush1.msra.mxu0 0.0
    %4814 = vmatprep.subr.mxu0 0.0
    %4815 = vmatpush1.msra.mxu0 0.0
    %4816 = vmatprep.subr.mxu0 0.0
    %4817 = vmatpush1.msra.mxu0 0.0
    %4818 = vmatprep.subr.mxu0 0.0
    %4819 = vmatpush1.msra.mxu0 0.0
    %4820 = vmatprep.subr.mxu0 0.0
    %4821 = vmatpush1.msra.mxu0 0.0
    %4822 = vmatprep.subr.mxu0 0.0
    %4823 = vmatpush1.msra.mxu0 0.0
    %4824 = vmatprep.subr.mxu0 0.0
    %4825 = vmatpush1.msra.mxu0 0.0
    %4826 = vmatprep.subr.mxu0 0.0
    %4827 = vmatpush1.msra.mxu0 0.0
    %4828 = vmatprep.mubr.f32.mxu0 0.0
    %4829 = vmatmul.mubr.f32.gmra.mrb[0].mxu0 %v4760
    %v4830 = vpop.f32.mrb[0].mxu0
    %v4831 = vadd.f32 0.0, %v4830
    %v4832 = vpop.f32.mrb[0].mxu0
    %4833 = vdwg.mxu0
    %4835 = vrot.lane.b32.xlu0 %v4495, 32
    %v4836 = vpop.permute.xlu0 %4835
    %4839 = vrot.lane.b32.xlu0 %v4664, 64
    %v4840 = vpop.permute.xlu0 %4839
    %4843 = vrot.lane.b32.xlu0 %v4831, 96
    %v4844 = vpop.permute.xlu0 %4843
    %v4846 = vsel %vm920, %v4326, %v4836
    %v4847 = vsel %vm1599, %v4846, %v4840
    %v4848 = vsel %vm1601, %v4847, %v4844
    %v4850 = vrot.slane %v4848, 3
    %v4852 = vsel %vm1014, %v4159, %v4850
    %v4853 = vpack.c.bf16 %v4850, %v4852
    %s4854 = scalar_lea.vmem %s6, 64
    %v4855 = vld [vmem:[%s4854] sm:$0xf]
    %v4856 = vld [vmem:[%s4854 + $0x4] sm:$0xf]
    %v4857 = vld [vmem:[%s4854 + $0x8] sm:$0xf]
    %v4858 = vld [vmem:[%s4854 + $0xc] sm:$0xf]
    %v4859 = vld [vmem:[%s4854 + $0x10] sm:$0xf]
    %v4860 = vld [vmem:[%s4854 + $0x14] sm:$0xf]
    %v4861 = vld [vmem:[%s4854 + $0x18] sm:$0xf]
    %v4862 = vld [vmem:[%s4854 + $0x1c] sm:$0xf]
    %v4863 = vld [vmem:[%s4854 + $0x20] sm:$0xf]
    %v4864 = vld [vmem:[%s4854 + $0x24] sm:$0xf]
    %v4865 = vld [vmem:[%s4854 + $0x28] sm:$0xf]
    %v4866 = vld [vmem:[%s4854 + $0x2c] sm:$0xf]
    %v4867 = vld [vmem:[%s4854 + $0x30] sm:$0xf]
    %v4868 = vld [vmem:[%s4854 + $0x34] sm:$0xf]
    %v4869 = vld [vmem:[%s4854 + $0x38] sm:$0xf]
    %v4870 = vld [vmem:[%s4854 + $0x3c] sm:$0xf]
    %v4871 = vlaneseq
    %v4872 = vshrl.u32 %v4871, 7
    %v4873 = vsub.s32 2, %v4872
    %v4874 = vrot.slane %v3179, %v4873
    %v4891 = vunpack.c.l.b16 %v4855
    %v4892 = vunpack.c.l.b16 %v4856
    %v4893 = vunpack.c.l.b16 %v4857
    %v4894 = vunpack.c.l.b16 %v4858
    %v4895 = vunpack.c.l.b16 %v4859
    %v4896 = vunpack.c.l.b16 %v4860
    %v4897 = vunpack.c.l.b16 %v4861
    %v4898 = vunpack.c.l.b16 %v4862
    %v4899 = vunpack.c.l.b16 %v4863
    %v4900 = vunpack.c.l.b16 %v4864
    %v4901 = vunpack.c.l.b16 %v4865
    %v4902 = vunpack.c.l.b16 %v4866
    %v4903 = vunpack.c.l.b16 %v4867
    %v4904 = vunpack.c.l.b16 %v4868
    %v4905 = vunpack.c.l.b16 %v4869
    %v4906 = vunpack.c.l.b16 %v4870
    %v4907 = vpack.c.b16 %v4892, %v4891
    %v4908 = vpack.c.b16 %v4894, %v4893
    %v4909 = vpack.c.b16 %v4896, %v4895
    %v4910 = vpack.c.b16 %v4898, %v4897
    %v4911 = vpack.c.b16 %v4900, %v4899
    %v4912 = vpack.c.b16 %v4902, %v4901
    %v4913 = vpack.c.b16 %v4904, %v4903
    %v4914 = vpack.c.b16 %v4906, %v4905
    %4923 = vmatprep.subr.bf16.mxu0 0
    %4924 = vmatpush1.bf16.msra.mxu0 %v4907
    %4925 = vmatprep.subr.bf16.mxu0 0
    %4926 = vmatpush1.bf16.msra.mxu0 %v4908
    %4927 = vmatprep.subr.bf16.mxu0 0
    %4928 = vmatpush1.bf16.msra.mxu0 %v4909
    %4929 = vmatprep.subr.bf16.mxu0 0
    %4930 = vmatpush1.bf16.msra.mxu0 %v4910
    %4931 = vmatprep.subr.bf16.mxu0 0
    %4932 = vmatpush1.bf16.msra.mxu0 %v4911
    %4933 = vmatprep.subr.bf16.mxu0 0
    %4934 = vmatpush1.bf16.msra.mxu0 %v4912
    %4935 = vmatprep.subr.bf16.mxu0 0
    %4936 = vmatpush1.bf16.msra.mxu0 %v4913
    %4937 = vmatprep.subr.bf16.mxu0 0
    %4938 = vmatpush1.bf16.msra.mxu0 %v4914
    %4939 = vmatprep.subr.bf16.mxu0 0
    %4940 = vmatpush1.bf16.msra.mxu0 0
    %4941 = vmatprep.subr.bf16.mxu0 0
    %4942 = vmatpush1.bf16.msra.mxu0 0
    %4943 = vmatprep.subr.bf16.mxu0 0
    %4944 = vmatpush1.bf16.msra.mxu0 0
    %4945 = vmatprep.subr.bf16.mxu0 0
    %4946 = vmatpush1.bf16.msra.mxu0 0
    %4947 = vmatprep.subr.bf16.mxu0 0
    %4948 = vmatpush1.bf16.msra.mxu0 0
    %4949 = vmatprep.subr.bf16.mxu0 0
    %4950 = vmatpush1.bf16.msra.mxu0 0
    %4951 = vmatprep.subr.bf16.mxu0 0
    %4952 = vmatpush1.bf16.msra.mxu0 0
    %4953 = vmatprep.subr.bf16.mxu0 0
    %4954 = vmatpush1.bf16.msra.mxu0 0
    %4955 = vmatprep.mubr.bf16.mxu0 0
    %4956 = vmatmul.mubr.bf16.gmra.mrb[0].mxu0 %v4853
    %v4957 = vpop.f32.mrb[0].mxu0
    %v4958 = vadd.f32 %v4874, %v4957
    %v4959 = vpop.f32.mrb[0].mxu0
    %v4960 = vpop.f32.mrb[0].mxu0
    %v4961 = vadd.f32 %v4874, %v4960
    %v4962 = vpop.f32.mrb[0].mxu0
    %4963 = vdwg.mxu0
    %v4964 = vlaneseq
    %v4965 = vshrl.u32 %v4964, 7
    %v4966 = vsub.s32 3, %v4965
    %v4967 = vrot.slane %v3179, %v4966
    %v4968 = vmul.f32 %v4967, %v4958
    %v4969 = vmul.f32 %v4967, %v4961
    %v4970 = vadd.f32 %v3176, %v4968
    %v4971 = vadd.f32 %v3177, %v4969
    %4972 = vadd.xlane.f32.xlu0 %v4970
    %v4973 = vpop.xlane.xlu0 %4972
    %v4974 = vsel %vm619, %v4971, 0.0
    %4975 = vadd.xlane.f32.xlu0 %v4974
    %v4976 = vpop.xlane.xlu0 %4975
    %v4977 = vmul.f32 %v4973, %v623
    %v4978 = vmul.f32 %v4976, %v623
    %v4979 = vsub.f32 %v4970, %v4977
    %v4980 = vsub.f32 %v4971, %v4978
    %v4981 = vmul.f32 %v4979, %v4979
    %v4982 = vmul.f32 %v4980, %v4980
    %4983 = vadd.xlane.f32.xlu0 %v4981
    %v4984 = vpop.xlane.xlu0 %4983
    %v4985 = vsel %vm619, %v4982, 0.0
    %4986 = vadd.xlane.f32.xlu0 %v4985
    %v4987 = vpop.xlane.xlu0 %4986
    %v4988 = vmul.f32 %v4984, %v623
    %v4989 = vmul.f32 %v4987, %v623
    %v4990 = vadd.f32 %v4988, 1e-06
    %v4991 = vadd.f32 %v4989, 1e-06
    %v4992 = vrsqrt.pop %v4990
    %v4993 = vrsqrt.pop %v4991
    %v4994 = vmul.f32 %v4979, %v4992
    %v4995 = vmul.f32 %v4980, %v4993
    %v4996 = vlaneseq
    %v4997 = vshrl.u32 %v4996, 7
    %v4998 = vsub.s32 4, %v4997
    %v4999 = vrot.slane %v3179, %v4998
    %v5000 = vmul.f32 %v4994, %v4999
    %v5001 = vmul.f32 %v4995, %v4999
    %v5002 = vlaneseq
    %v5003 = vshrl.u32 %v5002, 7
    %v5004 = vsub.s32 5, %v5003
    %v5005 = vrot.slane %v3179, %v5004
    %v5006 = vadd.f32 %v5000, %v5005
    %v5007 = vadd.f32 %v5001, %v5005
    %v5008 = vpack.c.bf16 %v5007, %v5006
    %s5009 = scalar_lea.vmem %s7, 256
    %v5010 = vld [vmem:[%s5009] sm:$0xff]
    %v5011 = vld [vmem:[%s5009 + $0x8] sm:$0xff]
    %v5012 = vld [vmem:[%s5009 + $0x10] sm:$0xff]
    %v5013 = vld [vmem:[%s5009 + $0x18] sm:$0xff]
    %v5014 = vld [vmem:[%s5009 + $0x20] sm:$0xff]
    %v5015 = vld [vmem:[%s5009 + $0x28] sm:$0xff]
    %v5016 = vld [vmem:[%s5009 + $0x30] sm:$0xff]
    %v5017 = vld [vmem:[%s5009 + $0x38] sm:$0xff]
    %v5018 = vld [vmem:[%s5009 + $0x40] sm:$0xff]
    %v5019 = vld [vmem:[%s5009 + $0x48] sm:$0xff]
    %v5020 = vld [vmem:[%s5009 + $0x50] sm:$0xff]
    %v5021 = vld [vmem:[%s5009 + $0x58] sm:$0xff]
    %v5022 = vld [vmem:[%s5009 + $0x60] sm:$0xff]
    %v5023 = vld [vmem:[%s5009 + $0x68] sm:$0xff]
    %v5024 = vld [vmem:[%s5009 + $0x70] sm:$0xff]
    %v5025 = vld [vmem:[%s5009 + $0x78] sm:$0xff]
    %v5026 = vld [vmem:[%s5009 + $0x80] sm:$0xff]
    %v5027 = vld [vmem:[%s5009 + $0x88] sm:$0xff]
    %v5028 = vld [vmem:[%s5009 + $0x90] sm:$0xff]
    %v5029 = vld [vmem:[%s5009 + $0x98] sm:$0xff]
    %v5030 = vld [vmem:[%s5009 + $0xa0] sm:$0xff]
    %v5031 = vld [vmem:[%s5009 + $0xa8] sm:$0xff]
    %v5032 = vld [vmem:[%s5009 + $0xb0] sm:$0xff]
    %v5033 = vld [vmem:[%s5009 + $0xb8] sm:$0xff]
    %v5034 = vld [vmem:[%s5009 + $0xc0] sm:$0xff]
    %v5035 = vld [vmem:[%s5009 + $0xc8] sm:$0xff]
    %v5036 = vld [vmem:[%s5009 + $0xd0] sm:$0xff]
    %v5037 = vld [vmem:[%s5009 + $0xd8] sm:$0xff]
    %v5038 = vld [vmem:[%s5009 + $0xe0] sm:$0xff]
    %v5039 = vld [vmem:[%s5009 + $0xe8] sm:$0xff]
    %v5040 = vld [vmem:[%s5009 + $0xf0] sm:$0xff]
    %v5041 = vld [vmem:[%s5009 + $0xf8] sm:$0xff]
    %s5042 = scalar_lea.vmem %s8, 4
    %v5043 = vld [vmem:[%s5042] sm:$0xf]
    %v5045 = vlaneseq
    %v5046 = vshrl.u32 %v5045, 7
    %v5047 = vsub.s32 0, %v5046
    %v5048 = vrot.slane %v5043, %v5047
    %v5049 = vlaneseq
    %v5050 = vshrl.u32 %v5049, 7
    %v5051 = vsub.s32 1, %v5050
    %v5052 = vrot.slane %v5043, %v5051
    %v5053 = vlaneseq
    %v5054 = vshrl.u32 %v5053, 7
    %v5055 = vsub.s32 2, %v5054
    %v5056 = vrot.slane %v5043, %v5055
    %v5057 = vlaneseq
    %v5058 = vshrl.u32 %v5057, 7
    %v5059 = vsub.s32 3, %v5058
    %v5060 = vrot.slane %v5043, %v5059
    %v5097 = vunpack.c.l.b16 %v5010
    %v5098 = vunpack.c.h.b16 %v5010
    %v5099 = vunpack.c.l.b16 %v5011
    %v5100 = vunpack.c.h.b16 %v5011
    %v5101 = vunpack.c.l.b16 %v5012
    %v5102 = vunpack.c.h.b16 %v5012
    %v5103 = vunpack.c.l.b16 %v5013
    %v5104 = vunpack.c.h.b16 %v5013
    %v5105 = vunpack.c.l.b16 %v5014
    %v5106 = vunpack.c.h.b16 %v5014
    %v5107 = vunpack.c.l.b16 %v5015
    %v5108 = vunpack.c.h.b16 %v5015
    %v5109 = vunpack.c.l.b16 %v5016
    %v5110 = vunpack.c.h.b16 %v5016
    %v5111 = vunpack.c.l.b16 %v5017
    %v5112 = vunpack.c.h.b16 %v5017
    %v5113 = vunpack.c.l.b16 %v5018
    %v5114 = vunpack.c.h.b16 %v5018
    %v5115 = vunpack.c.l.b16 %v5019
    %v5116 = vunpack.c.h.b16 %v5019
    %v5117 = vunpack.c.l.b16 %v5020
    %v5118 = vunpack.c.h.b16 %v5020
    %v5119 = vunpack.c.l.b16 %v5021
    %v5120 = vunpack.c.h.b16 %v5021
    %v5121 = vunpack.c.l.b16 %v5022
    %v5122 = vunpack.c.h.b16 %v5022
    %v5123 = vunpack.c.l.b16 %v5023
    %v5124 = vunpack.c.h.b16 %v5023
    %v5125 = vunpack.c.l.b16 %v5024
    %v5126 = vunpack.c.h.b16 %v5024
    %v5127 = vunpack.c.l.b16 %v5025
    %v5128 = vunpack.c.h.b16 %v5025
    %v5129 = vunpack.c.l.b16 %v5026
    %v5130 = vunpack.c.h.b16 %v5026
    %v5131 = vunpack.c.l.b16 %v5027
    %v5132 = vunpack.c.h.b16 %v5027
    %v5133 = vunpack.c.l.b16 %v5028
    %v5134 = vunpack.c.h.b16 %v5028
    %v5135 = vunpack.c.l.b16 %v5029
    %v5136 = vunpack.c.h.b16 %v5029
    %v5137 = vunpack.c.l.b16 %v5030
    %v5138 = vunpack.c.h.b16 %v5030
    %v5139 = vunpack.c.l.b16 %v5031
    %v5140 = vunpack.c.h.b16 %v5031
    %v5141 = vunpack.c.l.b16 %v5032
    %v5142 = vunpack.c.h.b16 %v5032
    %v5143 = vunpack.c.l.b16 %v5033
    %v5144 = vunpack.c.h.b16 %v5033
    %v5145 = vunpack.c.l.b16 %v5034
    %v5146 = vunpack.c.h.b16 %v5034
    %v5147 = vunpack.c.l.b16 %v5035
    %v5148 = vunpack.c.h.b16 %v5035
    %v5149 = vunpack.c.l.b16 %v5036
    %v5150 = vunpack.c.h.b16 %v5036
    %v5151 = vunpack.c.l.b16 %v5037
    %v5152 = vunpack.c.h.b16 %v5037
    %v5153 = vunpack.c.l.b16 %v5038
    %v5154 = vunpack.c.h.b16 %v5038
    %v5155 = vunpack.c.l.b16 %v5039
    %v5156 = vunpack.c.h.b16 %v5039
    %v5157 = vunpack.c.l.b16 %v5040
    %v5158 = vunpack.c.h.b16 %v5040
    %v5159 = vunpack.c.l.b16 %v5041
    %v5160 = vunpack.c.h.b16 %v5041
    %v5161 = vpack.c.b16 %v5101, %v5097
    %v5162 = vpack.c.b16 %v5102, %v5098
    %v5163 = vpack.c.b16 %v5103, %v5099
    %v5164 = vpack.c.b16 %v5104, %v5100
    %v5165 = vpack.c.b16 %v5109, %v5105
    %v5166 = vpack.c.b16 %v5110, %v5106
    %v5167 = vpack.c.b16 %v5111, %v5107
    %v5168 = vpack.c.b16 %v5112, %v5108
    %v5169 = vpack.c.b16 %v5117, %v5113
    %v5170 = vpack.c.b16 %v5118, %v5114
    %v5171 = vpack.c.b16 %v5119, %v5115
    %v5172 = vpack.c.b16 %v5120, %v5116
    %v5173 = vpack.c.b16 %v5125, %v5121
    %v5174 = vpack.c.b16 %v5126, %v5122
    %v5175 = vpack.c.b16 %v5127, %v5123
    %v5176 = vpack.c.b16 %v5128, %v5124
    %v5177 = vpack.c.b16 %v5133, %v5129
    %v5178 = vpack.c.b16 %v5134, %v5130
    %v5179 = vpack.c.b16 %v5135, %v5131
    %v5180 = vpack.c.b16 %v5136, %v5132
    %v5181 = vpack.c.b16 %v5141, %v5137
    %v5182 = vpack.c.b16 %v5142, %v5138
    %v5183 = vpack.c.b16 %v5143, %v5139
    %v5184 = vpack.c.b16 %v5144, %v5140
    %v5185 = vpack.c.b16 %v5149, %v5145
    %v5186 = vpack.c.b16 %v5150, %v5146
    %v5187 = vpack.c.b16 %v5151, %v5147
    %v5188 = vpack.c.b16 %v5152, %v5148
    %v5189 = vpack.c.b16 %v5157, %v5153
    %v5190 = vpack.c.b16 %v5158, %v5154
    %v5191 = vpack.c.b16 %v5159, %v5155
    %v5192 = vpack.c.b16 %v5160, %v5156
    %5225 = vmatprep.subr.bf16.mxu0 %v5162
    %5226 = vmatpush1.bf16.msra.mxu0 %v5161
    %5227 = vmatprep.subr.bf16.mxu0 %v5166
    %5228 = vmatpush1.bf16.msra.mxu0 %v5165
    %5229 = vmatprep.subr.bf16.mxu0 %v5170
    %5230 = vmatpush1.bf16.msra.mxu0 %v5169
    %5231 = vmatprep.subr.bf16.mxu0 %v5174
    %5232 = vmatpush1.bf16.msra.mxu0 %v5173
    %5233 = vmatprep.subr.bf16.mxu0 %v5178
    %5234 = vmatpush1.bf16.msra.mxu0 %v5177
    %5235 = vmatprep.subr.bf16.mxu0 %v5182
    %5236 = vmatpush1.bf16.msra.mxu0 %v5181
    %5237 = vmatprep.subr.bf16.mxu0 %v5186
    %5238 = vmatpush1.bf16.msra.mxu0 %v5185
    %5239 = vmatprep.subr.bf16.mxu0 %v5190
    %5240 = vmatpush1.bf16.msra.mxu0 %v5189
    %5241 = vmatprep.subr.bf16.mxu0 0
    %5242 = vmatpush1.bf16.msra.mxu0 0
    %5243 = vmatprep.subr.bf16.mxu0 0
    %5244 = vmatpush1.bf16.msra.mxu0 0
    %5245 = vmatprep.subr.bf16.mxu0 0
    %5246 = vmatpush1.bf16.msra.mxu0 0
    %5247 = vmatprep.subr.bf16.mxu0 0
    %5248 = vmatpush1.bf16.msra.mxu0 0
    %5249 = vmatprep.subr.bf16.mxu0 0
    %5250 = vmatpush1.bf16.msra.mxu0 0
    %5251 = vmatprep.subr.bf16.mxu0 0
    %5252 = vmatpush1.bf16.msra.mxu0 0
    %5253 = vmatprep.subr.bf16.mxu0 0
    %5254 = vmatpush1.bf16.msra.mxu0 0
    %5255 = vmatprep.subr.bf16.mxu0 0
    %5256 = vmatpush1.bf16.msra.mxu0 0
    %5257 = vmatprep.mubr.bf16.mxu0 0
    %5258 = vmatmul.mubr.bf16.gmra.mrb[0].mxu0 %v5008
    %v5259 = vpop.f32.mrb[0].mxu0
    %v5260 = vadd.f32 %v5048, %v5259
    %v5261 = vpop.f32.mrb[0].mxu0
    %v5262 = vadd.f32 %v5052, %v5261
    %v5263 = vpop.f32.mrb[0].mxu0
    %v5264 = vadd.f32 %v5048, %v5263
    %v5265 = vpop.f32.mrb[0].mxu0
    %v5266 = vadd.f32 %v5052, %v5265
    %5267 = vdwg.mxu0
    %5268 = vmatprep.subr.bf16.mxu0 %v5164
    %5269 = vmatpush1.bf16.msra.mxu0 %v5163
    %5270 = vmatprep.subr.bf16.mxu0 %v5168
    %5271 = vmatpush1.bf16.msra.mxu0 %v5167
    %5272 = vmatprep.subr.bf16.mxu0 %v5172
    %5273 = vmatpush1.bf16.msra.mxu0 %v5171
    %5274 = vmatprep.subr.bf16.mxu0 %v5176
    %5275 = vmatpush1.bf16.msra.mxu0 %v5175
    %5276 = vmatprep.subr.bf16.mxu0 %v5180
    %5277 = vmatpush1.bf16.msra.mxu0 %v5179
    %5278 = vmatprep.subr.bf16.mxu0 %v5184
    %5279 = vmatpush1.bf16.msra.mxu0 %v5183
    %5280 = vmatprep.subr.bf16.mxu0 %v5188
    %5281 = vmatpush1.bf16.msra.mxu0 %v5187
    %5282 = vmatprep.subr.bf16.mxu0 %v5192
    %5283 = vmatpush1.bf16.msra.mxu0 %v5191
    %5284 = vmatprep.subr.bf16.mxu0 0
    %5285 = vmatpush1.bf16.msra.mxu0 0
    %5286 = vmatprep.subr.bf16.mxu0 0
    %5287 = vmatpush1.bf16.msra.mxu0 0
    %5288 = vmatprep.subr.bf16.mxu0 0
    %5289 = vmatpush1.bf16.msra.mxu0 0
    %5290 = vmatprep.subr.bf16.mxu0 0
    %5291 = vmatpush1.bf16.msra.mxu0 0
    %5292 = vmatprep.subr.bf16.mxu0 0
    %5293 = vmatpush1.bf16.msra.mxu0 0
    %5294 = vmatprep.subr.bf16.mxu0 0
    %5295 = vmatpush1.bf16.msra.mxu0 0
    %5296 = vmatprep.subr.bf16.mxu0 0
    %5297 = vmatpush1.bf16.msra.mxu0 0
    %5298 = vmatprep.subr.bf16.mxu0 0
    %5299 = vmatpush1.bf16.msra.mxu0 0
    %5300 = vmatprep.mubr.bf16.mxu0 0
    %5301 = vmatmul.mubr.bf16.gmra.mrb[0].mxu0 %v5008
    %v5302 = vpop.f32.mrb[0].mxu0
    %v5303 = vadd.f32 %v5056, %v5302
    %v5304 = vpop.f32.mrb[0].mxu0
    %v5305 = vadd.f32 %v5060, %v5304
    %v5306 = vpop.f32.mrb[0].mxu0
    %v5307 = vadd.f32 %v5056, %v5306
    %v5308 = vpop.f32.mrb[0].mxu0
    %v5309 = vadd.f32 %v5060, %v5308
    %5310 = vdwg.mxu0
    %v5311 = vmul.f32 %v5260, %v5260
    %v5312 = vmul.f32 %v5262, %v5262
    %v5313 = vmul.f32 %v5303, %v5303
    %v5314 = vmul.f32 %v5305, %v5305
    %v5315 = vmul.f32 %v5264, %v5264
    %v5316 = vmul.f32 %v5266, %v5266
    %v5317 = vmul.f32 %v5307, %v5307
    %v5318 = vmul.f32 %v5309, %v5309
    %v5319 = vmul.f32 %v5260, %v5311
    %v5320 = vmul.f32 %v5262, %v5312
    %v5321 = vmul.f32 %v5303, %v5313
    %v5322 = vmul.f32 %v5305, %v5314
    %v5323 = vmul.f32 %v5264, %v5315
    %v5324 = vmul.f32 %v5266, %v5316
    %v5325 = vmul.f32 %v5307, %v5317
    %v5326 = vmul.f32 %v5309, %v5318
    %v5327 = vmul.f32 %v5319, 0.044715
    %v5328 = vmul.f32 %v5320, 0.044715
    %v5329 = vmul.f32 %v5321, 0.044715
    %v5330 = vmul.f32 %v5322, 0.044715
    %v5331 = vmul.f32 %v5323, 0.044715
    %v5332 = vmul.f32 %v5324, 0.044715
    %v5333 = vmul.f32 %v5325, 0.044715
    %v5334 = vmul.f32 %v5326, 0.044715
    %v5335 = vadd.f32 %v5260, %v5327
    %v5336 = vadd.f32 %v5262, %v5328
    %v5337 = vadd.f32 %v5303, %v5329
    %v5338 = vadd.f32 %v5305, %v5330
    %v5339 = vadd.f32 %v5264, %v5331
    %v5340 = vadd.f32 %v5266, %v5332
    %v5341 = vadd.f32 %v5307, %v5333
    %v5342 = vadd.f32 %v5309, %v5334
    %v5343 = vmul.f32 %v5335, 0.7978846
    %v5344 = vmul.f32 %v5336, 0.7978846
    %v5345 = vmul.f32 %v5337, 0.7978846
    %v5346 = vmul.f32 %v5338, 0.7978846
    %v5347 = vmul.f32 %v5339, 0.7978846
    %v5348 = vmul.f32 %v5340, 0.7978846
    %v5349 = vmul.f32 %v5341, 0.7978846
    %v5350 = vmul.f32 %v5342, 0.7978846
    %v5351 = vtanh.pop %v5343
    %v5352 = vtanh.pop %v5344
    %v5353 = vtanh.pop %v5345
    %v5354 = vtanh.pop %v5346
    %v5355 = vtanh.pop %v5347
    %v5356 = vtanh.pop %v5348
    %v5357 = vtanh.pop %v5349
    %v5358 = vtanh.pop %v5350
    %v5359 = vadd.f32 %v5351, 1.0
    %v5360 = vadd.f32 %v5352, 1.0
    %v5361 = vadd.f32 %v5353, 1.0
    %v5362 = vadd.f32 %v5354, 1.0
    %v5363 = vadd.f32 %v5355, 1.0
    %v5364 = vadd.f32 %v5356, 1.0
    %v5365 = vadd.f32 %v5357, 1.0
    %v5366 = vadd.f32 %v5358, 1.0
    %v5367 = vmul.f32 %v5359, 0.5
    %v5368 = vmul.f32 %v5360, 0.5
    %v5369 = vmul.f32 %v5361, 0.5
    %v5370 = vmul.f32 %v5362, 0.5
    %v5371 = vmul.f32 %v5363, 0.5
    %v5372 = vmul.f32 %v5364, 0.5
    %v5373 = vmul.f32 %v5365, 0.5
    %v5374 = vmul.f32 %v5366, 0.5
    %v5375 = vmul.f32 %v5260, %v5367
    %v5376 = vmul.f32 %v5262, %v5368
    %v5377 = vmul.f32 %v5303, %v5369
    %v5378 = vmul.f32 %v5305, %v5370
    %v5379 = vmul.f32 %v5264, %v5371
    %v5380 = vmul.f32 %v5266, %v5372
    %v5381 = vmul.f32 %v5307, %v5373
    %v5382 = vmul.f32 %v5309, %v5374
    %v5383 = vpack.c.bf16 %v5379, %v5375
    %v5384 = vpack.c.bf16 %v5380, %v5376
    %v5385 = vpack.c.bf16 %v5381, %v5377
    %v5386 = vpack.c.bf16 %v5382, %v5378
    %s5387 = scalar_lea.vmem %s9, 256
    %v5388 = vld [vmem:[%s5387] sm:$0xf]
    %v5389 = vld [vmem:[%s5387 + $0x4] sm:$0xf]
    %v5390 = vld [vmem:[%s5387 + $0x8] sm:$0xf]
    %v5391 = vld [vmem:[%s5387 + $0xc] sm:$0xf]
    %v5392 = vld [vmem:[%s5387 + $0x10] sm:$0xf]
    %v5393 = vld [vmem:[%s5387 + $0x14] sm:$0xf]
    %v5394 = vld [vmem:[%s5387 + $0x18] sm:$0xf]
    %v5395 = vld [vmem:[%s5387 + $0x1c] sm:$0xf]
    %v5396 = vld [vmem:[%s5387 + $0x20] sm:$0xf]
    %v5397 = vld [vmem:[%s5387 + $0x24] sm:$0xf]
    %v5398 = vld [vmem:[%s5387 + $0x28] sm:$0xf]
    %v5399 = vld [vmem:[%s5387 + $0x2c] sm:$0xf]
    %v5400 = vld [vmem:[%s5387 + $0x30] sm:$0xf]
    %v5401 = vld [vmem:[%s5387 + $0x34] sm:$0xf]
    %v5402 = vld [vmem:[%s5387 + $0x38] sm:$0xf]
    %v5403 = vld [vmem:[%s5387 + $0x3c] sm:$0xf]
    %v5404 = vld [vmem:[%s5387 + $0x40] sm:$0xf]
    %v5405 = vld [vmem:[%s5387 + $0x44] sm:$0xf]
    %v5406 = vld [vmem:[%s5387 + $0x48] sm:$0xf]
    %v5407 = vld [vmem:[%s5387 + $0x4c] sm:$0xf]
    %v5408 = vld [vmem:[%s5387 + $0x50] sm:$0xf]
    %v5409 = vld [vmem:[%s5387 + $0x54] sm:$0xf]
    %v5410 = vld [vmem:[%s5387 + $0x58] sm:$0xf]
    %v5411 = vld [vmem:[%s5387 + $0x5c] sm:$0xf]
    %v5412 = vld [vmem:[%s5387 + $0x60] sm:$0xf]
    %v5413 = vld [vmem:[%s5387 + $0x64] sm:$0xf]
    %v5414 = vld [vmem:[%s5387 + $0x68] sm:$0xf]
    %v5415 = vld [vmem:[%s5387 + $0x6c] sm:$0xf]
    %v5416 = vld [vmem:[%s5387 + $0x70] sm:$0xf]
    %v5417 = vld [vmem:[%s5387 + $0x74] sm:$0xf]
    %v5418 = vld [vmem:[%s5387 + $0x78] sm:$0xf]
    %v5419 = vld [vmem:[%s5387 + $0x7c] sm:$0xf]
    %v5420 = vld [vmem:[%s5387 + $0x80] sm:$0xf]
    %v5421 = vld [vmem:[%s5387 + $0x84] sm:$0xf]
    %v5422 = vld [vmem:[%s5387 + $0x88] sm:$0xf]
    %v5423 = vld [vmem:[%s5387 + $0x8c] sm:$0xf]
    %v5424 = vld [vmem:[%s5387 + $0x90] sm:$0xf]
    %v5425 = vld [vmem:[%s5387 + $0x94] sm:$0xf]
    %v5426 = vld [vmem:[%s5387 + $0x98] sm:$0xf]
    %v5427 = vld [vmem:[%s5387 + $0x9c] sm:$0xf]
    %v5428 = vld [vmem:[%s5387 + $0xa0] sm:$0xf]
    %v5429 = vld [vmem:[%s5387 + $0xa4] sm:$0xf]
    %v5430 = vld [vmem:[%s5387 + $0xa8] sm:$0xf]
    %v5431 = vld [vmem:[%s5387 + $0xac] sm:$0xf]
    %v5432 = vld [vmem:[%s5387 + $0xb0] sm:$0xf]
    %v5433 = vld [vmem:[%s5387 + $0xb4] sm:$0xf]
    %v5434 = vld [vmem:[%s5387 + $0xb8] sm:$0xf]
    %v5435 = vld [vmem:[%s5387 + $0xbc] sm:$0xf]
    %v5436 = vld [vmem:[%s5387 + $0xc0] sm:$0xf]
    %v5437 = vld [vmem:[%s5387 + $0xc4] sm:$0xf]
    %v5438 = vld [vmem:[%s5387 + $0xc8] sm:$0xf]
    %v5439 = vld [vmem:[%s5387 + $0xcc] sm:$0xf]
    %v5440 = vld [vmem:[%s5387 + $0xd0] sm:$0xf]
    %v5441 = vld [vmem:[%s5387 + $0xd4] sm:$0xf]
    %v5442 = vld [vmem:[%s5387 + $0xd8] sm:$0xf]
    %v5443 = vld [vmem:[%s5387 + $0xdc] sm:$0xf]
    %v5444 = vld [vmem:[%s5387 + $0xe0] sm:$0xf]
    %v5445 = vld [vmem:[%s5387 + $0xe4] sm:$0xf]
    %v5446 = vld [vmem:[%s5387 + $0xe8] sm:$0xf]
    %v5447 = vld [vmem:[%s5387 + $0xec] sm:$0xf]
    %v5448 = vld [vmem:[%s5387 + $0xf0] sm:$0xf]
    %v5449 = vld [vmem:[%s5387 + $0xf4] sm:$0xf]
    %v5450 = vld [vmem:[%s5387 + $0xf8] sm:$0xf]
    %v5451 = vld [vmem:[%s5387 + $0xfc] sm:$0xf]
    %v5452 = vlaneseq
    %v5453 = vshrl.u32 %v5452, 7
    %v5454 = vsub.s32 6, %v5453
    %v5455 = vrot.slane %v3179, %v5454
    %v5520 = vunpack.c.l.b16 %v5388
    %v5521 = vunpack.c.l.b16 %v5389
    %v5522 = vunpack.c.l.b16 %v5390
    %v5523 = vunpack.c.l.b16 %v5391
    %v5524 = vunpack.c.l.b16 %v5392
    %v5525 = vunpack.c.l.b16 %v5393
    %v5526 = vunpack.c.l.b16 %v5394
    %v5527 = vunpack.c.l.b16 %v5395
    %v5528 = vunpack.c.l.b16 %v5396
    %v5529 = vunpack.c.l.b16 %v5397
    %v5530 = vunpack.c.l.b16 %v5398
    %v5531 = vunpack.c.l.b16 %v5399
    %v5532 = vunpack.c.l.b16 %v5400
    %v5533 = vunpack.c.l.b16 %v5401
    %v5534 = vunpack.c.l.b16 %v5402
    %v5535 = vunpack.c.l.b16 %v5403
    %v5536 = vunpack.c.l.b16 %v5404
    %v5537 = vunpack.c.l.b16 %v5405
    %v5538 = vunpack.c.l.b16 %v5406
    %v5539 = vunpack.c.l.b16 %v5407
    %v5540 = vunpack.c.l.b16 %v5408
    %v5541 = vunpack.c.l.b16 %v5409
    %v5542 = vunpack.c.l.b16 %v5410
    %v5543 = vunpack.c.l.b16 %v5411
    %v5544 = vunpack.c.l.b16 %v5412
    %v5545 = vunpack.c.l.b16 %v5413
    %v5546 = vunpack.c.l.b16 %v5414
    %v5547 = vunpack.c.l.b16 %v5415
    %v5548 = vunpack.c.l.b16 %v5416
    %v5549 = vunpack.c.l.b16 %v5417
    %v5550 = vunpack.c.l.b16 %v5418
    %v5551 = vunpack.c.l.b16 %v5419
    %v5552 = vunpack.c.l.b16 %v5420
    %v5553 = vunpack.c.l.b16 %v5421
    %v5554 = vunpack.c.l.b16 %v5422
    %v5555 = vunpack.c.l.b16 %v5423
    %v5556 = vunpack.c.l.b16 %v5424
    %v5557 = vunpack.c.l.b16 %v5425
    %v5558 = vunpack.c.l.b16 %v5426
    %v5559 = vunpack.c.l.b16 %v5427
    %v5560 = vunpack.c.l.b16 %v5428
    %v5561 = vunpack.c.l.b16 %v5429
    %v5562 = vunpack.c.l.b16 %v5430
    %v5563 = vunpack.c.l.b16 %v5431
    %v5564 = vunpack.c.l.b16 %v5432
    %v5565 = vunpack.c.l.b16 %v5433
    %v5566 = vunpack.c.l.b16 %v5434
    %v5567 = vunpack.c.l.b16 %v5435
    %v5568 = vunpack.c.l.b16 %v5436
    %v5569 = vunpack.c.l.b16 %v5437
    %v5570 = vunpack.c.l.b16 %v5438
    %v5571 = vunpack.c.l.b16 %v5439
    %v5572 = vunpack.c.l.b16 %v5440
    %v5573 = vunpack.c.l.b16 %v5441
    %v5574 = vunpack.c.l.b16 %v5442
    %v5575 = vunpack.c.l.b16 %v5443
    %v5576 = vunpack.c.l.b16 %v5444
    %v5577 = vunpack.c.l.b16 %v5445
    %v5578 = vunpack.c.l.b16 %v5446
    %v5579 = vunpack.c.l.b16 %v5447
    %v5580 = vunpack.c.l.b16 %v5448
    %v5581 = vunpack.c.l.b16 %v5449
    %v5582 = vunpack.c.l.b16 %v5450
    %v5583 = vunpack.c.l.b16 %v5451
    %v5584 = vpack.c.b16 %v5521, %v5520
    %v5585 = vpack.c.b16 %v5523, %v5522
    %v5586 = vpack.c.b16 %v5525, %v5524
    %v5587 = vpack.c.b16 %v5527, %v5526
    %v5588 = vpack.c.b16 %v5529, %v5528
    %v5589 = vpack.c.b16 %v5531, %v5530
    %v5590 = vpack.c.b16 %v5533, %v5532
    %v5591 = vpack.c.b16 %v5535, %v5534
    %v5592 = vpack.c.b16 %v5537, %v5536
    %v5593 = vpack.c.b16 %v5539, %v5538
    %v5594 = vpack.c.b16 %v5541, %v5540
    %v5595 = vpack.c.b16 %v5543, %v5542
    %v5596 = vpack.c.b16 %v5545, %v5544
    %v5597 = vpack.c.b16 %v5547, %v5546
    %v5598 = vpack.c.b16 %v5549, %v5548
    %v5599 = vpack.c.b16 %v5551, %v5550
    %v5600 = vpack.c.b16 %v5553, %v5552
    %v5601 = vpack.c.b16 %v5555, %v5554
    %v5602 = vpack.c.b16 %v5557, %v5556
    %v5603 = vpack.c.b16 %v5559, %v5558
    %v5604 = vpack.c.b16 %v5561, %v5560
    %v5605 = vpack.c.b16 %v5563, %v5562
    %v5606 = vpack.c.b16 %v5565, %v5564
    %v5607 = vpack.c.b16 %v5567, %v5566
    %v5608 = vpack.c.b16 %v5569, %v5568
    %v5609 = vpack.c.b16 %v5571, %v5570
    %v5610 = vpack.c.b16 %v5573, %v5572
    %v5611 = vpack.c.b16 %v5575, %v5574
    %v5612 = vpack.c.b16 %v5577, %v5576
    %v5613 = vpack.c.b16 %v5579, %v5578
    %v5614 = vpack.c.b16 %v5581, %v5580
    %v5615 = vpack.c.b16 %v5583, %v5582
    %5648 = vmatprep.subr.bf16.mxu0 0
    %5649 = vmatpush1.bf16.msra.mxu0 %v5584
    %5650 = vmatprep.subr.bf16.mxu0 0
    %5651 = vmatpush1.bf16.msra.mxu0 %v5585
    %5652 = vmatprep.subr.bf16.mxu0 0
    %5653 = vmatpush1.bf16.msra.mxu0 %v5586
    %5654 = vmatprep.subr.bf16.mxu0 0
    %5655 = vmatpush1.bf16.msra.mxu0 %v5587
    %5656 = vmatprep.subr.bf16.mxu0 0
    %5657 = vmatpush1.bf16.msra.mxu0 %v5588
    %5658 = vmatprep.subr.bf16.mxu0 0
    %5659 = vmatpush1.bf16.msra.mxu0 %v5589
    %5660 = vmatprep.subr.bf16.mxu0 0
    %5661 = vmatpush1.bf16.msra.mxu0 %v5590
    %5662 = vmatprep.subr.bf16.mxu0 0
    %5663 = vmatpush1.bf16.msra.mxu0 %v5591
    %5664 = vmatprep.subr.bf16.mxu0 0
    %5665 = vmatpush1.bf16.msra.mxu0 %v5592
    %5666 = vmatprep.subr.bf16.mxu0 0
    %5667 = vmatpush1.bf16.msra.mxu0 %v5593
    %5668 = vmatprep.subr.bf16.mxu0 0
    %5669 = vmatpush1.bf16.msra.mxu0 %v5594
    %5670 = vmatprep.subr.bf16.mxu0 0
    %5671 = vmatpush1.bf16.msra.mxu0 %v5595
    %5672 = vmatprep.subr.bf16.mxu0 0
    %5673 = vmatpush1.bf16.msra.mxu0 %v5596
    %5674 = vmatprep.subr.bf16.mxu0 0
    %5675 = vmatpush1.bf16.msra.mxu0 %v5597
    %5676 = vmatprep.subr.bf16.mxu0 0
    %5677 = vmatpush1.bf16.msra.mxu0 %v5598
    %5678 = vmatprep.subr.bf16.mxu0 0
    %5679 = vmatpush1.bf16.msra.mxu0 %v5599
    %5680 = vmatprep.mubr.bf16.mxu0 %v5384
    %5681 = vmatmul.mubr.bf16.gmra.mrb[0].mxu0 %v5383
    %v5682 = vpop.f32.mrb[0].mxu0
    %v5683 = vadd.f32 %v5455, %v5682
    %v5684 = vpop.f32.mrb[0].mxu0
    %v5685 = vpop.f32.mrb[0].mxu0
    %v5686 = vadd.f32 %v5455, %v5685
    %v5687 = vpop.f32.mrb[0].mxu0
    %5688 = vdwg.mxu0
    %5689 = vmatprep.subr.bf16.mxu0 0
    %5690 = vmatpush1.bf16.msra.mxu0 %v5600
    %5691 = vmatprep.subr.bf16.mxu0 0
    %5692 = vmatpush1.bf16.msra.mxu0 %v5601
    %5693 = vmatprep.subr.bf16.mxu0 0
    %5694 = vmatpush1.bf16.msra.mxu0 %v5602
    %5695 = vmatprep.subr.bf16.mxu0 0
    %5696 = vmatpush1.bf16.msra.mxu0 %v5603
    %5697 = vmatprep.subr.bf16.mxu0 0
    %5698 = vmatpush1.bf16.msra.mxu0 %v5604
    %5699 = vmatprep.subr.bf16.mxu0 0
    %5700 = vmatpush1.bf16.msra.mxu0 %v5605
    %5701 = vmatprep.subr.bf16.mxu0 0
    %5702 = vmatpush1.bf16.msra.mxu0 %v5606
    %5703 = vmatprep.subr.bf16.mxu0 0
    %5704 = vmatpush1.bf16.msra.mxu0 %v5607
    %5705 = vmatprep.subr.bf16.mxu0 0
    %5706 = vmatpush1.bf16.msra.mxu0 %v5608
    %5707 = vmatprep.subr.bf16.mxu0 0
    %5708 = vmatpush1.bf16.msra.mxu0 %v5609
    %5709 = vmatprep.subr.bf16.mxu0 0
    %5710 = vmatpush1.bf16.msra.mxu0 %v5610
    %5711 = vmatprep.subr.bf16.mxu0 0
    %5712 = vmatpush1.bf16.msra.mxu0 %v5611
    %5713 = vmatprep.subr.bf16.mxu0 0
    %5714 = vmatpush1.bf16.msra.mxu0 %v5612
    %5715 = vmatprep.subr.bf16.mxu0 0
    %5716 = vmatpush1.bf16.msra.mxu0 %v5613
    %5717 = vmatprep.subr.bf16.mxu0 0
    %5718 = vmatpush1.bf16.msra.mxu0 %v5614
    %5719 = vmatprep.subr.bf16.mxu0 0
    %5720 = vmatpush1.bf16.msra.mxu0 %v5615
    %5721 = vmatprep.mubr.bf16.mxu0 %v5386
    %5722 = vmatmul.mubr.bf16.gmra.mrb[0].mxu0 %v5385
    %v5723 = vpop.f32.mrb[0].mxu0
    %v5724 = vadd.f32 %v5683, %v5723
    %v5725 = vpop.f32.mrb[0].mxu0
    %v5726 = vpop.f32.mrb[0].mxu0
    %v5727 = vadd.f32 %v5686, %v5726
    %v5728 = vpop.f32.mrb[0].mxu0
    %5729 = vdwg.mxu0
    %v5730 = vlaneseq
    %v5731 = vshrl.u32 %v5730, 7
    %v5732 = vsub.s32 7, %v5731
    %v5733 = vrot.slane %v3179, %v5732
    %v5734 = vmul.f32 %v5733, %v5724
    %v5735 = vmul.f32 %v5733, %v5727
    %v5736 = vadd.f32 %v4970, %v5734
    %v5737 = vadd.f32 %v4971, %v5735
    %v5738 = vld [vmem:[%s11] sm:$0x3]
    %5739 = vadd.xlane.f32.xlu0 %v5736
    %v5740 = vpop.xlane.xlu0 %5739
    %v5741 = vsel %vm619, %v5737, 0.0
    %5742 = vadd.xlane.f32.xlu0 %v5741
    %v5743 = vpop.xlane.xlu0 %5742
    %v5744 = vmul.f32 %v5740, %v623
    %v5745 = vmul.f32 %v5743, %v623
    %v5746 = vsub.f32 %v5736, %v5744
    %v5747 = vsub.f32 %v5737, %v5745
    %v5748 = vmul.f32 %v5746, %v5746
    %v5749 = vmul.f32 %v5747, %v5747
    %5750 = vadd.xlane.f32.xlu0 %v5748
    %v5751 = vpop.xlane.xlu0 %5750
    %v5752 = vsel %vm619, %v5749, 0.0
    %5753 = vadd.xlane.f32.xlu0 %v5752
    %v5754 = vpop.xlane.xlu0 %5753
    %v5755 = vmul.f32 %v5751, %v623
    %v5756 = vmul.f32 %v5754, %v623
    %v5757 = vadd.f32 %v5755, 1e-06
    %v5758 = vadd.f32 %v5756, 1e-06
    %v5759 = vrsqrt.pop %v5757
    %v5760 = vrsqrt.pop %v5758
    %v5761 = vmul.f32 %v5746, %v5759
    %v5762 = vmul.f32 %v5747, %v5760
    %v5763 = vlaneseq
    %v5764 = vshrl.u32 %v5763, 7
    %v5765 = vsub.s32 0, %v5764
    %v5766 = vrot.slane %v5738, %v5765
    %v5767 = vmul.f32 %v5761, %v5766
    %v5768 = vmul.f32 %v5762, %v5766
    %v5769 = vlaneseq
    %v5770 = vshrl.u32 %v5769, 7
    %v5771 = vsub.s32 1, %v5770
    %v5772 = vrot.slane %v5738, %v5771
    %v5773 = vadd.f32 %v5767, %v5772
    %v5774 = vadd.f32 %v5768, %v5772
    %5775 = vst [vmem:[%s15] sm:$0xff] %v5773
    %5776 = vst [vmem:[%s15 + $0x8] sm:$0x3] %v5774
    %v5777 = vmax.f32 %v5773, 1e-06
    %v5778 = vmax.f32 %v5774, 1e-06
    %v5779 = vmul.f32 %v5777, %v5777
    %v5780 = vmul.f32 %v5778, %v5778
    %v5781 = vmul.f32 %v5779, %v5777
    %v5782 = vmul.f32 %v5780, %v5778
    %v5783 = vld [vmem:[%s12] sm:$0x3]
    %vm5784 = vcmask 80896
    %v5786 = vsel %vm5784, %v5783, 0
    %v5789 = vsel %vm619, %v5782, 0
    %5791 = vmatprep.subr.mxu0 0.0
    %5792 = vmatpush1.msra.mxu0 %v5781
    %5793 = vmatprep.subr.mxu0 0.0
    %5794 = vmatpush1.msra.mxu0 %v5789
    %5795 = vmatprep.subr.mxu0 0.0
    %5796 = vmatpush1.msra.mxu0 0.0
    %5797 = vmatprep.subr.mxu0 0.0
    %5798 = vmatpush1.msra.mxu0 0.0
    %5799 = vmatprep.subr.mxu0 0.0
    %5800 = vmatpush1.msra.mxu0 0.0
    %5801 = vmatprep.subr.mxu0 0.0
    %5802 = vmatpush1.msra.mxu0 0.0
    %5803 = vmatprep.subr.mxu0 0.0
    %5804 = vmatpush1.msra.mxu0 0.0
    %5805 = vmatprep.subr.mxu0 0.0
    %5806 = vmatpush1.msra.mxu0 0.0
    %5807 = vmatprep.subr.mxu0 0.0
    %5808 = vmatpush1.msra.mxu0 0.0
    %5809 = vmatprep.subr.mxu0 0.0
    %5810 = vmatpush1.msra.mxu0 0.0
    %5811 = vmatprep.subr.mxu0 0.0
    %5812 = vmatpush1.msra.mxu0 0.0
    %5813 = vmatprep.subr.mxu0 0.0
    %5814 = vmatpush1.msra.mxu0 0.0
    %5815 = vmatprep.subr.mxu0 0.0
    %5816 = vmatpush1.msra.mxu0 0.0
    %5817 = vmatprep.subr.mxu0 0.0
    %5818 = vmatpush1.msra.mxu0 0.0
    %5819 = vmatprep.subr.mxu0 0.0
    %5820 = vmatpush1.msra.mxu0 0.0
    %5821 = vmatprep.subr.mxu0 0.0
    %5822 = vmatpush1.msra.mxu0 0.0
    %5823 = vmatprep.subr.mxu0 0.0
    %5824 = vmatpush1.msra.mxu0 0.0
    %5825 = vmatprep.subr.mxu0 0.0
    %5826 = vmatpush1.msra.mxu0 0.0
    %5827 = vmatprep.subr.mxu0 0.0
    %5828 = vmatpush1.msra.mxu0 0.0
    %5829 = vmatprep.subr.mxu0 0.0
    %5830 = vmatpush1.msra.mxu0 0.0
    %5831 = vmatprep.subr.mxu0 0.0
    %5832 = vmatpush1.msra.mxu0 0.0
    %5833 = vmatprep.subr.mxu0 0.0
    %5834 = vmatpush1.msra.mxu0 0.0
    %5835 = vmatprep.subr.mxu0 0.0
    %5836 = vmatpush1.msra.mxu0 0.0
    %5837 = vmatprep.subr.mxu0 0.0
    %5838 = vmatpush1.msra.mxu0 0.0
    %5839 = vmatprep.subr.mxu0 0.0
    %5840 = vmatpush1.msra.mxu0 0.0
    %5841 = vmatprep.subr.mxu0 0.0
    %5842 = vmatpush1.msra.mxu0 0.0
    %5843 = vmatprep.subr.mxu0 0.0
    %5844 = vmatpush1.msra.mxu0 0.0
    %5845 = vmatprep.subr.mxu0 0.0
    %5846 = vmatpush1.msra.mxu0 0.0
    %5847 = vmatprep.subr.mxu0 0.0
    %5848 = vmatpush1.msra.mxu0 0.0
    %5849 = vmatprep.subr.mxu0 0.0
    %5850 = vmatpush1.msra.mxu0 0.0
    %5851 = vmatprep.subr.mxu0 0.0
    %5852 = vmatpush1.msra.mxu0 0.0
    %5853 = vmatprep.subr.mxu0 0.0
    %5854 = vmatpush1.msra.mxu0 0.0
    %5855 = vmatprep.mubr.f32.mxu0 0.0
    %5856 = vmatmul.mubr.f32.gmra.mrb[0].mxu0 %v5786
    %v5857 = vpop.f32.mrb[0].mxu0
    %v5858 = vadd.f32 0.0, %v5857
    %v5859 = vpop.f32.mrb[0].mxu0
    %5860 = vdwg.mxu0
    %v5861 = vlog2.pop %v5858
    %v5862 = vmul.f32 %v5861, 0.6931472
    %v5863 = vrcp.pop 3.0
    %v5864 = vmul.f32 %v5862, %v5863
    %v5865 = vmul.f32 %v5864, 1.442695
    %v5866 = vpow.pop %v5865
    %v5867 = vpack.c.bf16 %v5866, %v5866
    %v5868 = vld [vmem:[%s13] sm:$0xf]
    %v5869 = vld [vmem:[%s13 + $0x4] sm:$0xf]
    %v5870 = vld [vmem:[%s13 + $0x8] sm:$0xf]
    %v5871 = vld [vmem:[%s13 + $0xc] sm:$0xf]
    %v5872 = vld [vmem:[%s13 + $0x10] sm:$0xf]
    %v5873 = vld [vmem:[%s13 + $0x14] sm:$0xf]
    %v5874 = vld [vmem:[%s13 + $0x18] sm:$0xf]
    %v5875 = vld [vmem:[%s13 + $0x1c] sm:$0xf]
    %v5876 = vld [vmem:[%s13 + $0x20] sm:$0xf]
    %v5877 = vld [vmem:[%s13 + $0x24] sm:$0xf]
    %v5878 = vld [vmem:[%s13 + $0x28] sm:$0xf]
    %v5879 = vld [vmem:[%s13 + $0x2c] sm:$0xf]
    %v5880 = vld [vmem:[%s13 + $0x30] sm:$0xf]
    %v5881 = vld [vmem:[%s13 + $0x34] sm:$0xf]
    %v5882 = vld [vmem:[%s13 + $0x38] sm:$0xf]
    %v5883 = vld [vmem:[%s13 + $0x3c] sm:$0xf]
    %v5884 = vld [vmem:[#allocation5] sm:$0x1]
    %v5886 = vlaneseq
    %v5887 = vshrl.u32 %v5886, 7
    %v5888 = vsub.s32 0, %v5887
    %v5889 = vrot.slane %v5884, %v5888
    %v5907 = vunpack.c.l.b16 %v5868
    %v5908 = vunpack.c.l.b16 %v5869
    %v5909 = vunpack.c.l.b16 %v5870
    %v5910 = vunpack.c.l.b16 %v5871
    %v5911 = vunpack.c.l.b16 %v5872
    %v5912 = vunpack.c.l.b16 %v5873
    %v5913 = vunpack.c.l.b16 %v5874
    %v5914 = vunpack.c.l.b16 %v5875
    %v5915 = vunpack.c.l.b16 %v5876
    %v5916 = vunpack.c.l.b16 %v5877
    %v5917 = vunpack.c.l.b16 %v5878
    %v5918 = vunpack.c.l.b16 %v5879
    %v5919 = vunpack.c.l.b16 %v5880
    %v5920 = vunpack.c.l.b16 %v5881
    %v5921 = vunpack.c.l.b16 %v5882
    %v5922 = vunpack.c.l.b16 %v5883
    %v5923 = vpack.c.b16 %v5908, %v5907
    %v5924 = vpack.c.b16 %v5910, %v5909
    %v5925 = vpack.c.b16 %v5912, %v5911
    %v5926 = vpack.c.b16 %v5914, %v5913
    %v5927 = vpack.c.b16 %v5916, %v5915
    %v5928 = vpack.c.b16 %v5918, %v5917
    %v5929 = vpack.c.b16 %v5920, %v5919
    %v5930 = vpack.c.b16 %v5922, %v5921
    %5939 = vmatprep.subr.bf16.mxu0 0
    %5940 = vmatpush1.bf16.msra.mxu0 %v5923
    %5941 = vmatprep.subr.bf16.mxu0 0
    %5942 = vmatpush1.bf16.msra.mxu0 %v5924
    %5943 = vmatprep.subr.bf16.mxu0 0
    %5944 = vmatpush1.bf16.msra.mxu0 %v5925
    %5945 = vmatprep.subr.bf16.mxu0 0
    %5946 = vmatpush1.bf16.msra.mxu0 %v5926
    %5947 = vmatprep.subr.bf16.mxu0 0
    %5948 = vmatpush1.bf16.msra.mxu0 %v5927
    %5949 = vmatprep.subr.bf16.mxu0 0
    %5950 = vmatpush1.bf16.msra.mxu0 %v5928
    %5951 = vmatprep.subr.bf16.mxu0 0
    %5952 = vmatpush1.bf16.msra.mxu0 %v5929
    %5953 = vmatprep.subr.bf16.mxu0 0
    %5954 = vmatpush1.bf16.msra.mxu0 %v5930
    %5955 = vmatprep.subr.bf16.mxu0 0
    %5956 = vmatpush1.bf16.msra.mxu0 0
    %5957 = vmatprep.subr.bf16.mxu0 0
    %5958 = vmatpush1.bf16.msra.mxu0 0
    %5959 = vmatprep.subr.bf16.mxu0 0
    %5960 = vmatpush1.bf16.msra.mxu0 0
    %5961 = vmatprep.subr.bf16.mxu0 0
    %5962 = vmatpush1.bf16.msra.mxu0 0
    %5963 = vmatprep.subr.bf16.mxu0 0
    %5964 = vmatpush1.bf16.msra.mxu0 0
    %5965 = vmatprep.subr.bf16.mxu0 0
    %5966 = vmatpush1.bf16.msra.mxu0 0
    %5967 = vmatprep.subr.bf16.mxu0 0
    %5968 = vmatpush1.bf16.msra.mxu0 0
    %5969 = vmatprep.subr.bf16.mxu0 0
    %5970 = vmatpush1.bf16.msra.mxu0 0
    %5971 = vmatprep.mubr.bf16.mxu0 0
    %5972 = vmatmul.mubr.bf16.gmra.mrb[0].mxu0 %v5867
    %v5973 = vpop.f32.mrb[0].mxu0
    %v5974 = vadd.f32 %v5889, %v5973
    %v5975 = vpop.f32.mrb[0].mxu0
    %v5976 = vpop.f32.mrb[0].mxu0
    %v5977 = vpop.f32.mrb[0].mxu0
    %5978 = vdwg.mxu0
    %v5979 = vmul.f32 %v5974, %v5974
    %vm5980 = vcmask 517120
    %v5981 = vsel %vm5980, %v5979, 0.0
    %5982 = vadd.xlane.f32.xlu0 %v5981
    %v5983 = vpop.xlane.xlu0 %5982
    %v5984 = vrsqrt.pop %v5983
    %v5985 = vmul.f32 %v5983, %v5984
    %vm5986 = vcmp.eq.f32.partialorder %v5983, inf
    %v5987 = vsel %vm5986, %v5983, %v5985
    %vm5988 = vcmp.eq.f32.partialorder %v5983, 0.0
    %v5989 = vand.u32 %v5983, 2147483648
    %v5990 = vsel %vm5988, %v5989, %v5987
    %v5991 = vmax.f32 %v5990, 1e-12
    %v5992 = vrcp.pop %v5991
    %v5993 = vmul.f32 %v5974, %v5992
    %5994 = vst.msk [vmem:[#allocation7] sm:$0x3] %vm5980, %v5993
    // Predicated region
    $region70: #{vglnet_test_forward.1} parent=1 // pred_check
      _
    $region71: #{vglnet_test_forward.1} parent=1 // pred_check_branch
      %5996 = sbr.rel (0) target = $region73
    $region72: #{vglnet_test_forward.1} parent=1 // pred_region
      _
    $region73: #{vglnet_test_forward.1} parent=1 // pred_fallthru
      _
    // Predicated region
    $region74: #{vglnet_test_forward.1} parent=1 // pred_check
      _
    $region75: #{vglnet_test_forward.1} parent=1 // pred_check_branch
      %5998 = sbr.rel (0) target = $region77
    $region76: #{vglnet_test_forward.1} parent=1 // pred_region
      %s6000 = ssub.s32 32, 32
      %6001 = vsyncadd [#allocation4], %s6000
      %s6003 = sshll.u32 [#allocation7], 4
      %s6004 = int_to_ptr.vmem [resolvable:$true] %s6003
      %6006 = dma.vmem_to_hbm [thread:$0]  %s6004, 32, %s16, [#allocation4]
    $region77: #{vglnet_test_forward.1} parent=1 // pred_fallthru
      _
    // Predicated region
    $region78: #{vglnet_test_forward.1} parent=1 // pred_check
      _
    $region79: #{vglnet_test_forward.1} parent=1 // pred_check_branch
      %6008 = sbr.rel (0) target = $region81
    $region80: #{vglnet_test_forward.1} parent=1 // pred_region
      _
    $region81: #{vglnet_test_forward.1} parent=1 // pred_fallthru
      _
    // Predicated region
    $region82: #{vglnet_test_forward.1} parent=1 // pred_check
      _
    $region83: #{vglnet_test_forward.1} parent=1 // pred_check_branch
      %6010 = sbr.rel (0) target = $region85
    $region84: #{vglnet_test_forward.1} parent=1 // pred_region
      %6011 = dma.done [#allocation4], 32
    $region85: #{vglnet_test_forward.1} parent=1 // pred_fallthru
      _
    %6012 = vsyncpa [#allocation3], 1
    %6013 = vsyncpa [#allocation6], 1
    %6014 = vsyncpa [#allocation4], 1

</llo_original>
